<compile_context>
chip_gen: v6e
topology: v6e:2x2x1
jax: 0.10.0
libtpu: 0.0.40
codegen_flags: <defaults>
</compile_context>

<pallas_src>
import functools

import jax
import jax.numpy as jnp
from jax import lax
from jax.experimental import pallas as pl
from jax.experimental.pallas import tpu as pltpu

BN_EPS = 1e-5


def _bn_relu(acc, gamma, beta):
    """Train-mode BatchNorm2d (batch statistics, biased variance) folded into
    a per-channel scale/shift, then ReLU.  One pass over the activations:
    sum and sum-of-squares, f32 accumulation.  acc: (N, C) f32."""
    n = acc.shape[0]
    mean = jnp.sum(acc, axis=0, keepdims=True) / n                 # (1, C)
    ex2 = jnp.sum(acc * acc, axis=0, keepdims=True) / n            # (1, C)
    var = jnp.maximum(ex2 - mean * mean, 0.0)                      # (1, C)
    scale = gamma * lax.rsqrt(var + BN_EPS)                        # (1, C)
    shift = beta - mean * scale                                    # (1, C)
    # Only mul + add + max touch the big (N, C) tensor.
    return jnp.maximum(acc * scale + shift, 0.0)


def _conv3x3(pad_ref, y, w_ref, B, H, W, C):
    """3x3 / stride 1 / pad 1 conv as nine per-tap MXU matmuls (K = C) read
    directly from the padded-activation scratch.  No im2col scratch and no
    lane-misaligned column stores.

    pad_ref: (B, H+2, W+2, C) f32 scratch
    y:       (B*H*W, C) f32 value, rows ordered (b, h, w)
    w_ref:   (9, C, Cout) bf16, tap index k = ky*3 + kx
    returns  (B*H*W, Cout) f32
    """
    N = B * H * W
    Cout = w_ref.shape[2]
    # In-kernel zero padding; interior overwritten with the activation.
    pad_ref[...] = jnp.zeros_like(pad_ref)
    pad_ref[:, 1:H + 1, 1:W + 1, :] = y.reshape(B, H, W, C)
    acc = jnp.zeros((N, Cout), jnp.float32)
    for k in range(9):
        dy, dx = k // 3, k % 3
        win = pad_ref[:, dy:dy + H, dx:dx + W, :].reshape(N, C)    # f32 window
        acc = acc + jnp.dot(win.astype(jnp.bfloat16), w_ref[k],
                            preferred_element_type=jnp.float32)
    return acc


def _maxpool2x2(tmp_ref, y_flat, B, H, W, C):
    """MaxPool2d(2, 2).  y_flat: (B*H*W, C) f32, rows ordered (b, h, w).
    tmp_ref: (B*(H//2)*W, C) f32 scratch.  Returns (B*(H//2)*(W//2), C)."""
    Hh, Wh = H // 2, W // 2
    # Pool H at value level: layout-free reshape (W % 8 == 0) + elementwise max.
    y = y_flat.reshape(B, Hh, 2, W, C)
    t = jnp.maximum(y[:, :, 0, :, :], y[:, :, 1, :, :])            # (B, Hh, W, C)
    tmp_ref[...] = t.reshape(B * Hh * W, C)                        # rows (b, i, w)
    # Pool W: stride-2 sublane loads (w parity == row parity since W is even).
    n = B * Hh * Wh
    even = tmp_ref[pl.ds(0, n, stride=2), :]
    odd = tmp_ref[pl.ds(1, n, stride=2), :]
    return jnp.maximum(even, odd)                                  # rows (b, i, j)


def feature_extractor_kernel(
        col1_ref, w1_ref, g1_ref, b1_ref, w2_ref, g2_ref, b2_ref,
        w3_ref, g3_ref, b3_ref, w4_ref, g4_ref, b4_ref, o_ref,
        pad2, pad3, pad4, tmp2, tmp3, *, B, H, W):
    C1 = w2_ref.shape[1]              # 32
    C3 = w4_ref.shape[1]              # 64
    H2, W2 = H // 2, W // 2
    H3, W3 = H2 // 2, W2 // 2

    # ---- conv1 + BN + ReLU: one lane-dense bf16 matmul over wrapper-built
    #      (B*H*W, 9*Cin) patches (Cin = 1). ----
    acc1 = jnp.dot(col1_ref[...], w1_ref[...],
                   preferred_element_type=jnp.float32)             # (B*H*W, C1)
    y1 = _bn_relu(acc1, g1_ref[...], b1_ref[...])

    # ---- conv2 + BN + ReLU + maxpool ----
    acc2 = _conv3x3(pad2, y1, w2_ref, B, H, W, C1)                 # (B*H*W, C1)
    y2 = _bn_relu(acc2, g2_ref[...], b2_ref[...])
    y2p = _maxpool2x2(tmp2, y2, B, H, W, C1)                       # (B*H2*W2, C1)

    # ---- conv3 + BN + ReLU + maxpool ----
    acc3 = _conv3x3(pad3, y2p, w3_ref, B, H2, W2, C1)              # (B*H2*W2, C3)
    y3 = _bn_relu(acc3, g3_ref[...], b3_ref[...])
    y3p = _maxpool2x2(tmp3, y3, B, H2, W2, C3)                     # (B*H3*W3, C3)

    # ---- conv4 + BN + ReLU ----
    acc4 = _conv3x3(pad4, y3p, w4_ref, B, H3, W3, C3)              # (B*H3*W3, C3)
    y4 = _bn_relu(acc4, g4_ref[...], b4_ref[...])

    # Emit one 2-D tile (rows ordered (b, h, w), channels on lanes); the
    # NCHW-order flatten is a tiny wrapper-side permute.
    o_ref[...] = y4


def init_params(key, in_channel=1, out_channel=32):
    """Synthetic parameters matching FeatureExtractor's shapes.

    conv1 weight is in flat im2col layout (9*Cin, C1), index order
    (ky*3 + kx)*Cin + cin; conv2..conv4 weights are (9, Cin, Cout) per-tap
    slabs.  All conv weights are bf16 (MXU operands).  Conv bias is omitted:
    with batch-statistic BatchNorm a per-channel constant cancels in the mean
    subtraction, so the forward pass is numerically equivalent."""
    chans = [(in_channel, out_channel),
             (out_channel, out_channel),
             (out_channel, out_channel * 2),
             (out_channel * 2, out_channel * 2)]
    params = []
    for i, (cin, cout) in enumerate(chans):
        key, kw, kg, kb = jax.random.split(key, 4)
        w = 0.1 * jax.random.normal(kw, (3, 3, cin, cout), jnp.float32)
        if i == 0:
            w = w.reshape(9 * cin, cout).astype(jnp.bfloat16)
        else:
            w = w.reshape(9, cin, cout).astype(jnp.bfloat16)
        gamma = 1.0 + 0.1 * jax.random.normal(kg, (1, cout), jnp.float32)
        beta = 0.05 * jax.random.normal(kb, (1, cout), jnp.float32)
        params.append((w, gamma, beta))
    return params


def feature_extractor(x_nchw, params):
    """Forward pass.  x_nchw: (B, Cin, H, W) f32 -> (B, 2*oc * H/4 * W/4),
    flattened in PyTorch NCHW order (matches x.view(B, -1))."""
    (w1, g1, b1), (w2, g2, b2), (w3, g3, b3), (w4, g4, b4) = params
    B, Cin, H, W = x_nchw.shape
    C1, C3 = w1.shape[1], w4.shape[1]
    H2, W2, H3, W3 = H // 2, W // 2, H // 4, W // 4
    hw = H3 * W3

    # conv1 im2col on the tiny input, wrapper side (cheap XLA glue on a 2 KiB
    # tensor): (B, Cin, H, W) -> lane-dense (B*H*W, 9*Cin) bf16 patch matrix.
    x_nhwc = jnp.transpose(x_nchw, (0, 2, 3, 1))                   # (B, H, W, Cin)
    xp = jnp.pad(x_nhwc, ((0, 0), (1, 1), (1, 1), (0, 0)))
    col1 = jnp.concatenate(
        [xp[:, dy:dy + H, dx:dx + W, :].reshape(B * H * W, Cin)
         for dy in range(3) for dx in range(3)],
        axis=1).astype(jnp.bfloat16)                               # (B*H*W, 9*Cin)

    out2d = pl.pallas_call(
        functools.partial(feature_extractor_kernel, B=B, H=H, W=W),
        out_shape=jax.ShapeDtypeStruct((B * H3 * W3, C3), jnp.float32),
        in_specs=[pl.BlockSpec(memory_space=pltpu.MemorySpace.VMEM)] * 13,
        out_specs=pl.BlockSpec(memory_space=pltpu.MemorySpace.VMEM),
        scratch_shapes=[
            pltpu.VMEM((B, H + 2, W + 2, C1), jnp.float32),        # pad2
            pltpu.VMEM((B, H2 + 2, W2 + 2, C1), jnp.float32),      # pad3
            pltpu.VMEM((B, H3 + 2, W3 + 2, C3), jnp.float32),      # pad4
            pltpu.VMEM((B * H2 * W, C1), jnp.float32),             # tmp2 (H-pooled)
            pltpu.VMEM((B * H3 * W2, C3), jnp.float32),            # tmp3 (H-pooled)
        ],
        compiler_params=pltpu.CompilerParams(
            vmem_limit_bytes=32 * 1024 * 1024),
    )(col1, w1, g1, b1, w2, g2, b2, w3, g3, b3, w4, g4, b4)

    # (B*hw, C) -> NCHW-order flatten: a tiny (8 KiB) permute, free in XLA.
    return out2d.reshape(B, hw, C3).transpose(0, 2, 1).reshape(B, -1)


if __name__ == "__main__":
    key = jax.random.PRNGKey(0)
    k_x, k_p = jax.random.split(key)

    # USPS-like input: batch=2, 1 channel, 16x16 spatial.
    x = jax.random.normal(k_x, (2, 1, 16, 16), jnp.float32)
    params = init_params(k_p, in_channel=1, out_channel=32)

    out = jax.block_until_ready(jax.jit(feature_extractor)(x, params))

    assert out.shape == (2, 64 * 4 * 4), out.shape
    assert bool(jnp.all(jnp.isfinite(out)))
    print("KERNEL_OK")
</pallas_src>

<mosaic_0001>
module attributes {stable_mosaic.version = 11 : i64} {
  func.func @feature_extractor_kernel(%arg0: memref<512x9xbf16, #tpu.memory_space<vmem>>, %arg1: memref<9x32xbf16, #tpu.memory_space<vmem>>, %arg2: memref<1x32xf32, #tpu.memory_space<vmem>>, %arg3: memref<1x32xf32, #tpu.memory_space<vmem>>, %arg4: memref<9x32x32xbf16, #tpu.memory_space<vmem>>, %arg5: memref<1x32xf32, #tpu.memory_space<vmem>>, %arg6: memref<1x32xf32, #tpu.memory_space<vmem>>, %arg7: memref<9x32x64xbf16, #tpu.memory_space<vmem>>, %arg8: memref<1x64xf32, #tpu.memory_space<vmem>>, %arg9: memref<1x64xf32, #tpu.memory_space<vmem>>, %arg10: memref<9x64x64xbf16, #tpu.memory_space<vmem>>, %arg11: memref<1x64xf32, #tpu.memory_space<vmem>>, %arg12: memref<1x64xf32, #tpu.memory_space<vmem>>, %arg13: memref<32x64xf32, #tpu.memory_space<vmem>>, %arg14: memref<2x18x18x32xf32, #tpu.memory_space<vmem>>, %arg15: memref<2x10x10x32xf32, #tpu.memory_space<vmem>>, %arg16: memref<2x6x6x64xf32, #tpu.memory_space<vmem>>, %arg17: memref<256x32xf32, #tpu.memory_space<vmem>>, %arg18: memref<64x64xf32, #tpu.memory_space<vmem>>) attributes {dimension_semantics = [], scalar_prefetch = 0 : i64, scratch_operands = 5 : i64, tpu.core_type = #tpu.core_type<tc>} {
    %c0 = arith.constant 0 : index
    %c0_0 = arith.constant 0 : index
    %0 = vector.load %arg0[%c0, %c0_0] : memref<512x9xbf16, #tpu.memory_space<vmem>>, vector<512x9xbf16>
    %c0_1 = arith.constant 0 : index
    %c0_2 = arith.constant 0 : index
    %1 = vector.load %arg1[%c0_1, %c0_2] : memref<9x32xbf16, #tpu.memory_space<vmem>>, vector<9x32xbf16>
    %cst = arith.constant dense<0.000000e+00> : vector<512x32xf32>
    %2 = tpu.matmul %0, %1, %cst {dimension_numbers = #tpu.dot_dimension_numbers<[1], [0], [0], [1], [0, 0, 1, 1], [], []>} : vector<512x9xbf16>, vector<9x32xbf16>, vector<512x32xf32> -> vector<512x32xf32>
    %c0_3 = arith.constant 0 : index
    %c0_4 = arith.constant 0 : index
    %3 = vector.load %arg2[%c0_3, %c0_4] : memref<1x32xf32, #tpu.memory_space<vmem>>, vector<1x32xf32>
    %c0_5 = arith.constant 0 : index
    %c0_6 = arith.constant 0 : index
    %4 = vector.load %arg3[%c0_5, %c0_6] : memref<1x32xf32, #tpu.memory_space<vmem>>, vector<1x32xf32>
    %cst_7 = arith.constant dense<0.000000e+00> : vector<32xf32>
    %5 = vector.multi_reduction <add>, %2, %cst_7 [0] : vector<512x32xf32> to vector<32xf32>
    %6 = vector.shape_cast %5 : vector<32xf32> to vector<1x32xf32>
    %cst_8 = arith.constant 5.120000e+02 : f32
    %7 = vector.broadcast %cst_8 : f32 to vector<1x32xf32>
    %8 = arith.divf %6, %7 : vector<1x32xf32>
    %9 = arith.mulf %2, %2 : vector<512x32xf32>
    %cst_9 = arith.constant dense<0.000000e+00> : vector<32xf32>
    %10 = vector.multi_reduction <add>, %9, %cst_9 [0] : vector<512x32xf32> to vector<32xf32>
    %11 = vector.shape_cast %10 : vector<32xf32> to vector<1x32xf32>
    %cst_10 = arith.constant 5.120000e+02 : f32
    %12 = vector.broadcast %cst_10 : f32 to vector<1x32xf32>
    %13 = arith.divf %11, %12 : vector<1x32xf32>
    %14 = arith.mulf %8, %8 : vector<1x32xf32>
    %15 = arith.subf %13, %14 : vector<1x32xf32>
    %cst_11 = arith.constant 0.000000e+00 : f32
    %16 = vector.broadcast %cst_11 : f32 to vector<1x32xf32>
    %17 = arith.maximumf %15, %16 : vector<1x32xf32>
    %cst_12 = arith.constant 9.99999974E-6 : f32
    %18 = vector.broadcast %cst_12 : f32 to vector<1x32xf32>
    %19 = arith.addf %17, %18 : vector<1x32xf32>
    %20 = math.rsqrt %19 : vector<1x32xf32>
    %21 = arith.mulf %3, %20 : vector<1x32xf32>
    %22 = arith.mulf %8, %21 : vector<1x32xf32>
    %23 = arith.subf %4, %22 : vector<1x32xf32>
    %24 = vector.broadcast %21 : vector<1x32xf32> to vector<512x32xf32>
    %25 = arith.mulf %2, %24 : vector<512x32xf32>
    %26 = vector.broadcast %23 : vector<1x32xf32> to vector<512x32xf32>
    %27 = arith.addf %25, %26 : vector<512x32xf32>
    %cst_13 = arith.constant 0.000000e+00 : f32
    %28 = vector.broadcast %cst_13 : f32 to vector<512x32xf32>
    %29 = arith.maximumf %27, %28 : vector<512x32xf32>
    %cst_14 = arith.constant 0.000000e+00 : f32
    %30 = vector.broadcast %cst_14 : f32 to vector<2x18x18x32xf32>
    %c0_15 = arith.constant 0 : index
    %c0_16 = arith.constant 0 : index
    %c0_17 = arith.constant 0 : index
    %c0_18 = arith.constant 0 : index
    %31 = vector.load %arg14[%c0_15, %c0_16, %c0_17, %c0_18] : memref<2x18x18x32xf32, #tpu.memory_space<vmem>>, vector<2x18x18x32xf32>
    tpu.vector_store %arg14[%c0_15, %c0_16, %c0_17, %c0_18], %30 {strides = array<i32>} : memref<2x18x18x32xf32, #tpu.memory_space<vmem>>, vector<2x18x18x32xf32>,
    %32 = vector.shape_cast %29 : vector<512x32xf32> to vector<2x16x16x32xf32>
    %c0_19 = arith.constant 0 : index
    %c1 = arith.constant 1 : index
    %c1_20 = arith.constant 1 : index
    %c0_21 = arith.constant 0 : index
    %33 = vector.load %arg14[%c0_19, %c1, %c1_20, %c0_21] : memref<2x18x18x32xf32, #tpu.memory_space<vmem>>, vector<2x16x16x32xf32>
    tpu.vector_store %arg14[%c0_19, %c1, %c1_20, %c0_21], %32 {strides = array<i32>} : memref<2x18x18x32xf32, #tpu.memory_space<vmem>>, vector<2x16x16x32xf32>,
    %cst_22 = arith.constant 0.000000e+00 : f32
    %34 = vector.broadcast %cst_22 : f32 to vector<512x32xf32>
    %c0_23 = arith.constant 0 : index
    %c0_24 = arith.constant 0 : index
    %c0_25 = arith.constant 0 : index
    %c0_26 = arith.constant 0 : index
    %35 = vector.load %arg14[%c0_23, %c0_24, %c0_25, %c0_26] : memref<2x18x18x32xf32, #tpu.memory_space<vmem>>, vector<2x16x16x32xf32>
    %36 = vector.shape_cast %35 : vector<2x16x16x32xf32> to vector<512x32xf32>
    %37 = arith.truncf %36 : vector<512x32xf32> to vector<512x32xbf16>
    %c0_27 = arith.constant 0 : index
    %c0_28 = arith.constant 0 : index
    %c0_29 = arith.constant 0 : index
    %38 = vector.load %arg4[%c0_27, %c0_28, %c0_29] : memref<9x32x32xbf16, #tpu.memory_space<vmem>>, vector<1x32x32xbf16>
    %39 = vector.shape_cast %38 : vector<1x32x32xbf16> to vector<32x32xbf16>
    %cst_30 = arith.constant dense<0.000000e+00> : vector<512x32xf32>
    %40 = tpu.matmul %37, %39, %cst_30 {dimension_numbers = #tpu.dot_dimension_numbers<[1], [0], [0], [1], [0, 0, 1, 1], [], []>} : vector<512x32xbf16>, vector<32x32xbf16>, vector<512x32xf32> -> vector<512x32xf32>
    %41 = arith.addf %34, %40 : vector<512x32xf32>
    %c0_31 = arith.constant 0 : index
    %c0_32 = arith.constant 0 : index
    %c1_33 = arith.constant 1 : index
    %c0_34 = arith.constant 0 : index
    %42 = vector.load %arg14[%c0_31, %c0_32, %c1_33, %c0_34] : memref<2x18x18x32xf32, #tpu.memory_space<vmem>>, vector<2x16x16x32xf32>
    %43 = vector.shape_cast %42 : vector<2x16x16x32xf32> to vector<512x32xf32>
    %44 = arith.truncf %43 : vector<512x32xf32> to vector<512x32xbf16>
    %c1_35 = arith.constant 1 : index
    %c0_36 = arith.constant 0 : index
    %c0_37 = arith.constant 0 : index
    %45 = vector.load %arg4[%c1_35, %c0_36, %c0_37] : memref<9x32x32xbf16, #tpu.memory_space<vmem>>, vector<1x32x32xbf16>
    %46 = vector.shape_cast %45 : vector<1x32x32xbf16> to vector<32x32xbf16>
    %cst_38 = arith.constant dense<0.000000e+00> : vector<512x32xf32>
    %47 = tpu.matmul %44, %46, %cst_38 {dimension_numbers = #tpu.dot_dimension_numbers<[1], [0], [0], [1], [0, 0, 1, 1], [], []>} : vector<512x32xbf16>, vector<32x32xbf16>, vector<512x32xf32> -> vector<512x32xf32>
    %48 = arith.addf %41, %47 : vector<512x32xf32>
    %c0_39 = arith.constant 0 : index
    %c0_40 = arith.constant 0 : index
    %c2 = arith.constant 2 : index
    %c0_41 = arith.constant 0 : index
    %49 = vector.load %arg14[%c0_39, %c0_40, %c2, %c0_41] : memref<2x18x18x32xf32, #tpu.memory_space<vmem>>, vector<2x16x16x32xf32>
    %50 = vector.shape_cast %49 : vector<2x16x16x32xf32> to vector<512x32xf32>
    %51 = arith.truncf %50 : vector<512x32xf32> to vector<512x32xbf16>
    %c2_42 = arith.constant 2 : index
    %c0_43 = arith.constant 0 : index
    %c0_44 = arith.constant 0 : index
    %52 = vector.load %arg4[%c2_42, %c0_43, %c0_44] : memref<9x32x32xbf16, #tpu.memory_space<vmem>>, vector<1x32x32xbf16>
    %53 = vector.shape_cast %52 : vector<1x32x32xbf16> to vector<32x32xbf16>
    %cst_45 = arith.constant dense<0.000000e+00> : vector<512x32xf32>
    %54 = tpu.matmul %51, %53, %cst_45 {dimension_numbers = #tpu.dot_dimension_numbers<[1], [0], [0], [1], [0, 0, 1, 1], [], []>} : vector<512x32xbf16>, vector<32x32xbf16>, vector<512x32xf32> -> vector<512x32xf32>
    %55 = arith.addf %48, %54 : vector<512x32xf32>
    %c0_46 = arith.constant 0 : index
    %c1_47 = arith.constant 1 : index
    %c0_48 = arith.constant 0 : index
    %c0_49 = arith.constant 0 : index
    %56 = vector.load %arg14[%c0_46, %c1_47, %c0_48, %c0_49] : memref<2x18x18x32xf32, #tpu.memory_space<vmem>>, vector<2x16x16x32xf32>
    %57 = vector.shape_cast %56 : vector<2x16x16x32xf32> to vector<512x32xf32>
    %58 = arith.truncf %57 : vector<512x32xf32> to vector<512x32xbf16>
    %c3 = arith.constant 3 : index
    %c0_50 = arith.constant 0 : index
    %c0_51 = arith.constant 0 : index
    %59 = vector.load %arg4[%c3, %c0_50, %c0_51] : memref<9x32x32xbf16, #tpu.memory_space<vmem>>, vector<1x32x32xbf16>
    %60 = vector.shape_cast %59 : vector<1x32x32xbf16> to vector<32x32xbf16>
    %cst_52 = arith.constant dense<0.000000e+00> : vector<512x32xf32>
    %61 = tpu.matmul %58, %60, %cst_52 {dimension_numbers = #tpu.dot_dimension_numbers<[1], [0], [0], [1], [0, 0, 1, 1], [], []>} : vector<512x32xbf16>, vector<32x32xbf16>, vector<512x32xf32> -> vector<512x32xf32>
    %62 = arith.addf %55, %61 : vector<512x32xf32>
    %c0_53 = arith.constant 0 : index
    %c1_54 = arith.constant 1 : index
    %c1_55 = arith.constant 1 : index
    %c0_56 = arith.constant 0 : index
    %63 = vector.load %arg14[%c0_53, %c1_54, %c1_55, %c0_56] : memref<2x18x18x32xf32, #tpu.memory_space<vmem>>, vector<2x16x16x32xf32>
    %64 = vector.shape_cast %63 : vector<2x16x16x32xf32> to vector<512x32xf32>
    %65 = arith.truncf %64 : vector<512x32xf32> to vector<512x32xbf16>
    %c4 = arith.constant 4 : index
    %c0_57 = arith.constant 0 : index
    %c0_58 = arith.constant 0 : index
    %66 = vector.load %arg4[%c4, %c0_57, %c0_58] : memref<9x32x32xbf16, #tpu.memory_space<vmem>>, vector<1x32x32xbf16>
    %67 = vector.shape_cast %66 : vector<1x32x32xbf16> to vector<32x32xbf16>
    %cst_59 = arith.constant dense<0.000000e+00> : vector<512x32xf32>
    %68 = tpu.matmul %65, %67, %cst_59 {dimension_numbers = #tpu.dot_dimension_numbers<[1], [0], [0], [1], [0, 0, 1, 1], [], []>} : vector<512x32xbf16>, vector<32x32xbf16>, vector<512x32xf32> -> vector<512x32xf32>
    %69 = arith.addf %62, %68 : vector<512x32xf32>
    %c0_60 = arith.constant 0 : index
    %c1_61 = arith.constant 1 : index
    %c2_62 = arith.constant 2 : index
    %c0_63 = arith.constant 0 : index
    %70 = vector.load %arg14[%c0_60, %c1_61, %c2_62, %c0_63] : memref<2x18x18x32xf32, #tpu.memory_space<vmem>>, vector<2x16x16x32xf32>
    %71 = vector.shape_cast %70 : vector<2x16x16x32xf32> to vector<512x32xf32>
    %72 = arith.truncf %71 : vector<512x32xf32> to vector<512x32xbf16>
    %c5 = arith.constant 5 : index
    %c0_64 = arith.constant 0 : index
    %c0_65 = arith.constant 0 : index
    %73 = vector.load %arg4[%c5, %c0_64, %c0_65] : memref<9x32x32xbf16, #tpu.memory_space<vmem>>, vector<1x32x32xbf16>
    %74 = vector.shape_cast %73 : vector<1x32x32xbf16> to vector<32x32xbf16>
    %cst_66 = arith.constant dense<0.000000e+00> : vector<512x32xf32>
    %75 = tpu.matmul %72, %74, %cst_66 {dimension_numbers = #tpu.dot_dimension_numbers<[1], [0], [0], [1], [0, 0, 1, 1], [], []>} : vector<512x32xbf16>, vector<32x32xbf16>, vector<512x32xf32> -> vector<512x32xf32>
    %76 = arith.addf %69, %75 : vector<512x32xf32>
    %c0_67 = arith.constant 0 : index
    %c2_68 = arith.constant 2 : index
    %c0_69 = arith.constant 0 : index
    %c0_70 = arith.constant 0 : index
    %77 = vector.load %arg14[%c0_67, %c2_68, %c0_69, %c0_70] : memref<2x18x18x32xf32, #tpu.memory_space<vmem>>, vector<2x16x16x32xf32>
    %78 = vector.shape_cast %77 : vector<2x16x16x32xf32> to vector<512x32xf32>
    %79 = arith.truncf %78 : vector<512x32xf32> to vector<512x32xbf16>
    %c6 = arith.constant 6 : index
    %c0_71 = arith.constant 0 : index
    %c0_72 = arith.constant 0 : index
    %80 = vector.load %arg4[%c6, %c0_71, %c0_72] : memref<9x32x32xbf16, #tpu.memory_space<vmem>>, vector<1x32x32xbf16>
    %81 = vector.shape_cast %80 : vector<1x32x32xbf16> to vector<32x32xbf16>
    %cst_73 = arith.constant dense<0.000000e+00> : vector<512x32xf32>
    %82 = tpu.matmul %79, %81, %cst_73 {dimension_numbers = #tpu.dot_dimension_numbers<[1], [0], [0], [1], [0, 0, 1, 1], [], []>} : vector<512x32xbf16>, vector<32x32xbf16>, vector<512x32xf32> -> vector<512x32xf32>
    %83 = arith.addf %76, %82 : vector<512x32xf32>
    %c0_74 = arith.constant 0 : index
    %c2_75 = arith.constant 2 : index
    %c1_76 = arith.constant 1 : index
    %c0_77 = arith.constant 0 : index
    %84 = vector.load %arg14[%c0_74, %c2_75, %c1_76, %c0_77] : memref<2x18x18x32xf32, #tpu.memory_space<vmem>>, vector<2x16x16x32xf32>
    %85 = vector.shape_cast %84 : vector<2x16x16x32xf32> to vector<512x32xf32>
    %86 = arith.truncf %85 : vector<512x32xf32> to vector<512x32xbf16>
    %c7 = arith.constant 7 : index
    %c0_78 = arith.constant 0 : index
    %c0_79 = arith.constant 0 : index
    %87 = vector.load %arg4[%c7, %c0_78, %c0_79] : memref<9x32x32xbf16, #tpu.memory_space<vmem>>, vector<1x32x32xbf16>
    %88 = vector.shape_cast %87 : vector<1x32x32xbf16> to vector<32x32xbf16>
    %cst_80 = arith.constant dense<0.000000e+00> : vector<512x32xf32>
    %89 = tpu.matmul %86, %88, %cst_80 {dimension_numbers = #tpu.dot_dimension_numbers<[1], [0], [0], [1], [0, 0, 1, 1], [], []>} : vector<512x32xbf16>, vector<32x32xbf16>, vector<512x32xf32> -> vector<512x32xf32>
    %90 = arith.addf %83, %89 : vector<512x32xf32>
    %c0_81 = arith.constant 0 : index
    %c2_82 = arith.constant 2 : index
    %c2_83 = arith.constant 2 : index
    %c0_84 = arith.constant 0 : index
    %91 = vector.load %arg14[%c0_81, %c2_82, %c2_83, %c0_84] : memref<2x18x18x32xf32, #tpu.memory_space<vmem>>, vector<2x16x16x32xf32>
    %92 = vector.shape_cast %91 : vector<2x16x16x32xf32> to vector<512x32xf32>
    %93 = arith.truncf %92 : vector<512x32xf32> to vector<512x32xbf16>
    %c8 = arith.constant 8 : index
    %c0_85 = arith.constant 0 : index
    %c0_86 = arith.constant 0 : index
    %94 = vector.load %arg4[%c8, %c0_85, %c0_86] : memref<9x32x32xbf16, #tpu.memory_space<vmem>>, vector<1x32x32xbf16>
    %95 = vector.shape_cast %94 : vector<1x32x32xbf16> to vector<32x32xbf16>
    %cst_87 = arith.constant dense<0.000000e+00> : vector<512x32xf32>
    %96 = tpu.matmul %93, %95, %cst_87 {dimension_numbers = #tpu.dot_dimension_numbers<[1], [0], [0], [1], [0, 0, 1, 1], [], []>} : vector<512x32xbf16>, vector<32x32xbf16>, vector<512x32xf32> -> vector<512x32xf32>
    %97 = arith.addf %90, %96 : vector<512x32xf32>
    %c0_88 = arith.constant 0 : index
    %c0_89 = arith.constant 0 : index
    %98 = vector.load %arg5[%c0_88, %c0_89] : memref<1x32xf32, #tpu.memory_space<vmem>>, vector<1x32xf32>
    %c0_90 = arith.constant 0 : index
    %c0_91 = arith.constant 0 : index
    %99 = vector.load %arg6[%c0_90, %c0_91] : memref<1x32xf32, #tpu.memory_space<vmem>>, vector<1x32xf32>
    %cst_92 = arith.constant dense<0.000000e+00> : vector<32xf32>
    %100 = vector.multi_reduction <add>, %97, %cst_92 [0] : vector<512x32xf32> to vector<32xf32>
    %101 = vector.shape_cast %100 : vector<32xf32> to vector<1x32xf32>
    %cst_93 = arith.constant 5.120000e+02 : f32
    %102 = vector.broadcast %cst_93 : f32 to vector<1x32xf32>
    %103 = arith.divf %101, %102 : vector<1x32xf32>
    %104 = arith.mulf %97, %97 : vector<512x32xf32>
    %cst_94 = arith.constant dense<0.000000e+00> : vector<32xf32>
    %105 = vector.multi_reduction <add>, %104, %cst_94 [0] : vector<512x32xf32> to vector<32xf32>
    %106 = vector.shape_cast %105 : vector<32xf32> to vector<1x32xf32>
    %cst_95 = arith.constant 5.120000e+02 : f32
    %107 = vector.broadcast %cst_95 : f32 to vector<1x32xf32>
    %108 = arith.divf %106, %107 : vector<1x32xf32>
    %109 = arith.mulf %103, %103 : vector<1x32xf32>
    %110 = arith.subf %108, %109 : vector<1x32xf32>
    %cst_96 = arith.constant 0.000000e+00 : f32
    %111 = vector.broadcast %cst_96 : f32 to vector<1x32xf32>
    %112 = arith.maximumf %110, %111 : vector<1x32xf32>
    %cst_97 = arith.constant 9.99999974E-6 : f32
    %113 = vector.broadcast %cst_97 : f32 to vector<1x32xf32>
    %114 = arith.addf %112, %113 : vector<1x32xf32>
    %115 = math.rsqrt %114 : vector<1x32xf32>
    %116 = arith.mulf %98, %115 : vector<1x32xf32>
    %117 = arith.mulf %103, %116 : vector<1x32xf32>
    %118 = arith.subf %99, %117 : vector<1x32xf32>
    %119 = vector.broadcast %116 : vector<1x32xf32> to vector<512x32xf32>
    %120 = arith.mulf %97, %119 : vector<512x32xf32>
    %121 = vector.broadcast %118 : vector<1x32xf32> to vector<512x32xf32>
    %122 = arith.addf %120, %121 : vector<512x32xf32>
    %cst_98 = arith.constant 0.000000e+00 : f32
    %123 = vector.broadcast %cst_98 : f32 to vector<512x32xf32>
    %124 = arith.maximumf %122, %123 : vector<512x32xf32>
    %125 = vector.shape_cast %124 : vector<512x32xf32> to vector<2x8x2x16x32xf32>
    %126 = vector.extract_strided_slice %125 {offsets = [0, 0, 0, 0, 0], sizes = [2, 8, 1, 16, 32], strides = [1, 1, 1, 1, 1]} : vector<2x8x2x16x32xf32> to vector<2x8x1x16x32xf32>
    %127 = vector.shape_cast %126 : vector<2x8x1x16x32xf32> to vector<2x8x16x32xf32>
    %128 = vector.extract_strided_slice %125 {offsets = [0, 0, 1, 0, 0], sizes = [2, 8, 1, 16, 32], strides = [1, 1, 1, 1, 1]} : vector<2x8x2x16x32xf32> to vector<2x8x1x16x32xf32>
    %129 = vector.shape_cast %128 : vector<2x8x1x16x32xf32> to vector<2x8x16x32xf32>
    %130 = arith.maximumf %127, %129 : vector<2x8x16x32xf32>
    %131 = vector.shape_cast %130 : vector<2x8x16x32xf32> to vector<256x32xf32>
    %c0_99 = arith.constant 0 : index
    %c0_100 = arith.constant 0 : index
    %132 = vector.load %arg17[%c0_99, %c0_100] : memref<256x32xf32, #tpu.memory_space<vmem>>, vector<256x32xf32>
    tpu.vector_store %arg17[%c0_99, %c0_100], %131 {strides = array<i32>} : memref<256x32xf32, #tpu.memory_space<vmem>>, vector<256x32xf32>,
    %c0_101 = arith.constant 0 : index
    %c0_102 = arith.constant 0 : index
    %133 = tpu.strided_load %arg17[%c0_101, %c0_102] {strides = array<i32: 2, 1>} : memref<256x32xf32, #tpu.memory_space<vmem>>, vector<128x32xf32>
    %c1_103 = arith.constant 1 : index
    %c0_104 = arith.constant 0 : index
    %134 = tpu.strided_load %arg17[%c1_103, %c0_104] {strides = array<i32: 2, 1>} : memref<256x32xf32, #tpu.memory_space<vmem>>, vector<128x32xf32>
    %135 = arith.maximumf %133, %134 : vector<128x32xf32>
    %cst_105 = arith.constant 0.000000e+00 : f32
    %136 = vector.broadcast %cst_105 : f32 to vector<2x10x10x32xf32>
    %c0_106 = arith.constant 0 : index
    %c0_107 = arith.constant 0 : index
    %c0_108 = arith.constant 0 : index
    %c0_109 = arith.constant 0 : index
    %137 = vector.load %arg15[%c0_106, %c0_107, %c0_108, %c0_109] : memref<2x10x10x32xf32, #tpu.memory_space<vmem>>, vector<2x10x10x32xf32>
    tpu.vector_store %arg15[%c0_106, %c0_107, %c0_108, %c0_109], %136 {strides = array<i32>} : memref<2x10x10x32xf32, #tpu.memory_space<vmem>>, vector<2x10x10x32xf32>,
    %138 = vector.shape_cast %135 : vector<128x32xf32> to vector<2x8x8x32xf32>
    %c0_110 = arith.constant 0 : index
    %c1_111 = arith.constant 1 : index
    %c1_112 = arith.constant 1 : index
    %c0_113 = arith.constant 0 : index
    %139 = vector.load %arg15[%c0_110, %c1_111, %c1_112, %c0_113] : memref<2x10x10x32xf32, #tpu.memory_space<vmem>>, vector<2x8x8x32xf32>
    tpu.vector_store %arg15[%c0_110, %c1_111, %c1_112, %c0_113], %138 {strides = array<i32>} : memref<2x10x10x32xf32, #tpu.memory_space<vmem>>, vector<2x8x8x32xf32>,
    %cst_114 = arith.constant 0.000000e+00 : f32
    %140 = vector.broadcast %cst_114 : f32 to vector<128x64xf32>
    %c0_115 = arith.constant 0 : index
    %c0_116 = arith.constant 0 : index
    %c0_117 = arith.constant 0 : index
    %c0_118 = arith.constant 0 : index
    %141 = vector.load %arg15[%c0_115, %c0_116, %c0_117, %c0_118] : memref<2x10x10x32xf32, #tpu.memory_space<vmem>>, vector<2x8x8x32xf32>
    %142 = vector.shape_cast %141 : vector<2x8x8x32xf32> to vector<128x32xf32>
    %143 = arith.truncf %142 : vector<128x32xf32> to vector<128x32xbf16>
    %c0_119 = arith.constant 0 : index
    %c0_120 = arith.constant 0 : index
    %c0_121 = arith.constant 0 : index
    %144 = vector.load %arg7[%c0_119, %c0_120, %c0_121] : memref<9x32x64xbf16, #tpu.memory_space<vmem>>, vector<1x32x64xbf16>
    %145 = vector.shape_cast %144 : vector<1x32x64xbf16> to vector<32x64xbf16>
    %cst_122 = arith.constant dense<0.000000e+00> : vector<128x64xf32>
    %146 = tpu.matmul %143, %145, %cst_122 {dimension_numbers = #tpu.dot_dimension_numbers<[1], [0], [0], [1], [0, 0, 1, 1], [], []>} : vector<128x32xbf16>, vector<32x64xbf16>, vector<128x64xf32> -> vector<128x64xf32>
    %147 = arith.addf %140, %146 : vector<128x64xf32>
    %c0_123 = arith.constant 0 : index
    %c0_124 = arith.constant 0 : index
    %c1_125 = arith.constant 1 : index
    %c0_126 = arith.constant 0 : index
    %148 = vector.load %arg15[%c0_123, %c0_124, %c1_125, %c0_126] : memref<2x10x10x32xf32, #tpu.memory_space<vmem>>, vector<2x8x8x32xf32>
    %149 = vector.shape_cast %148 : vector<2x8x8x32xf32> to vector<128x32xf32>
    %150 = arith.truncf %149 : vector<128x32xf32> to vector<128x32xbf16>
    %c1_127 = arith.constant 1 : index
    %c0_128 = arith.constant 0 : index
    %c0_129 = arith.constant 0 : index
    %151 = vector.load %arg7[%c1_127, %c0_128, %c0_129] : memref<9x32x64xbf16, #tpu.memory_space<vmem>>, vector<1x32x64xbf16>
    %152 = vector.shape_cast %151 : vector<1x32x64xbf16> to vector<32x64xbf16>
    %cst_130 = arith.constant dense<0.000000e+00> : vector<128x64xf32>
    %153 = tpu.matmul %150, %152, %cst_130 {dimension_numbers = #tpu.dot_dimension_numbers<[1], [0], [0], [1], [0, 0, 1, 1], [], []>} : vector<128x32xbf16>, vector<32x64xbf16>, vector<128x64xf32> -> vector<128x64xf32>
    %154 = arith.addf %147, %153 : vector<128x64xf32>
    %c0_131 = arith.constant 0 : index
    %c0_132 = arith.constant 0 : index
    %c2_133 = arith.constant 2 : index
    %c0_134 = arith.constant 0 : index
    %155 = vector.load %arg15[%c0_131, %c0_132, %c2_133, %c0_134] : memref<2x10x10x32xf32, #tpu.memory_space<vmem>>, vector<2x8x8x32xf32>
    %156 = vector.shape_cast %155 : vector<2x8x8x32xf32> to vector<128x32xf32>
    %157 = arith.truncf %156 : vector<128x32xf32> to vector<128x32xbf16>
    %c2_135 = arith.constant 2 : index
    %c0_136 = arith.constant 0 : index
    %c0_137 = arith.constant 0 : index
    %158 = vector.load %arg7[%c2_135, %c0_136, %c0_137] : memref<9x32x64xbf16, #tpu.memory_space<vmem>>, vector<1x32x64xbf16>
    %159 = vector.shape_cast %158 : vector<1x32x64xbf16> to vector<32x64xbf16>
    %cst_138 = arith.constant dense<0.000000e+00> : vector<128x64xf32>
    %160 = tpu.matmul %157, %159, %cst_138 {dimension_numbers = #tpu.dot_dimension_numbers<[1], [0], [0], [1], [0, 0, 1, 1], [], []>} : vector<128x32xbf16>, vector<32x64xbf16>, vector<128x64xf32> -> vector<128x64xf32>
    %161 = arith.addf %154, %160 : vector<128x64xf32>
    %c0_139 = arith.constant 0 : index
    %c1_140 = arith.constant 1 : index
    %c0_141 = arith.constant 0 : index
    %c0_142 = arith.constant 0 : index
    %162 = vector.load %arg15[%c0_139, %c1_140, %c0_141, %c0_142] : memref<2x10x10x32xf32, #tpu.memory_space<vmem>>, vector<2x8x8x32xf32>
    %163 = vector.shape_cast %162 : vector<2x8x8x32xf32> to vector<128x32xf32>
    %164 = arith.truncf %163 : vector<128x32xf32> to vector<128x32xbf16>
    %c3_143 = arith.constant 3 : index
    %c0_144 = arith.constant 0 : index
    %c0_145 = arith.constant 0 : index
    %165 = vector.load %arg7[%c3_143, %c0_144, %c0_145] : memref<9x32x64xbf16, #tpu.memory_space<vmem>>, vector<1x32x64xbf16>
    %166 = vector.shape_cast %165 : vector<1x32x64xbf16> to vector<32x64xbf16>
    %cst_146 = arith.constant dense<0.000000e+00> : vector<128x64xf32>
    %167 = tpu.matmul %164, %166, %cst_146 {dimension_numbers = #tpu.dot_dimension_numbers<[1], [0], [0], [1], [0, 0, 1, 1], [], []>} : vector<128x32xbf16>, vector<32x64xbf16>, vector<128x64xf32> -> vector<128x64xf32>
    %168 = arith.addf %161, %167 : vector<128x64xf32>
    %c0_147 = arith.constant 0 : index
    %c1_148 = arith.constant 1 : index
    %c1_149 = arith.constant 1 : index
    %c0_150 = arith.constant 0 : index
    %169 = vector.load %arg15[%c0_147, %c1_148, %c1_149, %c0_150] : memref<2x10x10x32xf32, #tpu.memory_space<vmem>>, vector<2x8x8x32xf32>
    %170 = vector.shape_cast %169 : vector<2x8x8x32xf32> to vector<128x32xf32>
    %171 = arith.truncf %170 : vector<128x32xf32> to vector<128x32xbf16>
    %c4_151 = arith.constant 4 : index
    %c0_152 = arith.constant 0 : index
    %c0_153 = arith.constant 0 : index
    %172 = vector.load %arg7[%c4_151, %c0_152, %c0_153] : memref<9x32x64xbf16, #tpu.memory_space<vmem>>, vector<1x32x64xbf16>
    %173 = vector.shape_cast %172 : vector<1x32x64xbf16> to vector<32x64xbf16>
    %cst_154 = arith.constant dense<0.000000e+00> : vector<128x64xf32>
    %174 = tpu.matmul %171, %173, %cst_154 {dimension_numbers = #tpu.dot_dimension_numbers<[1], [0], [0], [1], [0, 0, 1, 1], [], []>} : vector<128x32xbf16>, vector<32x64xbf16>, vector<128x64xf32> -> vector<128x64xf32>
    %175 = arith.addf %168, %174 : vector<128x64xf32>
    %c0_155 = arith.constant 0 : index
    %c1_156 = arith.constant 1 : index
    %c2_157 = arith.constant 2 : index
    %c0_158 = arith.constant 0 : index
    %176 = vector.load %arg15[%c0_155, %c1_156, %c2_157, %c0_158] : memref<2x10x10x32xf32, #tpu.memory_space<vmem>>, vector<2x8x8x32xf32>
    %177 = vector.shape_cast %176 : vector<2x8x8x32xf32> to vector<128x32xf32>
    %178 = arith.truncf %177 : vector<128x32xf32> to vector<128x32xbf16>
    %c5_159 = arith.constant 5 : index
    %c0_160 = arith.constant 0 : index
    %c0_161 = arith.constant 0 : index
    %179 = vector.load %arg7[%c5_159, %c0_160, %c0_161] : memref<9x32x64xbf16, #tpu.memory_space<vmem>>, vector<1x32x64xbf16>
    %180 = vector.shape_cast %179 : vector<1x32x64xbf16> to vector<32x64xbf16>
    %cst_162 = arith.constant dense<0.000000e+00> : vector<128x64xf32>
    %181 = tpu.matmul %178, %180, %cst_162 {dimension_numbers = #tpu.dot_dimension_numbers<[1], [0], [0], [1], [0, 0, 1, 1], [], []>} : vector<128x32xbf16>, vector<32x64xbf16>, vector<128x64xf32> -> vector<128x64xf32>
    %182 = arith.addf %175, %181 : vector<128x64xf32>
    %c0_163 = arith.constant 0 : index
    %c2_164 = arith.constant 2 : index
    %c0_165 = arith.constant 0 : index
    %c0_166 = arith.constant 0 : index
    %183 = vector.load %arg15[%c0_163, %c2_164, %c0_165, %c0_166] : memref<2x10x10x32xf32, #tpu.memory_space<vmem>>, vector<2x8x8x32xf32>
    %184 = vector.shape_cast %183 : vector<2x8x8x32xf32> to vector<128x32xf32>
    %185 = arith.truncf %184 : vector<128x32xf32> to vector<128x32xbf16>
    %c6_167 = arith.constant 6 : index
    %c0_168 = arith.constant 0 : index
    %c0_169 = arith.constant 0 : index
    %186 = vector.load %arg7[%c6_167, %c0_168, %c0_169] : memref<9x32x64xbf16, #tpu.memory_space<vmem>>, vector<1x32x64xbf16>
    %187 = vector.shape_cast %186 : vector<1x32x64xbf16> to vector<32x64xbf16>
    %cst_170 = arith.constant dense<0.000000e+00> : vector<128x64xf32>
    %188 = tpu.matmul %185, %187, %cst_170 {dimension_numbers = #tpu.dot_dimension_numbers<[1], [0], [0], [1], [0, 0, 1, 1], [], []>} : vector<128x32xbf16>, vector<32x64xbf16>, vector<128x64xf32> -> vector<128x64xf32>
    %189 = arith.addf %182, %188 : vector<128x64xf32>
    %c0_171 = arith.constant 0 : index
    %c2_172 = arith.constant 2 : index
    %c1_173 = arith.constant 1 : index
    %c0_174 = arith.constant 0 : index
    %190 = vector.load %arg15[%c0_171, %c2_172, %c1_173, %c0_174] : memref<2x10x10x32xf32, #tpu.memory_space<vmem>>, vector<2x8x8x32xf32>
    %191 = vector.shape_cast %190 : vector<2x8x8x32xf32> to vector<128x32xf32>
    %192 = arith.truncf %191 : vector<128x32xf32> to vector<128x32xbf16>
    %c7_175 = arith.constant 7 : index
    %c0_176 = arith.constant 0 : index
    %c0_177 = arith.constant 0 : index
    %193 = vector.load %arg7[%c7_175, %c0_176, %c0_177] : memref<9x32x64xbf16, #tpu.memory_space<vmem>>, vector<1x32x64xbf16>
    %194 = vector.shape_cast %193 : vector<1x32x64xbf16> to vector<32x64xbf16>
    %cst_178 = arith.constant dense<0.000000e+00> : vector<128x64xf32>
    %195 = tpu.matmul %192, %194, %cst_178 {dimension_numbers = #tpu.dot_dimension_numbers<[1], [0], [0], [1], [0, 0, 1, 1], [], []>} : vector<128x32xbf16>, vector<32x64xbf16>, vector<128x64xf32> -> vector<128x64xf32>
    %196 = arith.addf %189, %195 : vector<128x64xf32>
    %c0_179 = arith.constant 0 : index
    %c2_180 = arith.constant 2 : index
    %c2_181 = arith.constant 2 : index
    %c0_182 = arith.constant 0 : index
    %197 = vector.load %arg15[%c0_179, %c2_180, %c2_181, %c0_182] : memref<2x10x10x32xf32, #tpu.memory_space<vmem>>, vector<2x8x8x32xf32>
    %198 = vector.shape_cast %197 : vector<2x8x8x32xf32> to vector<128x32xf32>
    %199 = arith.truncf %198 : vector<128x32xf32> to vector<128x32xbf16>
    %c8_183 = arith.constant 8 : index
    %c0_184 = arith.constant 0 : index
    %c0_185 = arith.constant 0 : index
    %200 = vector.load %arg7[%c8_183, %c0_184, %c0_185] : memref<9x32x64xbf16, #tpu.memory_space<vmem>>, vector<1x32x64xbf16>
    %201 = vector.shape_cast %200 : vector<1x32x64xbf16> to vector<32x64xbf16>
    %cst_186 = arith.constant dense<0.000000e+00> : vector<128x64xf32>
    %202 = tpu.matmul %199, %201, %cst_186 {dimension_numbers = #tpu.dot_dimension_numbers<[1], [0], [0], [1], [0, 0, 1, 1], [], []>} : vector<128x32xbf16>, vector<32x64xbf16>, vector<128x64xf32> -> vector<128x64xf32>
    %203 = arith.addf %196, %202 : vector<128x64xf32>
    %c0_187 = arith.constant 0 : index
    %c0_188 = arith.constant 0 : index
    %204 = vector.load %arg8[%c0_187, %c0_188] : memref<1x64xf32, #tpu.memory_space<vmem>>, vector<1x64xf32>
    %c0_189 = arith.constant 0 : index
    %c0_190 = arith.constant 0 : index
    %205 = vector.load %arg9[%c0_189, %c0_190] : memref<1x64xf32, #tpu.memory_space<vmem>>, vector<1x64xf32>
    %cst_191 = arith.constant dense<0.000000e+00> : vector<64xf32>
    %206 = vector.multi_reduction <add>, %203, %cst_191 [0] : vector<128x64xf32> to vector<64xf32>
    %207 = vector.shape_cast %206 : vector<64xf32> to vector<1x64xf32>
    %cst_192 = arith.constant 1.280000e+02 : f32
    %208 = vector.broadcast %cst_192 : f32 to vector<1x64xf32>
    %209 = arith.divf %207, %208 : vector<1x64xf32>
    %210 = arith.mulf %203, %203 : vector<128x64xf32>
    %cst_193 = arith.constant dense<0.000000e+00> : vector<64xf32>
    %211 = vector.multi_reduction <add>, %210, %cst_193 [0] : vector<128x64xf32> to vector<64xf32>
    %212 = vector.shape_cast %211 : vector<64xf32> to vector<1x64xf32>
    %cst_194 = arith.constant 1.280000e+02 : f32
    %213 = vector.broadcast %cst_194 : f32 to vector<1x64xf32>
    %214 = arith.divf %212, %213 : vector<1x64xf32>
    %215 = arith.mulf %209, %209 : vector<1x64xf32>
    %216 = arith.subf %214, %215 : vector<1x64xf32>
    %cst_195 = arith.constant 0.000000e+00 : f32
    %217 = vector.broadcast %cst_195 : f32 to vector<1x64xf32>
    %218 = arith.maximumf %216, %217 : vector<1x64xf32>
    %cst_196 = arith.constant 9.99999974E-6 : f32
    %219 = vector.broadcast %cst_196 : f32 to vector<1x64xf32>
    %220 = arith.addf %218, %219 : vector<1x64xf32>
    %221 = math.rsqrt %220 : vector<1x64xf32>
    %222 = arith.mulf %204, %221 : vector<1x64xf32>
    %223 = arith.mulf %209, %222 : vector<1x64xf32>
    %224 = arith.subf %205, %223 : vector<1x64xf32>
    %225 = vector.broadcast %222 : vector<1x64xf32> to vector<128x64xf32>
    %226 = arith.mulf %203, %225 : vector<128x64xf32>
    %227 = vector.broadcast %224 : vector<1x64xf32> to vector<128x64xf32>
    %228 = arith.addf %226, %227 : vector<128x64xf32>
    %cst_197 = arith.constant 0.000000e+00 : f32
    %229 = vector.broadcast %cst_197 : f32 to vector<128x64xf32>
    %230 = arith.maximumf %228, %229 : vector<128x64xf32>
    %231 = vector.shape_cast %230 : vector<128x64xf32> to vector<2x4x2x8x64xf32>
    %232 = vector.extract_strided_slice %231 {offsets = [0, 0, 0, 0, 0], sizes = [2, 4, 1, 8, 64], strides = [1, 1, 1, 1, 1]} : vector<2x4x2x8x64xf32> to vector<2x4x1x8x64xf32>
    %233 = vector.shape_cast %232 : vector<2x4x1x8x64xf32> to vector<2x4x8x64xf32>
    %234 = vector.extract_strided_slice %231 {offsets = [0, 0, 1, 0, 0], sizes = [2, 4, 1, 8, 64], strides = [1, 1, 1, 1, 1]} : vector<2x4x2x8x64xf32> to vector<2x4x1x8x64xf32>
    %235 = vector.shape_cast %234 : vector<2x4x1x8x64xf32> to vector<2x4x8x64xf32>
    %236 = arith.maximumf %233, %235 : vector<2x4x8x64xf32>
    %237 = vector.shape_cast %236 : vector<2x4x8x64xf32> to vector<64x64xf32>
    %c0_198 = arith.constant 0 : index
    %c0_199 = arith.constant 0 : index
    %238 = vector.load %arg18[%c0_198, %c0_199] : memref<64x64xf32, #tpu.memory_space<vmem>>, vector<64x64xf32>
    tpu.vector_store %arg18[%c0_198, %c0_199], %237 {strides = array<i32>} : memref<64x64xf32, #tpu.memory_space<vmem>>, vector<64x64xf32>,
    %c0_200 = arith.constant 0 : index
    %c0_201 = arith.constant 0 : index
    %239 = tpu.strided_load %arg18[%c0_200, %c0_201] {strides = array<i32: 2, 1>} : memref<64x64xf32, #tpu.memory_space<vmem>>, vector<32x64xf32>
    %c1_202 = arith.constant 1 : index
    %c0_203 = arith.constant 0 : index
    %240 = tpu.strided_load %arg18[%c1_202, %c0_203] {strides = array<i32: 2, 1>} : memref<64x64xf32, #tpu.memory_space<vmem>>, vector<32x64xf32>
    %241 = arith.maximumf %239, %240 : vector<32x64xf32>
    %cst_204 = arith.constant 0.000000e+00 : f32
    %242 = vector.broadcast %cst_204 : f32 to vector<2x6x6x64xf32>
    %c0_205 = arith.constant 0 : index
    %c0_206 = arith.constant 0 : index
    %c0_207 = arith.constant 0 : index
    %c0_208 = arith.constant 0 : index
    %243 = vector.load %arg16[%c0_205, %c0_206, %c0_207, %c0_208] : memref<2x6x6x64xf32, #tpu.memory_space<vmem>>, vector<2x6x6x64xf32>
    tpu.vector_store %arg16[%c0_205, %c0_206, %c0_207, %c0_208], %242 {strides = array<i32>} : memref<2x6x6x64xf32, #tpu.memory_space<vmem>>, vector<2x6x6x64xf32>,
    %244 = vector.shape_cast %241 : vector<32x64xf32> to vector<2x4x4x64xf32>
    %c0_209 = arith.constant 0 : index
    %c1_210 = arith.constant 1 : index
    %c1_211 = arith.constant 1 : index
    %c0_212 = arith.constant 0 : index
    %245 = vector.load %arg16[%c0_209, %c1_210, %c1_211, %c0_212] : memref<2x6x6x64xf32, #tpu.memory_space<vmem>>, vector<2x4x4x64xf32>
    tpu.vector_store %arg16[%c0_209, %c1_210, %c1_211, %c0_212], %244 {strides = array<i32>} : memref<2x6x6x64xf32, #tpu.memory_space<vmem>>, vector<2x4x4x64xf32>,
    %cst_213 = arith.constant 0.000000e+00 : f32
    %246 = vector.broadcast %cst_213 : f32 to vector<32x64xf32>
    %c0_214 = arith.constant 0 : index
    %c0_215 = arith.constant 0 : index
    %c0_216 = arith.constant 0 : index
    %c0_217 = arith.constant 0 : index
    %247 = vector.load %arg16[%c0_214, %c0_215, %c0_216, %c0_217] : memref<2x6x6x64xf32, #tpu.memory_space<vmem>>, vector<2x4x4x64xf32>
    %248 = vector.shape_cast %247 : vector<2x4x4x64xf32> to vector<32x64xf32>
    %249 = arith.truncf %248 : vector<32x64xf32> to vector<32x64xbf16>
    %c0_218 = arith.constant 0 : index
    %c0_219 = arith.constant 0 : index
    %c0_220 = arith.constant 0 : index
    %250 = vector.load %arg10[%c0_218, %c0_219, %c0_220] : memref<9x64x64xbf16, #tpu.memory_space<vmem>>, vector<1x64x64xbf16>
    %251 = vector.shape_cast %250 : vector<1x64x64xbf16> to vector<64x64xbf16>
    %cst_221 = arith.constant dense<0.000000e+00> : vector<32x64xf32>
    %252 = tpu.matmul %249, %251, %cst_221 {dimension_numbers = #tpu.dot_dimension_numbers<[1], [0], [0], [1], [0, 0, 1, 1], [], []>} : vector<32x64xbf16>, vector<64x64xbf16>, vector<32x64xf32> -> vector<32x64xf32>
    %253 = arith.addf %246, %252 : vector<32x64xf32>
    %c0_222 = arith.constant 0 : index
    %c0_223 = arith.constant 0 : index
    %c1_224 = arith.constant 1 : index
    %c0_225 = arith.constant 0 : index
    %254 = vector.load %arg16[%c0_222, %c0_223, %c1_224, %c0_225] : memref<2x6x6x64xf32, #tpu.memory_space<vmem>>, vector<2x4x4x64xf32>
    %255 = vector.shape_cast %254 : vector<2x4x4x64xf32> to vector<32x64xf32>
    %256 = arith.truncf %255 : vector<32x64xf32> to vector<32x64xbf16>
    %c1_226 = arith.constant 1 : index
    %c0_227 = arith.constant 0 : index
    %c0_228 = arith.constant 0 : index
    %257 = vector.load %arg10[%c1_226, %c0_227, %c0_228] : memref<9x64x64xbf16, #tpu.memory_space<vmem>>, vector<1x64x64xbf16>
    %258 = vector.shape_cast %257 : vector<1x64x64xbf16> to vector<64x64xbf16>
    %cst_229 = arith.constant dense<0.000000e+00> : vector<32x64xf32>
    %259 = tpu.matmul %256, %258, %cst_229 {dimension_numbers = #tpu.dot_dimension_numbers<[1], [0], [0], [1], [0, 0, 1, 1], [], []>} : vector<32x64xbf16>, vector<64x64xbf16>, vector<32x64xf32> -> vector<32x64xf32>
    %260 = arith.addf %253, %259 : vector<32x64xf32>
    %c0_230 = arith.constant 0 : index
    %c0_231 = arith.constant 0 : index
    %c2_232 = arith.constant 2 : index
    %c0_233 = arith.constant 0 : index
    %261 = vector.load %arg16[%c0_230, %c0_231, %c2_232, %c0_233] : memref<2x6x6x64xf32, #tpu.memory_space<vmem>>, vector<2x4x4x64xf32>
    %262 = vector.shape_cast %261 : vector<2x4x4x64xf32> to vector<32x64xf32>
    %263 = arith.truncf %262 : vector<32x64xf32> to vector<32x64xbf16>
    %c2_234 = arith.constant 2 : index
    %c0_235 = arith.constant 0 : index
    %c0_236 = arith.constant 0 : index
    %264 = vector.load %arg10[%c2_234, %c0_235, %c0_236] : memref<9x64x64xbf16, #tpu.memory_space<vmem>>, vector<1x64x64xbf16>
    %265 = vector.shape_cast %264 : vector<1x64x64xbf16> to vector<64x64xbf16>
    %cst_237 = arith.constant dense<0.000000e+00> : vector<32x64xf32>
    %266 = tpu.matmul %263, %265, %cst_237 {dimension_numbers = #tpu.dot_dimension_numbers<[1], [0], [0], [1], [0, 0, 1, 1], [], []>} : vector<32x64xbf16>, vector<64x64xbf16>, vector<32x64xf32> -> vector<32x64xf32>
    %267 = arith.addf %260, %266 : vector<32x64xf32>
    %c0_238 = arith.constant 0 : index
    %c1_239 = arith.constant 1 : index
    %c0_240 = arith.constant 0 : index
    %c0_241 = arith.constant 0 : index
    %268 = vector.load %arg16[%c0_238, %c1_239, %c0_240, %c0_241] : memref<2x6x6x64xf32, #tpu.memory_space<vmem>>, vector<2x4x4x64xf32>
    %269 = vector.shape_cast %268 : vector<2x4x4x64xf32> to vector<32x64xf32>
    %270 = arith.truncf %269 : vector<32x64xf32> to vector<32x64xbf16>
    %c3_242 = arith.constant 3 : index
    %c0_243 = arith.constant 0 : index
    %c0_244 = arith.constant 0 : index
    %271 = vector.load %arg10[%c3_242, %c0_243, %c0_244] : memref<9x64x64xbf16, #tpu.memory_space<vmem>>, vector<1x64x64xbf16>
    %272 = vector.shape_cast %271 : vector<1x64x64xbf16> to vector<64x64xbf16>
    %cst_245 = arith.constant dense<0.000000e+00> : vector<32x64xf32>
    %273 = tpu.matmul %270, %272, %cst_245 {dimension_numbers = #tpu.dot_dimension_numbers<[1], [0], [0], [1], [0, 0, 1, 1], [], []>} : vector<32x64xbf16>, vector<64x64xbf16>, vector<32x64xf32> -> vector<32x64xf32>
    %274 = arith.addf %267, %273 : vector<32x64xf32>
    %c0_246 = arith.constant 0 : index
    %c1_247 = arith.constant 1 : index
    %c1_248 = arith.constant 1 : index
    %c0_249 = arith.constant 0 : index
    %275 = vector.load %arg16[%c0_246, %c1_247, %c1_248, %c0_249] : memref<2x6x6x64xf32, #tpu.memory_space<vmem>>, vector<2x4x4x64xf32>
    %276 = vector.shape_cast %275 : vector<2x4x4x64xf32> to vector<32x64xf32>
    %277 = arith.truncf %276 : vector<32x64xf32> to vector<32x64xbf16>
    %c4_250 = arith.constant 4 : index
    %c0_251 = arith.constant 0 : index
    %c0_252 = arith.constant 0 : index
    %278 = vector.load %arg10[%c4_250, %c0_251, %c0_252] : memref<9x64x64xbf16, #tpu.memory_space<vmem>>, vector<1x64x64xbf16>
    %279 = vector.shape_cast %278 : vector<1x64x64xbf16> to vector<64x64xbf16>
    %cst_253 = arith.constant dense<0.000000e+00> : vector<32x64xf32>
    %280 = tpu.matmul %277, %279, %cst_253 {dimension_numbers = #tpu.dot_dimension_numbers<[1], [0], [0], [1], [0, 0, 1, 1], [], []>} : vector<32x64xbf16>, vector<64x64xbf16>, vector<32x64xf32> -> vector<32x64xf32>
    %281 = arith.addf %274, %280 : vector<32x64xf32>
    %c0_254 = arith.constant 0 : index
    %c1_255 = arith.constant 1 : index
    %c2_256 = arith.constant 2 : index
    %c0_257 = arith.constant 0 : index
    %282 = vector.load %arg16[%c0_254, %c1_255, %c2_256, %c0_257] : memref<2x6x6x64xf32, #tpu.memory_space<vmem>>, vector<2x4x4x64xf32>
    %283 = vector.shape_cast %282 : vector<2x4x4x64xf32> to vector<32x64xf32>
    %284 = arith.truncf %283 : vector<32x64xf32> to vector<32x64xbf16>
    %c5_258 = arith.constant 5 : index
    %c0_259 = arith.constant 0 : index
    %c0_260 = arith.constant 0 : index
    %285 = vector.load %arg10[%c5_258, %c0_259, %c0_260] : memref<9x64x64xbf16, #tpu.memory_space<vmem>>, vector<1x64x64xbf16>
    %286 = vector.shape_cast %285 : vector<1x64x64xbf16> to vector<64x64xbf16>
    %cst_261 = arith.constant dense<0.000000e+00> : vector<32x64xf32>
    %287 = tpu.matmul %284, %286, %cst_261 {dimension_numbers = #tpu.dot_dimension_numbers<[1], [0], [0], [1], [0, 0, 1, 1], [], []>} : vector<32x64xbf16>, vector<64x64xbf16>, vector<32x64xf32> -> vector<32x64xf32>
    %288 = arith.addf %281, %287 : vector<32x64xf32>
    %c0_262 = arith.constant 0 : index
    %c2_263 = arith.constant 2 : index
    %c0_264 = arith.constant 0 : index
    %c0_265 = arith.constant 0 : index
    %289 = vector.load %arg16[%c0_262, %c2_263, %c0_264, %c0_265] : memref<2x6x6x64xf32, #tpu.memory_space<vmem>>, vector<2x4x4x64xf32>
    %290 = vector.shape_cast %289 : vector<2x4x4x64xf32> to vector<32x64xf32>
    %291 = arith.truncf %290 : vector<32x64xf32> to vector<32x64xbf16>
    %c6_266 = arith.constant 6 : index
    %c0_267 = arith.constant 0 : index
    %c0_268 = arith.constant 0 : index
    %292 = vector.load %arg10[%c6_266, %c0_267, %c0_268] : memref<9x64x64xbf16, #tpu.memory_space<vmem>>, vector<1x64x64xbf16>
    %293 = vector.shape_cast %292 : vector<1x64x64xbf16> to vector<64x64xbf16>
    %cst_269 = arith.constant dense<0.000000e+00> : vector<32x64xf32>
    %294 = tpu.matmul %291, %293, %cst_269 {dimension_numbers = #tpu.dot_dimension_numbers<[1], [0], [0], [1], [0, 0, 1, 1], [], []>} : vector<32x64xbf16>, vector<64x64xbf16>, vector<32x64xf32> -> vector<32x64xf32>
    %295 = arith.addf %288, %294 : vector<32x64xf32>
    %c0_270 = arith.constant 0 : index
    %c2_271 = arith.constant 2 : index
    %c1_272 = arith.constant 1 : index
    %c0_273 = arith.constant 0 : index
    %296 = vector.load %arg16[%c0_270, %c2_271, %c1_272, %c0_273] : memref<2x6x6x64xf32, #tpu.memory_space<vmem>>, vector<2x4x4x64xf32>
    %297 = vector.shape_cast %296 : vector<2x4x4x64xf32> to vector<32x64xf32>
    %298 = arith.truncf %297 : vector<32x64xf32> to vector<32x64xbf16>
    %c7_274 = arith.constant 7 : index
    %c0_275 = arith.constant 0 : index
    %c0_276 = arith.constant 0 : index
    %299 = vector.load %arg10[%c7_274, %c0_275, %c0_276] : memref<9x64x64xbf16, #tpu.memory_space<vmem>>, vector<1x64x64xbf16>
    %300 = vector.shape_cast %299 : vector<1x64x64xbf16> to vector<64x64xbf16>
    %cst_277 = arith.constant dense<0.000000e+00> : vector<32x64xf32>
    %301 = tpu.matmul %298, %300, %cst_277 {dimension_numbers = #tpu.dot_dimension_numbers<[1], [0], [0], [1], [0, 0, 1, 1], [], []>} : vector<32x64xbf16>, vector<64x64xbf16>, vector<32x64xf32> -> vector<32x64xf32>
    %302 = arith.addf %295, %301 : vector<32x64xf32>
    %c0_278 = arith.constant 0 : index
    %c2_279 = arith.constant 2 : index
    %c2_280 = arith.constant 2 : index
    %c0_281 = arith.constant 0 : index
    %303 = vector.load %arg16[%c0_278, %c2_279, %c2_280, %c0_281] : memref<2x6x6x64xf32, #tpu.memory_space<vmem>>, vector<2x4x4x64xf32>
    %304 = vector.shape_cast %303 : vector<2x4x4x64xf32> to vector<32x64xf32>
    %305 = arith.truncf %304 : vector<32x64xf32> to vector<32x64xbf16>
    %c8_282 = arith.constant 8 : index
    %c0_283 = arith.constant 0 : index
    %c0_284 = arith.constant 0 : index
    %306 = vector.load %arg10[%c8_282, %c0_283, %c0_284] : memref<9x64x64xbf16, #tpu.memory_space<vmem>>, vector<1x64x64xbf16>
    %307 = vector.shape_cast %306 : vector<1x64x64xbf16> to vector<64x64xbf16>
    %cst_285 = arith.constant dense<0.000000e+00> : vector<32x64xf32>
    %308 = tpu.matmul %305, %307, %cst_285 {dimension_numbers = #tpu.dot_dimension_numbers<[1], [0], [0], [1], [0, 0, 1, 1], [], []>} : vector<32x64xbf16>, vector<64x64xbf16>, vector<32x64xf32> -> vector<32x64xf32>
    %309 = arith.addf %302, %308 : vector<32x64xf32>
    %c0_286 = arith.constant 0 : index
    %c0_287 = arith.constant 0 : index
    %310 = vector.load %arg11[%c0_286, %c0_287] : memref<1x64xf32, #tpu.memory_space<vmem>>, vector<1x64xf32>
    %c0_288 = arith.constant 0 : index
    %c0_289 = arith.constant 0 : index
    %311 = vector.load %arg12[%c0_288, %c0_289] : memref<1x64xf32, #tpu.memory_space<vmem>>, vector<1x64xf32>
    %cst_290 = arith.constant dense<0.000000e+00> : vector<64xf32>
    %312 = vector.multi_reduction <add>, %309, %cst_290 [0] : vector<32x64xf32> to vector<64xf32>
    %313 = vector.shape_cast %312 : vector<64xf32> to vector<1x64xf32>
    %cst_291 = arith.constant 3.200000e+01 : f32
    %314 = vector.broadcast %cst_291 : f32 to vector<1x64xf32>
    %315 = arith.divf %313, %314 : vector<1x64xf32>
    %316 = arith.mulf %309, %309 : vector<32x64xf32>
    %cst_292 = arith.constant dense<0.000000e+00> : vector<64xf32>
    %317 = vector.multi_reduction <add>, %316, %cst_292 [0] : vector<32x64xf32> to vector<64xf32>
    %318 = vector.shape_cast %317 : vector<64xf32> to vector<1x64xf32>
    %cst_293 = arith.constant 3.200000e+01 : f32
    %319 = vector.broadcast %cst_293 : f32 to vector<1x64xf32>
    %320 = arith.divf %318, %319 : vector<1x64xf32>
    %321 = arith.mulf %315, %315 : vector<1x64xf32>
    %322 = arith.subf %320, %321 : vector<1x64xf32>
    %cst_294 = arith.constant 0.000000e+00 : f32
    %323 = vector.broadcast %cst_294 : f32 to vector<1x64xf32>
    %324 = arith.maximumf %322, %323 : vector<1x64xf32>
    %cst_295 = arith.constant 9.99999974E-6 : f32
    %325 = vector.broadcast %cst_295 : f32 to vector<1x64xf32>
    %326 = arith.addf %324, %325 : vector<1x64xf32>
    %327 = math.rsqrt %326 : vector<1x64xf32>
    %328 = arith.mulf %310, %327 : vector<1x64xf32>
    %329 = arith.mulf %315, %328 : vector<1x64xf32>
    %330 = arith.subf %311, %329 : vector<1x64xf32>
    %331 = vector.broadcast %328 : vector<1x64xf32> to vector<32x64xf32>
    %332 = arith.mulf %309, %331 : vector<32x64xf32>
    %333 = vector.broadcast %330 : vector<1x64xf32> to vector<32x64xf32>
    %334 = arith.addf %332, %333 : vector<32x64xf32>
    %cst_296 = arith.constant 0.000000e+00 : f32
    %335 = vector.broadcast %cst_296 : f32 to vector<32x64xf32>
    %336 = arith.maximumf %334, %335 : vector<32x64xf32>
    %c0_297 = arith.constant 0 : index
    %c0_298 = arith.constant 0 : index
    %337 = vector.load %arg13[%c0_297, %c0_298] : memref<32x64xf32, #tpu.memory_space<vmem>>, vector<32x64xf32>
    tpu.vector_store %arg13[%c0_297, %c0_298], %336 {strides = array<i32>} : memref<32x64xf32, #tpu.memory_space<vmem>>, vector<32x64xf32>,
    return
  }
}

</mosaic_0001>

<llo_original>
// kernel: feature_extractor.1
$region0: #{feature_extractor.1}
  #allocation0 [shape = 'u32[]', space=smem, size = 0x4, offset = 0x4, fixed_abs, tag = 'smem constant byte address 0x4 - core index']
  #allocation1 [shape = 'u32[144,128]{1,0:T(1,128)}', space=vmem, size = 0x12000, scoped, tag = 'internal scratch']
  #allocation2 [shape = 'f32[2,18,18,32]{3,2,1,0:T(8,128)}', space=vmem, size = 0x6c000, scoped, tag = 'scratch operand']
  #allocation3 [shape = 'f32[2,10,10,32]{3,2,1,0:T(8,128)}', space=vmem, size = 0x28000, scoped, tag = 'scratch operand']
  #allocation4 [shape = 'f32[2,6,6,64]{3,2,1,0:T(8,128)}', space=vmem, size = 0xc000, scoped, tag = 'scratch operand']
  #allocation5 [shape = 'f32[256,32]{1,0:T(8,128)}', space=vmem, size = 0x20000, scoped, tag = 'scratch operand']
  #allocation6 [shape = 'f32[64,64]{1,0:T(8,128)}', space=vmem, size = 0x8000, scoped, tag = 'scratch operand']
  %s0 = inlined_call_operand.vmem [shape: bf16[512,9], index: 0, kind: input, shape index: {}]
  %s1 = inlined_call_operand.vmem [shape: bf16[9,32], index: 1, kind: input, shape index: {}]
  %s2 = inlined_call_operand.vmem [shape: f32[1,32], index: 2, kind: input, shape index: {}]
  %s3 = inlined_call_operand.vmem [shape: f32[1,32], index: 3, kind: input, shape index: {}]
  %s4 = inlined_call_operand.vmem [shape: bf16[9,32,32], index: 4, kind: input, shape index: {}]
  %s5 = inlined_call_operand.vmem [shape: f32[1,32], index: 5, kind: input, shape index: {}]
  %s6 = inlined_call_operand.vmem [shape: f32[1,32], index: 6, kind: input, shape index: {}]
  %s7 = inlined_call_operand.vmem [shape: bf16[9,32,64], index: 7, kind: input, shape index: {}]
  %s8 = inlined_call_operand.vmem [shape: f32[1,64], index: 8, kind: input, shape index: {}]
  %s9 = inlined_call_operand.vmem [shape: f32[1,64], index: 9, kind: input, shape index: {}]
  %s10 = inlined_call_operand.vmem [shape: bf16[9,64,64], index: 10, kind: input, shape index: {}]
  %s11 = inlined_call_operand.vmem [shape: f32[1,64], index: 11, kind: input, shape index: {}]
  %s12 = inlined_call_operand.vmem [shape: f32[1,64], index: 12, kind: input, shape index: {}]
  %s13 = inlined_call_operand.vmem [shape: f32[32,64], index: 13, kind: output, shape index: {}]
  %s14 = sld [smem:[#allocation0]]
  $region62: #{feature_extractor.1} parent=0
    _
  %s16 = ssub.s32 1, %s14
  %s17 = scalar_select 0, %s16, %s14
  // Predicated region
  $region2: #{feature_extractor.1} parent=0 // pred_check
    _
  $region3: #{feature_extractor.1} parent=0 // pred_check_branch
    %19 = sbr.rel (0) target = $region5
  $region4: #{feature_extractor.1} parent=0 // pred_region
    _
  $region5: #{feature_extractor.1} parent=0 // pred_fallthru
    _
  // Predicated region
  $region6: #{feature_extractor.1} parent=0 // pred_check
    _
  $region7: #{feature_extractor.1} parent=0 // pred_check_branch
    %21 = sbr.rel (0) target = $region9
  $region8: #{feature_extractor.1} parent=0 // pred_region
    _
  $region9: #{feature_extractor.1} parent=0 // pred_fallthru
    _
  // Predicated region
  $region10: #{feature_extractor.1} parent=0 // pred_check
    _
  $region11: #{feature_extractor.1} parent=0 // pred_check_branch
    %23 = sbr.rel (0) target = $region13
  $region12: #{feature_extractor.1} parent=0 // pred_region
    _
  $region13: #{feature_extractor.1} parent=0 // pred_fallthru
    _
  // Predicated region
  $region14: #{feature_extractor.1} parent=0 // pred_check
    _
  $region15: #{feature_extractor.1} parent=0 // pred_check_branch
    %25 = sbr.rel (0) target = $region17
  $region16: #{feature_extractor.1} parent=0 // pred_region
    _
  $region17: #{feature_extractor.1} parent=0 // pred_fallthru
    _
  // Predicated region
  $region18: #{feature_extractor.1} parent=0 // pred_check
    _
  $region19: #{feature_extractor.1} parent=0 // pred_check_branch
    %27 = sbr.rel (0) target = $region21
  $region20: #{feature_extractor.1} parent=0 // pred_region
    _
  $region21: #{feature_extractor.1} parent=0 // pred_fallthru
    _
  // Predicated region
  $region22: #{feature_extractor.1} parent=0 // pred_check
    _
  $region23: #{feature_extractor.1} parent=0 // pred_check_branch
    %29 = sbr.rel (0) target = $region25
  $region24: #{feature_extractor.1} parent=0 // pred_region
    _
  $region25: #{feature_extractor.1} parent=0 // pred_fallthru
    _
  // Predicated region
  $region26: #{feature_extractor.1} parent=0 // pred_check
    _
  $region27: #{feature_extractor.1} parent=0 // pred_check_branch
    %31 = sbr.rel (0) target = $region29
  $region28: #{feature_extractor.1} parent=0 // pred_region
    _
  $region29: #{feature_extractor.1} parent=0 // pred_fallthru
    _
  // Predicated region
  $region30: #{feature_extractor.1} parent=0 // pred_check
    _
  $region31: #{feature_extractor.1} parent=0 // pred_check_branch
    %33 = sbr.rel (0) target = $region33
  $region32: #{feature_extractor.1} parent=0 // pred_region
    _
  $region33: #{feature_extractor.1} parent=0 // pred_fallthru
    _
  // Predicated region
  $region34: #{feature_extractor.1} parent=0 // pred_check
    _
  $region35: #{feature_extractor.1} parent=0 // pred_check_branch
    %35 = sbr.rel (0) target = $region37
  $region36: #{feature_extractor.1} parent=0 // pred_region
    _
  $region37: #{feature_extractor.1} parent=0 // pred_fallthru
    _
  // Predicated region
  $region38: #{feature_extractor.1} parent=0 // pred_check
    _
  $region39: #{feature_extractor.1} parent=0 // pred_check_branch
    %37 = sbr.rel (0) target = $region41
  $region40: #{feature_extractor.1} parent=0 // pred_region
    _
  $region41: #{feature_extractor.1} parent=0 // pred_fallthru
    _
  // Predicated region
  $region42: #{feature_extractor.1} parent=0 // pred_check
    _
  $region43: #{feature_extractor.1} parent=0 // pred_check_branch
    %39 = sbr.rel (0) target = $region45
  $region44: #{feature_extractor.1} parent=0 // pred_region
    _
  $region45: #{feature_extractor.1} parent=0 // pred_fallthru
    _
  // Predicated region
  $region46: #{feature_extractor.1} parent=0 // pred_check
    _
  $region47: #{feature_extractor.1} parent=0 // pred_check_branch
    %41 = sbr.rel (0) target = $region49
  $region48: #{feature_extractor.1} parent=0 // pred_region
    _
  $region49: #{feature_extractor.1} parent=0 // pred_fallthru
    _
  // Predicated region
  $region50: #{feature_extractor.1} parent=0 // pred_check
    _
  $region51: #{feature_extractor.1} parent=0 // pred_check_branch
    %43 = sbr.rel (0) target = $region53
  $region52: #{feature_extractor.1} parent=0 // pred_region
    _
  $region53: #{feature_extractor.1} parent=0 // pred_fallthru
    _
  %v45 = vld [vmem:[%s0] sm:$0xf]
  %v46 = vld [vmem:[%s0 + $0x4] sm:$0xf]
  %v47 = vld [vmem:[%s0 + $0x8] sm:$0xf]
  %v48 = vld [vmem:[%s0 + $0xc] sm:$0xf]
  %v49 = vld [vmem:[%s0 + $0x10] sm:$0xf]
  %v50 = vld [vmem:[%s0 + $0x14] sm:$0xf]
  %v51 = vld [vmem:[%s0 + $0x18] sm:$0xf]
  %v52 = vld [vmem:[%s0 + $0x1c] sm:$0xf]
  %v53 = vld [vmem:[%s0 + $0x20] sm:$0xf]
  %v54 = vld [vmem:[%s0 + $0x24] sm:$0xf]
  %v55 = vld [vmem:[%s0 + $0x28] sm:$0xf]
  %v56 = vld [vmem:[%s0 + $0x2c] sm:$0xf]
  %v57 = vld [vmem:[%s0 + $0x30] sm:$0xf]
  %v58 = vld [vmem:[%s0 + $0x34] sm:$0xf]
  %v59 = vld [vmem:[%s0 + $0x38] sm:$0xf]
  %v60 = vld [vmem:[%s0 + $0x3c] sm:$0xf]
  %v61 = vld [vmem:[%s0 + $0x40] sm:$0xf]
  %v62 = vld [vmem:[%s0 + $0x44] sm:$0xf]
  %v63 = vld [vmem:[%s0 + $0x48] sm:$0xf]
  %v64 = vld [vmem:[%s0 + $0x4c] sm:$0xf]
  %v65 = vld [vmem:[%s0 + $0x50] sm:$0xf]
  %v66 = vld [vmem:[%s0 + $0x54] sm:$0xf]
  %v67 = vld [vmem:[%s0 + $0x58] sm:$0xf]
  %v68 = vld [vmem:[%s0 + $0x5c] sm:$0xf]
  %v69 = vld [vmem:[%s0 + $0x60] sm:$0xf]
  %v70 = vld [vmem:[%s0 + $0x64] sm:$0xf]
  %v71 = vld [vmem:[%s0 + $0x68] sm:$0xf]
  %v72 = vld [vmem:[%s0 + $0x6c] sm:$0xf]
  %v73 = vld [vmem:[%s0 + $0x70] sm:$0xf]
  %v74 = vld [vmem:[%s0 + $0x74] sm:$0xf]
  %v75 = vld [vmem:[%s0 + $0x78] sm:$0xf]
  %v76 = vld [vmem:[%s0 + $0x7c] sm:$0xf]
  %v77 = vld [vmem:[%s0 + $0x80] sm:$0xf]
  %v78 = vld [vmem:[%s0 + $0x84] sm:$0xf]
  %v79 = vld [vmem:[%s0 + $0x88] sm:$0xf]
  %v80 = vld [vmem:[%s0 + $0x8c] sm:$0xf]
  %v81 = vld [vmem:[%s0 + $0x90] sm:$0xf]
  %v82 = vld [vmem:[%s0 + $0x94] sm:$0xf]
  %v83 = vld [vmem:[%s0 + $0x98] sm:$0xf]
  %v84 = vld [vmem:[%s0 + $0x9c] sm:$0xf]
  %v85 = vld [vmem:[%s0 + $0xa0] sm:$0xf]
  %v86 = vld [vmem:[%s0 + $0xa4] sm:$0xf]
  %v87 = vld [vmem:[%s0 + $0xa8] sm:$0xf]
  %v88 = vld [vmem:[%s0 + $0xac] sm:$0xf]
  %v89 = vld [vmem:[%s0 + $0xb0] sm:$0xf]
  %v90 = vld [vmem:[%s0 + $0xb4] sm:$0xf]
  %v91 = vld [vmem:[%s0 + $0xb8] sm:$0xf]
  %v92 = vld [vmem:[%s0 + $0xbc] sm:$0xf]
  %v93 = vld [vmem:[%s0 + $0xc0] sm:$0xf]
  %v94 = vld [vmem:[%s0 + $0xc4] sm:$0xf]
  %v95 = vld [vmem:[%s0 + $0xc8] sm:$0xf]
  %v96 = vld [vmem:[%s0 + $0xcc] sm:$0xf]
  %v97 = vld [vmem:[%s0 + $0xd0] sm:$0xf]
  %v98 = vld [vmem:[%s0 + $0xd4] sm:$0xf]
  %v99 = vld [vmem:[%s0 + $0xd8] sm:$0xf]
  %v100 = vld [vmem:[%s0 + $0xdc] sm:$0xf]
  %v101 = vld [vmem:[%s0 + $0xe0] sm:$0xf]
  %v102 = vld [vmem:[%s0 + $0xe4] sm:$0xf]
  %v103 = vld [vmem:[%s0 + $0xe8] sm:$0xf]
  %v104 = vld [vmem:[%s0 + $0xec] sm:$0xf]
  %v105 = vld [vmem:[%s0 + $0xf0] sm:$0xf]
  %v106 = vld [vmem:[%s0 + $0xf4] sm:$0xf]
  %v107 = vld [vmem:[%s0 + $0xf8] sm:$0xf]
  %v108 = vld [vmem:[%s0 + $0xfc] sm:$0xf]
  %v109 = vld [vmem:[%s1] sm:$0xf]
  %v110 = vld [vmem:[%s1 + $0x4] sm:$0x1]
  %v175 = vunpack.c.l.b16 %v45
  %v176 = vunpack.c.l.b16 %v46
  %v177 = vunpack.c.l.b16 %v47
  %v178 = vunpack.c.l.b16 %v48
  %v179 = vunpack.c.l.b16 %v49
  %v180 = vunpack.c.l.b16 %v50
  %v181 = vunpack.c.l.b16 %v51
  %v182 = vunpack.c.l.b16 %v52
  %v183 = vunpack.c.l.b16 %v53
  %v184 = vunpack.c.l.b16 %v54
  %v185 = vunpack.c.l.b16 %v55
  %v186 = vunpack.c.l.b16 %v56
  %v187 = vunpack.c.l.b16 %v57
  %v188 = vunpack.c.l.b16 %v58
  %v189 = vunpack.c.l.b16 %v59
  %v190 = vunpack.c.l.b16 %v60
  %v191 = vunpack.c.l.b16 %v61
  %v192 = vunpack.c.l.b16 %v62
  %v193 = vunpack.c.l.b16 %v63
  %v194 = vunpack.c.l.b16 %v64
  %v195 = vunpack.c.l.b16 %v65
  %v196 = vunpack.c.l.b16 %v66
  %v197 = vunpack.c.l.b16 %v67
  %v198 = vunpack.c.l.b16 %v68
  %v199 = vunpack.c.l.b16 %v69
  %v200 = vunpack.c.l.b16 %v70
  %v201 = vunpack.c.l.b16 %v71
  %v202 = vunpack.c.l.b16 %v72
  %v203 = vunpack.c.l.b16 %v73
  %v204 = vunpack.c.l.b16 %v74
  %v205 = vunpack.c.l.b16 %v75
  %v206 = vunpack.c.l.b16 %v76
  %v207 = vunpack.c.l.b16 %v77
  %v208 = vunpack.c.l.b16 %v78
  %v209 = vunpack.c.l.b16 %v79
  %v210 = vunpack.c.l.b16 %v80
  %v211 = vunpack.c.l.b16 %v81
  %v212 = vunpack.c.l.b16 %v82
  %v213 = vunpack.c.l.b16 %v83
  %v214 = vunpack.c.l.b16 %v84
  %v215 = vunpack.c.l.b16 %v85
  %v216 = vunpack.c.l.b16 %v86
  %v217 = vunpack.c.l.b16 %v87
  %v218 = vunpack.c.l.b16 %v88
  %v219 = vunpack.c.l.b16 %v89
  %v220 = vunpack.c.l.b16 %v90
  %v221 = vunpack.c.l.b16 %v91
  %v222 = vunpack.c.l.b16 %v92
  %v223 = vunpack.c.l.b16 %v93
  %v224 = vunpack.c.l.b16 %v94
  %v225 = vunpack.c.l.b16 %v95
  %v226 = vunpack.c.l.b16 %v96
  %v227 = vunpack.c.l.b16 %v97
  %v228 = vunpack.c.l.b16 %v98
  %v229 = vunpack.c.l.b16 %v99
  %v230 = vunpack.c.l.b16 %v100
  %v231 = vunpack.c.l.b16 %v101
  %v232 = vunpack.c.l.b16 %v102
  %v233 = vunpack.c.l.b16 %v103
  %v234 = vunpack.c.l.b16 %v104
  %v235 = vunpack.c.l.b16 %v105
  %v236 = vunpack.c.l.b16 %v106
  %v237 = vunpack.c.l.b16 %v107
  %v238 = vunpack.c.l.b16 %v108
  %v239 = vpack.c.b16 %v176, %v175
  %v240 = vpack.c.b16 %v178, %v177
  %v241 = vpack.c.b16 %v180, %v179
  %v242 = vpack.c.b16 %v182, %v181
  %v243 = vpack.c.b16 %v184, %v183
  %v244 = vpack.c.b16 %v186, %v185
  %v245 = vpack.c.b16 %v188, %v187
  %v246 = vpack.c.b16 %v190, %v189
  %v247 = vpack.c.b16 %v192, %v191
  %v248 = vpack.c.b16 %v194, %v193
  %v249 = vpack.c.b16 %v196, %v195
  %v250 = vpack.c.b16 %v198, %v197
  %v251 = vpack.c.b16 %v200, %v199
  %v252 = vpack.c.b16 %v202, %v201
  %v253 = vpack.c.b16 %v204, %v203
  %v254 = vpack.c.b16 %v206, %v205
  %v255 = vpack.c.b16 %v208, %v207
  %v256 = vpack.c.b16 %v210, %v209
  %v257 = vpack.c.b16 %v212, %v211
  %v258 = vpack.c.b16 %v214, %v213
  %v259 = vpack.c.b16 %v216, %v215
  %v260 = vpack.c.b16 %v218, %v217
  %v261 = vpack.c.b16 %v220, %v219
  %v262 = vpack.c.b16 %v222, %v221
  %v263 = vpack.c.b16 %v224, %v223
  %v264 = vpack.c.b16 %v226, %v225
  %v265 = vpack.c.b16 %v228, %v227
  %v266 = vpack.c.b16 %v230, %v229
  %v267 = vpack.c.b16 %v232, %v231
  %v268 = vpack.c.b16 %v234, %v233
  %v269 = vpack.c.b16 %v236, %v235
  %v270 = vpack.c.b16 %v238, %v237
  %v273 = vunpack.c.l.b16 %v109
  %v274 = vunpack.c.l.b16 %v110
  %v275 = vpack.c.b16 %v274, %v273
  %vm276 = vcmask 72704
  %v278 = vsel %vm276, %v239, 0
  %v281 = vsel %vm276, %v240, 0
  %v284 = vsel %vm276, %v241, 0
  %v287 = vsel %vm276, %v242, 0
  %v290 = vsel %vm276, %v243, 0
  %v293 = vsel %vm276, %v244, 0
  %v296 = vsel %vm276, %v245, 0
  %v299 = vsel %vm276, %v246, 0
  %v302 = vsel %vm276, %v247, 0
  %v305 = vsel %vm276, %v248, 0
  %v308 = vsel %vm276, %v249, 0
  %v311 = vsel %vm276, %v250, 0
  %v314 = vsel %vm276, %v251, 0
  %v317 = vsel %vm276, %v252, 0
  %v320 = vsel %vm276, %v253, 0
  %v323 = vsel %vm276, %v254, 0
  %v326 = vsel %vm276, %v255, 0
  %v329 = vsel %vm276, %v256, 0
  %v332 = vsel %vm276, %v257, 0
  %v335 = vsel %vm276, %v258, 0
  %v338 = vsel %vm276, %v259, 0
  %v341 = vsel %vm276, %v260, 0
  %v344 = vsel %vm276, %v261, 0
  %v347 = vsel %vm276, %v262, 0
  %v350 = vsel %vm276, %v263, 0
  %v353 = vsel %vm276, %v264, 0
  %v356 = vsel %vm276, %v265, 0
  %v359 = vsel %vm276, %v266, 0
  %v362 = vsel %vm276, %v267, 0
  %v365 = vsel %vm276, %v268, 0
  %v368 = vsel %vm276, %v269, 0
  %v371 = vsel %vm276, %v270, 0
  %vm373 = vcmask 1043456
  %vm374 = vcmask 1044480
  %v375 = vsel %vm373, 4294967295, 65535
  %v376 = vsel %vm374, %v375, 0
  %v378 = vand.u32 %v275, %v376
  %380 = vmatprep.subr.bf16.mxu0 0
  %381 = vmatpush1.bf16.msra.mxu0 0
  %382 = vmatprep.subr.bf16.mxu0 0
  %383 = vmatpush1.bf16.msra.mxu0 0
  %384 = vmatprep.subr.bf16.mxu0 0
  %385 = vmatpush1.bf16.msra.mxu0 0
  %386 = vmatprep.subr.bf16.mxu0 0
  %387 = vmatpush1.bf16.msra.mxu0 0
  %388 = vmatprep.subr.bf16.mxu0 0
  %389 = vmatpush1.bf16.msra.mxu0 0
  %390 = vmatprep.subr.bf16.mxu0 0
  %391 = vmatpush1.bf16.msra.mxu0 0
  %392 = vmatprep.subr.bf16.mxu0 0
  %393 = vmatpush1.bf16.msra.mxu0 0
  %394 = vmatprep.subr.bf16.mxu0 0
  %395 = vmatpush1.bf16.msra.mxu0 %v378
  %396 = vmatprep.subr.bf16.mxu0 0
  %397 = vmatpush2.bf16.msra.mxu0 0
  %398 = vmatprep.subr.bf16.mxu0 0
  %399 = vmatpush2.bf16.msra.mxu0 0
  %400 = vmatprep.subr.bf16.mxu0 0
  %401 = vmatpush2.bf16.msra.mxu0 0
  %402 = vmatprep.subr.bf16.mxu0 0
  %403 = vmatpush2.bf16.msra.mxu0 0
  %404 = vmatprep.subr.bf16.mxu0 0
  %405 = vmatpush2.bf16.msra.mxu0 0
  %406 = vmatprep.subr.bf16.mxu0 0
  %407 = vmatpush2.bf16.msra.mxu0 0
  %408 = vmatprep.subr.bf16.mxu0 0
  %409 = vmatpush2.bf16.msra.mxu0 0
  %410 = vmatprep.subr.bf16.mxu0 0
  %411 = vmatpush2.bf16.msra.mxu0 0
  %412 = vmatprep.mubr.bf16.mxu0 0
  %413 = vmatmul.mubr.bf16.gmra.mxu0 %v278
  %v414 = vpop.f32.mrf.mxu0
  %v415 = vadd.f32 0.0, %v414
  %v416 = vpop.f32.mrf.mxu0
  %v417 = vpop.f32.mrf.mxu0
  %v418 = vadd.f32 0.0, %v417
  %v419 = vpop.f32.mrf.mxu0
  %420 = vmatprep.mubr.bf16.mxu0 0
  %421 = vmatmul.mubr.bf16.gmra.mxu0 %v281
  %v422 = vpop.f32.mrf.mxu0
  %v423 = vadd.f32 0.0, %v422
  %v424 = vpop.f32.mrf.mxu0
  %v425 = vpop.f32.mrf.mxu0
  %v426 = vadd.f32 0.0, %v425
  %v427 = vpop.f32.mrf.mxu0
  %428 = vmatprep.mubr.bf16.mxu0 0
  %429 = vmatmul.mubr.bf16.gmra.mxu0 %v284
  %v430 = vpop.f32.mrf.mxu0
  %v431 = vadd.f32 0.0, %v430
  %v432 = vpop.f32.mrf.mxu0
  %v433 = vpop.f32.mrf.mxu0
  %v434 = vadd.f32 0.0, %v433
  %v435 = vpop.f32.mrf.mxu0
  %436 = vmatprep.mubr.bf16.mxu0 0
  %437 = vmatmul.mubr.bf16.gmra.mxu0 %v287
  %v438 = vpop.f32.mrf.mxu0
  %v439 = vadd.f32 0.0, %v438
  %v440 = vpop.f32.mrf.mxu0
  %v441 = vpop.f32.mrf.mxu0
  %v442 = vadd.f32 0.0, %v441
  %v443 = vpop.f32.mrf.mxu0
  %444 = vmatprep.mubr.bf16.mxu0 0
  %445 = vmatmul.mubr.bf16.gmra.mxu0 %v290
  %v446 = vpop.f32.mrf.mxu0
  %v447 = vadd.f32 0.0, %v446
  %v448 = vpop.f32.mrf.mxu0
  %v449 = vpop.f32.mrf.mxu0
  %v450 = vadd.f32 0.0, %v449
  %v451 = vpop.f32.mrf.mxu0
  %452 = vmatprep.mubr.bf16.mxu0 0
  %453 = vmatmul.mubr.bf16.gmra.mxu0 %v293
  %v454 = vpop.f32.mrf.mxu0
  %v455 = vadd.f32 0.0, %v454
  %v456 = vpop.f32.mrf.mxu0
  %v457 = vpop.f32.mrf.mxu0
  %v458 = vadd.f32 0.0, %v457
  %v459 = vpop.f32.mrf.mxu0
  %460 = vmatprep.mubr.bf16.mxu0 0
  %461 = vmatmul.mubr.bf16.gmra.mxu0 %v296
  %v462 = vpop.f32.mrf.mxu0
  %v463 = vadd.f32 0.0, %v462
  %v464 = vpop.f32.mrf.mxu0
  %v465 = vpop.f32.mrf.mxu0
  %v466 = vadd.f32 0.0, %v465
  %v467 = vpop.f32.mrf.mxu0
  %468 = vmatprep.mubr.bf16.mxu0 0
  %469 = vmatmul.mubr.bf16.gmra.mxu0 %v299
  %v470 = vpop.f32.mrf.mxu0
  %v471 = vadd.f32 0.0, %v470
  %v472 = vpop.f32.mrf.mxu0
  %v473 = vpop.f32.mrf.mxu0
  %v474 = vadd.f32 0.0, %v473
  %v475 = vpop.f32.mrf.mxu0
  %476 = vmatprep.mubr.bf16.mxu0 0
  %477 = vmatmul.mubr.bf16.gmra.mxu0 %v302
  %v478 = vpop.f32.mrf.mxu0
  %v479 = vadd.f32 0.0, %v478
  %v480 = vpop.f32.mrf.mxu0
  %v481 = vpop.f32.mrf.mxu0
  %v482 = vadd.f32 0.0, %v481
  %v483 = vpop.f32.mrf.mxu0
  %484 = vmatprep.mubr.bf16.mxu0 0
  %485 = vmatmul.mubr.bf16.gmra.mxu0 %v305
  %v486 = vpop.f32.mrf.mxu0
  %v487 = vadd.f32 0.0, %v486
  %v488 = vpop.f32.mrf.mxu0
  %v489 = vpop.f32.mrf.mxu0
  %v490 = vadd.f32 0.0, %v489
  %v491 = vpop.f32.mrf.mxu0
  %492 = vmatprep.mubr.bf16.mxu0 0
  %493 = vmatmul.mubr.bf16.gmra.mxu0 %v308
  %v494 = vpop.f32.mrf.mxu0
  %v495 = vadd.f32 0.0, %v494
  %v496 = vpop.f32.mrf.mxu0
  %v497 = vpop.f32.mrf.mxu0
  %v498 = vadd.f32 0.0, %v497
  %v499 = vpop.f32.mrf.mxu0
  %500 = vmatprep.mubr.bf16.mxu0 0
  %501 = vmatmul.mubr.bf16.gmra.mxu0 %v311
  %v502 = vpop.f32.mrf.mxu0
  %v503 = vadd.f32 0.0, %v502
  %v504 = vpop.f32.mrf.mxu0
  %v505 = vpop.f32.mrf.mxu0
  %v506 = vadd.f32 0.0, %v505
  %v507 = vpop.f32.mrf.mxu0
  %508 = vmatprep.mubr.bf16.mxu0 0
  %509 = vmatmul.mubr.bf16.gmra.mxu0 %v314
  %v510 = vpop.f32.mrf.mxu0
  %v511 = vadd.f32 0.0, %v510
  %v512 = vpop.f32.mrf.mxu0
  %v513 = vpop.f32.mrf.mxu0
  %v514 = vadd.f32 0.0, %v513
  %v515 = vpop.f32.mrf.mxu0
  %516 = vmatprep.mubr.bf16.mxu0 0
  %517 = vmatmul.mubr.bf16.gmra.mxu0 %v317
  %v518 = vpop.f32.mrf.mxu0
  %v519 = vadd.f32 0.0, %v518
  %v520 = vpop.f32.mrf.mxu0
  %v521 = vpop.f32.mrf.mxu0
  %v522 = vadd.f32 0.0, %v521
  %v523 = vpop.f32.mrf.mxu0
  %524 = vmatprep.mubr.bf16.mxu0 0
  %525 = vmatmul.mubr.bf16.gmra.mxu0 %v320
  %v526 = vpop.f32.mrf.mxu0
  %v527 = vadd.f32 0.0, %v526
  %v528 = vpop.f32.mrf.mxu0
  %v529 = vpop.f32.mrf.mxu0
  %v530 = vadd.f32 0.0, %v529
  %v531 = vpop.f32.mrf.mxu0
  %532 = vmatprep.mubr.bf16.mxu0 0
  %533 = vmatmul.mubr.bf16.gmra.mxu0 %v323
  %v534 = vpop.f32.mrf.mxu0
  %v535 = vadd.f32 0.0, %v534
  %v536 = vpop.f32.mrf.mxu0
  %v537 = vpop.f32.mrf.mxu0
  %v538 = vadd.f32 0.0, %v537
  %v539 = vpop.f32.mrf.mxu0
  %540 = vmatprep.mubr.bf16.mxu0 0
  %541 = vmatmul.mubr.bf16.gmra.mxu0 %v326
  %v542 = vpop.f32.mrf.mxu0
  %v543 = vadd.f32 0.0, %v542
  %v544 = vpop.f32.mrf.mxu0
  %v545 = vpop.f32.mrf.mxu0
  %v546 = vadd.f32 0.0, %v545
  %v547 = vpop.f32.mrf.mxu0
  %548 = vmatprep.mubr.bf16.mxu0 0
  %549 = vmatmul.mubr.bf16.gmra.mxu0 %v329
  %v550 = vpop.f32.mrf.mxu0
  %v551 = vadd.f32 0.0, %v550
  %v552 = vpop.f32.mrf.mxu0
  %v553 = vpop.f32.mrf.mxu0
  %v554 = vadd.f32 0.0, %v553
  %v555 = vpop.f32.mrf.mxu0
  %556 = vmatprep.mubr.bf16.mxu0 0
  %557 = vmatmul.mubr.bf16.gmra.mxu0 %v332
  %v558 = vpop.f32.mrf.mxu0
  %v559 = vadd.f32 0.0, %v558
  %v560 = vpop.f32.mrf.mxu0
  %v561 = vpop.f32.mrf.mxu0
  %v562 = vadd.f32 0.0, %v561
  %v563 = vpop.f32.mrf.mxu0
  %564 = vmatprep.mubr.bf16.mxu0 0
  %565 = vmatmul.mubr.bf16.gmra.mxu0 %v335
  %v566 = vpop.f32.mrf.mxu0
  %v567 = vadd.f32 0.0, %v566
  %v568 = vpop.f32.mrf.mxu0
  %v569 = vpop.f32.mrf.mxu0
  %v570 = vadd.f32 0.0, %v569
  %v571 = vpop.f32.mrf.mxu0
  %572 = vmatprep.mubr.bf16.mxu0 0
  %573 = vmatmul.mubr.bf16.gmra.mxu0 %v338
  %v574 = vpop.f32.mrf.mxu0
  %v575 = vadd.f32 0.0, %v574
  %v576 = vpop.f32.mrf.mxu0
  %v577 = vpop.f32.mrf.mxu0
  %v578 = vadd.f32 0.0, %v577
  %v579 = vpop.f32.mrf.mxu0
  %580 = vmatprep.mubr.bf16.mxu0 0
  %581 = vmatmul.mubr.bf16.gmra.mxu0 %v341
  %v582 = vpop.f32.mrf.mxu0
  %v583 = vadd.f32 0.0, %v582
  %v584 = vpop.f32.mrf.mxu0
  %v585 = vpop.f32.mrf.mxu0
  %v586 = vadd.f32 0.0, %v585
  %v587 = vpop.f32.mrf.mxu0
  %588 = vmatprep.mubr.bf16.mxu0 0
  %589 = vmatmul.mubr.bf16.gmra.mxu0 %v344
  %v590 = vpop.f32.mrf.mxu0
  %v591 = vadd.f32 0.0, %v590
  %v592 = vpop.f32.mrf.mxu0
  %v593 = vpop.f32.mrf.mxu0
  %v594 = vadd.f32 0.0, %v593
  %v595 = vpop.f32.mrf.mxu0
  %596 = vmatprep.mubr.bf16.mxu0 0
  %597 = vmatmul.mubr.bf16.gmra.mxu0 %v347
  %v598 = vpop.f32.mrf.mxu0
  %v599 = vadd.f32 0.0, %v598
  %v600 = vpop.f32.mrf.mxu0
  %v601 = vpop.f32.mrf.mxu0
  %v602 = vadd.f32 0.0, %v601
  %v603 = vpop.f32.mrf.mxu0
  %604 = vmatprep.mubr.bf16.mxu0 0
  %605 = vmatmul.mubr.bf16.gmra.mxu0 %v350
  %v606 = vpop.f32.mrf.mxu0
  %v607 = vadd.f32 0.0, %v606
  %v608 = vpop.f32.mrf.mxu0
  %v609 = vpop.f32.mrf.mxu0
  %v610 = vadd.f32 0.0, %v609
  %v611 = vpop.f32.mrf.mxu0
  %612 = vmatprep.mubr.bf16.mxu0 0
  %613 = vmatmul.mubr.bf16.gmra.mxu0 %v353
  %v614 = vpop.f32.mrf.mxu0
  %v615 = vadd.f32 0.0, %v614
  %v616 = vpop.f32.mrf.mxu0
  %v617 = vpop.f32.mrf.mxu0
  %v618 = vadd.f32 0.0, %v617
  %v619 = vpop.f32.mrf.mxu0
  %620 = vmatprep.mubr.bf16.mxu0 0
  %621 = vmatmul.mubr.bf16.gmra.mxu0 %v356
  %v622 = vpop.f32.mrf.mxu0
  %v623 = vadd.f32 0.0, %v622
  %v624 = vpop.f32.mrf.mxu0
  %v625 = vpop.f32.mrf.mxu0
  %v626 = vadd.f32 0.0, %v625
  %v627 = vpop.f32.mrf.mxu0
  %628 = vmatprep.mubr.bf16.mxu0 0
  %629 = vmatmul.mubr.bf16.gmra.mxu0 %v359
  %v630 = vpop.f32.mrf.mxu0
  %v631 = vadd.f32 0.0, %v630
  %v632 = vpop.f32.mrf.mxu0
  %v633 = vpop.f32.mrf.mxu0
  %v634 = vadd.f32 0.0, %v633
  %v635 = vpop.f32.mrf.mxu0
  %636 = vmatprep.mubr.bf16.mxu0 0
  %637 = vmatmul.mubr.bf16.gmra.mxu0 %v362
  %v638 = vpop.f32.mrf.mxu0
  %v639 = vadd.f32 0.0, %v638
  %v640 = vpop.f32.mrf.mxu0
  %v641 = vpop.f32.mrf.mxu0
  %v642 = vadd.f32 0.0, %v641
  %v643 = vpop.f32.mrf.mxu0
  %644 = vmatprep.mubr.bf16.mxu0 0
  %645 = vmatmul.mubr.bf16.gmra.mxu0 %v365
  %v646 = vpop.f32.mrf.mxu0
  %v647 = vadd.f32 0.0, %v646
  %v648 = vpop.f32.mrf.mxu0
  %v649 = vpop.f32.mrf.mxu0
  %v650 = vadd.f32 0.0, %v649
  %v651 = vpop.f32.mrf.mxu0
  %652 = vmatprep.mubr.bf16.mxu0 0
  %653 = vmatmul.mubr.bf16.gmra.mxu0 %v368
  %v654 = vpop.f32.mrf.mxu0
  %v655 = vadd.f32 0.0, %v654
  %v656 = vpop.f32.mrf.mxu0
  %v657 = vpop.f32.mrf.mxu0
  %v658 = vadd.f32 0.0, %v657
  %v659 = vpop.f32.mrf.mxu0
  %660 = vmatprep.mubr.bf16.mxu0 0
  %661 = vmatmul.mubr.bf16.gmra.mxu0 %v371
  %v662 = vpop.f32.mrf.mxu0
  %v663 = vadd.f32 0.0, %v662
  %v664 = vpop.f32.mrf.mxu0
  %v665 = vpop.f32.mrf.mxu0
  %v666 = vadd.f32 0.0, %v665
  %v667 = vpop.f32.mrf.mxu0
  %668 = vdwg.mxu0
  %v669 = vld [vmem:[%s2] sm:$0x1]
  %v670 = vld [vmem:[%s3] sm:$0x1]
  %vm671 = vcmask 261120
  %v672 = vsel %vm671, %v415, 0.0
  %v673 = vsel %vm671, %v418, 0.0
  %v674 = vadd.f32 %v672, %v673
  %v675 = vsel %vm671, %v423, 0.0
  %v676 = vadd.f32 %v674, %v675
  %v677 = vsel %vm671, %v426, 0.0
  %v678 = vadd.f32 %v676, %v677
  %v679 = vsel %vm671, %v431, 0.0
  %v680 = vadd.f32 %v678, %v679
  %v681 = vsel %vm671, %v434, 0.0
  %v682 = vadd.f32 %v680, %v681
  %v683 = vsel %vm671, %v439, 0.0
  %v684 = vadd.f32 %v682, %v683
  %v685 = vsel %vm671, %v442, 0.0
  %v686 = vadd.f32 %v684, %v685
  %v687 = vsel %vm671, %v447, 0.0
  %v688 = vadd.f32 %v686, %v687
  %v689 = vsel %vm671, %v450, 0.0
  %v690 = vadd.f32 %v688, %v689
  %v691 = vsel %vm671, %v455, 0.0
  %v692 = vadd.f32 %v690, %v691
  %v693 = vsel %vm671, %v458, 0.0
  %v694 = vadd.f32 %v692, %v693
  %v695 = vsel %vm671, %v463, 0.0
  %v696 = vadd.f32 %v694, %v695
  %v697 = vsel %vm671, %v466, 0.0
  %v698 = vadd.f32 %v696, %v697
  %v699 = vsel %vm671, %v471, 0.0
  %v700 = vadd.f32 %v698, %v699
  %v701 = vsel %vm671, %v474, 0.0
  %v702 = vadd.f32 %v700, %v701
  %v703 = vsel %vm671, %v479, 0.0
  %v704 = vadd.f32 %v702, %v703
  %v705 = vsel %vm671, %v482, 0.0
  %v706 = vadd.f32 %v704, %v705
  %v707 = vsel %vm671, %v487, 0.0
  %v708 = vadd.f32 %v706, %v707
  %v709 = vsel %vm671, %v490, 0.0
  %v710 = vadd.f32 %v708, %v709
  %v711 = vsel %vm671, %v495, 0.0
  %v712 = vadd.f32 %v710, %v711
  %v713 = vsel %vm671, %v498, 0.0
  %v714 = vadd.f32 %v712, %v713
  %v715 = vsel %vm671, %v503, 0.0
  %v716 = vadd.f32 %v714, %v715
  %v717 = vsel %vm671, %v506, 0.0
  %v718 = vadd.f32 %v716, %v717
  %v719 = vsel %vm671, %v511, 0.0
  %v720 = vadd.f32 %v718, %v719
  %v721 = vsel %vm671, %v514, 0.0
  %v722 = vadd.f32 %v720, %v721
  %v723 = vsel %vm671, %v519, 0.0
  %v724 = vadd.f32 %v722, %v723
  %v725 = vsel %vm671, %v522, 0.0
  %v726 = vadd.f32 %v724, %v725
  %v727 = vsel %vm671, %v527, 0.0
  %v728 = vadd.f32 %v726, %v727
  %v729 = vsel %vm671, %v530, 0.0
  %v730 = vadd.f32 %v728, %v729
  %v731 = vsel %vm671, %v535, 0.0
  %v732 = vadd.f32 %v730, %v731
  %v733 = vsel %vm671, %v538, 0.0
  %v734 = vadd.f32 %v732, %v733
  %v735 = vsel %vm671, %v543, 0.0
  %v736 = vadd.f32 %v734, %v735
  %v737 = vsel %vm671, %v546, 0.0
  %v738 = vadd.f32 %v736, %v737
  %v739 = vsel %vm671, %v551, 0.0
  %v740 = vadd.f32 %v738, %v739
  %v741 = vsel %vm671, %v554, 0.0
  %v742 = vadd.f32 %v740, %v741
  %v743 = vsel %vm671, %v559, 0.0
  %v744 = vadd.f32 %v742, %v743
  %v745 = vsel %vm671, %v562, 0.0
  %v746 = vadd.f32 %v744, %v745
  %v747 = vsel %vm671, %v567, 0.0
  %v748 = vadd.f32 %v746, %v747
  %v749 = vsel %vm671, %v570, 0.0
  %v750 = vadd.f32 %v748, %v749
  %v751 = vsel %vm671, %v575, 0.0
  %v752 = vadd.f32 %v750, %v751
  %v753 = vsel %vm671, %v578, 0.0
  %v754 = vadd.f32 %v752, %v753
  %v755 = vsel %vm671, %v583, 0.0
  %v756 = vadd.f32 %v754, %v755
  %v757 = vsel %vm671, %v586, 0.0
  %v758 = vadd.f32 %v756, %v757
  %v759 = vsel %vm671, %v591, 0.0
  %v760 = vadd.f32 %v758, %v759
  %v761 = vsel %vm671, %v594, 0.0
  %v762 = vadd.f32 %v760, %v761
  %v763 = vsel %vm671, %v599, 0.0
  %v764 = vadd.f32 %v762, %v763
  %v765 = vsel %vm671, %v602, 0.0
  %v766 = vadd.f32 %v764, %v765
  %v767 = vsel %vm671, %v607, 0.0
  %v768 = vadd.f32 %v766, %v767
  %v769 = vsel %vm671, %v610, 0.0
  %v770 = vadd.f32 %v768, %v769
  %v771 = vsel %vm671, %v615, 0.0
  %v772 = vadd.f32 %v770, %v771
  %v773 = vsel %vm671, %v618, 0.0
  %v774 = vadd.f32 %v772, %v773
  %v775 = vsel %vm671, %v623, 0.0
  %v776 = vadd.f32 %v774, %v775
  %v777 = vsel %vm671, %v626, 0.0
  %v778 = vadd.f32 %v776, %v777
  %v779 = vsel %vm671, %v631, 0.0
  %v780 = vadd.f32 %v778, %v779
  %v781 = vsel %vm671, %v634, 0.0
  %v782 = vadd.f32 %v780, %v781
  %v783 = vsel %vm671, %v639, 0.0
  %v784 = vadd.f32 %v782, %v783
  %v785 = vsel %vm671, %v642, 0.0
  %v786 = vadd.f32 %v784, %v785
  %v787 = vsel %vm671, %v647, 0.0
  %v788 = vadd.f32 %v786, %v787
  %v789 = vsel %vm671, %v650, 0.0
  %v790 = vadd.f32 %v788, %v789
  %v791 = vsel %vm671, %v655, 0.0
  %v792 = vadd.f32 %v790, %v791
  %v793 = vsel %vm671, %v658, 0.0
  %v794 = vadd.f32 %v792, %v793
  %v795 = vsel %vm671, %v663, 0.0
  %v796 = vadd.f32 %v794, %v795
  %v797 = vsel %vm671, %v666, 0.0
  %v798 = vadd.f32 %v796, %v797
  %v799 = vrot.slane %v798, 4
  %v800 = vadd.f32 %v798, %v799
  %v801 = vrot.slane %v800, 2
  %v802 = vadd.f32 %v800, %v801
  %v803 = vrot.slane %v802, 1
  %v804 = vadd.f32 %v802, %v803
  %v805 = vrcp.pop 512.0
  %v806 = vmul.f32 %v804, %v805
  %v807 = vmul.f32 %v415, %v415
  %v808 = vmul.f32 %v418, %v418
  %v809 = vmul.f32 %v423, %v423
  %v810 = vmul.f32 %v426, %v426
  %v811 = vmul.f32 %v431, %v431
  %v812 = vmul.f32 %v434, %v434
  %v813 = vmul.f32 %v439, %v439
  %v814 = vmul.f32 %v442, %v442
  %v815 = vmul.f32 %v447, %v447
  %v816 = vmul.f32 %v450, %v450
  %v817 = vmul.f32 %v455, %v455
  %v818 = vmul.f32 %v458, %v458
  %v819 = vmul.f32 %v463, %v463
  %v820 = vmul.f32 %v466, %v466
  %v821 = vmul.f32 %v471, %v471
  %v822 = vmul.f32 %v474, %v474
  %v823 = vmul.f32 %v479, %v479
  %v824 = vmul.f32 %v482, %v482
  %v825 = vmul.f32 %v487, %v487
  %v826 = vmul.f32 %v490, %v490
  %v827 = vmul.f32 %v495, %v495
  %v828 = vmul.f32 %v498, %v498
  %v829 = vmul.f32 %v503, %v503
  %v830 = vmul.f32 %v506, %v506
  %v831 = vmul.f32 %v511, %v511
  %v832 = vmul.f32 %v514, %v514
  %v833 = vmul.f32 %v519, %v519
  %v834 = vmul.f32 %v522, %v522
  %v835 = vmul.f32 %v527, %v527
  %v836 = vmul.f32 %v530, %v530
  %v837 = vmul.f32 %v535, %v535
  %v838 = vmul.f32 %v538, %v538
  %v839 = vmul.f32 %v543, %v543
  %v840 = vmul.f32 %v546, %v546
  %v841 = vmul.f32 %v551, %v551
  %v842 = vmul.f32 %v554, %v554
  %v843 = vmul.f32 %v559, %v559
  %v844 = vmul.f32 %v562, %v562
  %v845 = vmul.f32 %v567, %v567
  %v846 = vmul.f32 %v570, %v570
  %v847 = vmul.f32 %v575, %v575
  %v848 = vmul.f32 %v578, %v578
  %v849 = vmul.f32 %v583, %v583
  %v850 = vmul.f32 %v586, %v586
  %v851 = vmul.f32 %v591, %v591
  %v852 = vmul.f32 %v594, %v594
  %v853 = vmul.f32 %v599, %v599
  %v854 = vmul.f32 %v602, %v602
  %v855 = vmul.f32 %v607, %v607
  %v856 = vmul.f32 %v610, %v610
  %v857 = vmul.f32 %v615, %v615
  %v858 = vmul.f32 %v618, %v618
  %v859 = vmul.f32 %v623, %v623
  %v860 = vmul.f32 %v626, %v626
  %v861 = vmul.f32 %v631, %v631
  %v862 = vmul.f32 %v634, %v634
  %v863 = vmul.f32 %v639, %v639
  %v864 = vmul.f32 %v642, %v642
  %v865 = vmul.f32 %v647, %v647
  %v866 = vmul.f32 %v650, %v650
  %v867 = vmul.f32 %v655, %v655
  %v868 = vmul.f32 %v658, %v658
  %v869 = vmul.f32 %v663, %v663
  %v870 = vmul.f32 %v666, %v666
  %v871 = vsel %vm671, %v807, 0.0
  %v872 = vsel %vm671, %v808, 0.0
  %v873 = vadd.f32 %v871, %v872
  %v874 = vsel %vm671, %v809, 0.0
  %v875 = vadd.f32 %v873, %v874
  %v876 = vsel %vm671, %v810, 0.0
  %v877 = vadd.f32 %v875, %v876
  %v878 = vsel %vm671, %v811, 0.0
  %v879 = vadd.f32 %v877, %v878
  %v880 = vsel %vm671, %v812, 0.0
  %v881 = vadd.f32 %v879, %v880
  %v882 = vsel %vm671, %v813, 0.0
  %v883 = vadd.f32 %v881, %v882
  %v884 = vsel %vm671, %v814, 0.0
  %v885 = vadd.f32 %v883, %v884
  %v886 = vsel %vm671, %v815, 0.0
  %v887 = vadd.f32 %v885, %v886
  %v888 = vsel %vm671, %v816, 0.0
  %v889 = vadd.f32 %v887, %v888
  %v890 = vsel %vm671, %v817, 0.0
  %v891 = vadd.f32 %v889, %v890
  %v892 = vsel %vm671, %v818, 0.0
  %v893 = vadd.f32 %v891, %v892
  %v894 = vsel %vm671, %v819, 0.0
  %v895 = vadd.f32 %v893, %v894
  %v896 = vsel %vm671, %v820, 0.0
  %v897 = vadd.f32 %v895, %v896
  %v898 = vsel %vm671, %v821, 0.0
  %v899 = vadd.f32 %v897, %v898
  %v900 = vsel %vm671, %v822, 0.0
  %v901 = vadd.f32 %v899, %v900
  %v902 = vsel %vm671, %v823, 0.0
  %v903 = vadd.f32 %v901, %v902
  %v904 = vsel %vm671, %v824, 0.0
  %v905 = vadd.f32 %v903, %v904
  %v906 = vsel %vm671, %v825, 0.0
  %v907 = vadd.f32 %v905, %v906
  %v908 = vsel %vm671, %v826, 0.0
  %v909 = vadd.f32 %v907, %v908
  %v910 = vsel %vm671, %v827, 0.0
  %v911 = vadd.f32 %v909, %v910
  %v912 = vsel %vm671, %v828, 0.0
  %v913 = vadd.f32 %v911, %v912
  %v914 = vsel %vm671, %v829, 0.0
  %v915 = vadd.f32 %v913, %v914
  %v916 = vsel %vm671, %v830, 0.0
  %v917 = vadd.f32 %v915, %v916
  %v918 = vsel %vm671, %v831, 0.0
  %v919 = vadd.f32 %v917, %v918
  %v920 = vsel %vm671, %v832, 0.0
  %v921 = vadd.f32 %v919, %v920
  %v922 = vsel %vm671, %v833, 0.0
  %v923 = vadd.f32 %v921, %v922
  %v924 = vsel %vm671, %v834, 0.0
  %v925 = vadd.f32 %v923, %v924
  %v926 = vsel %vm671, %v835, 0.0
  %v927 = vadd.f32 %v925, %v926
  %v928 = vsel %vm671, %v836, 0.0
  %v929 = vadd.f32 %v927, %v928
  %v930 = vsel %vm671, %v837, 0.0
  %v931 = vadd.f32 %v929, %v930
  %v932 = vsel %vm671, %v838, 0.0
  %v933 = vadd.f32 %v931, %v932
  %v934 = vsel %vm671, %v839, 0.0
  %v935 = vadd.f32 %v933, %v934
  %v936 = vsel %vm671, %v840, 0.0
  %v937 = vadd.f32 %v935, %v936
  %v938 = vsel %vm671, %v841, 0.0
  %v939 = vadd.f32 %v937, %v938
  %v940 = vsel %vm671, %v842, 0.0
  %v941 = vadd.f32 %v939, %v940
  %v942 = vsel %vm671, %v843, 0.0
  %v943 = vadd.f32 %v941, %v942
  %v944 = vsel %vm671, %v844, 0.0
  %v945 = vadd.f32 %v943, %v944
  %v946 = vsel %vm671, %v845, 0.0
  %v947 = vadd.f32 %v945, %v946
  %v948 = vsel %vm671, %v846, 0.0
  %v949 = vadd.f32 %v947, %v948
  %v950 = vsel %vm671, %v847, 0.0
  %v951 = vadd.f32 %v949, %v950
  %v952 = vsel %vm671, %v848, 0.0
  %v953 = vadd.f32 %v951, %v952
  %v954 = vsel %vm671, %v849, 0.0
  %v955 = vadd.f32 %v953, %v954
  %v956 = vsel %vm671, %v850, 0.0
  %v957 = vadd.f32 %v955, %v956
  %v958 = vsel %vm671, %v851, 0.0
  %v959 = vadd.f32 %v957, %v958
  %v960 = vsel %vm671, %v852, 0.0
  %v961 = vadd.f32 %v959, %v960
  %v962 = vsel %vm671, %v853, 0.0
  %v963 = vadd.f32 %v961, %v962
  %v964 = vsel %vm671, %v854, 0.0
  %v965 = vadd.f32 %v963, %v964
  %v966 = vsel %vm671, %v855, 0.0
  %v967 = vadd.f32 %v965, %v966
  %v968 = vsel %vm671, %v856, 0.0
  %v969 = vadd.f32 %v967, %v968
  %v970 = vsel %vm671, %v857, 0.0
  %v971 = vadd.f32 %v969, %v970
  %v972 = vsel %vm671, %v858, 0.0
  %v973 = vadd.f32 %v971, %v972
  %v974 = vsel %vm671, %v859, 0.0
  %v975 = vadd.f32 %v973, %v974
  %v976 = vsel %vm671, %v860, 0.0
  %v977 = vadd.f32 %v975, %v976
  %v978 = vsel %vm671, %v861, 0.0
  %v979 = vadd.f32 %v977, %v978
  %v980 = vsel %vm671, %v862, 0.0
  %v981 = vadd.f32 %v979, %v980
  %v982 = vsel %vm671, %v863, 0.0
  %v983 = vadd.f32 %v981, %v982
  %v984 = vsel %vm671, %v864, 0.0
  %v985 = vadd.f32 %v983, %v984
  %v986 = vsel %vm671, %v865, 0.0
  %v987 = vadd.f32 %v985, %v986
  %v988 = vsel %vm671, %v866, 0.0
  %v989 = vadd.f32 %v987, %v988
  %v990 = vsel %vm671, %v867, 0.0
  %v991 = vadd.f32 %v989, %v990
  %v992 = vsel %vm671, %v868, 0.0
  %v993 = vadd.f32 %v991, %v992
  %v994 = vsel %vm671, %v869, 0.0
  %v995 = vadd.f32 %v993, %v994
  %v996 = vsel %vm671, %v870, 0.0
  %v997 = vadd.f32 %v995, %v996
  %v998 = vrot.slane %v997, 4
  %v999 = vadd.f32 %v997, %v998
  %v1000 = vrot.slane %v999, 2
  %v1001 = vadd.f32 %v999, %v1000
  %v1002 = vrot.slane %v1001, 1
  %v1003 = vadd.f32 %v1001, %v1002
  %v1004 = vmul.f32 %v1003, %v805
  %v1005 = vmul.f32 %v806, %v806
  %v1006 = vsub.f32 %v1004, %v1005
  %v1007 = vmax.f32 %v1006, 0.0
  %v1008 = vadd.f32 %v1007, 1e-05
  %v1009 = vrsqrt.pop %v1008
  %v1010 = vmul.f32 %v669, %v1009
  %v1011 = vmul.f32 %v806, %v1010
  %v1012 = vsub.f32 %v670, %v1011
  %v1014 = vlaneseq
  %v1015 = vshrl.u32 %v1014, 7
  %v1016 = vsub.s32 0, %v1015
  %v1017 = vrot.slane %v1010, %v1016
  %v1019 = vmul.f32 %v415, %v1017
  %v1020 = vmul.f32 %v418, %v1017
  %v1021 = vmul.f32 %v423, %v1017
  %v1022 = vmul.f32 %v426, %v1017
  %v1023 = vmul.f32 %v431, %v1017
  %v1024 = vmul.f32 %v434, %v1017
  %v1025 = vmul.f32 %v439, %v1017
  %v1026 = vmul.f32 %v442, %v1017
  %v1027 = vmul.f32 %v447, %v1017
  %v1028 = vmul.f32 %v450, %v1017
  %v1029 = vmul.f32 %v455, %v1017
  %v1030 = vmul.f32 %v458, %v1017
  %v1031 = vmul.f32 %v463, %v1017
  %v1032 = vmul.f32 %v466, %v1017
  %v1033 = vmul.f32 %v471, %v1017
  %v1034 = vmul.f32 %v474, %v1017
  %v1035 = vmul.f32 %v479, %v1017
  %v1036 = vmul.f32 %v482, %v1017
  %v1037 = vmul.f32 %v487, %v1017
  %v1038 = vmul.f32 %v490, %v1017
  %v1039 = vmul.f32 %v495, %v1017
  %v1040 = vmul.f32 %v498, %v1017
  %v1041 = vmul.f32 %v503, %v1017
  %v1042 = vmul.f32 %v506, %v1017
  %v1043 = vmul.f32 %v511, %v1017
  %v1044 = vmul.f32 %v514, %v1017
  %v1045 = vmul.f32 %v519, %v1017
  %v1046 = vmul.f32 %v522, %v1017
  %v1047 = vmul.f32 %v527, %v1017
  %v1048 = vmul.f32 %v530, %v1017
  %v1049 = vmul.f32 %v535, %v1017
  %v1050 = vmul.f32 %v538, %v1017
  %v1051 = vmul.f32 %v543, %v1017
  %v1052 = vmul.f32 %v546, %v1017
  %v1053 = vmul.f32 %v551, %v1017
  %v1054 = vmul.f32 %v554, %v1017
  %v1055 = vmul.f32 %v559, %v1017
  %v1056 = vmul.f32 %v562, %v1017
  %v1057 = vmul.f32 %v567, %v1017
  %v1058 = vmul.f32 %v570, %v1017
  %v1059 = vmul.f32 %v575, %v1017
  %v1060 = vmul.f32 %v578, %v1017
  %v1061 = vmul.f32 %v583, %v1017
  %v1062 = vmul.f32 %v586, %v1017
  %v1063 = vmul.f32 %v591, %v1017
  %v1064 = vmul.f32 %v594, %v1017
  %v1065 = vmul.f32 %v599, %v1017
  %v1066 = vmul.f32 %v602, %v1017
  %v1067 = vmul.f32 %v607, %v1017
  %v1068 = vmul.f32 %v610, %v1017
  %v1069 = vmul.f32 %v615, %v1017
  %v1070 = vmul.f32 %v618, %v1017
  %v1071 = vmul.f32 %v623, %v1017
  %v1072 = vmul.f32 %v626, %v1017
  %v1073 = vmul.f32 %v631, %v1017
  %v1074 = vmul.f32 %v634, %v1017
  %v1075 = vmul.f32 %v639, %v1017
  %v1076 = vmul.f32 %v642, %v1017
  %v1077 = vmul.f32 %v647, %v1017
  %v1078 = vmul.f32 %v650, %v1017
  %v1079 = vmul.f32 %v655, %v1017
  %v1080 = vmul.f32 %v658, %v1017
  %v1081 = vmul.f32 %v663, %v1017
  %v1082 = vmul.f32 %v666, %v1017
  %v1084 = vlaneseq
  %v1085 = vshrl.u32 %v1084, 7
  %v1086 = vsub.s32 0, %v1085
  %v1087 = vrot.slane %v1012, %v1086
  %v1089 = vadd.f32 %v1019, %v1087
  %v1090 = vadd.f32 %v1020, %v1087
  %v1091 = vadd.f32 %v1021, %v1087
  %v1092 = vadd.f32 %v1022, %v1087
  %v1093 = vadd.f32 %v1023, %v1087
  %v1094 = vadd.f32 %v1024, %v1087
  %v1095 = vadd.f32 %v1025, %v1087
  %v1096 = vadd.f32 %v1026, %v1087
  %v1097 = vadd.f32 %v1027, %v1087
  %v1098 = vadd.f32 %v1028, %v1087
  %v1099 = vadd.f32 %v1029, %v1087
  %v1100 = vadd.f32 %v1030, %v1087
  %v1101 = vadd.f32 %v1031, %v1087
  %v1102 = vadd.f32 %v1032, %v1087
  %v1103 = vadd.f32 %v1033, %v1087
  %v1104 = vadd.f32 %v1034, %v1087
  %v1105 = vadd.f32 %v1035, %v1087
  %v1106 = vadd.f32 %v1036, %v1087
  %v1107 = vadd.f32 %v1037, %v1087
  %v1108 = vadd.f32 %v1038, %v1087
  %v1109 = vadd.f32 %v1039, %v1087
  %v1110 = vadd.f32 %v1040, %v1087
  %v1111 = vadd.f32 %v1041, %v1087
  %v1112 = vadd.f32 %v1042, %v1087
  %v1113 = vadd.f32 %v1043, %v1087
  %v1114 = vadd.f32 %v1044, %v1087
  %v1115 = vadd.f32 %v1045, %v1087
  %v1116 = vadd.f32 %v1046, %v1087
  %v1117 = vadd.f32 %v1047, %v1087
  %v1118 = vadd.f32 %v1048, %v1087
  %v1119 = vadd.f32 %v1049, %v1087
  %v1120 = vadd.f32 %v1050, %v1087
  %v1121 = vadd.f32 %v1051, %v1087
  %v1122 = vadd.f32 %v1052, %v1087
  %v1123 = vadd.f32 %v1053, %v1087
  %v1124 = vadd.f32 %v1054, %v1087
  %v1125 = vadd.f32 %v1055, %v1087
  %v1126 = vadd.f32 %v1056, %v1087
  %v1127 = vadd.f32 %v1057, %v1087
  %v1128 = vadd.f32 %v1058, %v1087
  %v1129 = vadd.f32 %v1059, %v1087
  %v1130 = vadd.f32 %v1060, %v1087
  %v1131 = vadd.f32 %v1061, %v1087
  %v1132 = vadd.f32 %v1062, %v1087
  %v1133 = vadd.f32 %v1063, %v1087
  %v1134 = vadd.f32 %v1064, %v1087
  %v1135 = vadd.f32 %v1065, %v1087
  %v1136 = vadd.f32 %v1066, %v1087
  %v1137 = vadd.f32 %v1067, %v1087
  %v1138 = vadd.f32 %v1068, %v1087
  %v1139 = vadd.f32 %v1069, %v1087
  %v1140 = vadd.f32 %v1070, %v1087
  %v1141 = vadd.f32 %v1071, %v1087
  %v1142 = vadd.f32 %v1072, %v1087
  %v1143 = vadd.f32 %v1073, %v1087
  %v1144 = vadd.f32 %v1074, %v1087
  %v1145 = vadd.f32 %v1075, %v1087
  %v1146 = vadd.f32 %v1076, %v1087
  %v1147 = vadd.f32 %v1077, %v1087
  %v1148 = vadd.f32 %v1078, %v1087
  %v1149 = vadd.f32 %v1079, %v1087
  %v1150 = vadd.f32 %v1080, %v1087
  %v1151 = vadd.f32 %v1081, %v1087
  %v1152 = vadd.f32 %v1082, %v1087
  %v1153 = vmax.f32 %v1089, 0.0
  %v1154 = vmax.f32 %v1090, 0.0
  %v1155 = vmax.f32 %v1091, 0.0
  %v1156 = vmax.f32 %v1092, 0.0
  %v1157 = vmax.f32 %v1093, 0.0
  %v1158 = vmax.f32 %v1094, 0.0
  %v1159 = vmax.f32 %v1095, 0.0
  %v1160 = vmax.f32 %v1096, 0.0
  %v1161 = vmax.f32 %v1097, 0.0
  %v1162 = vmax.f32 %v1098, 0.0
  %v1163 = vmax.f32 %v1099, 0.0
  %v1164 = vmax.f32 %v1100, 0.0
  %v1165 = vmax.f32 %v1101, 0.0
  %v1166 = vmax.f32 %v1102, 0.0
  %v1167 = vmax.f32 %v1103, 0.0
  %v1168 = vmax.f32 %v1104, 0.0
  %v1169 = vmax.f32 %v1105, 0.0
  %v1170 = vmax.f32 %v1106, 0.0
  %v1171 = vmax.f32 %v1107, 0.0
  %v1172 = vmax.f32 %v1108, 0.0
  %v1173 = vmax.f32 %v1109, 0.0
  %v1174 = vmax.f32 %v1110, 0.0
  %v1175 = vmax.f32 %v1111, 0.0
  %v1176 = vmax.f32 %v1112, 0.0
  %v1177 = vmax.f32 %v1113, 0.0
  %v1178 = vmax.f32 %v1114, 0.0
  %v1179 = vmax.f32 %v1115, 0.0
  %v1180 = vmax.f32 %v1116, 0.0
  %v1181 = vmax.f32 %v1117, 0.0
  %v1182 = vmax.f32 %v1118, 0.0
  %v1183 = vmax.f32 %v1119, 0.0
  %v1184 = vmax.f32 %v1120, 0.0
  %v1185 = vmax.f32 %v1121, 0.0
  %v1186 = vmax.f32 %v1122, 0.0
  %v1187 = vmax.f32 %v1123, 0.0
  %v1188 = vmax.f32 %v1124, 0.0
  %v1189 = vmax.f32 %v1125, 0.0
  %v1190 = vmax.f32 %v1126, 0.0
  %v1191 = vmax.f32 %v1127, 0.0
  %v1192 = vmax.f32 %v1128, 0.0
  %v1193 = vmax.f32 %v1129, 0.0
  %v1194 = vmax.f32 %v1130, 0.0
  %v1195 = vmax.f32 %v1131, 0.0
  %v1196 = vmax.f32 %v1132, 0.0
  %v1197 = vmax.f32 %v1133, 0.0
  %v1198 = vmax.f32 %v1134, 0.0
  %v1199 = vmax.f32 %v1135, 0.0
  %v1200 = vmax.f32 %v1136, 0.0
  %v1201 = vmax.f32 %v1137, 0.0
  %v1202 = vmax.f32 %v1138, 0.0
  %v1203 = vmax.f32 %v1139, 0.0
  %v1204 = vmax.f32 %v1140, 0.0
  %v1205 = vmax.f32 %v1141, 0.0
  %v1206 = vmax.f32 %v1142, 0.0
  %v1207 = vmax.f32 %v1143, 0.0
  %v1208 = vmax.f32 %v1144, 0.0
  %v1209 = vmax.f32 %v1145, 0.0
  %v1210 = vmax.f32 %v1146, 0.0
  %v1211 = vmax.f32 %v1147, 0.0
  %v1212 = vmax.f32 %v1148, 0.0
  %v1213 = vmax.f32 %v1149, 0.0
  %v1214 = vmax.f32 %v1150, 0.0
  %v1215 = vmax.f32 %v1151, 0.0
  %v1216 = vmax.f32 %v1152, 0.0
  %1217 = vst.msk [vmem:[#allocation2] sm:$0xff] %vm671, 0.0
  %1218 = vst.msk [vmem:[#allocation2 + $0x8] sm:$0xff] %vm671, 0.0
  %vm1219 = vcmask 254976
  %1220 = vst.msk [vmem:[#allocation2 + $0x10] sm:$0x3] %vm1219, 0.0
  %1221 = vst.msk [vmem:[#allocation2 + $0x18] sm:$0xff] %vm671, 0.0
  %1222 = vst.msk [vmem:[#allocation2 + $0x20] sm:$0xff] %vm671, 0.0
  %1223 = vst.msk [vmem:[#allocation2 + $0x28] sm:$0x3] %vm1219, 0.0
  %1224 = vst.msk [vmem:[#allocation2 + $0x30] sm:$0xff] %vm671, 0.0
  %1225 = vst.msk [vmem:[#allocation2 + $0x38] sm:$0xff] %vm671, 0.0
  %1226 = vst.msk [vmem:[#allocation2 + $0x40] sm:$0x3] %vm1219, 0.0
  %1227 = vst.msk [vmem:[#allocation2 + $0x48] sm:$0xff] %vm671, 0.0
  %1228 = vst.msk [vmem:[#allocation2 + $0x50] sm:$0xff] %vm671, 0.0
  %1229 = vst.msk [vmem:[#allocation2 + $0x58] sm:$0x3] %vm1219, 0.0
  %1230 = vst.msk [vmem:[#allocation2 + $0x60] sm:$0xff] %vm671, 0.0
  %1231 = vst.msk [vmem:[#allocation2 + $0x68] sm:$0xff] %vm671, 0.0
  %1232 = vst.msk [vmem:[#allocation2 + $0x70] sm:$0x3] %vm1219, 0.0
  %1233 = vst.msk [vmem:[#allocation2 + $0x78] sm:$0xff] %vm671, 0.0
  %1234 = vst.msk [vmem:[#allocation2 + $0x80] sm:$0xff] %vm671, 0.0
  %1235 = vst.msk [vmem:[#allocation2 + $0x88] sm:$0x3] %vm1219, 0.0
  %1236 = vst.msk [vmem:[#allocation2 + $0x90] sm:$0xff] %vm671, 0.0
  %1237 = vst.msk [vmem:[#allocation2 + $0x98] sm:$0xff] %vm671, 0.0
  %1238 = vst.msk [vmem:[#allocation2 + $0xa0] sm:$0x3] %vm1219, 0.0
  %1239 = vst.msk [vmem:[#allocation2 + $0xa8] sm:$0xff] %vm671, 0.0
  %1240 = vst.msk [vmem:[#allocation2 + $0xb0] sm:$0xff] %vm671, 0.0
  %1241 = vst.msk [vmem:[#allocation2 + $0xb8] sm:$0x3] %vm1219, 0.0
  %1242 = vst.msk [vmem:[#allocation2 + $0xc0] sm:$0xff] %vm671, 0.0
  %1243 = vst.msk [vmem:[#allocation2 + $0xc8] sm:$0xff] %vm671, 0.0
  %1244 = vst.msk [vmem:[#allocation2 + $0xd0] sm:$0x3] %vm1219, 0.0
  %1245 = vst.msk [vmem:[#allocation2 + $0xd8] sm:$0xff] %vm671, 0.0
  %1246 = vst.msk [vmem:[#allocation2 + $0xe0] sm:$0xff] %vm671, 0.0
  %1247 = vst.msk [vmem:[#allocation2 + $0xe8] sm:$0x3] %vm1219, 0.0
  %1248 = vst.msk [vmem:[#allocation2 + $0xf0] sm:$0xff] %vm671, 0.0
  %1249 = vst.msk [vmem:[#allocation2 + $0xf8] sm:$0xff] %vm671, 0.0
  %1250 = vst.msk [vmem:[#allocation2 + $0x100] sm:$0x3] %vm1219, 0.0
  %1251 = vst.msk [vmem:[#allocation2 + $0x108] sm:$0xff] %vm671, 0.0
  %1252 = vst.msk [vmem:[#allocation2 + $0x110] sm:$0xff] %vm671, 0.0
  %1253 = vst.msk [vmem:[#allocation2 + $0x118] sm:$0x3] %vm1219, 0.0
  %1254 = vst.msk [vmem:[#allocation2 + $0x120] sm:$0xff] %vm671, 0.0
  %1255 = vst.msk [vmem:[#allocation2 + $0x128] sm:$0xff] %vm671, 0.0
  %1256 = vst.msk [vmem:[#allocation2 + $0x130] sm:$0x3] %vm1219, 0.0
  %1257 = vst.msk [vmem:[#allocation2 + $0x138] sm:$0xff] %vm671, 0.0
  %1258 = vst.msk [vmem:[#allocation2 + $0x140] sm:$0xff] %vm671, 0.0
  %1259 = vst.msk [vmem:[#allocation2 + $0x148] sm:$0x3] %vm1219, 0.0
  %1260 = vst.msk [vmem:[#allocation2 + $0x150] sm:$0xff] %vm671, 0.0
  %1261 = vst.msk [vmem:[#allocation2 + $0x158] sm:$0xff] %vm671, 0.0
  %1262 = vst.msk [vmem:[#allocation2 + $0x160] sm:$0x3] %vm1219, 0.0
  %1263 = vst.msk [vmem:[#allocation2 + $0x168] sm:$0xff] %vm671, 0.0
  %1264 = vst.msk [vmem:[#allocation2 + $0x170] sm:$0xff] %vm671, 0.0
  %1265 = vst.msk [vmem:[#allocation2 + $0x178] sm:$0x3] %vm1219, 0.0
  %1266 = vst.msk [vmem:[#allocation2 + $0x180] sm:$0xff] %vm671, 0.0
  %1267 = vst.msk [vmem:[#allocation2 + $0x188] sm:$0xff] %vm671, 0.0
  %1268 = vst.msk [vmem:[#allocation2 + $0x190] sm:$0x3] %vm1219, 0.0
  %1269 = vst.msk [vmem:[#allocation2 + $0x198] sm:$0xff] %vm671, 0.0
  %1270 = vst.msk [vmem:[#allocation2 + $0x1a0] sm:$0xff] %vm671, 0.0
  %1271 = vst.msk [vmem:[#allocation2 + $0x1a8] sm:$0x3] %vm1219, 0.0
  %1272 = vst.msk [vmem:[#allocation2 + $0x1b0] sm:$0xff] %vm671, 0.0
  %1273 = vst.msk [vmem:[#allocation2 + $0x1b8] sm:$0xff] %vm671, 0.0
  %1274 = vst.msk [vmem:[#allocation2 + $0x1c0] sm:$0x3] %vm1219, 0.0
  %1275 = vst.msk [vmem:[#allocation2 + $0x1c8] sm:$0xff] %vm671, 0.0
  %1276 = vst.msk [vmem:[#allocation2 + $0x1d0] sm:$0xff] %vm671, 0.0
  %1277 = vst.msk [vmem:[#allocation2 + $0x1d8] sm:$0x3] %vm1219, 0.0
  %1278 = vst.msk [vmem:[#allocation2 + $0x1e0] sm:$0xff] %vm671, 0.0
  %1279 = vst.msk [vmem:[#allocation2 + $0x1e8] sm:$0xff] %vm671, 0.0
  %1280 = vst.msk [vmem:[#allocation2 + $0x1f0] sm:$0x3] %vm1219, 0.0
  %1281 = vst.msk [vmem:[#allocation2 + $0x1f8] sm:$0xff] %vm671, 0.0
  %1282 = vst.msk [vmem:[#allocation2 + $0x200] sm:$0xff] %vm671, 0.0
  %1283 = vst.msk [vmem:[#allocation2 + $0x208] sm:$0x3] %vm1219, 0.0
  %1284 = vst.msk [vmem:[#allocation2 + $0x210] sm:$0xff] %vm671, 0.0
  %1285 = vst.msk [vmem:[#allocation2 + $0x218] sm:$0xff] %vm671, 0.0
  %1286 = vst.msk [vmem:[#allocation2 + $0x220] sm:$0x3] %vm1219, 0.0
  %1287 = vst.msk [vmem:[#allocation2 + $0x228] sm:$0xff] %vm671, 0.0
  %1288 = vst.msk [vmem:[#allocation2 + $0x230] sm:$0xff] %vm671, 0.0
  %1289 = vst.msk [vmem:[#allocation2 + $0x238] sm:$0x3] %vm1219, 0.0
  %1290 = vst.msk [vmem:[#allocation2 + $0x240] sm:$0xff] %vm671, 0.0
  %1291 = vst.msk [vmem:[#allocation2 + $0x248] sm:$0xff] %vm671, 0.0
  %1292 = vst.msk [vmem:[#allocation2 + $0x250] sm:$0x3] %vm1219, 0.0
  %1293 = vst.msk [vmem:[#allocation2 + $0x258] sm:$0xff] %vm671, 0.0
  %1294 = vst.msk [vmem:[#allocation2 + $0x260] sm:$0xff] %vm671, 0.0
  %1295 = vst.msk [vmem:[#allocation2 + $0x268] sm:$0x3] %vm1219, 0.0
  %1296 = vst.msk [vmem:[#allocation2 + $0x270] sm:$0xff] %vm671, 0.0
  %1297 = vst.msk [vmem:[#allocation2 + $0x278] sm:$0xff] %vm671, 0.0
  %1298 = vst.msk [vmem:[#allocation2 + $0x280] sm:$0x3] %vm1219, 0.0
  %1299 = vst.msk [vmem:[#allocation2 + $0x288] sm:$0xff] %vm671, 0.0
  %1300 = vst.msk [vmem:[#allocation2 + $0x290] sm:$0xff] %vm671, 0.0
  %1301 = vst.msk [vmem:[#allocation2 + $0x298] sm:$0x3] %vm1219, 0.0
  %1302 = vst.msk [vmem:[#allocation2 + $0x2a0] sm:$0xff] %vm671, 0.0
  %1303 = vst.msk [vmem:[#allocation2 + $0x2a8] sm:$0xff] %vm671, 0.0
  %1304 = vst.msk [vmem:[#allocation2 + $0x2b0] sm:$0x3] %vm1219, 0.0
  %1305 = vst.msk [vmem:[#allocation2 + $0x2b8] sm:$0xff] %vm671, 0.0
  %1306 = vst.msk [vmem:[#allocation2 + $0x2c0] sm:$0xff] %vm671, 0.0
  %1307 = vst.msk [vmem:[#allocation2 + $0x2c8] sm:$0x3] %vm1219, 0.0
  %1308 = vst.msk [vmem:[#allocation2 + $0x2d0] sm:$0xff] %vm671, 0.0
  %1309 = vst.msk [vmem:[#allocation2 + $0x2d8] sm:$0xff] %vm671, 0.0
  %1310 = vst.msk [vmem:[#allocation2 + $0x2e0] sm:$0x3] %vm1219, 0.0
  %1311 = vst.msk [vmem:[#allocation2 + $0x2e8] sm:$0xff] %vm671, 0.0
  %1312 = vst.msk [vmem:[#allocation2 + $0x2f0] sm:$0xff] %vm671, 0.0
  %1313 = vst.msk [vmem:[#allocation2 + $0x2f8] sm:$0x3] %vm1219, 0.0
  %1314 = vst.msk [vmem:[#allocation2 + $0x300] sm:$0xff] %vm671, 0.0
  %1315 = vst.msk [vmem:[#allocation2 + $0x308] sm:$0xff] %vm671, 0.0
  %1316 = vst.msk [vmem:[#allocation2 + $0x310] sm:$0x3] %vm1219, 0.0
  %1317 = vst.msk [vmem:[#allocation2 + $0x318] sm:$0xff] %vm671, 0.0
  %1318 = vst.msk [vmem:[#allocation2 + $0x320] sm:$0xff] %vm671, 0.0
  %1319 = vst.msk [vmem:[#allocation2 + $0x328] sm:$0x3] %vm1219, 0.0
  %1320 = vst.msk [vmem:[#allocation2 + $0x330] sm:$0xff] %vm671, 0.0
  %1321 = vst.msk [vmem:[#allocation2 + $0x338] sm:$0xff] %vm671, 0.0
  %1322 = vst.msk [vmem:[#allocation2 + $0x340] sm:$0x3] %vm1219, 0.0
  %1323 = vst.msk [vmem:[#allocation2 + $0x348] sm:$0xff] %vm671, 0.0
  %1324 = vst.msk [vmem:[#allocation2 + $0x350] sm:$0xff] %vm671, 0.0
  %1325 = vst.msk [vmem:[#allocation2 + $0x358] sm:$0x3] %vm1219, 0.0
  %s1326 = scalar_lea.vmem [#allocation2], 24
  %1327 = vst.msk [vmem:[%s1326 + $0x1] sm:$0xff] %vm671, %v1153
  %1328 = vst.msk [vmem:[%s1326 + $0x9] sm:$0xff] %vm671, %v1154
  %1329 = vst.msk [vmem:[%s1326 + $0x19] sm:$0xff] %vm671, %v1155
  %1330 = vst.msk [vmem:[%s1326 + $0x21] sm:$0xff] %vm671, %v1156
  %1331 = vst.msk [vmem:[%s1326 + $0x31] sm:$0xff] %vm671, %v1157
  %1332 = vst.msk [vmem:[%s1326 + $0x39] sm:$0xff] %vm671, %v1158
  %1333 = vst.msk [vmem:[%s1326 + $0x49] sm:$0xff] %vm671, %v1159
  %1334 = vst.msk [vmem:[%s1326 + $0x51] sm:$0xff] %vm671, %v1160
  %1335 = vst.msk [vmem:[%s1326 + $0x61] sm:$0xff] %vm671, %v1161
  %1336 = vst.msk [vmem:[%s1326 + $0x69] sm:$0xff] %vm671, %v1162
  %1337 = vst.msk [vmem:[%s1326 + $0x79] sm:$0xff] %vm671, %v1163
  %1338 = vst.msk [vmem:[%s1326 + $0x81] sm:$0xff] %vm671, %v1164
  %1339 = vst.msk [vmem:[%s1326 + $0x91] sm:$0xff] %vm671, %v1165
  %1340 = vst.msk [vmem:[%s1326 + $0x99] sm:$0xff] %vm671, %v1166
  %1341 = vst.msk [vmem:[%s1326 + $0xa9] sm:$0xff] %vm671, %v1167
  %1342 = vst.msk [vmem:[%s1326 + $0xb1] sm:$0xff] %vm671, %v1168
  %1343 = vst.msk [vmem:[%s1326 + $0xc1] sm:$0xff] %vm671, %v1169
  %1344 = vst.msk [vmem:[%s1326 + $0xc9] sm:$0xff] %vm671, %v1170
  %1345 = vst.msk [vmem:[%s1326 + $0xd9] sm:$0xff] %vm671, %v1171
  %1346 = vst.msk [vmem:[%s1326 + $0xe1] sm:$0xff] %vm671, %v1172
  %1347 = vst.msk [vmem:[%s1326 + $0xf1] sm:$0xff] %vm671, %v1173
  %1348 = vst.msk [vmem:[%s1326 + $0xf9] sm:$0xff] %vm671, %v1174
  %1349 = vst.msk [vmem:[%s1326 + $0x109] sm:$0xff] %vm671, %v1175
  %1350 = vst.msk [vmem:[%s1326 + $0x111] sm:$0xff] %vm671, %v1176
  %1351 = vst.msk [vmem:[%s1326 + $0x121] sm:$0xff] %vm671, %v1177
  %1352 = vst.msk [vmem:[%s1326 + $0x129] sm:$0xff] %vm671, %v1178
  %1353 = vst.msk [vmem:[%s1326 + $0x139] sm:$0xff] %vm671, %v1179
  %1354 = vst.msk [vmem:[%s1326 + $0x141] sm:$0xff] %vm671, %v1180
  %1355 = vst.msk [vmem:[%s1326 + $0x151] sm:$0xff] %vm671, %v1181
  %1356 = vst.msk [vmem:[%s1326 + $0x159] sm:$0xff] %vm671, %v1182
  %1357 = vst.msk [vmem:[%s1326 + $0x169] sm:$0xff] %vm671, %v1183
  %1358 = vst.msk [vmem:[%s1326 + $0x171] sm:$0xff] %vm671, %v1184
  %1359 = vst.msk [vmem:[%s1326 + $0x1b1] sm:$0xff] %vm671, %v1185
  %1360 = vst.msk [vmem:[%s1326 + $0x1b9] sm:$0xff] %vm671, %v1186
  %1361 = vst.msk [vmem:[%s1326 + $0x1c9] sm:$0xff] %vm671, %v1187
  %1362 = vst.msk [vmem:[%s1326 + $0x1d1] sm:$0xff] %vm671, %v1188
  %1363 = vst.msk [vmem:[%s1326 + $0x1e1] sm:$0xff] %vm671, %v1189
  %1364 = vst.msk [vmem:[%s1326 + $0x1e9] sm:$0xff] %vm671, %v1190
  %1365 = vst.msk [vmem:[%s1326 + $0x1f9] sm:$0xff] %vm671, %v1191
  %1366 = vst.msk [vmem:[%s1326 + $0x201] sm:$0xff] %vm671, %v1192
  %1367 = vst.msk [vmem:[%s1326 + $0x211] sm:$0xff] %vm671, %v1193
  %1368 = vst.msk [vmem:[%s1326 + $0x219] sm:$0xff] %vm671, %v1194
  %1369 = vst.msk [vmem:[%s1326 + $0x229] sm:$0xff] %vm671, %v1195
  %1370 = vst.msk [vmem:[%s1326 + $0x231] sm:$0xff] %vm671, %v1196
  %1371 = vst.msk [vmem:[%s1326 + $0x241] sm:$0xff] %vm671, %v1197
  %1372 = vst.msk [vmem:[%s1326 + $0x249] sm:$0xff] %vm671, %v1198
  %1373 = vst.msk [vmem:[%s1326 + $0x259] sm:$0xff] %vm671, %v1199
  %1374 = vst.msk [vmem:[%s1326 + $0x261] sm:$0xff] %vm671, %v1200
  %1375 = vst.msk [vmem:[%s1326 + $0x271] sm:$0xff] %vm671, %v1201
  %1376 = vst.msk [vmem:[%s1326 + $0x279] sm:$0xff] %vm671, %v1202
  %1377 = vst.msk [vmem:[%s1326 + $0x289] sm:$0xff] %vm671, %v1203
  %1378 = vst.msk [vmem:[%s1326 + $0x291] sm:$0xff] %vm671, %v1204
  %1379 = vst.msk [vmem:[%s1326 + $0x2a1] sm:$0xff] %vm671, %v1205
  %1380 = vst.msk [vmem:[%s1326 + $0x2a9] sm:$0xff] %vm671, %v1206
  %1381 = vst.msk [vmem:[%s1326 + $0x2b9] sm:$0xff] %vm671, %v1207
  %1382 = vst.msk [vmem:[%s1326 + $0x2c1] sm:$0xff] %vm671, %v1208
  %1383 = vst.msk [vmem:[%s1326 + $0x2d1] sm:$0xff] %vm671, %v1209
  %1384 = vst.msk [vmem:[%s1326 + $0x2d9] sm:$0xff] %vm671, %v1210
  %1385 = vst.msk [vmem:[%s1326 + $0x2e9] sm:$0xff] %vm671, %v1211
  %1386 = vst.msk [vmem:[%s1326 + $0x2f1] sm:$0xff] %vm671, %v1212
  %1387 = vst.msk [vmem:[%s1326 + $0x301] sm:$0xff] %vm671, %v1213
  %1388 = vst.msk [vmem:[%s1326 + $0x309] sm:$0xff] %vm671, %v1214
  %1389 = vst.msk [vmem:[%s1326 + $0x319] sm:$0xff] %vm671, %v1215
  %1390 = vst.msk [vmem:[%s1326 + $0x321] sm:$0xff] %vm671, %v1216
  %v1391 = vld [vmem:[#allocation2] sm:$0xff]
  %v1392 = vld [vmem:[#allocation2 + $0x8] sm:$0xff]
  %v1393 = vld [vmem:[#allocation2 + $0x18] sm:$0xff]
  %v1394 = vld [vmem:[#allocation2 + $0x20] sm:$0xff]
  %v1395 = vld [vmem:[#allocation2 + $0x30] sm:$0xff]
  %v1396 = vld [vmem:[#allocation2 + $0x38] sm:$0xff]
  %v1397 = vld [vmem:[#allocation2 + $0x48] sm:$0xff]
  %v1398 = vld [vmem:[#allocation2 + $0x50] sm:$0xff]
  %v1399 = vld [vmem:[#allocation2 + $0x60] sm:$0xff]
  %v1400 = vld [vmem:[#allocation2 + $0x68] sm:$0xff]
  %v1401 = vld [vmem:[#allocation2 + $0x78] sm:$0xff]
  %v1402 = vld [vmem:[#allocation2 + $0x80] sm:$0xff]
  %v1403 = vld [vmem:[#allocation2 + $0x90] sm:$0xff]
  %v1404 = vld [vmem:[#allocation2 + $0x98] sm:$0xff]
  %v1405 = vld [vmem:[#allocation2 + $0xa8] sm:$0xff]
  %v1406 = vld [vmem:[#allocation2 + $0xb0] sm:$0xff]
  %v1407 = vld [vmem:[#allocation2 + $0xc0] sm:$0xff]
  %v1408 = vld [vmem:[#allocation2 + $0xc8] sm:$0xff]
  %v1409 = vld [vmem:[#allocation2 + $0xd8] sm:$0xff]
  %v1410 = vld [vmem:[#allocation2 + $0xe0] sm:$0xff]
  %v1411 = vld [vmem:[#allocation2 + $0xf0] sm:$0xff]
  %v1412 = vld [vmem:[#allocation2 + $0xf8] sm:$0xff]
  %v1413 = vld [vmem:[#allocation2 + $0x108] sm:$0xff]
  %v1414 = vld [vmem:[#allocation2 + $0x110] sm:$0xff]
  %v1415 = vld [vmem:[#allocation2 + $0x120] sm:$0xff]
  %v1416 = vld [vmem:[#allocation2 + $0x128] sm:$0xff]
  %v1417 = vld [vmem:[#allocation2 + $0x138] sm:$0xff]
  %v1418 = vld [vmem:[#allocation2 + $0x140] sm:$0xff]
  %v1419 = vld [vmem:[#allocation2 + $0x150] sm:$0xff]
  %v1420 = vld [vmem:[#allocation2 + $0x158] sm:$0xff]
  %v1421 = vld [vmem:[#allocation2 + $0x168] sm:$0xff]
  %v1422 = vld [vmem:[#allocation2 + $0x170] sm:$0xff]
  %v1423 = vld [vmem:[#allocation2 + $0x1b0] sm:$0xff]
  %v1424 = vld [vmem:[#allocation2 + $0x1b8] sm:$0xff]
  %v1425 = vld [vmem:[#allocation2 + $0x1c8] sm:$0xff]
  %v1426 = vld [vmem:[#allocation2 + $0x1d0] sm:$0xff]
  %v1427 = vld [vmem:[#allocation2 + $0x1e0] sm:$0xff]
  %v1428 = vld [vmem:[#allocation2 + $0x1e8] sm:$0xff]
  %v1429 = vld [vmem:[#allocation2 + $0x1f8] sm:$0xff]
  %v1430 = vld [vmem:[#allocation2 + $0x200] sm:$0xff]
  %v1431 = vld [vmem:[#allocation2 + $0x210] sm:$0xff]
  %v1432 = vld [vmem:[#allocation2 + $0x218] sm:$0xff]
  %v1433 = vld [vmem:[#allocation2 + $0x228] sm:$0xff]
  %v1434 = vld [vmem:[#allocation2 + $0x230] sm:$0xff]
  %v1435 = vld [vmem:[#allocation2 + $0x240] sm:$0xff]
  %v1436 = vld [vmem:[#allocation2 + $0x248] sm:$0xff]
  %v1437 = vld [vmem:[#allocation2 + $0x258] sm:$0xff]
  %v1438 = vld [vmem:[#allocation2 + $0x260] sm:$0xff]
  %v1439 = vld [vmem:[#allocation2 + $0x270] sm:$0xff]
  %v1440 = vld [vmem:[#allocation2 + $0x278] sm:$0xff]
  %v1441 = vld [vmem:[#allocation2 + $0x288] sm:$0xff]
  %v1442 = vld [vmem:[#allocation2 + $0x290] sm:$0xff]
  %v1443 = vld [vmem:[#allocation2 + $0x2a0] sm:$0xff]
  %v1444 = vld [vmem:[#allocation2 + $0x2a8] sm:$0xff]
  %v1445 = vld [vmem:[#allocation2 + $0x2b8] sm:$0xff]
  %v1446 = vld [vmem:[#allocation2 + $0x2c0] sm:$0xff]
  %v1447 = vld [vmem:[#allocation2 + $0x2d0] sm:$0xff]
  %v1448 = vld [vmem:[#allocation2 + $0x2d8] sm:$0xff]
  %v1449 = vld [vmem:[#allocation2 + $0x2e8] sm:$0xff]
  %v1450 = vld [vmem:[#allocation2 + $0x2f0] sm:$0xff]
  %v1451 = vld [vmem:[#allocation2 + $0x300] sm:$0xff]
  %v1452 = vld [vmem:[#allocation2 + $0x308] sm:$0xff]
  %v1453 = vld [vmem:[#allocation2 + $0x318] sm:$0xff]
  %v1454 = vld [vmem:[#allocation2 + $0x320] sm:$0xff]
  %v1455 = vpack.c.bf16 %v1392, %v1391
  %v1456 = vpack.c.bf16 %v1394, %v1393
  %v1457 = vpack.c.bf16 %v1396, %v1395
  %v1458 = vpack.c.bf16 %v1398, %v1397
  %v1459 = vpack.c.bf16 %v1400, %v1399
  %v1460 = vpack.c.bf16 %v1402, %v1401
  %v1461 = vpack.c.bf16 %v1404, %v1403
  %v1462 = vpack.c.bf16 %v1406, %v1405
  %v1463 = vpack.c.bf16 %v1408, %v1407
  %v1464 = vpack.c.bf16 %v1410, %v1409
  %v1465 = vpack.c.bf16 %v1412, %v1411
  %v1466 = vpack.c.bf16 %v1414, %v1413
  %v1467 = vpack.c.bf16 %v1416, %v1415
  %v1468 = vpack.c.bf16 %v1418, %v1417
  %v1469 = vpack.c.bf16 %v1420, %v1419
  %v1470 = vpack.c.bf16 %v1422, %v1421
  %v1471 = vpack.c.bf16 %v1424, %v1423
  %v1472 = vpack.c.bf16 %v1426, %v1425
  %v1473 = vpack.c.bf16 %v1428, %v1427
  %v1474 = vpack.c.bf16 %v1430, %v1429
  %v1475 = vpack.c.bf16 %v1432, %v1431
  %v1476 = vpack.c.bf16 %v1434, %v1433
  %v1477 = vpack.c.bf16 %v1436, %v1435
  %v1478 = vpack.c.bf16 %v1438, %v1437
  %v1479 = vpack.c.bf16 %v1440, %v1439
  %v1480 = vpack.c.bf16 %v1442, %v1441
  %v1481 = vpack.c.bf16 %v1444, %v1443
  %v1482 = vpack.c.bf16 %v1446, %v1445
  %v1483 = vpack.c.bf16 %v1448, %v1447
  %v1484 = vpack.c.bf16 %v1450, %v1449
  %v1485 = vpack.c.bf16 %v1452, %v1451
  %v1486 = vpack.c.bf16 %v1454, %v1453
  %v1487 = vld [vmem:[%s4] sm:$0xf]
  %v1488 = vld [vmem:[%s4 + $0x4] sm:$0xf]
  %v1489 = vld [vmem:[%s4 + $0x8] sm:$0xf]
  %v1490 = vld [vmem:[%s4 + $0xc] sm:$0xf]
  %v1491 = vld [vmem:[#allocation2 + $0x1] sm:$0xff]
  %v1492 = vld [vmem:[#allocation2 + $0x9] sm:$0xff]
  %v1493 = vld [vmem:[#allocation2 + $0x19] sm:$0xff]
  %v1494 = vld [vmem:[#allocation2 + $0x21] sm:$0xff]
  %v1495 = vld [vmem:[#allocation2 + $0x31] sm:$0xff]
  %v1496 = vld [vmem:[#allocation2 + $0x39] sm:$0xff]
  %v1497 = vld [vmem:[#allocation2 + $0x49] sm:$0xff]
  %v1498 = vld [vmem:[#allocation2 + $0x51] sm:$0xff]
  %v1499 = vld [vmem:[#allocation2 + $0x61] sm:$0xff]
  %v1500 = vld [vmem:[#allocation2 + $0x69] sm:$0xff]
  %v1501 = vld [vmem:[#allocation2 + $0x79] sm:$0xff]
  %v1502 = vld [vmem:[#allocation2 + $0x81] sm:$0xff]
  %v1503 = vld [vmem:[#allocation2 + $0x91] sm:$0xff]
  %v1504 = vld [vmem:[#allocation2 + $0x99] sm:$0xff]
  %v1505 = vld [vmem:[#allocation2 + $0xa9] sm:$0xff]
  %v1506 = vld [vmem:[#allocation2 + $0xb1] sm:$0xff]
  %v1507 = vld [vmem:[#allocation2 + $0xc1] sm:$0xff]
  %v1508 = vld [vmem:[#allocation2 + $0xc9] sm:$0xff]
  %v1509 = vld [vmem:[#allocation2 + $0xd9] sm:$0xff]
  %v1510 = vld [vmem:[#allocation2 + $0xe1] sm:$0xff]
  %v1511 = vld [vmem:[#allocation2 + $0xf1] sm:$0xff]
  %v1512 = vld [vmem:[#allocation2 + $0xf9] sm:$0xff]
  %v1513 = vld [vmem:[#allocation2 + $0x109] sm:$0xff]
  %v1514 = vld [vmem:[#allocation2 + $0x111] sm:$0xff]
  %v1515 = vld [vmem:[#allocation2 + $0x121] sm:$0xff]
  %v1516 = vld [vmem:[#allocation2 + $0x129] sm:$0xff]
  %v1517 = vld [vmem:[#allocation2 + $0x139] sm:$0xff]
  %v1518 = vld [vmem:[#allocation2 + $0x141] sm:$0xff]
  %v1519 = vld [vmem:[#allocation2 + $0x151] sm:$0xff]
  %v1520 = vld [vmem:[#allocation2 + $0x159] sm:$0xff]
  %v1521 = vld [vmem:[#allocation2 + $0x169] sm:$0xff]
  %v1522 = vld [vmem:[#allocation2 + $0x171] sm:$0xff]
  %v1523 = vld [vmem:[#allocation2 + $0x1b1] sm:$0xff]
  %v1524 = vld [vmem:[#allocation2 + $0x1b9] sm:$0xff]
  %v1525 = vld [vmem:[#allocation2 + $0x1c9] sm:$0xff]
  %v1526 = vld [vmem:[#allocation2 + $0x1d1] sm:$0xff]
  %v1527 = vld [vmem:[#allocation2 + $0x1e1] sm:$0xff]
  %v1528 = vld [vmem:[#allocation2 + $0x1e9] sm:$0xff]
  %v1529 = vld [vmem:[#allocation2 + $0x1f9] sm:$0xff]
  %v1530 = vld [vmem:[#allocation2 + $0x201] sm:$0xff]
  %v1531 = vld [vmem:[#allocation2 + $0x211] sm:$0xff]
  %v1532 = vld [vmem:[#allocation2 + $0x219] sm:$0xff]
  %v1533 = vld [vmem:[#allocation2 + $0x229] sm:$0xff]
  %v1534 = vld [vmem:[#allocation2 + $0x231] sm:$0xff]
  %v1535 = vld [vmem:[#allocation2 + $0x241] sm:$0xff]
  %v1536 = vld [vmem:[#allocation2 + $0x249] sm:$0xff]
  %v1537 = vld [vmem:[#allocation2 + $0x259] sm:$0xff]
  %v1538 = vld [vmem:[#allocation2 + $0x261] sm:$0xff]
  %v1539 = vld [vmem:[#allocation2 + $0x271] sm:$0xff]
  %v1540 = vld [vmem:[#allocation2 + $0x279] sm:$0xff]
  %v1541 = vld [vmem:[#allocation2 + $0x289] sm:$0xff]
  %v1542 = vld [vmem:[#allocation2 + $0x291] sm:$0xff]
  %v1543 = vld [vmem:[#allocation2 + $0x2a1] sm:$0xff]
  %v1544 = vld [vmem:[#allocation2 + $0x2a9] sm:$0xff]
  %v1545 = vld [vmem:[#allocation2 + $0x2b9] sm:$0xff]
  %v1546 = vld [vmem:[#allocation2 + $0x2c1] sm:$0xff]
  %v1547 = vld [vmem:[#allocation2 + $0x2d1] sm:$0xff]
  %v1548 = vld [vmem:[#allocation2 + $0x2d9] sm:$0xff]
  %v1549 = vld [vmem:[#allocation2 + $0x2e9] sm:$0xff]
  %v1550 = vld [vmem:[#allocation2 + $0x2f1] sm:$0xff]
  %v1551 = vld [vmem:[#allocation2 + $0x301] sm:$0xff]
  %v1552 = vld [vmem:[#allocation2 + $0x309] sm:$0xff]
  %v1553 = vld [vmem:[#allocation2 + $0x319] sm:$0xff]
  %v1554 = vld [vmem:[#allocation2 + $0x321] sm:$0xff]
  %v1555 = vpack.c.bf16 %v1492, %v1491
  %v1556 = vpack.c.bf16 %v1494, %v1493
  %v1557 = vpack.c.bf16 %v1496, %v1495
  %v1558 = vpack.c.bf16 %v1498, %v1497
  %v1559 = vpack.c.bf16 %v1500, %v1499
  %v1560 = vpack.c.bf16 %v1502, %v1501
  %v1561 = vpack.c.bf16 %v1504, %v1503
  %v1562 = vpack.c.bf16 %v1506, %v1505
  %v1563 = vpack.c.bf16 %v1508, %v1507
  %v1564 = vpack.c.bf16 %v1510, %v1509
  %v1565 = vpack.c.bf16 %v1512, %v1511
  %v1566 = vpack.c.bf16 %v1514, %v1513
  %v1567 = vpack.c.bf16 %v1516, %v1515
  %v1568 = vpack.c.bf16 %v1518, %v1517
  %v1569 = vpack.c.bf16 %v1520, %v1519
  %v1570 = vpack.c.bf16 %v1522, %v1521
  %v1571 = vpack.c.bf16 %v1524, %v1523
  %v1572 = vpack.c.bf16 %v1526, %v1525
  %v1573 = vpack.c.bf16 %v1528, %v1527
  %v1574 = vpack.c.bf16 %v1530, %v1529
  %v1575 = vpack.c.bf16 %v1532, %v1531
  %v1576 = vpack.c.bf16 %v1534, %v1533
  %v1577 = vpack.c.bf16 %v1536, %v1535
  %v1578 = vpack.c.bf16 %v1538, %v1537
  %v1579 = vpack.c.bf16 %v1540, %v1539
  %v1580 = vpack.c.bf16 %v1542, %v1541
  %v1581 = vpack.c.bf16 %v1544, %v1543
  %v1582 = vpack.c.bf16 %v1546, %v1545
  %v1583 = vpack.c.bf16 %v1548, %v1547
  %v1584 = vpack.c.bf16 %v1550, %v1549
  %v1585 = vpack.c.bf16 %v1552, %v1551
  %v1586 = vpack.c.bf16 %v1554, %v1553
  %s1587 = scalar_lea.vmem %s4, 16
  %v1588 = vld [vmem:[%s1587] sm:$0xf]
  %v1589 = vld [vmem:[%s1587 + $0x4] sm:$0xf]
  %v1590 = vld [vmem:[%s1587 + $0x8] sm:$0xf]
  %v1591 = vld [vmem:[%s1587 + $0xc] sm:$0xf]
  %v1596 = vunpack.c.l.b16 %v1588
  %v1597 = vunpack.c.l.b16 %v1589
  %v1598 = vunpack.c.l.b16 %v1590
  %v1599 = vunpack.c.l.b16 %v1591
  %v1600 = vpack.c.b16 %v1597, %v1596
  %v1601 = vpack.c.b16 %v1599, %v1598
  %v1605 = vsel %vm671, %v1555, 0
  %v1608 = vsel %vm671, %v1556, 0
  %v1611 = vsel %vm671, %v1557, 0
  %v1614 = vsel %vm671, %v1558, 0
  %v1617 = vsel %vm671, %v1559, 0
  %v1620 = vsel %vm671, %v1560, 0
  %v1623 = vsel %vm671, %v1561, 0
  %v1626 = vsel %vm671, %v1562, 0
  %v1629 = vsel %vm671, %v1563, 0
  %v1632 = vsel %vm671, %v1564, 0
  %v1635 = vsel %vm671, %v1565, 0
  %v1638 = vsel %vm671, %v1566, 0
  %v1641 = vsel %vm671, %v1567, 0
  %v1644 = vsel %vm671, %v1568, 0
  %v1647 = vsel %vm671, %v1569, 0
  %v1650 = vsel %vm671, %v1570, 0
  %v1653 = vsel %vm671, %v1571, 0
  %v1656 = vsel %vm671, %v1572, 0
  %v1659 = vsel %vm671, %v1573, 0
  %v1662 = vsel %vm671, %v1574, 0
  %v1665 = vsel %vm671, %v1575, 0
  %v1668 = vsel %vm671, %v1576, 0
  %v1671 = vsel %vm671, %v1577, 0
  %v1674 = vsel %vm671, %v1578, 0
  %v1677 = vsel %vm671, %v1579, 0
  %v1680 = vsel %vm671, %v1580, 0
  %v1683 = vsel %vm671, %v1581, 0
  %v1686 = vsel %vm671, %v1582, 0
  %v1689 = vsel %vm671, %v1583, 0
  %v1692 = vsel %vm671, %v1584, 0
  %v1695 = vsel %vm671, %v1585, 0
  %v1698 = vsel %vm671, %v1586, 0
  %1700 = vmatprep.subr.bf16.mxu0 0
  %1701 = vmatpush1.bf16.msra.mxu0 0
  %1702 = vmatprep.subr.bf16.mxu0 0
  %1703 = vmatpush1.bf16.msra.mxu0 0
  %1704 = vmatprep.subr.bf16.mxu0 0
  %1705 = vmatpush1.bf16.msra.mxu0 0
  %1706 = vmatprep.subr.bf16.mxu0 0
  %1707 = vmatpush1.bf16.msra.mxu0 0
  %1708 = vmatprep.subr.bf16.mxu0 0
  %1709 = vmatpush1.bf16.msra.mxu0 0
  %1710 = vmatprep.subr.bf16.mxu0 0
  %1711 = vmatpush1.bf16.msra.mxu0 0
  %1712 = vmatprep.subr.bf16.mxu0 0
  %1713 = vmatpush1.bf16.msra.mxu0 %v1601
  %1714 = vmatprep.subr.bf16.mxu0 0
  %1715 = vmatpush1.bf16.msra.mxu0 %v1600
  %1716 = vmatprep.subr.bf16.mxu0 0
  %1717 = vmatpush2.bf16.msra.mxu0 0
  %1718 = vmatprep.subr.bf16.mxu0 0
  %1719 = vmatpush2.bf16.msra.mxu0 0
  %1720 = vmatprep.subr.bf16.mxu0 0
  %1721 = vmatpush2.bf16.msra.mxu0 0
  %1722 = vmatprep.subr.bf16.mxu0 0
  %1723 = vmatpush2.bf16.msra.mxu0 0
  %1724 = vmatprep.subr.bf16.mxu0 0
  %1725 = vmatpush2.bf16.msra.mxu0 0
  %1726 = vmatprep.subr.bf16.mxu0 0
  %1727 = vmatpush2.bf16.msra.mxu0 0
  %1728 = vmatprep.subr.bf16.mxu0 0
  %1729 = vmatpush2.bf16.msra.mxu0 0
  %1730 = vmatprep.subr.bf16.mxu0 0
  %1731 = vmatpush2.bf16.msra.mxu0 0
  %1732 = vmatprep.mubr.bf16.mxu0 0
  %1733 = vmatmul.mubr.bf16.gmra.mxu0 %v1605
  %v1734 = vpop.f32.mrf.mxu0
  %v1735 = vadd.f32 0.0, %v1734
  %v1736 = vpop.f32.mrf.mxu0
  %v1737 = vpop.f32.mrf.mxu0
  %v1738 = vadd.f32 0.0, %v1737
  %v1739 = vpop.f32.mrf.mxu0
  %1740 = vmatprep.mubr.bf16.mxu0 0
  %1741 = vmatmul.mubr.bf16.gmra.mxu0 %v1608
  %v1742 = vpop.f32.mrf.mxu0
  %v1743 = vadd.f32 0.0, %v1742
  %v1744 = vpop.f32.mrf.mxu0
  %v1745 = vpop.f32.mrf.mxu0
  %v1746 = vadd.f32 0.0, %v1745
  %v1747 = vpop.f32.mrf.mxu0
  %1748 = vmatprep.mubr.bf16.mxu0 0
  %1749 = vmatmul.mubr.bf16.gmra.mxu0 %v1611
  %v1750 = vpop.f32.mrf.mxu0
  %v1751 = vadd.f32 0.0, %v1750
  %v1752 = vpop.f32.mrf.mxu0
  %v1753 = vpop.f32.mrf.mxu0
  %v1754 = vadd.f32 0.0, %v1753
  %v1755 = vpop.f32.mrf.mxu0
  %1756 = vmatprep.mubr.bf16.mxu0 0
  %1757 = vmatmul.mubr.bf16.gmra.mxu0 %v1614
  %v1758 = vpop.f32.mrf.mxu0
  %v1759 = vadd.f32 0.0, %v1758
  %v1760 = vpop.f32.mrf.mxu0
  %v1761 = vpop.f32.mrf.mxu0
  %v1762 = vadd.f32 0.0, %v1761
  %v1763 = vpop.f32.mrf.mxu0
  %1764 = vmatprep.mubr.bf16.mxu0 0
  %1765 = vmatmul.mubr.bf16.gmra.mxu0 %v1617
  %v1766 = vpop.f32.mrf.mxu0
  %v1767 = vadd.f32 0.0, %v1766
  %v1768 = vpop.f32.mrf.mxu0
  %v1769 = vpop.f32.mrf.mxu0
  %v1770 = vadd.f32 0.0, %v1769
  %v1771 = vpop.f32.mrf.mxu0
  %1772 = vmatprep.mubr.bf16.mxu0 0
  %1773 = vmatmul.mubr.bf16.gmra.mxu0 %v1620
  %v1774 = vpop.f32.mrf.mxu0
  %v1775 = vadd.f32 0.0, %v1774
  %v1776 = vpop.f32.mrf.mxu0
  %v1777 = vpop.f32.mrf.mxu0
  %v1778 = vadd.f32 0.0, %v1777
  %v1779 = vpop.f32.mrf.mxu0
  %1780 = vmatprep.mubr.bf16.mxu0 0
  %1781 = vmatmul.mubr.bf16.gmra.mxu0 %v1623
  %v1782 = vpop.f32.mrf.mxu0
  %v1783 = vadd.f32 0.0, %v1782
  %v1784 = vpop.f32.mrf.mxu0
  %v1785 = vpop.f32.mrf.mxu0
  %v1786 = vadd.f32 0.0, %v1785
  %v1787 = vpop.f32.mrf.mxu0
  %1788 = vmatprep.mubr.bf16.mxu0 0
  %1789 = vmatmul.mubr.bf16.gmra.mxu0 %v1626
  %v1790 = vpop.f32.mrf.mxu0
  %v1791 = vadd.f32 0.0, %v1790
  %v1792 = vpop.f32.mrf.mxu0
  %v1793 = vpop.f32.mrf.mxu0
  %v1794 = vadd.f32 0.0, %v1793
  %v1795 = vpop.f32.mrf.mxu0
  %1796 = vmatprep.mubr.bf16.mxu0 0
  %1797 = vmatmul.mubr.bf16.gmra.mxu0 %v1629
  %v1798 = vpop.f32.mrf.mxu0
  %v1799 = vadd.f32 0.0, %v1798
  %v1800 = vpop.f32.mrf.mxu0
  %v1801 = vpop.f32.mrf.mxu0
  %v1802 = vadd.f32 0.0, %v1801
  %v1803 = vpop.f32.mrf.mxu0
  %1804 = vmatprep.mubr.bf16.mxu0 0
  %1805 = vmatmul.mubr.bf16.gmra.mxu0 %v1632
  %v1806 = vpop.f32.mrf.mxu0
  %v1807 = vadd.f32 0.0, %v1806
  %v1808 = vpop.f32.mrf.mxu0
  %v1809 = vpop.f32.mrf.mxu0
  %v1810 = vadd.f32 0.0, %v1809
  %v1811 = vpop.f32.mrf.mxu0
  %1812 = vmatprep.mubr.bf16.mxu0 0
  %1813 = vmatmul.mubr.bf16.gmra.mxu0 %v1635
  %v1814 = vpop.f32.mrf.mxu0
  %v1815 = vadd.f32 0.0, %v1814
  %v1816 = vpop.f32.mrf.mxu0
  %v1817 = vpop.f32.mrf.mxu0
  %v1818 = vadd.f32 0.0, %v1817
  %v1819 = vpop.f32.mrf.mxu0
  %1820 = vmatprep.mubr.bf16.mxu0 0
  %1821 = vmatmul.mubr.bf16.gmra.mxu0 %v1638
  %v1822 = vpop.f32.mrf.mxu0
  %v1823 = vadd.f32 0.0, %v1822
  %v1824 = vpop.f32.mrf.mxu0
  %v1825 = vpop.f32.mrf.mxu0
  %v1826 = vadd.f32 0.0, %v1825
  %v1827 = vpop.f32.mrf.mxu0
  %1828 = vmatprep.mubr.bf16.mxu0 0
  %1829 = vmatmul.mubr.bf16.gmra.mxu0 %v1641
  %v1830 = vpop.f32.mrf.mxu0
  %v1831 = vadd.f32 0.0, %v1830
  %v1832 = vpop.f32.mrf.mxu0
  %v1833 = vpop.f32.mrf.mxu0
  %v1834 = vadd.f32 0.0, %v1833
  %v1835 = vpop.f32.mrf.mxu0
  %1836 = vmatprep.mubr.bf16.mxu0 0
  %1837 = vmatmul.mubr.bf16.gmra.mxu0 %v1644
  %v1838 = vpop.f32.mrf.mxu0
  %v1839 = vadd.f32 0.0, %v1838
  %v1840 = vpop.f32.mrf.mxu0
  %v1841 = vpop.f32.mrf.mxu0
  %v1842 = vadd.f32 0.0, %v1841
  %v1843 = vpop.f32.mrf.mxu0
  %1844 = vmatprep.mubr.bf16.mxu0 0
  %1845 = vmatmul.mubr.bf16.gmra.mxu0 %v1647
  %v1846 = vpop.f32.mrf.mxu0
  %v1847 = vadd.f32 0.0, %v1846
  %v1848 = vpop.f32.mrf.mxu0
  %v1849 = vpop.f32.mrf.mxu0
  %v1850 = vadd.f32 0.0, %v1849
  %v1851 = vpop.f32.mrf.mxu0
  %1852 = vmatprep.mubr.bf16.mxu0 0
  %1853 = vmatmul.mubr.bf16.gmra.mxu0 %v1650
  %v1854 = vpop.f32.mrf.mxu0
  %v1855 = vadd.f32 0.0, %v1854
  %v1856 = vpop.f32.mrf.mxu0
  %v1857 = vpop.f32.mrf.mxu0
  %v1858 = vadd.f32 0.0, %v1857
  %v1859 = vpop.f32.mrf.mxu0
  %1860 = vmatprep.mubr.bf16.mxu0 0
  %1861 = vmatmul.mubr.bf16.gmra.mxu0 %v1653
  %v1862 = vpop.f32.mrf.mxu0
  %v1863 = vadd.f32 0.0, %v1862
  %v1864 = vpop.f32.mrf.mxu0
  %v1865 = vpop.f32.mrf.mxu0
  %v1866 = vadd.f32 0.0, %v1865
  %v1867 = vpop.f32.mrf.mxu0
  %1868 = vmatprep.mubr.bf16.mxu0 0
  %1869 = vmatmul.mubr.bf16.gmra.mxu0 %v1656
  %v1870 = vpop.f32.mrf.mxu0
  %v1871 = vadd.f32 0.0, %v1870
  %v1872 = vpop.f32.mrf.mxu0
  %v1873 = vpop.f32.mrf.mxu0
  %v1874 = vadd.f32 0.0, %v1873
  %v1875 = vpop.f32.mrf.mxu0
  %1876 = vmatprep.mubr.bf16.mxu0 0
  %1877 = vmatmul.mubr.bf16.gmra.mxu0 %v1659
  %v1878 = vpop.f32.mrf.mxu0
  %v1879 = vadd.f32 0.0, %v1878
  %v1880 = vpop.f32.mrf.mxu0
  %v1881 = vpop.f32.mrf.mxu0
  %v1882 = vadd.f32 0.0, %v1881
  %v1883 = vpop.f32.mrf.mxu0
  %1884 = vmatprep.mubr.bf16.mxu0 0
  %1885 = vmatmul.mubr.bf16.gmra.mxu0 %v1662
  %v1886 = vpop.f32.mrf.mxu0
  %v1887 = vadd.f32 0.0, %v1886
  %v1888 = vpop.f32.mrf.mxu0
  %v1889 = vpop.f32.mrf.mxu0
  %v1890 = vadd.f32 0.0, %v1889
  %v1891 = vpop.f32.mrf.mxu0
  %1892 = vmatprep.mubr.bf16.mxu0 0
  %1893 = vmatmul.mubr.bf16.gmra.mxu0 %v1665
  %v1894 = vpop.f32.mrf.mxu0
  %v1895 = vadd.f32 0.0, %v1894
  %v1896 = vpop.f32.mrf.mxu0
  %v1897 = vpop.f32.mrf.mxu0
  %v1898 = vadd.f32 0.0, %v1897
  %v1899 = vpop.f32.mrf.mxu0
  %1900 = vmatprep.mubr.bf16.mxu0 0
  %1901 = vmatmul.mubr.bf16.gmra.mxu0 %v1668
  %v1902 = vpop.f32.mrf.mxu0
  %v1903 = vadd.f32 0.0, %v1902
  %v1904 = vpop.f32.mrf.mxu0
  %v1905 = vpop.f32.mrf.mxu0
  %v1906 = vadd.f32 0.0, %v1905
  %v1907 = vpop.f32.mrf.mxu0
  %1908 = vmatprep.mubr.bf16.mxu0 0
  %1909 = vmatmul.mubr.bf16.gmra.mxu0 %v1671
  %v1910 = vpop.f32.mrf.mxu0
  %v1911 = vadd.f32 0.0, %v1910
  %v1912 = vpop.f32.mrf.mxu0
  %v1913 = vpop.f32.mrf.mxu0
  %v1914 = vadd.f32 0.0, %v1913
  %v1915 = vpop.f32.mrf.mxu0
  %1916 = vmatprep.mubr.bf16.mxu0 0
  %1917 = vmatmul.mubr.bf16.gmra.mxu0 %v1674
  %v1918 = vpop.f32.mrf.mxu0
  %v1919 = vadd.f32 0.0, %v1918
  %v1920 = vpop.f32.mrf.mxu0
  %v1921 = vpop.f32.mrf.mxu0
  %v1922 = vadd.f32 0.0, %v1921
  %v1923 = vpop.f32.mrf.mxu0
  %1924 = vmatprep.mubr.bf16.mxu0 0
  %1925 = vmatmul.mubr.bf16.gmra.mxu0 %v1677
  %v1926 = vpop.f32.mrf.mxu0
  %v1927 = vadd.f32 0.0, %v1926
  %v1928 = vpop.f32.mrf.mxu0
  %v1929 = vpop.f32.mrf.mxu0
  %v1930 = vadd.f32 0.0, %v1929
  %v1931 = vpop.f32.mrf.mxu0
  %1932 = vmatprep.mubr.bf16.mxu0 0
  %1933 = vmatmul.mubr.bf16.gmra.mxu0 %v1680
  %v1934 = vpop.f32.mrf.mxu0
  %v1935 = vadd.f32 0.0, %v1934
  %v1936 = vpop.f32.mrf.mxu0
  %v1937 = vpop.f32.mrf.mxu0
  %v1938 = vadd.f32 0.0, %v1937
  %v1939 = vpop.f32.mrf.mxu0
  %1940 = vmatprep.mubr.bf16.mxu0 0
  %1941 = vmatmul.mubr.bf16.gmra.mxu0 %v1683
  %v1942 = vpop.f32.mrf.mxu0
  %v1943 = vadd.f32 0.0, %v1942
  %v1944 = vpop.f32.mrf.mxu0
  %v1945 = vpop.f32.mrf.mxu0
  %v1946 = vadd.f32 0.0, %v1945
  %v1947 = vpop.f32.mrf.mxu0
  %1948 = vmatprep.mubr.bf16.mxu0 0
  %1949 = vmatmul.mubr.bf16.gmra.mxu0 %v1686
  %v1950 = vpop.f32.mrf.mxu0
  %v1951 = vadd.f32 0.0, %v1950
  %v1952 = vpop.f32.mrf.mxu0
  %v1953 = vpop.f32.mrf.mxu0
  %v1954 = vadd.f32 0.0, %v1953
  %v1955 = vpop.f32.mrf.mxu0
  %1956 = vmatprep.mubr.bf16.mxu0 0
  %1957 = vmatmul.mubr.bf16.gmra.mxu0 %v1689
  %v1958 = vpop.f32.mrf.mxu0
  %v1959 = vadd.f32 0.0, %v1958
  %v1960 = vpop.f32.mrf.mxu0
  %v1961 = vpop.f32.mrf.mxu0
  %v1962 = vadd.f32 0.0, %v1961
  %v1963 = vpop.f32.mrf.mxu0
  %1964 = vmatprep.mubr.bf16.mxu0 0
  %1965 = vmatmul.mubr.bf16.gmra.mxu0 %v1692
  %v1966 = vpop.f32.mrf.mxu0
  %v1967 = vadd.f32 0.0, %v1966
  %v1968 = vpop.f32.mrf.mxu0
  %v1969 = vpop.f32.mrf.mxu0
  %v1970 = vadd.f32 0.0, %v1969
  %v1971 = vpop.f32.mrf.mxu0
  %1972 = vmatprep.mubr.bf16.mxu0 0
  %1973 = vmatmul.mubr.bf16.gmra.mxu0 %v1695
  %v1974 = vpop.f32.mrf.mxu0
  %v1975 = vadd.f32 0.0, %v1974
  %v1976 = vpop.f32.mrf.mxu0
  %v1977 = vpop.f32.mrf.mxu0
  %v1978 = vadd.f32 0.0, %v1977
  %v1979 = vpop.f32.mrf.mxu0
  %1980 = vmatprep.mubr.bf16.mxu0 0
  %1981 = vmatmul.mubr.bf16.gmra.mxu0 %v1698
  %v1982 = vpop.f32.mrf.mxu0
  %v1983 = vadd.f32 0.0, %v1982
  %v1984 = vpop.f32.mrf.mxu0
  %v1985 = vpop.f32.mrf.mxu0
  %v1986 = vadd.f32 0.0, %v1985
  %v1987 = vpop.f32.mrf.mxu0
  %1988 = vdwg.mxu0
  %v1993 = vunpack.c.l.b16 %v1487
  %v1994 = vunpack.c.l.b16 %v1488
  %v1995 = vunpack.c.l.b16 %v1489
  %v1996 = vunpack.c.l.b16 %v1490
  %v1997 = vpack.c.b16 %v1994, %v1993
  %v1998 = vpack.c.b16 %v1996, %v1995
  %v2002 = vsel %vm671, %v1455, 0
  %v2005 = vsel %vm671, %v1456, 0
  %v2008 = vsel %vm671, %v1457, 0
  %v2011 = vsel %vm671, %v1458, 0
  %v2014 = vsel %vm671, %v1459, 0
  %v2017 = vsel %vm671, %v1460, 0
  %v2020 = vsel %vm671, %v1461, 0
  %v2023 = vsel %vm671, %v1462, 0
  %v2026 = vsel %vm671, %v1463, 0
  %v2029 = vsel %vm671, %v1464, 0
  %v2032 = vsel %vm671, %v1465, 0
  %v2035 = vsel %vm671, %v1466, 0
  %v2038 = vsel %vm671, %v1467, 0
  %v2041 = vsel %vm671, %v1468, 0
  %v2044 = vsel %vm671, %v1469, 0
  %v2047 = vsel %vm671, %v1470, 0
  %v2050 = vsel %vm671, %v1471, 0
  %v2053 = vsel %vm671, %v1472, 0
  %v2056 = vsel %vm671, %v1473, 0
  %v2059 = vsel %vm671, %v1474, 0
  %v2062 = vsel %vm671, %v1475, 0
  %v2065 = vsel %vm671, %v1476, 0
  %v2068 = vsel %vm671, %v1477, 0
  %v2071 = vsel %vm671, %v1478, 0
  %v2074 = vsel %vm671, %v1479, 0
  %v2077 = vsel %vm671, %v1480, 0
  %v2080 = vsel %vm671, %v1481, 0
  %v2083 = vsel %vm671, %v1482, 0
  %v2086 = vsel %vm671, %v1483, 0
  %v2089 = vsel %vm671, %v1484, 0
  %v2092 = vsel %vm671, %v1485, 0
  %v2095 = vsel %vm671, %v1486, 0
  %2097 = vmatprep.subr.bf16.mxu0 0
  %2098 = vmatpush1.bf16.msra.mxu0 0
  %2099 = vmatprep.subr.bf16.mxu0 0
  %2100 = vmatpush1.bf16.msra.mxu0 0
  %2101 = vmatprep.subr.bf16.mxu0 0
  %2102 = vmatpush1.bf16.msra.mxu0 0
  %2103 = vmatprep.subr.bf16.mxu0 0
  %2104 = vmatpush1.bf16.msra.mxu0 0
  %2105 = vmatprep.subr.bf16.mxu0 0
  %2106 = vmatpush1.bf16.msra.mxu0 0
  %2107 = vmatprep.subr.bf16.mxu0 0
  %2108 = vmatpush1.bf16.msra.mxu0 0
  %2109 = vmatprep.subr.bf16.mxu0 0
  %2110 = vmatpush1.bf16.msra.mxu0 %v1998
  %2111 = vmatprep.subr.bf16.mxu0 0
  %2112 = vmatpush1.bf16.msra.mxu0 %v1997
  %2113 = vmatprep.subr.bf16.mxu0 0
  %2114 = vmatpush2.bf16.msra.mxu0 0
  %2115 = vmatprep.subr.bf16.mxu0 0
  %2116 = vmatpush2.bf16.msra.mxu0 0
  %2117 = vmatprep.subr.bf16.mxu0 0
  %2118 = vmatpush2.bf16.msra.mxu0 0
  %2119 = vmatprep.subr.bf16.mxu0 0
  %2120 = vmatpush2.bf16.msra.mxu0 0
  %2121 = vmatprep.subr.bf16.mxu0 0
  %2122 = vmatpush2.bf16.msra.mxu0 0
  %2123 = vmatprep.subr.bf16.mxu0 0
  %2124 = vmatpush2.bf16.msra.mxu0 0
  %2125 = vmatprep.subr.bf16.mxu0 0
  %2126 = vmatpush2.bf16.msra.mxu0 0
  %2127 = vmatprep.subr.bf16.mxu0 0
  %2128 = vmatpush2.bf16.msra.mxu0 0
  %2129 = vmatprep.mubr.bf16.mxu0 0
  %2130 = vmatmul.mubr.bf16.gmra.mxu0 %v2002
  %v2131 = vpop.f32.mrf.mxu0
  %v2132 = vadd.f32 %v1735, %v2131
  %v2133 = vpop.f32.mrf.mxu0
  %v2134 = vpop.f32.mrf.mxu0
  %v2135 = vadd.f32 %v1738, %v2134
  %v2136 = vpop.f32.mrf.mxu0
  %2137 = vmatprep.mubr.bf16.mxu0 0
  %2138 = vmatmul.mubr.bf16.gmra.mxu0 %v2005
  %v2139 = vpop.f32.mrf.mxu0
  %v2140 = vadd.f32 %v1743, %v2139
  %v2141 = vpop.f32.mrf.mxu0
  %v2142 = vpop.f32.mrf.mxu0
  %v2143 = vadd.f32 %v1746, %v2142
  %v2144 = vpop.f32.mrf.mxu0
  %2145 = vmatprep.mubr.bf16.mxu0 0
  %2146 = vmatmul.mubr.bf16.gmra.mxu0 %v2008
  %v2147 = vpop.f32.mrf.mxu0
  %v2148 = vadd.f32 %v1751, %v2147
  %v2149 = vpop.f32.mrf.mxu0
  %v2150 = vpop.f32.mrf.mxu0
  %v2151 = vadd.f32 %v1754, %v2150
  %v2152 = vpop.f32.mrf.mxu0
  %2153 = vmatprep.mubr.bf16.mxu0 0
  %2154 = vmatmul.mubr.bf16.gmra.mxu0 %v2011
  %v2155 = vpop.f32.mrf.mxu0
  %v2156 = vadd.f32 %v1759, %v2155
  %v2157 = vpop.f32.mrf.mxu0
  %v2158 = vpop.f32.mrf.mxu0
  %v2159 = vadd.f32 %v1762, %v2158
  %v2160 = vpop.f32.mrf.mxu0
  %2161 = vmatprep.mubr.bf16.mxu0 0
  %2162 = vmatmul.mubr.bf16.gmra.mxu0 %v2014
  %v2163 = vpop.f32.mrf.mxu0
  %v2164 = vadd.f32 %v1767, %v2163
  %v2165 = vpop.f32.mrf.mxu0
  %v2166 = vpop.f32.mrf.mxu0
  %v2167 = vadd.f32 %v1770, %v2166
  %v2168 = vpop.f32.mrf.mxu0
  %2169 = vmatprep.mubr.bf16.mxu0 0
  %2170 = vmatmul.mubr.bf16.gmra.mxu0 %v2017
  %v2171 = vpop.f32.mrf.mxu0
  %v2172 = vadd.f32 %v1775, %v2171
  %v2173 = vpop.f32.mrf.mxu0
  %v2174 = vpop.f32.mrf.mxu0
  %v2175 = vadd.f32 %v1778, %v2174
  %v2176 = vpop.f32.mrf.mxu0
  %2177 = vmatprep.mubr.bf16.mxu0 0
  %2178 = vmatmul.mubr.bf16.gmra.mxu0 %v2020
  %v2179 = vpop.f32.mrf.mxu0
  %v2180 = vadd.f32 %v1783, %v2179
  %v2181 = vpop.f32.mrf.mxu0
  %v2182 = vpop.f32.mrf.mxu0
  %v2183 = vadd.f32 %v1786, %v2182
  %v2184 = vpop.f32.mrf.mxu0
  %2185 = vmatprep.mubr.bf16.mxu0 0
  %2186 = vmatmul.mubr.bf16.gmra.mxu0 %v2023
  %v2187 = vpop.f32.mrf.mxu0
  %v2188 = vadd.f32 %v1791, %v2187
  %v2189 = vpop.f32.mrf.mxu0
  %v2190 = vpop.f32.mrf.mxu0
  %v2191 = vadd.f32 %v1794, %v2190
  %v2192 = vpop.f32.mrf.mxu0
  %2193 = vmatprep.mubr.bf16.mxu0 0
  %2194 = vmatmul.mubr.bf16.gmra.mxu0 %v2026
  %v2195 = vpop.f32.mrf.mxu0
  %v2196 = vadd.f32 %v1799, %v2195
  %v2197 = vpop.f32.mrf.mxu0
  %v2198 = vpop.f32.mrf.mxu0
  %v2199 = vadd.f32 %v1802, %v2198
  %v2200 = vpop.f32.mrf.mxu0
  %2201 = vmatprep.mubr.bf16.mxu0 0
  %2202 = vmatmul.mubr.bf16.gmra.mxu0 %v2029
  %v2203 = vpop.f32.mrf.mxu0
  %v2204 = vadd.f32 %v1807, %v2203
  %v2205 = vpop.f32.mrf.mxu0
  %v2206 = vpop.f32.mrf.mxu0
  %v2207 = vadd.f32 %v1810, %v2206
  %v2208 = vpop.f32.mrf.mxu0
  %2209 = vmatprep.mubr.bf16.mxu0 0
  %2210 = vmatmul.mubr.bf16.gmra.mxu0 %v2032
  %v2211 = vpop.f32.mrf.mxu0
  %v2212 = vadd.f32 %v1815, %v2211
  %v2213 = vpop.f32.mrf.mxu0
  %v2214 = vpop.f32.mrf.mxu0
  %v2215 = vadd.f32 %v1818, %v2214
  %v2216 = vpop.f32.mrf.mxu0
  %2217 = vmatprep.mubr.bf16.mxu0 0
  %2218 = vmatmul.mubr.bf16.gmra.mxu0 %v2035
  %v2219 = vpop.f32.mrf.mxu0
  %v2220 = vadd.f32 %v1823, %v2219
  %v2221 = vpop.f32.mrf.mxu0
  %v2222 = vpop.f32.mrf.mxu0
  %v2223 = vadd.f32 %v1826, %v2222
  %v2224 = vpop.f32.mrf.mxu0
  %2225 = vmatprep.mubr.bf16.mxu0 0
  %2226 = vmatmul.mubr.bf16.gmra.mxu0 %v2038
  %v2227 = vpop.f32.mrf.mxu0
  %v2228 = vadd.f32 %v1831, %v2227
  %v2229 = vpop.f32.mrf.mxu0
  %v2230 = vpop.f32.mrf.mxu0
  %v2231 = vadd.f32 %v1834, %v2230
  %v2232 = vpop.f32.mrf.mxu0
  %2233 = vmatprep.mubr.bf16.mxu0 0
  %2234 = vmatmul.mubr.bf16.gmra.mxu0 %v2041
  %v2235 = vpop.f32.mrf.mxu0
  %v2236 = vadd.f32 %v1839, %v2235
  %v2237 = vpop.f32.mrf.mxu0
  %v2238 = vpop.f32.mrf.mxu0
  %v2239 = vadd.f32 %v1842, %v2238
  %v2240 = vpop.f32.mrf.mxu0
  %2241 = vmatprep.mubr.bf16.mxu0 0
  %2242 = vmatmul.mubr.bf16.gmra.mxu0 %v2044
  %v2243 = vpop.f32.mrf.mxu0
  %v2244 = vadd.f32 %v1847, %v2243
  %v2245 = vpop.f32.mrf.mxu0
  %v2246 = vpop.f32.mrf.mxu0
  %v2247 = vadd.f32 %v1850, %v2246
  %v2248 = vpop.f32.mrf.mxu0
  %2249 = vmatprep.mubr.bf16.mxu0 0
  %2250 = vmatmul.mubr.bf16.gmra.mxu0 %v2047
  %v2251 = vpop.f32.mrf.mxu0
  %v2252 = vadd.f32 %v1855, %v2251
  %v2253 = vpop.f32.mrf.mxu0
  %v2254 = vpop.f32.mrf.mxu0
  %v2255 = vadd.f32 %v1858, %v2254
  %v2256 = vpop.f32.mrf.mxu0
  %2257 = vmatprep.mubr.bf16.mxu0 0
  %2258 = vmatmul.mubr.bf16.gmra.mxu0 %v2050
  %v2259 = vpop.f32.mrf.mxu0
  %v2260 = vadd.f32 %v1863, %v2259
  %v2261 = vpop.f32.mrf.mxu0
  %v2262 = vpop.f32.mrf.mxu0
  %v2263 = vadd.f32 %v1866, %v2262
  %v2264 = vpop.f32.mrf.mxu0
  %2265 = vmatprep.mubr.bf16.mxu0 0
  %2266 = vmatmul.mubr.bf16.gmra.mxu0 %v2053
  %v2267 = vpop.f32.mrf.mxu0
  %v2268 = vadd.f32 %v1871, %v2267
  %v2269 = vpop.f32.mrf.mxu0
  %v2270 = vpop.f32.mrf.mxu0
  %v2271 = vadd.f32 %v1874, %v2270
  %v2272 = vpop.f32.mrf.mxu0
  %2273 = vmatprep.mubr.bf16.mxu0 0
  %2274 = vmatmul.mubr.bf16.gmra.mxu0 %v2056
  %v2275 = vpop.f32.mrf.mxu0
  %v2276 = vadd.f32 %v1879, %v2275
  %v2277 = vpop.f32.mrf.mxu0
  %v2278 = vpop.f32.mrf.mxu0
  %v2279 = vadd.f32 %v1882, %v2278
  %v2280 = vpop.f32.mrf.mxu0
  %2281 = vmatprep.mubr.bf16.mxu0 0
  %2282 = vmatmul.mubr.bf16.gmra.mxu0 %v2059
  %v2283 = vpop.f32.mrf.mxu0
  %v2284 = vadd.f32 %v1887, %v2283
  %v2285 = vpop.f32.mrf.mxu0
  %v2286 = vpop.f32.mrf.mxu0
  %v2287 = vadd.f32 %v1890, %v2286
  %v2288 = vpop.f32.mrf.mxu0
  %2289 = vmatprep.mubr.bf16.mxu0 0
  %2290 = vmatmul.mubr.bf16.gmra.mxu0 %v2062
  %v2291 = vpop.f32.mrf.mxu0
  %v2292 = vadd.f32 %v1895, %v2291
  %v2293 = vpop.f32.mrf.mxu0
  %v2294 = vpop.f32.mrf.mxu0
  %v2295 = vadd.f32 %v1898, %v2294
  %v2296 = vpop.f32.mrf.mxu0
  %2297 = vmatprep.mubr.bf16.mxu0 0
  %2298 = vmatmul.mubr.bf16.gmra.mxu0 %v2065
  %v2299 = vpop.f32.mrf.mxu0
  %v2300 = vadd.f32 %v1903, %v2299
  %v2301 = vpop.f32.mrf.mxu0
  %v2302 = vpop.f32.mrf.mxu0
  %v2303 = vadd.f32 %v1906, %v2302
  %v2304 = vpop.f32.mrf.mxu0
  %2305 = vmatprep.mubr.bf16.mxu0 0
  %2306 = vmatmul.mubr.bf16.gmra.mxu0 %v2068
  %v2307 = vpop.f32.mrf.mxu0
  %v2308 = vadd.f32 %v1911, %v2307
  %v2309 = vpop.f32.mrf.mxu0
  %v2310 = vpop.f32.mrf.mxu0
  %v2311 = vadd.f32 %v1914, %v2310
  %v2312 = vpop.f32.mrf.mxu0
  %2313 = vmatprep.mubr.bf16.mxu0 0
  %2314 = vmatmul.mubr.bf16.gmra.mxu0 %v2071
  %v2315 = vpop.f32.mrf.mxu0
  %v2316 = vadd.f32 %v1919, %v2315
  %v2317 = vpop.f32.mrf.mxu0
  %v2318 = vpop.f32.mrf.mxu0
  %v2319 = vadd.f32 %v1922, %v2318
  %v2320 = vpop.f32.mrf.mxu0
  %2321 = vmatprep.mubr.bf16.mxu0 0
  %2322 = vmatmul.mubr.bf16.gmra.mxu0 %v2074
  %v2323 = vpop.f32.mrf.mxu0
  %v2324 = vadd.f32 %v1927, %v2323
  %v2325 = vpop.f32.mrf.mxu0
  %v2326 = vpop.f32.mrf.mxu0
  %v2327 = vadd.f32 %v1930, %v2326
  %v2328 = vpop.f32.mrf.mxu0
  %2329 = vmatprep.mubr.bf16.mxu0 0
  %2330 = vmatmul.mubr.bf16.gmra.mxu0 %v2077
  %v2331 = vpop.f32.mrf.mxu0
  %v2332 = vadd.f32 %v1935, %v2331
  %v2333 = vpop.f32.mrf.mxu0
  %v2334 = vpop.f32.mrf.mxu0
  %v2335 = vadd.f32 %v1938, %v2334
  %v2336 = vpop.f32.mrf.mxu0
  %2337 = vmatprep.mubr.bf16.mxu0 0
  %2338 = vmatmul.mubr.bf16.gmra.mxu0 %v2080
  %v2339 = vpop.f32.mrf.mxu0
  %v2340 = vadd.f32 %v1943, %v2339
  %v2341 = vpop.f32.mrf.mxu0
  %v2342 = vpop.f32.mrf.mxu0
  %v2343 = vadd.f32 %v1946, %v2342
  %v2344 = vpop.f32.mrf.mxu0
  %2345 = vmatprep.mubr.bf16.mxu0 0
  %2346 = vmatmul.mubr.bf16.gmra.mxu0 %v2083
  %v2347 = vpop.f32.mrf.mxu0
  %v2348 = vadd.f32 %v1951, %v2347
  %v2349 = vpop.f32.mrf.mxu0
  %v2350 = vpop.f32.mrf.mxu0
  %v2351 = vadd.f32 %v1954, %v2350
  %v2352 = vpop.f32.mrf.mxu0
  %2353 = vmatprep.mubr.bf16.mxu0 0
  %2354 = vmatmul.mubr.bf16.gmra.mxu0 %v2086
  %v2355 = vpop.f32.mrf.mxu0
  %v2356 = vadd.f32 %v1959, %v2355
  %v2357 = vpop.f32.mrf.mxu0
  %v2358 = vpop.f32.mrf.mxu0
  %v2359 = vadd.f32 %v1962, %v2358
  %v2360 = vpop.f32.mrf.mxu0
  %2361 = vmatprep.mubr.bf16.mxu0 0
  %2362 = vmatmul.mubr.bf16.gmra.mxu0 %v2089
  %v2363 = vpop.f32.mrf.mxu0
  %v2364 = vadd.f32 %v1967, %v2363
  %v2365 = vpop.f32.mrf.mxu0
  %v2366 = vpop.f32.mrf.mxu0
  %v2367 = vadd.f32 %v1970, %v2366
  %v2368 = vpop.f32.mrf.mxu0
  %2369 = vmatprep.mubr.bf16.mxu0 0
  %2370 = vmatmul.mubr.bf16.gmra.mxu0 %v2092
  %v2371 = vpop.f32.mrf.mxu0
  %v2372 = vadd.f32 %v1975, %v2371
  %v2373 = vpop.f32.mrf.mxu0
  %v2374 = vpop.f32.mrf.mxu0
  %v2375 = vadd.f32 %v1978, %v2374
  %v2376 = vpop.f32.mrf.mxu0
  %2377 = vmatprep.mubr.bf16.mxu0 0
  %2378 = vmatmul.mubr.bf16.gmra.mxu0 %v2095
  %v2379 = vpop.f32.mrf.mxu0
  %v2380 = vadd.f32 %v1983, %v2379
  %v2381 = vpop.f32.mrf.mxu0
  %v2382 = vpop.f32.mrf.mxu0
  %v2383 = vadd.f32 %v1986, %v2382
  %v2384 = vpop.f32.mrf.mxu0
  %2385 = vdwg.mxu0
  %v2386 = vld [vmem:[#allocation2 + $0x2] sm:$0xff]
  %v2387 = vld [vmem:[#allocation2 + $0xa] sm:$0xff]
  %v2388 = vld [vmem:[#allocation2 + $0x1a] sm:$0xff]
  %v2389 = vld [vmem:[#allocation2 + $0x22] sm:$0xff]
  %v2390 = vld [vmem:[#allocation2 + $0x32] sm:$0xff]
  %v2391 = vld [vmem:[#allocation2 + $0x3a] sm:$0xff]
  %v2392 = vld [vmem:[#allocation2 + $0x4a] sm:$0xff]
  %v2393 = vld [vmem:[#allocation2 + $0x52] sm:$0xff]
  %v2394 = vld [vmem:[#allocation2 + $0x62] sm:$0xff]
  %v2395 = vld [vmem:[#allocation2 + $0x6a] sm:$0xff]
  %v2396 = vld [vmem:[#allocation2 + $0x7a] sm:$0xff]
  %v2397 = vld [vmem:[#allocation2 + $0x82] sm:$0xff]
  %v2398 = vld [vmem:[#allocation2 + $0x92] sm:$0xff]
  %v2399 = vld [vmem:[#allocation2 + $0x9a] sm:$0xff]
  %v2400 = vld [vmem:[#allocation2 + $0xaa] sm:$0xff]
  %v2401 = vld [vmem:[#allocation2 + $0xb2] sm:$0xff]
  %v2402 = vld [vmem:[#allocation2 + $0xc2] sm:$0xff]
  %v2403 = vld [vmem:[#allocation2 + $0xca] sm:$0xff]
  %v2404 = vld [vmem:[#allocation2 + $0xda] sm:$0xff]
  %v2405 = vld [vmem:[#allocation2 + $0xe2] sm:$0xff]
  %v2406 = vld [vmem:[#allocation2 + $0xf2] sm:$0xff]
  %v2407 = vld [vmem:[#allocation2 + $0xfa] sm:$0xff]
  %v2408 = vld [vmem:[#allocation2 + $0x10a] sm:$0xff]
  %v2409 = vld [vmem:[#allocation2 + $0x112] sm:$0xff]
  %v2410 = vld [vmem:[#allocation2 + $0x122] sm:$0xff]
  %v2411 = vld [vmem:[#allocation2 + $0x12a] sm:$0xff]
  %v2412 = vld [vmem:[#allocation2 + $0x13a] sm:$0xff]
  %v2413 = vld [vmem:[#allocation2 + $0x142] sm:$0xff]
  %v2414 = vld [vmem:[#allocation2 + $0x152] sm:$0xff]
  %v2415 = vld [vmem:[#allocation2 + $0x15a] sm:$0xff]
  %v2416 = vld [vmem:[#allocation2 + $0x16a] sm:$0xff]
  %v2417 = vld [vmem:[#allocation2 + $0x172] sm:$0xff]
  %v2418 = vld [vmem:[#allocation2 + $0x1b2] sm:$0xff]
  %v2419 = vld [vmem:[#allocation2 + $0x1ba] sm:$0xff]
  %v2420 = vld [vmem:[#allocation2 + $0x1ca] sm:$0xff]
  %v2421 = vld [vmem:[#allocation2 + $0x1d2] sm:$0xff]
  %v2422 = vld [vmem:[#allocation2 + $0x1e2] sm:$0xff]
  %v2423 = vld [vmem:[#allocation2 + $0x1ea] sm:$0xff]
  %v2424 = vld [vmem:[#allocation2 + $0x1fa] sm:$0xff]
  %v2425 = vld [vmem:[#allocation2 + $0x202] sm:$0xff]
  %v2426 = vld [vmem:[#allocation2 + $0x212] sm:$0xff]
  %v2427 = vld [vmem:[#allocation2 + $0x21a] sm:$0xff]
  %v2428 = vld [vmem:[#allocation2 + $0x22a] sm:$0xff]
  %v2429 = vld [vmem:[#allocation2 + $0x232] sm:$0xff]
  %v2430 = vld [vmem:[#allocation2 + $0x242] sm:$0xff]
  %v2431 = vld [vmem:[#allocation2 + $0x24a] sm:$0xff]
  %v2432 = vld [vmem:[#allocation2 + $0x25a] sm:$0xff]
  %v2433 = vld [vmem:[#allocation2 + $0x262] sm:$0xff]
  %v2434 = vld [vmem:[#allocation2 + $0x272] sm:$0xff]
  %v2435 = vld [vmem:[#allocation2 + $0x27a] sm:$0xff]
  %v2436 = vld [vmem:[#allocation2 + $0x28a] sm:$0xff]
  %v2437 = vld [vmem:[#allocation2 + $0x292] sm:$0xff]
  %v2438 = vld [vmem:[#allocation2 + $0x2a2] sm:$0xff]
  %v2439 = vld [vmem:[#allocation2 + $0x2aa] sm:$0xff]
  %v2440 = vld [vmem:[#allocation2 + $0x2ba] sm:$0xff]
  %v2441 = vld [vmem:[#allocation2 + $0x2c2] sm:$0xff]
  %v2442 = vld [vmem:[#allocation2 + $0x2d2] sm:$0xff]
  %v2443 = vld [vmem:[#allocation2 + $0x2da] sm:$0xff]
  %v2444 = vld [vmem:[#allocation2 + $0x2ea] sm:$0xff]
  %v2445 = vld [vmem:[#allocation2 + $0x2f2] sm:$0xff]
  %v2446 = vld [vmem:[#allocation2 + $0x302] sm:$0xff]
  %v2447 = vld [vmem:[#allocation2 + $0x30a] sm:$0xff]
  %v2448 = vld [vmem:[#allocation2 + $0x31a] sm:$0xff]
  %v2449 = vld [vmem:[#allocation2 + $0x322] sm:$0xff]
  %v2450 = vpack.c.bf16 %v2387, %v2386
  %v2451 = vpack.c.bf16 %v2389, %v2388
  %v2452 = vpack.c.bf16 %v2391, %v2390
  %v2453 = vpack.c.bf16 %v2393, %v2392
  %v2454 = vpack.c.bf16 %v2395, %v2394
  %v2455 = vpack.c.bf16 %v2397, %v2396
  %v2456 = vpack.c.bf16 %v2399, %v2398
  %v2457 = vpack.c.bf16 %v2401, %v2400
  %v2458 = vpack.c.bf16 %v2403, %v2402
  %v2459 = vpack.c.bf16 %v2405, %v2404
  %v2460 = vpack.c.bf16 %v2407, %v2406
  %v2461 = vpack.c.bf16 %v2409, %v2408
  %v2462 = vpack.c.bf16 %v2411, %v2410
  %v2463 = vpack.c.bf16 %v2413, %v2412
  %v2464 = vpack.c.bf16 %v2415, %v2414
  %v2465 = vpack.c.bf16 %v2417, %v2416
  %v2466 = vpack.c.bf16 %v2419, %v2418
  %v2467 = vpack.c.bf16 %v2421, %v2420
  %v2468 = vpack.c.bf16 %v2423, %v2422
  %v2469 = vpack.c.bf16 %v2425, %v2424
  %v2470 = vpack.c.bf16 %v2427, %v2426
  %v2471 = vpack.c.bf16 %v2429, %v2428
  %v2472 = vpack.c.bf16 %v2431, %v2430
  %v2473 = vpack.c.bf16 %v2433, %v2432
  %v2474 = vpack.c.bf16 %v2435, %v2434
  %v2475 = vpack.c.bf16 %v2437, %v2436
  %v2476 = vpack.c.bf16 %v2439, %v2438
  %v2477 = vpack.c.bf16 %v2441, %v2440
  %v2478 = vpack.c.bf16 %v2443, %v2442
  %v2479 = vpack.c.bf16 %v2445, %v2444
  %v2480 = vpack.c.bf16 %v2447, %v2446
  %v2481 = vpack.c.bf16 %v2449, %v2448
  %s2482 = scalar_lea.vmem %s4, 32
  %v2483 = vld [vmem:[%s2482] sm:$0xf]
  %v2484 = vld [vmem:[%s2482 + $0x4] sm:$0xf]
  %v2485 = vld [vmem:[%s2482 + $0x8] sm:$0xf]
  %v2486 = vld [vmem:[%s2482 + $0xc] sm:$0xf]
  %v2491 = vunpack.c.l.b16 %v2483
  %v2492 = vunpack.c.l.b16 %v2484
  %v2493 = vunpack.c.l.b16 %v2485
  %v2494 = vunpack.c.l.b16 %v2486
  %v2495 = vpack.c.b16 %v2492, %v2491
  %v2496 = vpack.c.b16 %v2494, %v2493
  %v2500 = vsel %vm671, %v2450, 0
  %v2503 = vsel %vm671, %v2451, 0
  %v2506 = vsel %vm671, %v2452, 0
  %v2509 = vsel %vm671, %v2453, 0
  %v2512 = vsel %vm671, %v2454, 0
  %v2515 = vsel %vm671, %v2455, 0
  %v2518 = vsel %vm671, %v2456, 0
  %v2521 = vsel %vm671, %v2457, 0
  %v2524 = vsel %vm671, %v2458, 0
  %v2527 = vsel %vm671, %v2459, 0
  %v2530 = vsel %vm671, %v2460, 0
  %v2533 = vsel %vm671, %v2461, 0
  %v2536 = vsel %vm671, %v2462, 0
  %v2539 = vsel %vm671, %v2463, 0
  %v2542 = vsel %vm671, %v2464, 0
  %v2545 = vsel %vm671, %v2465, 0
  %v2548 = vsel %vm671, %v2466, 0
  %v2551 = vsel %vm671, %v2467, 0
  %v2554 = vsel %vm671, %v2468, 0
  %v2557 = vsel %vm671, %v2469, 0
  %v2560 = vsel %vm671, %v2470, 0
  %v2563 = vsel %vm671, %v2471, 0
  %v2566 = vsel %vm671, %v2472, 0
  %v2569 = vsel %vm671, %v2473, 0
  %v2572 = vsel %vm671, %v2474, 0
  %v2575 = vsel %vm671, %v2475, 0
  %v2578 = vsel %vm671, %v2476, 0
  %v2581 = vsel %vm671, %v2477, 0
  %v2584 = vsel %vm671, %v2478, 0
  %v2587 = vsel %vm671, %v2479, 0
  %v2590 = vsel %vm671, %v2480, 0
  %v2593 = vsel %vm671, %v2481, 0
  %2595 = vmatprep.subr.bf16.mxu0 0
  %2596 = vmatpush1.bf16.msra.mxu0 0
  %2597 = vmatprep.subr.bf16.mxu0 0
  %2598 = vmatpush1.bf16.msra.mxu0 0
  %2599 = vmatprep.subr.bf16.mxu0 0
  %2600 = vmatpush1.bf16.msra.mxu0 0
  %2601 = vmatprep.subr.bf16.mxu0 0
  %2602 = vmatpush1.bf16.msra.mxu0 0
  %2603 = vmatprep.subr.bf16.mxu0 0
  %2604 = vmatpush1.bf16.msra.mxu0 0
  %2605 = vmatprep.subr.bf16.mxu0 0
  %2606 = vmatpush1.bf16.msra.mxu0 0
  %2607 = vmatprep.subr.bf16.mxu0 0
  %2608 = vmatpush1.bf16.msra.mxu0 %v2496
  %2609 = vmatprep.subr.bf16.mxu0 0
  %2610 = vmatpush1.bf16.msra.mxu0 %v2495
  %2611 = vmatprep.subr.bf16.mxu0 0
  %2612 = vmatpush2.bf16.msra.mxu0 0
  %2613 = vmatprep.subr.bf16.mxu0 0
  %2614 = vmatpush2.bf16.msra.mxu0 0
  %2615 = vmatprep.subr.bf16.mxu0 0
  %2616 = vmatpush2.bf16.msra.mxu0 0
  %2617 = vmatprep.subr.bf16.mxu0 0
  %2618 = vmatpush2.bf16.msra.mxu0 0
  %2619 = vmatprep.subr.bf16.mxu0 0
  %2620 = vmatpush2.bf16.msra.mxu0 0
  %2621 = vmatprep.subr.bf16.mxu0 0
  %2622 = vmatpush2.bf16.msra.mxu0 0
  %2623 = vmatprep.subr.bf16.mxu0 0
  %2624 = vmatpush2.bf16.msra.mxu0 0
  %2625 = vmatprep.subr.bf16.mxu0 0
  %2626 = vmatpush2.bf16.msra.mxu0 0
  %2627 = vmatprep.mubr.bf16.mxu0 0
  %2628 = vmatmul.mubr.bf16.gmra.mxu0 %v2500
  %v2629 = vpop.f32.mrf.mxu0
  %v2630 = vadd.f32 0.0, %v2629
  %v2631 = vpop.f32.mrf.mxu0
  %v2632 = vpop.f32.mrf.mxu0
  %v2633 = vadd.f32 0.0, %v2632
  %v2634 = vpop.f32.mrf.mxu0
  %2635 = vmatprep.mubr.bf16.mxu0 0
  %2636 = vmatmul.mubr.bf16.gmra.mxu0 %v2503
  %v2637 = vpop.f32.mrf.mxu0
  %v2638 = vadd.f32 0.0, %v2637
  %v2639 = vpop.f32.mrf.mxu0
  %v2640 = vpop.f32.mrf.mxu0
  %v2641 = vadd.f32 0.0, %v2640
  %v2642 = vpop.f32.mrf.mxu0
  %2643 = vmatprep.mubr.bf16.mxu0 0
  %2644 = vmatmul.mubr.bf16.gmra.mxu0 %v2506
  %v2645 = vpop.f32.mrf.mxu0
  %v2646 = vadd.f32 0.0, %v2645
  %v2647 = vpop.f32.mrf.mxu0
  %v2648 = vpop.f32.mrf.mxu0
  %v2649 = vadd.f32 0.0, %v2648
  %v2650 = vpop.f32.mrf.mxu0
  %2651 = vmatprep.mubr.bf16.mxu0 0
  %2652 = vmatmul.mubr.bf16.gmra.mxu0 %v2509
  %v2653 = vpop.f32.mrf.mxu0
  %v2654 = vadd.f32 0.0, %v2653
  %v2655 = vpop.f32.mrf.mxu0
  %v2656 = vpop.f32.mrf.mxu0
  %v2657 = vadd.f32 0.0, %v2656
  %v2658 = vpop.f32.mrf.mxu0
  %2659 = vmatprep.mubr.bf16.mxu0 0
  %2660 = vmatmul.mubr.bf16.gmra.mxu0 %v2512
  %v2661 = vpop.f32.mrf.mxu0
  %v2662 = vadd.f32 0.0, %v2661
  %v2663 = vpop.f32.mrf.mxu0
  %v2664 = vpop.f32.mrf.mxu0
  %v2665 = vadd.f32 0.0, %v2664
  %v2666 = vpop.f32.mrf.mxu0
  %2667 = vmatprep.mubr.bf16.mxu0 0
  %2668 = vmatmul.mubr.bf16.gmra.mxu0 %v2515
  %v2669 = vpop.f32.mrf.mxu0
  %v2670 = vadd.f32 0.0, %v2669
  %v2671 = vpop.f32.mrf.mxu0
  %v2672 = vpop.f32.mrf.mxu0
  %v2673 = vadd.f32 0.0, %v2672
  %v2674 = vpop.f32.mrf.mxu0
  %2675 = vmatprep.mubr.bf16.mxu0 0
  %2676 = vmatmul.mubr.bf16.gmra.mxu0 %v2518
  %v2677 = vpop.f32.mrf.mxu0
  %v2678 = vadd.f32 0.0, %v2677
  %v2679 = vpop.f32.mrf.mxu0
  %v2680 = vpop.f32.mrf.mxu0
  %v2681 = vadd.f32 0.0, %v2680
  %v2682 = vpop.f32.mrf.mxu0
  %2683 = vmatprep.mubr.bf16.mxu0 0
  %2684 = vmatmul.mubr.bf16.gmra.mxu0 %v2521
  %v2685 = vpop.f32.mrf.mxu0
  %v2686 = vadd.f32 0.0, %v2685
  %v2687 = vpop.f32.mrf.mxu0
  %v2688 = vpop.f32.mrf.mxu0
  %v2689 = vadd.f32 0.0, %v2688
  %v2690 = vpop.f32.mrf.mxu0
  %2691 = vmatprep.mubr.bf16.mxu0 0
  %2692 = vmatmul.mubr.bf16.gmra.mxu0 %v2524
  %v2693 = vpop.f32.mrf.mxu0
  %v2694 = vadd.f32 0.0, %v2693
  %v2695 = vpop.f32.mrf.mxu0
  %v2696 = vpop.f32.mrf.mxu0
  %v2697 = vadd.f32 0.0, %v2696
  %v2698 = vpop.f32.mrf.mxu0
  %2699 = vmatprep.mubr.bf16.mxu0 0
  %2700 = vmatmul.mubr.bf16.gmra.mxu0 %v2527
  %v2701 = vpop.f32.mrf.mxu0
  %v2702 = vadd.f32 0.0, %v2701
  %v2703 = vpop.f32.mrf.mxu0
  %v2704 = vpop.f32.mrf.mxu0
  %v2705 = vadd.f32 0.0, %v2704
  %v2706 = vpop.f32.mrf.mxu0
  %2707 = vmatprep.mubr.bf16.mxu0 0
  %2708 = vmatmul.mubr.bf16.gmra.mxu0 %v2530
  %v2709 = vpop.f32.mrf.mxu0
  %v2710 = vadd.f32 0.0, %v2709
  %v2711 = vpop.f32.mrf.mxu0
  %v2712 = vpop.f32.mrf.mxu0
  %v2713 = vadd.f32 0.0, %v2712
  %v2714 = vpop.f32.mrf.mxu0
  %2715 = vmatprep.mubr.bf16.mxu0 0
  %2716 = vmatmul.mubr.bf16.gmra.mxu0 %v2533
  %v2717 = vpop.f32.mrf.mxu0
  %v2718 = vadd.f32 0.0, %v2717
  %v2719 = vpop.f32.mrf.mxu0
  %v2720 = vpop.f32.mrf.mxu0
  %v2721 = vadd.f32 0.0, %v2720
  %v2722 = vpop.f32.mrf.mxu0
  %2723 = vmatprep.mubr.bf16.mxu0 0
  %2724 = vmatmul.mubr.bf16.gmra.mxu0 %v2536
  %v2725 = vpop.f32.mrf.mxu0
  %v2726 = vadd.f32 0.0, %v2725
  %v2727 = vpop.f32.mrf.mxu0
  %v2728 = vpop.f32.mrf.mxu0
  %v2729 = vadd.f32 0.0, %v2728
  %v2730 = vpop.f32.mrf.mxu0
  %2731 = vmatprep.mubr.bf16.mxu0 0
  %2732 = vmatmul.mubr.bf16.gmra.mxu0 %v2539
  %v2733 = vpop.f32.mrf.mxu0
  %v2734 = vadd.f32 0.0, %v2733
  %v2735 = vpop.f32.mrf.mxu0
  %v2736 = vpop.f32.mrf.mxu0
  %v2737 = vadd.f32 0.0, %v2736
  %v2738 = vpop.f32.mrf.mxu0
  %2739 = vmatprep.mubr.bf16.mxu0 0
  %2740 = vmatmul.mubr.bf16.gmra.mxu0 %v2542
  %v2741 = vpop.f32.mrf.mxu0
  %v2742 = vadd.f32 0.0, %v2741
  %v2743 = vpop.f32.mrf.mxu0
  %v2744 = vpop.f32.mrf.mxu0
  %v2745 = vadd.f32 0.0, %v2744
  %v2746 = vpop.f32.mrf.mxu0
  %2747 = vmatprep.mubr.bf16.mxu0 0
  %2748 = vmatmul.mubr.bf16.gmra.mxu0 %v2545
  %v2749 = vpop.f32.mrf.mxu0
  %v2750 = vadd.f32 0.0, %v2749
  %v2751 = vpop.f32.mrf.mxu0
  %v2752 = vpop.f32.mrf.mxu0
  %v2753 = vadd.f32 0.0, %v2752
  %v2754 = vpop.f32.mrf.mxu0
  %2755 = vmatprep.mubr.bf16.mxu0 0
  %2756 = vmatmul.mubr.bf16.gmra.mxu0 %v2548
  %v2757 = vpop.f32.mrf.mxu0
  %v2758 = vadd.f32 0.0, %v2757
  %v2759 = vpop.f32.mrf.mxu0
  %v2760 = vpop.f32.mrf.mxu0
  %v2761 = vadd.f32 0.0, %v2760
  %v2762 = vpop.f32.mrf.mxu0
  %2763 = vmatprep.mubr.bf16.mxu0 0
  %2764 = vmatmul.mubr.bf16.gmra.mxu0 %v2551
  %v2765 = vpop.f32.mrf.mxu0
  %v2766 = vadd.f32 0.0, %v2765
  %v2767 = vpop.f32.mrf.mxu0
  %v2768 = vpop.f32.mrf.mxu0
  %v2769 = vadd.f32 0.0, %v2768
  %v2770 = vpop.f32.mrf.mxu0
  %2771 = vmatprep.mubr.bf16.mxu0 0
  %2772 = vmatmul.mubr.bf16.gmra.mxu0 %v2554
  %v2773 = vpop.f32.mrf.mxu0
  %v2774 = vadd.f32 0.0, %v2773
  %v2775 = vpop.f32.mrf.mxu0
  %v2776 = vpop.f32.mrf.mxu0
  %v2777 = vadd.f32 0.0, %v2776
  %v2778 = vpop.f32.mrf.mxu0
  %2779 = vmatprep.mubr.bf16.mxu0 0
  %2780 = vmatmul.mubr.bf16.gmra.mxu0 %v2557
  %v2781 = vpop.f32.mrf.mxu0
  %v2782 = vadd.f32 0.0, %v2781
  %v2783 = vpop.f32.mrf.mxu0
  %v2784 = vpop.f32.mrf.mxu0
  %v2785 = vadd.f32 0.0, %v2784
  %v2786 = vpop.f32.mrf.mxu0
  %2787 = vmatprep.mubr.bf16.mxu0 0
  %2788 = vmatmul.mubr.bf16.gmra.mxu0 %v2560
  %v2789 = vpop.f32.mrf.mxu0
  %v2790 = vadd.f32 0.0, %v2789
  %v2791 = vpop.f32.mrf.mxu0
  %v2792 = vpop.f32.mrf.mxu0
  %v2793 = vadd.f32 0.0, %v2792
  %v2794 = vpop.f32.mrf.mxu0
  %2795 = vmatprep.mubr.bf16.mxu0 0
  %2796 = vmatmul.mubr.bf16.gmra.mxu0 %v2563
  %v2797 = vpop.f32.mrf.mxu0
  %v2798 = vadd.f32 0.0, %v2797
  %v2799 = vpop.f32.mrf.mxu0
  %v2800 = vpop.f32.mrf.mxu0
  %v2801 = vadd.f32 0.0, %v2800
  %v2802 = vpop.f32.mrf.mxu0
  %2803 = vmatprep.mubr.bf16.mxu0 0
  %2804 = vmatmul.mubr.bf16.gmra.mxu0 %v2566
  %v2805 = vpop.f32.mrf.mxu0
  %v2806 = vadd.f32 0.0, %v2805
  %v2807 = vpop.f32.mrf.mxu0
  %v2808 = vpop.f32.mrf.mxu0
  %v2809 = vadd.f32 0.0, %v2808
  %v2810 = vpop.f32.mrf.mxu0
  %2811 = vmatprep.mubr.bf16.mxu0 0
  %2812 = vmatmul.mubr.bf16.gmra.mxu0 %v2569
  %v2813 = vpop.f32.mrf.mxu0
  %v2814 = vadd.f32 0.0, %v2813
  %v2815 = vpop.f32.mrf.mxu0
  %v2816 = vpop.f32.mrf.mxu0
  %v2817 = vadd.f32 0.0, %v2816
  %v2818 = vpop.f32.mrf.mxu0
  %2819 = vmatprep.mubr.bf16.mxu0 0
  %2820 = vmatmul.mubr.bf16.gmra.mxu0 %v2572
  %v2821 = vpop.f32.mrf.mxu0
  %v2822 = vadd.f32 0.0, %v2821
  %v2823 = vpop.f32.mrf.mxu0
  %v2824 = vpop.f32.mrf.mxu0
  %v2825 = vadd.f32 0.0, %v2824
  %v2826 = vpop.f32.mrf.mxu0
  %2827 = vmatprep.mubr.bf16.mxu0 0
  %2828 = vmatmul.mubr.bf16.gmra.mxu0 %v2575
  %v2829 = vpop.f32.mrf.mxu0
  %v2830 = vadd.f32 0.0, %v2829
  %v2831 = vpop.f32.mrf.mxu0
  %v2832 = vpop.f32.mrf.mxu0
  %v2833 = vadd.f32 0.0, %v2832
  %v2834 = vpop.f32.mrf.mxu0
  %2835 = vmatprep.mubr.bf16.mxu0 0
  %2836 = vmatmul.mubr.bf16.gmra.mxu0 %v2578
  %v2837 = vpop.f32.mrf.mxu0
  %v2838 = vadd.f32 0.0, %v2837
  %v2839 = vpop.f32.mrf.mxu0
  %v2840 = vpop.f32.mrf.mxu0
  %v2841 = vadd.f32 0.0, %v2840
  %v2842 = vpop.f32.mrf.mxu0
  %2843 = vmatprep.mubr.bf16.mxu0 0
  %2844 = vmatmul.mubr.bf16.gmra.mxu0 %v2581
  %v2845 = vpop.f32.mrf.mxu0
  %v2846 = vadd.f32 0.0, %v2845
  %v2847 = vpop.f32.mrf.mxu0
  %v2848 = vpop.f32.mrf.mxu0
  %v2849 = vadd.f32 0.0, %v2848
  %v2850 = vpop.f32.mrf.mxu0
  %2851 = vmatprep.mubr.bf16.mxu0 0
  %2852 = vmatmul.mubr.bf16.gmra.mxu0 %v2584
  %v2853 = vpop.f32.mrf.mxu0
  %v2854 = vadd.f32 0.0, %v2853
  %v2855 = vpop.f32.mrf.mxu0
  %v2856 = vpop.f32.mrf.mxu0
  %v2857 = vadd.f32 0.0, %v2856
  %v2858 = vpop.f32.mrf.mxu0
  %2859 = vmatprep.mubr.bf16.mxu0 0
  %2860 = vmatmul.mubr.bf16.gmra.mxu0 %v2587
  %v2861 = vpop.f32.mrf.mxu0
  %v2862 = vadd.f32 0.0, %v2861
  %v2863 = vpop.f32.mrf.mxu0
  %v2864 = vpop.f32.mrf.mxu0
  %v2865 = vadd.f32 0.0, %v2864
  %v2866 = vpop.f32.mrf.mxu0
  %2867 = vmatprep.mubr.bf16.mxu0 0
  %2868 = vmatmul.mubr.bf16.gmra.mxu0 %v2590
  %v2869 = vpop.f32.mrf.mxu0
  %v2870 = vadd.f32 0.0, %v2869
  %v2871 = vpop.f32.mrf.mxu0
  %v2872 = vpop.f32.mrf.mxu0
  %v2873 = vadd.f32 0.0, %v2872
  %v2874 = vpop.f32.mrf.mxu0
  %2875 = vmatprep.mubr.bf16.mxu0 0
  %2876 = vmatmul.mubr.bf16.gmra.mxu0 %v2593
  %v2877 = vpop.f32.mrf.mxu0
  %v2878 = vadd.f32 0.0, %v2877
  %v2879 = vpop.f32.mrf.mxu0
  %v2880 = vpop.f32.mrf.mxu0
  %v2881 = vadd.f32 0.0, %v2880
  %v2882 = vpop.f32.mrf.mxu0
  %2883 = vdwg.mxu0
  %v2884 = vadd.f32 %v2132, %v2630
  %v2885 = vadd.f32 %v2135, %v2633
  %v2886 = vadd.f32 %v2140, %v2638
  %v2887 = vadd.f32 %v2143, %v2641
  %v2888 = vadd.f32 %v2148, %v2646
  %v2889 = vadd.f32 %v2151, %v2649
  %v2890 = vadd.f32 %v2156, %v2654
  %v2891 = vadd.f32 %v2159, %v2657
  %v2892 = vadd.f32 %v2164, %v2662
  %v2893 = vadd.f32 %v2167, %v2665
  %v2894 = vadd.f32 %v2172, %v2670
  %v2895 = vadd.f32 %v2175, %v2673
  %v2896 = vadd.f32 %v2180, %v2678
  %v2897 = vadd.f32 %v2183, %v2681
  %v2898 = vadd.f32 %v2188, %v2686
  %v2899 = vadd.f32 %v2191, %v2689
  %v2900 = vadd.f32 %v2196, %v2694
  %v2901 = vadd.f32 %v2199, %v2697
  %v2902 = vadd.f32 %v2204, %v2702
  %v2903 = vadd.f32 %v2207, %v2705
  %v2904 = vadd.f32 %v2212, %v2710
  %v2905 = vadd.f32 %v2215, %v2713
  %v2906 = vadd.f32 %v2220, %v2718
  %v2907 = vadd.f32 %v2223, %v2721
  %v2908 = vadd.f32 %v2228, %v2726
  %v2909 = vadd.f32 %v2231, %v2729
  %v2910 = vadd.f32 %v2236, %v2734
  %v2911 = vadd.f32 %v2239, %v2737
  %v2912 = vadd.f32 %v2244, %v2742
  %v2913 = vadd.f32 %v2247, %v2745
  %v2914 = vadd.f32 %v2252, %v2750
  %v2915 = vadd.f32 %v2255, %v2753
  %v2916 = vadd.f32 %v2260, %v2758
  %v2917 = vadd.f32 %v2263, %v2761
  %v2918 = vadd.f32 %v2268, %v2766
  %v2919 = vadd.f32 %v2271, %v2769
  %v2920 = vadd.f32 %v2276, %v2774
  %v2921 = vadd.f32 %v2279, %v2777
  %v2922 = vadd.f32 %v2284, %v2782
  %v2923 = vadd.f32 %v2287, %v2785
  %v2924 = vadd.f32 %v2292, %v2790
  %v2925 = vadd.f32 %v2295, %v2793
  %v2926 = vadd.f32 %v2300, %v2798
  %v2927 = vadd.f32 %v2303, %v2801
  %v2928 = vadd.f32 %v2308, %v2806
  %v2929 = vadd.f32 %v2311, %v2809
  %v2930 = vadd.f32 %v2316, %v2814
  %v2931 = vadd.f32 %v2319, %v2817
  %v2932 = vadd.f32 %v2324, %v2822
  %v2933 = vadd.f32 %v2327, %v2825
  %v2934 = vadd.f32 %v2332, %v2830
  %v2935 = vadd.f32 %v2335, %v2833
  %v2936 = vadd.f32 %v2340, %v2838
  %v2937 = vadd.f32 %v2343, %v2841
  %v2938 = vadd.f32 %v2348, %v2846
  %v2939 = vadd.f32 %v2351, %v2849
  %v2940 = vadd.f32 %v2356, %v2854
  %v2941 = vadd.f32 %v2359, %v2857
  %v2942 = vadd.f32 %v2364, %v2862
  %v2943 = vadd.f32 %v2367, %v2865
  %v2944 = vadd.f32 %v2372, %v2870
  %v2945 = vadd.f32 %v2375, %v2873
  %v2946 = vadd.f32 %v2380, %v2878
  %v2947 = vadd.f32 %v2383, %v2881
  %v2948 = vld [vmem:[%s1326] sm:$0xff]
  %v2949 = vld [vmem:[%s1326 + $0x8] sm:$0xff]
  %v2950 = vld [vmem:[%s1326 + $0x18] sm:$0xff]
  %v2951 = vld [vmem:[%s1326 + $0x20] sm:$0xff]
  %v2952 = vld [vmem:[%s1326 + $0x30] sm:$0xff]
  %v2953 = vld [vmem:[%s1326 + $0x38] sm:$0xff]
  %v2954 = vld [vmem:[%s1326 + $0x48] sm:$0xff]
  %v2955 = vld [vmem:[%s1326 + $0x50] sm:$0xff]
  %v2956 = vld [vmem:[%s1326 + $0x60] sm:$0xff]
  %v2957 = vld [vmem:[%s1326 + $0x68] sm:$0xff]
  %v2958 = vld [vmem:[%s1326 + $0x78] sm:$0xff]
  %v2959 = vld [vmem:[%s1326 + $0x80] sm:$0xff]
  %v2960 = vld [vmem:[%s1326 + $0x90] sm:$0xff]
  %v2961 = vld [vmem:[%s1326 + $0x98] sm:$0xff]
  %v2962 = vld [vmem:[%s1326 + $0xa8] sm:$0xff]
  %v2963 = vld [vmem:[%s1326 + $0xb0] sm:$0xff]
  %v2964 = vld [vmem:[%s1326 + $0xc0] sm:$0xff]
  %v2965 = vld [vmem:[%s1326 + $0xc8] sm:$0xff]
  %v2966 = vld [vmem:[%s1326 + $0xd8] sm:$0xff]
  %v2967 = vld [vmem:[%s1326 + $0xe0] sm:$0xff]
  %v2968 = vld [vmem:[%s1326 + $0xf0] sm:$0xff]
  %v2969 = vld [vmem:[%s1326 + $0xf8] sm:$0xff]
  %v2970 = vld [vmem:[%s1326 + $0x108] sm:$0xff]
  %v2971 = vld [vmem:[%s1326 + $0x110] sm:$0xff]
  %v2972 = vld [vmem:[%s1326 + $0x120] sm:$0xff]
  %v2973 = vld [vmem:[%s1326 + $0x128] sm:$0xff]
  %v2974 = vld [vmem:[%s1326 + $0x138] sm:$0xff]
  %v2975 = vld [vmem:[%s1326 + $0x140] sm:$0xff]
  %v2976 = vld [vmem:[%s1326 + $0x150] sm:$0xff]
  %v2977 = vld [vmem:[%s1326 + $0x158] sm:$0xff]
  %v2978 = vld [vmem:[%s1326 + $0x168] sm:$0xff]
  %v2979 = vld [vmem:[%s1326 + $0x170] sm:$0xff]
  %v2980 = vld [vmem:[%s1326 + $0x1b0] sm:$0xff]
  %v2981 = vld [vmem:[%s1326 + $0x1b8] sm:$0xff]
  %v2982 = vld [vmem:[%s1326 + $0x1c8] sm:$0xff]
  %v2983 = vld [vmem:[%s1326 + $0x1d0] sm:$0xff]
  %v2984 = vld [vmem:[%s1326 + $0x1e0] sm:$0xff]
  %v2985 = vld [vmem:[%s1326 + $0x1e8] sm:$0xff]
  %v2986 = vld [vmem:[%s1326 + $0x1f8] sm:$0xff]
  %v2987 = vld [vmem:[%s1326 + $0x200] sm:$0xff]
  %v2988 = vld [vmem:[%s1326 + $0x210] sm:$0xff]
  %v2989 = vld [vmem:[%s1326 + $0x218] sm:$0xff]
  %v2990 = vld [vmem:[%s1326 + $0x228] sm:$0xff]
  %v2991 = vld [vmem:[%s1326 + $0x230] sm:$0xff]
  %v2992 = vld [vmem:[%s1326 + $0x240] sm:$0xff]
  %v2993 = vld [vmem:[%s1326 + $0x248] sm:$0xff]
  %v2994 = vld [vmem:[%s1326 + $0x258] sm:$0xff]
  %v2995 = vld [vmem:[%s1326 + $0x260] sm:$0xff]
  %v2996 = vld [vmem:[%s1326 + $0x270] sm:$0xff]
  %v2997 = vld [vmem:[%s1326 + $0x278] sm:$0xff]
  %v2998 = vld [vmem:[%s1326 + $0x288] sm:$0xff]
  %v2999 = vld [vmem:[%s1326 + $0x290] sm:$0xff]
  %v3000 = vld [vmem:[%s1326 + $0x2a0] sm:$0xff]
  %v3001 = vld [vmem:[%s1326 + $0x2a8] sm:$0xff]
  %v3002 = vld [vmem:[%s1326 + $0x2b8] sm:$0xff]
  %v3003 = vld [vmem:[%s1326 + $0x2c0] sm:$0xff]
  %v3004 = vld [vmem:[%s1326 + $0x2d0] sm:$0xff]
  %v3005 = vld [vmem:[%s1326 + $0x2d8] sm:$0xff]
  %v3006 = vld [vmem:[%s1326 + $0x2e8] sm:$0xff]
  %v3007 = vld [vmem:[%s1326 + $0x2f0] sm:$0xff]
  %v3008 = vld [vmem:[%s1326 + $0x300] sm:$0xff]
  %v3009 = vld [vmem:[%s1326 + $0x308] sm:$0xff]
  %v3010 = vld [vmem:[%s1326 + $0x318] sm:$0xff]
  %v3011 = vld [vmem:[%s1326 + $0x320] sm:$0xff]
  %v3012 = vpack.c.bf16 %v2949, %v2948
  %v3013 = vpack.c.bf16 %v2951, %v2950
  %v3014 = vpack.c.bf16 %v2953, %v2952
  %v3015 = vpack.c.bf16 %v2955, %v2954
  %v3016 = vpack.c.bf16 %v2957, %v2956
  %v3017 = vpack.c.bf16 %v2959, %v2958
  %v3018 = vpack.c.bf16 %v2961, %v2960
  %v3019 = vpack.c.bf16 %v2963, %v2962
  %v3020 = vpack.c.bf16 %v2965, %v2964
  %v3021 = vpack.c.bf16 %v2967, %v2966
  %v3022 = vpack.c.bf16 %v2969, %v2968
  %v3023 = vpack.c.bf16 %v2971, %v2970
  %v3024 = vpack.c.bf16 %v2973, %v2972
  %v3025 = vpack.c.bf16 %v2975, %v2974
  %v3026 = vpack.c.bf16 %v2977, %v2976
  %v3027 = vpack.c.bf16 %v2979, %v2978
  %v3028 = vpack.c.bf16 %v2981, %v2980
  %v3029 = vpack.c.bf16 %v2983, %v2982
  %v3030 = vpack.c.bf16 %v2985, %v2984
  %v3031 = vpack.c.bf16 %v2987, %v2986
  %v3032 = vpack.c.bf16 %v2989, %v2988
  %v3033 = vpack.c.bf16 %v2991, %v2990
  %v3034 = vpack.c.bf16 %v2993, %v2992
  %v3035 = vpack.c.bf16 %v2995, %v2994
  %v3036 = vpack.c.bf16 %v2997, %v2996
  %v3037 = vpack.c.bf16 %v2999, %v2998
  %v3038 = vpack.c.bf16 %v3001, %v3000
  %v3039 = vpack.c.bf16 %v3003, %v3002
  %v3040 = vpack.c.bf16 %v3005, %v3004
  %v3041 = vpack.c.bf16 %v3007, %v3006
  %v3042 = vpack.c.bf16 %v3009, %v3008
  %v3043 = vpack.c.bf16 %v3011, %v3010
  %s3044 = scalar_lea.vmem %s4, 48
  %v3045 = vld [vmem:[%s3044] sm:$0xf]
  %v3046 = vld [vmem:[%s3044 + $0x4] sm:$0xf]
  %v3047 = vld [vmem:[%s3044 + $0x8] sm:$0xf]
  %v3048 = vld [vmem:[%s3044 + $0xc] sm:$0xf]
  %v3053 = vunpack.c.l.b16 %v3045
  %v3054 = vunpack.c.l.b16 %v3046
  %v3055 = vunpack.c.l.b16 %v3047
  %v3056 = vunpack.c.l.b16 %v3048
  %v3057 = vpack.c.b16 %v3054, %v3053
  %v3058 = vpack.c.b16 %v3056, %v3055
  %v3062 = vsel %vm671, %v3012, 0
  %v3065 = vsel %vm671, %v3013, 0
  %v3068 = vsel %vm671, %v3014, 0
  %v3071 = vsel %vm671, %v3015, 0
  %v3074 = vsel %vm671, %v3016, 0
  %v3077 = vsel %vm671, %v3017, 0
  %v3080 = vsel %vm671, %v3018, 0
  %v3083 = vsel %vm671, %v3019, 0
  %v3086 = vsel %vm671, %v3020, 0
  %v3089 = vsel %vm671, %v3021, 0
  %v3092 = vsel %vm671, %v3022, 0
  %v3095 = vsel %vm671, %v3023, 0
  %v3098 = vsel %vm671, %v3024, 0
  %v3101 = vsel %vm671, %v3025, 0
  %v3104 = vsel %vm671, %v3026, 0
  %v3107 = vsel %vm671, %v3027, 0
  %v3110 = vsel %vm671, %v3028, 0
  %v3113 = vsel %vm671, %v3029, 0
  %v3116 = vsel %vm671, %v3030, 0
  %v3119 = vsel %vm671, %v3031, 0
  %v3122 = vsel %vm671, %v3032, 0
  %v3125 = vsel %vm671, %v3033, 0
  %v3128 = vsel %vm671, %v3034, 0
  %v3131 = vsel %vm671, %v3035, 0
  %v3134 = vsel %vm671, %v3036, 0
  %v3137 = vsel %vm671, %v3037, 0
  %v3140 = vsel %vm671, %v3038, 0
  %v3143 = vsel %vm671, %v3039, 0
  %v3146 = vsel %vm671, %v3040, 0
  %v3149 = vsel %vm671, %v3041, 0
  %v3152 = vsel %vm671, %v3042, 0
  %v3155 = vsel %vm671, %v3043, 0
  %3157 = vmatprep.subr.bf16.mxu0 0
  %3158 = vmatpush1.bf16.msra.mxu0 0
  %3159 = vmatprep.subr.bf16.mxu0 0
  %3160 = vmatpush1.bf16.msra.mxu0 0
  %3161 = vmatprep.subr.bf16.mxu0 0
  %3162 = vmatpush1.bf16.msra.mxu0 0
  %3163 = vmatprep.subr.bf16.mxu0 0
  %3164 = vmatpush1.bf16.msra.mxu0 0
  %3165 = vmatprep.subr.bf16.mxu0 0
  %3166 = vmatpush1.bf16.msra.mxu0 0
  %3167 = vmatprep.subr.bf16.mxu0 0
  %3168 = vmatpush1.bf16.msra.mxu0 0
  %3169 = vmatprep.subr.bf16.mxu0 0
  %3170 = vmatpush1.bf16.msra.mxu0 %v3058
  %3171 = vmatprep.subr.bf16.mxu0 0
  %3172 = vmatpush1.bf16.msra.mxu0 %v3057
  %3173 = vmatprep.subr.bf16.mxu0 0
  %3174 = vmatpush2.bf16.msra.mxu0 0
  %3175 = vmatprep.subr.bf16.mxu0 0
  %3176 = vmatpush2.bf16.msra.mxu0 0
  %3177 = vmatprep.subr.bf16.mxu0 0
  %3178 = vmatpush2.bf16.msra.mxu0 0
  %3179 = vmatprep.subr.bf16.mxu0 0
  %3180 = vmatpush2.bf16.msra.mxu0 0
  %3181 = vmatprep.subr.bf16.mxu0 0
  %3182 = vmatpush2.bf16.msra.mxu0 0
  %3183 = vmatprep.subr.bf16.mxu0 0
  %3184 = vmatpush2.bf16.msra.mxu0 0
  %3185 = vmatprep.subr.bf16.mxu0 0
  %3186 = vmatpush2.bf16.msra.mxu0 0
  %3187 = vmatprep.subr.bf16.mxu0 0
  %3188 = vmatpush2.bf16.msra.mxu0 0
  %3189 = vmatprep.mubr.bf16.mxu0 0
  %3190 = vmatmul.mubr.bf16.gmra.mxu0 %v3062
  %v3191 = vpop.f32.mrf.mxu0
  %v3192 = vadd.f32 0.0, %v3191
  %v3193 = vpop.f32.mrf.mxu0
  %v3194 = vpop.f32.mrf.mxu0
  %v3195 = vadd.f32 0.0, %v3194
  %v3196 = vpop.f32.mrf.mxu0
  %3197 = vmatprep.mubr.bf16.mxu0 0
  %3198 = vmatmul.mubr.bf16.gmra.mxu0 %v3065
  %v3199 = vpop.f32.mrf.mxu0
  %v3200 = vadd.f32 0.0, %v3199
  %v3201 = vpop.f32.mrf.mxu0
  %v3202 = vpop.f32.mrf.mxu0
  %v3203 = vadd.f32 0.0, %v3202
  %v3204 = vpop.f32.mrf.mxu0
  %3205 = vmatprep.mubr.bf16.mxu0 0
  %3206 = vmatmul.mubr.bf16.gmra.mxu0 %v3068
  %v3207 = vpop.f32.mrf.mxu0
  %v3208 = vadd.f32 0.0, %v3207
  %v3209 = vpop.f32.mrf.mxu0
  %v3210 = vpop.f32.mrf.mxu0
  %v3211 = vadd.f32 0.0, %v3210
  %v3212 = vpop.f32.mrf.mxu0
  %3213 = vmatprep.mubr.bf16.mxu0 0
  %3214 = vmatmul.mubr.bf16.gmra.mxu0 %v3071
  %v3215 = vpop.f32.mrf.mxu0
  %v3216 = vadd.f32 0.0, %v3215
  %v3217 = vpop.f32.mrf.mxu0
  %v3218 = vpop.f32.mrf.mxu0
  %v3219 = vadd.f32 0.0, %v3218
  %v3220 = vpop.f32.mrf.mxu0
  %3221 = vmatprep.mubr.bf16.mxu0 0
  %3222 = vmatmul.mubr.bf16.gmra.mxu0 %v3074
  %v3223 = vpop.f32.mrf.mxu0
  %v3224 = vadd.f32 0.0, %v3223
  %v3225 = vpop.f32.mrf.mxu0
  %v3226 = vpop.f32.mrf.mxu0
  %v3227 = vadd.f32 0.0, %v3226
  %v3228 = vpop.f32.mrf.mxu0
  %3229 = vmatprep.mubr.bf16.mxu0 0
  %3230 = vmatmul.mubr.bf16.gmra.mxu0 %v3077
  %v3231 = vpop.f32.mrf.mxu0
  %v3232 = vadd.f32 0.0, %v3231
  %v3233 = vpop.f32.mrf.mxu0
  %v3234 = vpop.f32.mrf.mxu0
  %v3235 = vadd.f32 0.0, %v3234
  %v3236 = vpop.f32.mrf.mxu0
  %3237 = vmatprep.mubr.bf16.mxu0 0
  %3238 = vmatmul.mubr.bf16.gmra.mxu0 %v3080
  %v3239 = vpop.f32.mrf.mxu0
  %v3240 = vadd.f32 0.0, %v3239
  %v3241 = vpop.f32.mrf.mxu0
  %v3242 = vpop.f32.mrf.mxu0
  %v3243 = vadd.f32 0.0, %v3242
  %v3244 = vpop.f32.mrf.mxu0
  %3245 = vmatprep.mubr.bf16.mxu0 0
  %3246 = vmatmul.mubr.bf16.gmra.mxu0 %v3083
  %v3247 = vpop.f32.mrf.mxu0
  %v3248 = vadd.f32 0.0, %v3247
  %v3249 = vpop.f32.mrf.mxu0
  %v3250 = vpop.f32.mrf.mxu0
  %v3251 = vadd.f32 0.0, %v3250
  %v3252 = vpop.f32.mrf.mxu0
  %3253 = vmatprep.mubr.bf16.mxu0 0
  %3254 = vmatmul.mubr.bf16.gmra.mxu0 %v3086
  %v3255 = vpop.f32.mrf.mxu0
  %v3256 = vadd.f32 0.0, %v3255
  %v3257 = vpop.f32.mrf.mxu0
  %v3258 = vpop.f32.mrf.mxu0
  %v3259 = vadd.f32 0.0, %v3258
  %v3260 = vpop.f32.mrf.mxu0
  %3261 = vmatprep.mubr.bf16.mxu0 0
  %3262 = vmatmul.mubr.bf16.gmra.mxu0 %v3089
  %v3263 = vpop.f32.mrf.mxu0
  %v3264 = vadd.f32 0.0, %v3263
  %v3265 = vpop.f32.mrf.mxu0
  %v3266 = vpop.f32.mrf.mxu0
  %v3267 = vadd.f32 0.0, %v3266
  %v3268 = vpop.f32.mrf.mxu0
  %3269 = vmatprep.mubr.bf16.mxu0 0
  %3270 = vmatmul.mubr.bf16.gmra.mxu0 %v3092
  %v3271 = vpop.f32.mrf.mxu0
  %v3272 = vadd.f32 0.0, %v3271
  %v3273 = vpop.f32.mrf.mxu0
  %v3274 = vpop.f32.mrf.mxu0
  %v3275 = vadd.f32 0.0, %v3274
  %v3276 = vpop.f32.mrf.mxu0
  %3277 = vmatprep.mubr.bf16.mxu0 0
  %3278 = vmatmul.mubr.bf16.gmra.mxu0 %v3095
  %v3279 = vpop.f32.mrf.mxu0
  %v3280 = vadd.f32 0.0, %v3279
  %v3281 = vpop.f32.mrf.mxu0
  %v3282 = vpop.f32.mrf.mxu0
  %v3283 = vadd.f32 0.0, %v3282
  %v3284 = vpop.f32.mrf.mxu0
  %3285 = vmatprep.mubr.bf16.mxu0 0
  %3286 = vmatmul.mubr.bf16.gmra.mxu0 %v3098
  %v3287 = vpop.f32.mrf.mxu0
  %v3288 = vadd.f32 0.0, %v3287
  %v3289 = vpop.f32.mrf.mxu0
  %v3290 = vpop.f32.mrf.mxu0
  %v3291 = vadd.f32 0.0, %v3290
  %v3292 = vpop.f32.mrf.mxu0
  %3293 = vmatprep.mubr.bf16.mxu0 0
  %3294 = vmatmul.mubr.bf16.gmra.mxu0 %v3101
  %v3295 = vpop.f32.mrf.mxu0
  %v3296 = vadd.f32 0.0, %v3295
  %v3297 = vpop.f32.mrf.mxu0
  %v3298 = vpop.f32.mrf.mxu0
  %v3299 = vadd.f32 0.0, %v3298
  %v3300 = vpop.f32.mrf.mxu0
  %3301 = vmatprep.mubr.bf16.mxu0 0
  %3302 = vmatmul.mubr.bf16.gmra.mxu0 %v3104
  %v3303 = vpop.f32.mrf.mxu0
  %v3304 = vadd.f32 0.0, %v3303
  %v3305 = vpop.f32.mrf.mxu0
  %v3306 = vpop.f32.mrf.mxu0
  %v3307 = vadd.f32 0.0, %v3306
  %v3308 = vpop.f32.mrf.mxu0
  %3309 = vmatprep.mubr.bf16.mxu0 0
  %3310 = vmatmul.mubr.bf16.gmra.mxu0 %v3107
  %v3311 = vpop.f32.mrf.mxu0
  %v3312 = vadd.f32 0.0, %v3311
  %v3313 = vpop.f32.mrf.mxu0
  %v3314 = vpop.f32.mrf.mxu0
  %v3315 = vadd.f32 0.0, %v3314
  %v3316 = vpop.f32.mrf.mxu0
  %3317 = vmatprep.mubr.bf16.mxu0 0
  %3318 = vmatmul.mubr.bf16.gmra.mxu0 %v3110
  %v3319 = vpop.f32.mrf.mxu0
  %v3320 = vadd.f32 0.0, %v3319
  %v3321 = vpop.f32.mrf.mxu0
  %v3322 = vpop.f32.mrf.mxu0
  %v3323 = vadd.f32 0.0, %v3322
  %v3324 = vpop.f32.mrf.mxu0
  %3325 = vmatprep.mubr.bf16.mxu0 0
  %3326 = vmatmul.mubr.bf16.gmra.mxu0 %v3113
  %v3327 = vpop.f32.mrf.mxu0
  %v3328 = vadd.f32 0.0, %v3327
  %v3329 = vpop.f32.mrf.mxu0
  %v3330 = vpop.f32.mrf.mxu0
  %v3331 = vadd.f32 0.0, %v3330
  %v3332 = vpop.f32.mrf.mxu0
  %3333 = vmatprep.mubr.bf16.mxu0 0
  %3334 = vmatmul.mubr.bf16.gmra.mxu0 %v3116
  %v3335 = vpop.f32.mrf.mxu0
  %v3336 = vadd.f32 0.0, %v3335
  %v3337 = vpop.f32.mrf.mxu0
  %v3338 = vpop.f32.mrf.mxu0
  %v3339 = vadd.f32 0.0, %v3338
  %v3340 = vpop.f32.mrf.mxu0
  %3341 = vmatprep.mubr.bf16.mxu0 0
  %3342 = vmatmul.mubr.bf16.gmra.mxu0 %v3119
  %v3343 = vpop.f32.mrf.mxu0
  %v3344 = vadd.f32 0.0, %v3343
  %v3345 = vpop.f32.mrf.mxu0
  %v3346 = vpop.f32.mrf.mxu0
  %v3347 = vadd.f32 0.0, %v3346
  %v3348 = vpop.f32.mrf.mxu0
  %3349 = vmatprep.mubr.bf16.mxu0 0
  %3350 = vmatmul.mubr.bf16.gmra.mxu0 %v3122
  %v3351 = vpop.f32.mrf.mxu0
  %v3352 = vadd.f32 0.0, %v3351
  %v3353 = vpop.f32.mrf.mxu0
  %v3354 = vpop.f32.mrf.mxu0
  %v3355 = vadd.f32 0.0, %v3354
  %v3356 = vpop.f32.mrf.mxu0
  %3357 = vmatprep.mubr.bf16.mxu0 0
  %3358 = vmatmul.mubr.bf16.gmra.mxu0 %v3125
  %v3359 = vpop.f32.mrf.mxu0
  %v3360 = vadd.f32 0.0, %v3359
  %v3361 = vpop.f32.mrf.mxu0
  %v3362 = vpop.f32.mrf.mxu0
  %v3363 = vadd.f32 0.0, %v3362
  %v3364 = vpop.f32.mrf.mxu0
  %3365 = vmatprep.mubr.bf16.mxu0 0
  %3366 = vmatmul.mubr.bf16.gmra.mxu0 %v3128
  %v3367 = vpop.f32.mrf.mxu0
  %v3368 = vadd.f32 0.0, %v3367
  %v3369 = vpop.f32.mrf.mxu0
  %v3370 = vpop.f32.mrf.mxu0
  %v3371 = vadd.f32 0.0, %v3370
  %v3372 = vpop.f32.mrf.mxu0
  %3373 = vmatprep.mubr.bf16.mxu0 0
  %3374 = vmatmul.mubr.bf16.gmra.mxu0 %v3131
  %v3375 = vpop.f32.mrf.mxu0
  %v3376 = vadd.f32 0.0, %v3375
  %v3377 = vpop.f32.mrf.mxu0
  %v3378 = vpop.f32.mrf.mxu0
  %v3379 = vadd.f32 0.0, %v3378
  %v3380 = vpop.f32.mrf.mxu0
  %3381 = vmatprep.mubr.bf16.mxu0 0
  %3382 = vmatmul.mubr.bf16.gmra.mxu0 %v3134
  %v3383 = vpop.f32.mrf.mxu0
  %v3384 = vadd.f32 0.0, %v3383
  %v3385 = vpop.f32.mrf.mxu0
  %v3386 = vpop.f32.mrf.mxu0
  %v3387 = vadd.f32 0.0, %v3386
  %v3388 = vpop.f32.mrf.mxu0
  %3389 = vmatprep.mubr.bf16.mxu0 0
  %3390 = vmatmul.mubr.bf16.gmra.mxu0 %v3137
  %v3391 = vpop.f32.mrf.mxu0
  %v3392 = vadd.f32 0.0, %v3391
  %v3393 = vpop.f32.mrf.mxu0
  %v3394 = vpop.f32.mrf.mxu0
  %v3395 = vadd.f32 0.0, %v3394
  %v3396 = vpop.f32.mrf.mxu0
  %3397 = vmatprep.mubr.bf16.mxu0 0
  %3398 = vmatmul.mubr.bf16.gmra.mxu0 %v3140
  %v3399 = vpop.f32.mrf.mxu0
  %v3400 = vadd.f32 0.0, %v3399
  %v3401 = vpop.f32.mrf.mxu0
  %v3402 = vpop.f32.mrf.mxu0
  %v3403 = vadd.f32 0.0, %v3402
  %v3404 = vpop.f32.mrf.mxu0
  %3405 = vmatprep.mubr.bf16.mxu0 0
  %3406 = vmatmul.mubr.bf16.gmra.mxu0 %v3143
  %v3407 = vpop.f32.mrf.mxu0
  %v3408 = vadd.f32 0.0, %v3407
  %v3409 = vpop.f32.mrf.mxu0
  %v3410 = vpop.f32.mrf.mxu0
  %v3411 = vadd.f32 0.0, %v3410
  %v3412 = vpop.f32.mrf.mxu0
  %3413 = vmatprep.mubr.bf16.mxu0 0
  %3414 = vmatmul.mubr.bf16.gmra.mxu0 %v3146
  %v3415 = vpop.f32.mrf.mxu0
  %v3416 = vadd.f32 0.0, %v3415
  %v3417 = vpop.f32.mrf.mxu0
  %v3418 = vpop.f32.mrf.mxu0
  %v3419 = vadd.f32 0.0, %v3418
  %v3420 = vpop.f32.mrf.mxu0
  %3421 = vmatprep.mubr.bf16.mxu0 0
  %3422 = vmatmul.mubr.bf16.gmra.mxu0 %v3149
  %v3423 = vpop.f32.mrf.mxu0
  %v3424 = vadd.f32 0.0, %v3423
  %v3425 = vpop.f32.mrf.mxu0
  %v3426 = vpop.f32.mrf.mxu0
  %v3427 = vadd.f32 0.0, %v3426
  %v3428 = vpop.f32.mrf.mxu0
  %3429 = vmatprep.mubr.bf16.mxu0 0
  %3430 = vmatmul.mubr.bf16.gmra.mxu0 %v3152
  %v3431 = vpop.f32.mrf.mxu0
  %v3432 = vadd.f32 0.0, %v3431
  %v3433 = vpop.f32.mrf.mxu0
  %v3434 = vpop.f32.mrf.mxu0
  %v3435 = vadd.f32 0.0, %v3434
  %v3436 = vpop.f32.mrf.mxu0
  %3437 = vmatprep.mubr.bf16.mxu0 0
  %3438 = vmatmul.mubr.bf16.gmra.mxu0 %v3155
  %v3439 = vpop.f32.mrf.mxu0
  %v3440 = vadd.f32 0.0, %v3439
  %v3441 = vpop.f32.mrf.mxu0
  %v3442 = vpop.f32.mrf.mxu0
  %v3443 = vadd.f32 0.0, %v3442
  %v3444 = vpop.f32.mrf.mxu0
  %3445 = vdwg.mxu0
  %v3446 = vadd.f32 %v2884, %v3192
  %v3447 = vadd.f32 %v2885, %v3195
  %v3448 = vadd.f32 %v2886, %v3200
  %v3449 = vadd.f32 %v2887, %v3203
  %v3450 = vadd.f32 %v2888, %v3208
  %v3451 = vadd.f32 %v2889, %v3211
  %v3452 = vadd.f32 %v2890, %v3216
  %v3453 = vadd.f32 %v2891, %v3219
  %v3454 = vadd.f32 %v2892, %v3224
  %v3455 = vadd.f32 %v2893, %v3227
  %v3456 = vadd.f32 %v2894, %v3232
  %v3457 = vadd.f32 %v2895, %v3235
  %v3458 = vadd.f32 %v2896, %v3240
  %v3459 = vadd.f32 %v2897, %v3243
  %v3460 = vadd.f32 %v2898, %v3248
  %v3461 = vadd.f32 %v2899, %v3251
  %v3462 = vadd.f32 %v2900, %v3256
  %v3463 = vadd.f32 %v2901, %v3259
  %v3464 = vadd.f32 %v2902, %v3264
  %v3465 = vadd.f32 %v2903, %v3267
  %v3466 = vadd.f32 %v2904, %v3272
  %v3467 = vadd.f32 %v2905, %v3275
  %v3468 = vadd.f32 %v2906, %v3280
  %v3469 = vadd.f32 %v2907, %v3283
  %v3470 = vadd.f32 %v2908, %v3288
  %v3471 = vadd.f32 %v2909, %v3291
  %v3472 = vadd.f32 %v2910, %v3296
  %v3473 = vadd.f32 %v2911, %v3299
  %v3474 = vadd.f32 %v2912, %v3304
  %v3475 = vadd.f32 %v2913, %v3307
  %v3476 = vadd.f32 %v2914, %v3312
  %v3477 = vadd.f32 %v2915, %v3315
  %v3478 = vadd.f32 %v2916, %v3320
  %v3479 = vadd.f32 %v2917, %v3323
  %v3480 = vadd.f32 %v2918, %v3328
  %v3481 = vadd.f32 %v2919, %v3331
  %v3482 = vadd.f32 %v2920, %v3336
  %v3483 = vadd.f32 %v2921, %v3339
  %v3484 = vadd.f32 %v2922, %v3344
  %v3485 = vadd.f32 %v2923, %v3347
  %v3486 = vadd.f32 %v2924, %v3352
  %v3487 = vadd.f32 %v2925, %v3355
  %v3488 = vadd.f32 %v2926, %v3360
  %v3489 = vadd.f32 %v2927, %v3363
  %v3490 = vadd.f32 %v2928, %v3368
  %v3491 = vadd.f32 %v2929, %v3371
  %v3492 = vadd.f32 %v2930, %v3376
  %v3493 = vadd.f32 %v2931, %v3379
  %v3494 = vadd.f32 %v2932, %v3384
  %v3495 = vadd.f32 %v2933, %v3387
  %v3496 = vadd.f32 %v2934, %v3392
  %v3497 = vadd.f32 %v2935, %v3395
  %v3498 = vadd.f32 %v2936, %v3400
  %v3499 = vadd.f32 %v2937, %v3403
  %v3500 = vadd.f32 %v2938, %v3408
  %v3501 = vadd.f32 %v2939, %v3411
  %v3502 = vadd.f32 %v2940, %v3416
  %v3503 = vadd.f32 %v2941, %v3419
  %v3504 = vadd.f32 %v2942, %v3424
  %v3505 = vadd.f32 %v2943, %v3427
  %v3506 = vadd.f32 %v2944, %v3432
  %v3507 = vadd.f32 %v2945, %v3435
  %v3508 = vadd.f32 %v2946, %v3440
  %v3509 = vadd.f32 %v2947, %v3443
  %v3510 = vld [vmem:[%s1326 + $0x1] sm:$0xff]
  %v3511 = vld [vmem:[%s1326 + $0x9] sm:$0xff]
  %v3512 = vld [vmem:[%s1326 + $0x19] sm:$0xff]
  %v3513 = vld [vmem:[%s1326 + $0x21] sm:$0xff]
  %v3514 = vld [vmem:[%s1326 + $0x31] sm:$0xff]
  %v3515 = vld [vmem:[%s1326 + $0x39] sm:$0xff]
  %v3516 = vld [vmem:[%s1326 + $0x49] sm:$0xff]
  %v3517 = vld [vmem:[%s1326 + $0x51] sm:$0xff]
  %v3518 = vld [vmem:[%s1326 + $0x61] sm:$0xff]
  %v3519 = vld [vmem:[%s1326 + $0x69] sm:$0xff]
  %v3520 = vld [vmem:[%s1326 + $0x79] sm:$0xff]
  %v3521 = vld [vmem:[%s1326 + $0x81] sm:$0xff]
  %v3522 = vld [vmem:[%s1326 + $0x91] sm:$0xff]
  %v3523 = vld [vmem:[%s1326 + $0x99] sm:$0xff]
  %v3524 = vld [vmem:[%s1326 + $0xa9] sm:$0xff]
  %v3525 = vld [vmem:[%s1326 + $0xb1] sm:$0xff]
  %v3526 = vld [vmem:[%s1326 + $0xc1] sm:$0xff]
  %v3527 = vld [vmem:[%s1326 + $0xc9] sm:$0xff]
  %v3528 = vld [vmem:[%s1326 + $0xd9] sm:$0xff]
  %v3529 = vld [vmem:[%s1326 + $0xe1] sm:$0xff]
  %v3530 = vld [vmem:[%s1326 + $0xf1] sm:$0xff]
  %v3531 = vld [vmem:[%s1326 + $0xf9] sm:$0xff]
  %v3532 = vld [vmem:[%s1326 + $0x109] sm:$0xff]
  %v3533 = vld [vmem:[%s1326 + $0x111] sm:$0xff]
  %v3534 = vld [vmem:[%s1326 + $0x121] sm:$0xff]
  %v3535 = vld [vmem:[%s1326 + $0x129] sm:$0xff]
  %v3536 = vld [vmem:[%s1326 + $0x139] sm:$0xff]
  %v3537 = vld [vmem:[%s1326 + $0x141] sm:$0xff]
  %v3538 = vld [vmem:[%s1326 + $0x151] sm:$0xff]
  %v3539 = vld [vmem:[%s1326 + $0x159] sm:$0xff]
  %v3540 = vld [vmem:[%s1326 + $0x169] sm:$0xff]
  %v3541 = vld [vmem:[%s1326 + $0x171] sm:$0xff]
  %v3542 = vld [vmem:[%s1326 + $0x1b1] sm:$0xff]
  %v3543 = vld [vmem:[%s1326 + $0x1b9] sm:$0xff]
  %v3544 = vld [vmem:[%s1326 + $0x1c9] sm:$0xff]
  %v3545 = vld [vmem:[%s1326 + $0x1d1] sm:$0xff]
  %v3546 = vld [vmem:[%s1326 + $0x1e1] sm:$0xff]
  %v3547 = vld [vmem:[%s1326 + $0x1e9] sm:$0xff]
  %v3548 = vld [vmem:[%s1326 + $0x1f9] sm:$0xff]
  %v3549 = vld [vmem:[%s1326 + $0x201] sm:$0xff]
  %v3550 = vld [vmem:[%s1326 + $0x211] sm:$0xff]
  %v3551 = vld [vmem:[%s1326 + $0x219] sm:$0xff]
  %v3552 = vld [vmem:[%s1326 + $0x229] sm:$0xff]
  %v3553 = vld [vmem:[%s1326 + $0x231] sm:$0xff]
  %v3554 = vld [vmem:[%s1326 + $0x241] sm:$0xff]
  %v3555 = vld [vmem:[%s1326 + $0x249] sm:$0xff]
  %v3556 = vld [vmem:[%s1326 + $0x259] sm:$0xff]
  %v3557 = vld [vmem:[%s1326 + $0x261] sm:$0xff]
  %v3558 = vld [vmem:[%s1326 + $0x271] sm:$0xff]
  %v3559 = vld [vmem:[%s1326 + $0x279] sm:$0xff]
  %v3560 = vld [vmem:[%s1326 + $0x289] sm:$0xff]
  %v3561 = vld [vmem:[%s1326 + $0x291] sm:$0xff]
  %v3562 = vld [vmem:[%s1326 + $0x2a1] sm:$0xff]
  %v3563 = vld [vmem:[%s1326 + $0x2a9] sm:$0xff]
  %v3564 = vld [vmem:[%s1326 + $0x2b9] sm:$0xff]
  %v3565 = vld [vmem:[%s1326 + $0x2c1] sm:$0xff]
  %v3566 = vld [vmem:[%s1326 + $0x2d1] sm:$0xff]
  %v3567 = vld [vmem:[%s1326 + $0x2d9] sm:$0xff]
  %v3568 = vld [vmem:[%s1326 + $0x2e9] sm:$0xff]
  %v3569 = vld [vmem:[%s1326 + $0x2f1] sm:$0xff]
  %v3570 = vld [vmem:[%s1326 + $0x301] sm:$0xff]
  %v3571 = vld [vmem:[%s1326 + $0x309] sm:$0xff]
  %v3572 = vld [vmem:[%s1326 + $0x319] sm:$0xff]
  %v3573 = vld [vmem:[%s1326 + $0x321] sm:$0xff]
  %v3574 = vpack.c.bf16 %v3511, %v3510
  %v3575 = vpack.c.bf16 %v3513, %v3512
  %v3576 = vpack.c.bf16 %v3515, %v3514
  %v3577 = vpack.c.bf16 %v3517, %v3516
  %v3578 = vpack.c.bf16 %v3519, %v3518
  %v3579 = vpack.c.bf16 %v3521, %v3520
  %v3580 = vpack.c.bf16 %v3523, %v3522
  %v3581 = vpack.c.bf16 %v3525, %v3524
  %v3582 = vpack.c.bf16 %v3527, %v3526
  %v3583 = vpack.c.bf16 %v3529, %v3528
  %v3584 = vpack.c.bf16 %v3531, %v3530
  %v3585 = vpack.c.bf16 %v3533, %v3532
  %v3586 = vpack.c.bf16 %v3535, %v3534
  %v3587 = vpack.c.bf16 %v3537, %v3536
  %v3588 = vpack.c.bf16 %v3539, %v3538
  %v3589 = vpack.c.bf16 %v3541, %v3540
  %v3590 = vpack.c.bf16 %v3543, %v3542
  %v3591 = vpack.c.bf16 %v3545, %v3544
  %v3592 = vpack.c.bf16 %v3547, %v3546
  %v3593 = vpack.c.bf16 %v3549, %v3548
  %v3594 = vpack.c.bf16 %v3551, %v3550
  %v3595 = vpack.c.bf16 %v3553, %v3552
  %v3596 = vpack.c.bf16 %v3555, %v3554
  %v3597 = vpack.c.bf16 %v3557, %v3556
  %v3598 = vpack.c.bf16 %v3559, %v3558
  %v3599 = vpack.c.bf16 %v3561, %v3560
  %v3600 = vpack.c.bf16 %v3563, %v3562
  %v3601 = vpack.c.bf16 %v3565, %v3564
  %v3602 = vpack.c.bf16 %v3567, %v3566
  %v3603 = vpack.c.bf16 %v3569, %v3568
  %v3604 = vpack.c.bf16 %v3571, %v3570
  %v3605 = vpack.c.bf16 %v3573, %v3572
  %s3606 = scalar_lea.vmem %s4, 64
  %v3607 = vld [vmem:[%s3606] sm:$0xf]
  %v3608 = vld [vmem:[%s3606 + $0x4] sm:$0xf]
  %v3609 = vld [vmem:[%s3606 + $0x8] sm:$0xf]
  %v3610 = vld [vmem:[%s3606 + $0xc] sm:$0xf]
  %v3615 = vunpack.c.l.b16 %v3607
  %v3616 = vunpack.c.l.b16 %v3608
  %v3617 = vunpack.c.l.b16 %v3609
  %v3618 = vunpack.c.l.b16 %v3610
  %v3619 = vpack.c.b16 %v3616, %v3615
  %v3620 = vpack.c.b16 %v3618, %v3617
  %v3624 = vsel %vm671, %v3574, 0
  %v3627 = vsel %vm671, %v3575, 0
  %v3630 = vsel %vm671, %v3576, 0
  %v3633 = vsel %vm671, %v3577, 0
  %v3636 = vsel %vm671, %v3578, 0
  %v3639 = vsel %vm671, %v3579, 0
  %v3642 = vsel %vm671, %v3580, 0
  %v3645 = vsel %vm671, %v3581, 0
  %v3648 = vsel %vm671, %v3582, 0
  %v3651 = vsel %vm671, %v3583, 0
  %v3654 = vsel %vm671, %v3584, 0
  %v3657 = vsel %vm671, %v3585, 0
  %v3660 = vsel %vm671, %v3586, 0
  %v3663 = vsel %vm671, %v3587, 0
  %v3666 = vsel %vm671, %v3588, 0
  %v3669 = vsel %vm671, %v3589, 0
  %v3672 = vsel %vm671, %v3590, 0
  %v3675 = vsel %vm671, %v3591, 0
  %v3678 = vsel %vm671, %v3592, 0
  %v3681 = vsel %vm671, %v3593, 0
  %v3684 = vsel %vm671, %v3594, 0
  %v3687 = vsel %vm671, %v3595, 0
  %v3690 = vsel %vm671, %v3596, 0
  %v3693 = vsel %vm671, %v3597, 0
  %v3696 = vsel %vm671, %v3598, 0
  %v3699 = vsel %vm671, %v3599, 0
  %v3702 = vsel %vm671, %v3600, 0
  %v3705 = vsel %vm671, %v3601, 0
  %v3708 = vsel %vm671, %v3602, 0
  %v3711 = vsel %vm671, %v3603, 0
  %v3714 = vsel %vm671, %v3604, 0
  %v3717 = vsel %vm671, %v3605, 0
  %3719 = vmatprep.subr.bf16.mxu0 0
  %3720 = vmatpush1.bf16.msra.mxu0 0
  %3721 = vmatprep.subr.bf16.mxu0 0
  %3722 = vmatpush1.bf16.msra.mxu0 0
  %3723 = vmatprep.subr.bf16.mxu0 0
  %3724 = vmatpush1.bf16.msra.mxu0 0
  %3725 = vmatprep.subr.bf16.mxu0 0
  %3726 = vmatpush1.bf16.msra.mxu0 0
  %3727 = vmatprep.subr.bf16.mxu0 0
  %3728 = vmatpush1.bf16.msra.mxu0 0
  %3729 = vmatprep.subr.bf16.mxu0 0
  %3730 = vmatpush1.bf16.msra.mxu0 0
  %3731 = vmatprep.subr.bf16.mxu0 0
  %3732 = vmatpush1.bf16.msra.mxu0 %v3620
  %3733 = vmatprep.subr.bf16.mxu0 0
  %3734 = vmatpush1.bf16.msra.mxu0 %v3619
  %3735 = vmatprep.subr.bf16.mxu0 0
  %3736 = vmatpush2.bf16.msra.mxu0 0
  %3737 = vmatprep.subr.bf16.mxu0 0
  %3738 = vmatpush2.bf16.msra.mxu0 0
  %3739 = vmatprep.subr.bf16.mxu0 0
  %3740 = vmatpush2.bf16.msra.mxu0 0
  %3741 = vmatprep.subr.bf16.mxu0 0
  %3742 = vmatpush2.bf16.msra.mxu0 0
  %3743 = vmatprep.subr.bf16.mxu0 0
  %3744 = vmatpush2.bf16.msra.mxu0 0
  %3745 = vmatprep.subr.bf16.mxu0 0
  %3746 = vmatpush2.bf16.msra.mxu0 0
  %3747 = vmatprep.subr.bf16.mxu0 0
  %3748 = vmatpush2.bf16.msra.mxu0 0
  %3749 = vmatprep.subr.bf16.mxu0 0
  %3750 = vmatpush2.bf16.msra.mxu0 0
  %3751 = vmatprep.mubr.bf16.mxu0 0
  %3752 = vmatmul.mubr.bf16.gmra.mxu0 %v3624
  %v3753 = vpop.f32.mrf.mxu0
  %v3754 = vadd.f32 0.0, %v3753
  %v3755 = vpop.f32.mrf.mxu0
  %v3756 = vpop.f32.mrf.mxu0
  %v3757 = vadd.f32 0.0, %v3756
  %v3758 = vpop.f32.mrf.mxu0
  %3759 = vmatprep.mubr.bf16.mxu0 0
  %3760 = vmatmul.mubr.bf16.gmra.mxu0 %v3627
  %v3761 = vpop.f32.mrf.mxu0
  %v3762 = vadd.f32 0.0, %v3761
  %v3763 = vpop.f32.mrf.mxu0
  %v3764 = vpop.f32.mrf.mxu0
  %v3765 = vadd.f32 0.0, %v3764
  %v3766 = vpop.f32.mrf.mxu0
  %3767 = vmatprep.mubr.bf16.mxu0 0
  %3768 = vmatmul.mubr.bf16.gmra.mxu0 %v3630
  %v3769 = vpop.f32.mrf.mxu0
  %v3770 = vadd.f32 0.0, %v3769
  %v3771 = vpop.f32.mrf.mxu0
  %v3772 = vpop.f32.mrf.mxu0
  %v3773 = vadd.f32 0.0, %v3772
  %v3774 = vpop.f32.mrf.mxu0
  %3775 = vmatprep.mubr.bf16.mxu0 0
  %3776 = vmatmul.mubr.bf16.gmra.mxu0 %v3633
  %v3777 = vpop.f32.mrf.mxu0
  %v3778 = vadd.f32 0.0, %v3777
  %v3779 = vpop.f32.mrf.mxu0
  %v3780 = vpop.f32.mrf.mxu0
  %v3781 = vadd.f32 0.0, %v3780
  %v3782 = vpop.f32.mrf.mxu0
  %3783 = vmatprep.mubr.bf16.mxu0 0
  %3784 = vmatmul.mubr.bf16.gmra.mxu0 %v3636
  %v3785 = vpop.f32.mrf.mxu0
  %v3786 = vadd.f32 0.0, %v3785
  %v3787 = vpop.f32.mrf.mxu0
  %v3788 = vpop.f32.mrf.mxu0
  %v3789 = vadd.f32 0.0, %v3788
  %v3790 = vpop.f32.mrf.mxu0
  %3791 = vmatprep.mubr.bf16.mxu0 0
  %3792 = vmatmul.mubr.bf16.gmra.mxu0 %v3639
  %v3793 = vpop.f32.mrf.mxu0
  %v3794 = vadd.f32 0.0, %v3793
  %v3795 = vpop.f32.mrf.mxu0
  %v3796 = vpop.f32.mrf.mxu0
  %v3797 = vadd.f32 0.0, %v3796
  %v3798 = vpop.f32.mrf.mxu0
  %3799 = vmatprep.mubr.bf16.mxu0 0
  %3800 = vmatmul.mubr.bf16.gmra.mxu0 %v3642
  %v3801 = vpop.f32.mrf.mxu0
  %v3802 = vadd.f32 0.0, %v3801
  %v3803 = vpop.f32.mrf.mxu0
  %v3804 = vpop.f32.mrf.mxu0
  %v3805 = vadd.f32 0.0, %v3804
  %v3806 = vpop.f32.mrf.mxu0
  %3807 = vmatprep.mubr.bf16.mxu0 0
  %3808 = vmatmul.mubr.bf16.gmra.mxu0 %v3645
  %v3809 = vpop.f32.mrf.mxu0
  %v3810 = vadd.f32 0.0, %v3809
  %v3811 = vpop.f32.mrf.mxu0
  %v3812 = vpop.f32.mrf.mxu0
  %v3813 = vadd.f32 0.0, %v3812
  %v3814 = vpop.f32.mrf.mxu0
  %3815 = vmatprep.mubr.bf16.mxu0 0
  %3816 = vmatmul.mubr.bf16.gmra.mxu0 %v3648
  %v3817 = vpop.f32.mrf.mxu0
  %v3818 = vadd.f32 0.0, %v3817
  %v3819 = vpop.f32.mrf.mxu0
  %v3820 = vpop.f32.mrf.mxu0
  %v3821 = vadd.f32 0.0, %v3820
  %v3822 = vpop.f32.mrf.mxu0
  %3823 = vmatprep.mubr.bf16.mxu0 0
  %3824 = vmatmul.mubr.bf16.gmra.mxu0 %v3651
  %v3825 = vpop.f32.mrf.mxu0
  %v3826 = vadd.f32 0.0, %v3825
  %v3827 = vpop.f32.mrf.mxu0
  %v3828 = vpop.f32.mrf.mxu0
  %v3829 = vadd.f32 0.0, %v3828
  %v3830 = vpop.f32.mrf.mxu0
  %3831 = vmatprep.mubr.bf16.mxu0 0
  %3832 = vmatmul.mubr.bf16.gmra.mxu0 %v3654
  %v3833 = vpop.f32.mrf.mxu0
  %v3834 = vadd.f32 0.0, %v3833
  %v3835 = vpop.f32.mrf.mxu0
  %v3836 = vpop.f32.mrf.mxu0
  %v3837 = vadd.f32 0.0, %v3836
  %v3838 = vpop.f32.mrf.mxu0
  %3839 = vmatprep.mubr.bf16.mxu0 0
  %3840 = vmatmul.mubr.bf16.gmra.mxu0 %v3657
  %v3841 = vpop.f32.mrf.mxu0
  %v3842 = vadd.f32 0.0, %v3841
  %v3843 = vpop.f32.mrf.mxu0
  %v3844 = vpop.f32.mrf.mxu0
  %v3845 = vadd.f32 0.0, %v3844
  %v3846 = vpop.f32.mrf.mxu0
  %3847 = vmatprep.mubr.bf16.mxu0 0
  %3848 = vmatmul.mubr.bf16.gmra.mxu0 %v3660
  %v3849 = vpop.f32.mrf.mxu0
  %v3850 = vadd.f32 0.0, %v3849
  %v3851 = vpop.f32.mrf.mxu0
  %v3852 = vpop.f32.mrf.mxu0
  %v3853 = vadd.f32 0.0, %v3852
  %v3854 = vpop.f32.mrf.mxu0
  %3855 = vmatprep.mubr.bf16.mxu0 0
  %3856 = vmatmul.mubr.bf16.gmra.mxu0 %v3663
  %v3857 = vpop.f32.mrf.mxu0
  %v3858 = vadd.f32 0.0, %v3857
  %v3859 = vpop.f32.mrf.mxu0
  %v3860 = vpop.f32.mrf.mxu0
  %v3861 = vadd.f32 0.0, %v3860
  %v3862 = vpop.f32.mrf.mxu0
  %3863 = vmatprep.mubr.bf16.mxu0 0
  %3864 = vmatmul.mubr.bf16.gmra.mxu0 %v3666
  %v3865 = vpop.f32.mrf.mxu0
  %v3866 = vadd.f32 0.0, %v3865
  %v3867 = vpop.f32.mrf.mxu0
  %v3868 = vpop.f32.mrf.mxu0
  %v3869 = vadd.f32 0.0, %v3868
  %v3870 = vpop.f32.mrf.mxu0
  %3871 = vmatprep.mubr.bf16.mxu0 0
  %3872 = vmatmul.mubr.bf16.gmra.mxu0 %v3669
  %v3873 = vpop.f32.mrf.mxu0
  %v3874 = vadd.f32 0.0, %v3873
  %v3875 = vpop.f32.mrf.mxu0
  %v3876 = vpop.f32.mrf.mxu0
  %v3877 = vadd.f32 0.0, %v3876
  %v3878 = vpop.f32.mrf.mxu0
  %3879 = vmatprep.mubr.bf16.mxu0 0
  %3880 = vmatmul.mubr.bf16.gmra.mxu0 %v3672
  %v3881 = vpop.f32.mrf.mxu0
  %v3882 = vadd.f32 0.0, %v3881
  %v3883 = vpop.f32.mrf.mxu0
  %v3884 = vpop.f32.mrf.mxu0
  %v3885 = vadd.f32 0.0, %v3884
  %v3886 = vpop.f32.mrf.mxu0
  %3887 = vmatprep.mubr.bf16.mxu0 0
  %3888 = vmatmul.mubr.bf16.gmra.mxu0 %v3675
  %v3889 = vpop.f32.mrf.mxu0
  %v3890 = vadd.f32 0.0, %v3889
  %v3891 = vpop.f32.mrf.mxu0
  %v3892 = vpop.f32.mrf.mxu0
  %v3893 = vadd.f32 0.0, %v3892
  %v3894 = vpop.f32.mrf.mxu0
  %3895 = vmatprep.mubr.bf16.mxu0 0
  %3896 = vmatmul.mubr.bf16.gmra.mxu0 %v3678
  %v3897 = vpop.f32.mrf.mxu0
  %v3898 = vadd.f32 0.0, %v3897
  %v3899 = vpop.f32.mrf.mxu0
  %v3900 = vpop.f32.mrf.mxu0
  %v3901 = vadd.f32 0.0, %v3900
  %v3902 = vpop.f32.mrf.mxu0
  %3903 = vmatprep.mubr.bf16.mxu0 0
  %3904 = vmatmul.mubr.bf16.gmra.mxu0 %v3681
  %v3905 = vpop.f32.mrf.mxu0
  %v3906 = vadd.f32 0.0, %v3905
  %v3907 = vpop.f32.mrf.mxu0
  %v3908 = vpop.f32.mrf.mxu0
  %v3909 = vadd.f32 0.0, %v3908
  %v3910 = vpop.f32.mrf.mxu0
  %3911 = vmatprep.mubr.bf16.mxu0 0
  %3912 = vmatmul.mubr.bf16.gmra.mxu0 %v3684
  %v3913 = vpop.f32.mrf.mxu0
  %v3914 = vadd.f32 0.0, %v3913
  %v3915 = vpop.f32.mrf.mxu0
  %v3916 = vpop.f32.mrf.mxu0
  %v3917 = vadd.f32 0.0, %v3916
  %v3918 = vpop.f32.mrf.mxu0
  %3919 = vmatprep.mubr.bf16.mxu0 0
  %3920 = vmatmul.mubr.bf16.gmra.mxu0 %v3687
  %v3921 = vpop.f32.mrf.mxu0
  %v3922 = vadd.f32 0.0, %v3921
  %v3923 = vpop.f32.mrf.mxu0
  %v3924 = vpop.f32.mrf.mxu0
  %v3925 = vadd.f32 0.0, %v3924
  %v3926 = vpop.f32.mrf.mxu0
  %3927 = vmatprep.mubr.bf16.mxu0 0
  %3928 = vmatmul.mubr.bf16.gmra.mxu0 %v3690
  %v3929 = vpop.f32.mrf.mxu0
  %v3930 = vadd.f32 0.0, %v3929
  %v3931 = vpop.f32.mrf.mxu0
  %v3932 = vpop.f32.mrf.mxu0
  %v3933 = vadd.f32 0.0, %v3932
  %v3934 = vpop.f32.mrf.mxu0
  %3935 = vmatprep.mubr.bf16.mxu0 0
  %3936 = vmatmul.mubr.bf16.gmra.mxu0 %v3693
  %v3937 = vpop.f32.mrf.mxu0
  %v3938 = vadd.f32 0.0, %v3937
  %v3939 = vpop.f32.mrf.mxu0
  %v3940 = vpop.f32.mrf.mxu0
  %v3941 = vadd.f32 0.0, %v3940
  %v3942 = vpop.f32.mrf.mxu0
  %3943 = vmatprep.mubr.bf16.mxu0 0
  %3944 = vmatmul.mubr.bf16.gmra.mxu0 %v3696
  %v3945 = vpop.f32.mrf.mxu0
  %v3946 = vadd.f32 0.0, %v3945
  %v3947 = vpop.f32.mrf.mxu0
  %v3948 = vpop.f32.mrf.mxu0
  %v3949 = vadd.f32 0.0, %v3948
  %v3950 = vpop.f32.mrf.mxu0
  %3951 = vmatprep.mubr.bf16.mxu0 0
  %3952 = vmatmul.mubr.bf16.gmra.mxu0 %v3699
  %v3953 = vpop.f32.mrf.mxu0
  %v3954 = vadd.f32 0.0, %v3953
  %v3955 = vpop.f32.mrf.mxu0
  %v3956 = vpop.f32.mrf.mxu0
  %v3957 = vadd.f32 0.0, %v3956
  %v3958 = vpop.f32.mrf.mxu0
  %3959 = vmatprep.mubr.bf16.mxu0 0
  %3960 = vmatmul.mubr.bf16.gmra.mxu0 %v3702
  %v3961 = vpop.f32.mrf.mxu0
  %v3962 = vadd.f32 0.0, %v3961
  %v3963 = vpop.f32.mrf.mxu0
  %v3964 = vpop.f32.mrf.mxu0
  %v3965 = vadd.f32 0.0, %v3964
  %v3966 = vpop.f32.mrf.mxu0
  %3967 = vmatprep.mubr.bf16.mxu0 0
  %3968 = vmatmul.mubr.bf16.gmra.mxu0 %v3705
  %v3969 = vpop.f32.mrf.mxu0
  %v3970 = vadd.f32 0.0, %v3969
  %v3971 = vpop.f32.mrf.mxu0
  %v3972 = vpop.f32.mrf.mxu0
  %v3973 = vadd.f32 0.0, %v3972
  %v3974 = vpop.f32.mrf.mxu0
  %3975 = vmatprep.mubr.bf16.mxu0 0
  %3976 = vmatmul.mubr.bf16.gmra.mxu0 %v3708
  %v3977 = vpop.f32.mrf.mxu0
  %v3978 = vadd.f32 0.0, %v3977
  %v3979 = vpop.f32.mrf.mxu0
  %v3980 = vpop.f32.mrf.mxu0
  %v3981 = vadd.f32 0.0, %v3980
  %v3982 = vpop.f32.mrf.mxu0
  %3983 = vmatprep.mubr.bf16.mxu0 0
  %3984 = vmatmul.mubr.bf16.gmra.mxu0 %v3711
  %v3985 = vpop.f32.mrf.mxu0
  %v3986 = vadd.f32 0.0, %v3985
  %v3987 = vpop.f32.mrf.mxu0
  %v3988 = vpop.f32.mrf.mxu0
  %v3989 = vadd.f32 0.0, %v3988
  %v3990 = vpop.f32.mrf.mxu0
  %3991 = vmatprep.mubr.bf16.mxu0 0
  %3992 = vmatmul.mubr.bf16.gmra.mxu0 %v3714
  %v3993 = vpop.f32.mrf.mxu0
  %v3994 = vadd.f32 0.0, %v3993
  %v3995 = vpop.f32.mrf.mxu0
  %v3996 = vpop.f32.mrf.mxu0
  %v3997 = vadd.f32 0.0, %v3996
  %v3998 = vpop.f32.mrf.mxu0
  %3999 = vmatprep.mubr.bf16.mxu0 0
  %4000 = vmatmul.mubr.bf16.gmra.mxu0 %v3717
  %v4001 = vpop.f32.mrf.mxu0
  %v4002 = vadd.f32 0.0, %v4001
  %v4003 = vpop.f32.mrf.mxu0
  %v4004 = vpop.f32.mrf.mxu0
  %v4005 = vadd.f32 0.0, %v4004
  %v4006 = vpop.f32.mrf.mxu0
  %4007 = vdwg.mxu0
  %v4008 = vadd.f32 %v3446, %v3754
  %v4009 = vadd.f32 %v3447, %v3757
  %v4010 = vadd.f32 %v3448, %v3762
  %v4011 = vadd.f32 %v3449, %v3765
  %v4012 = vadd.f32 %v3450, %v3770
  %v4013 = vadd.f32 %v3451, %v3773
  %v4014 = vadd.f32 %v3452, %v3778
  %v4015 = vadd.f32 %v3453, %v3781
  %v4016 = vadd.f32 %v3454, %v3786
  %v4017 = vadd.f32 %v3455, %v3789
  %v4018 = vadd.f32 %v3456, %v3794
  %v4019 = vadd.f32 %v3457, %v3797
  %v4020 = vadd.f32 %v3458, %v3802
  %v4021 = vadd.f32 %v3459, %v3805
  %v4022 = vadd.f32 %v3460, %v3810
  %v4023 = vadd.f32 %v3461, %v3813
  %v4024 = vadd.f32 %v3462, %v3818
  %v4025 = vadd.f32 %v3463, %v3821
  %v4026 = vadd.f32 %v3464, %v3826
  %v4027 = vadd.f32 %v3465, %v3829
  %v4028 = vadd.f32 %v3466, %v3834
  %v4029 = vadd.f32 %v3467, %v3837
  %v4030 = vadd.f32 %v3468, %v3842
  %v4031 = vadd.f32 %v3469, %v3845
  %v4032 = vadd.f32 %v3470, %v3850
  %v4033 = vadd.f32 %v3471, %v3853
  %v4034 = vadd.f32 %v3472, %v3858
  %v4035 = vadd.f32 %v3473, %v3861
  %v4036 = vadd.f32 %v3474, %v3866
  %v4037 = vadd.f32 %v3475, %v3869
  %v4038 = vadd.f32 %v3476, %v3874
  %v4039 = vadd.f32 %v3477, %v3877
  %v4040 = vadd.f32 %v3478, %v3882
  %v4041 = vadd.f32 %v3479, %v3885
  %v4042 = vadd.f32 %v3480, %v3890
  %v4043 = vadd.f32 %v3481, %v3893
  %v4044 = vadd.f32 %v3482, %v3898
  %v4045 = vadd.f32 %v3483, %v3901
  %v4046 = vadd.f32 %v3484, %v3906
  %v4047 = vadd.f32 %v3485, %v3909
  %v4048 = vadd.f32 %v3486, %v3914
  %v4049 = vadd.f32 %v3487, %v3917
  %v4050 = vadd.f32 %v3488, %v3922
  %v4051 = vadd.f32 %v3489, %v3925
  %v4052 = vadd.f32 %v3490, %v3930
  %v4053 = vadd.f32 %v3491, %v3933
  %v4054 = vadd.f32 %v3492, %v3938
  %v4055 = vadd.f32 %v3493, %v3941
  %v4056 = vadd.f32 %v3494, %v3946
  %v4057 = vadd.f32 %v3495, %v3949
  %v4058 = vadd.f32 %v3496, %v3954
  %v4059 = vadd.f32 %v3497, %v3957
  %v4060 = vadd.f32 %v3498, %v3962
  %v4061 = vadd.f32 %v3499, %v3965
  %v4062 = vadd.f32 %v3500, %v3970
  %v4063 = vadd.f32 %v3501, %v3973
  %v4064 = vadd.f32 %v3502, %v3978
  %v4065 = vadd.f32 %v3503, %v3981
  %v4066 = vadd.f32 %v3504, %v3986
  %v4067 = vadd.f32 %v3505, %v3989
  %v4068 = vadd.f32 %v3506, %v3994
  %v4069 = vadd.f32 %v3507, %v3997
  %v4070 = vadd.f32 %v3508, %v4002
  %v4071 = vadd.f32 %v3509, %v4005
  %v4072 = vld [vmem:[%s1326 + $0x2] sm:$0xff]
  %v4073 = vld [vmem:[%s1326 + $0xa] sm:$0xff]
  %v4074 = vld [vmem:[%s1326 + $0x1a] sm:$0xff]
  %v4075 = vld [vmem:[%s1326 + $0x22] sm:$0xff]
  %v4076 = vld [vmem:[%s1326 + $0x32] sm:$0xff]
  %v4077 = vld [vmem:[%s1326 + $0x3a] sm:$0xff]
  %v4078 = vld [vmem:[%s1326 + $0x4a] sm:$0xff]
  %v4079 = vld [vmem:[%s1326 + $0x52] sm:$0xff]
  %v4080 = vld [vmem:[%s1326 + $0x62] sm:$0xff]
  %v4081 = vld [vmem:[%s1326 + $0x6a] sm:$0xff]
  %v4082 = vld [vmem:[%s1326 + $0x7a] sm:$0xff]
  %v4083 = vld [vmem:[%s1326 + $0x82] sm:$0xff]
  %v4084 = vld [vmem:[%s1326 + $0x92] sm:$0xff]
  %v4085 = vld [vmem:[%s1326 + $0x9a] sm:$0xff]
  %v4086 = vld [vmem:[%s1326 + $0xaa] sm:$0xff]
  %v4087 = vld [vmem:[%s1326 + $0xb2] sm:$0xff]
  %v4088 = vld [vmem:[%s1326 + $0xc2] sm:$0xff]
  %v4089 = vld [vmem:[%s1326 + $0xca] sm:$0xff]
  %v4090 = vld [vmem:[%s1326 + $0xda] sm:$0xff]
  %v4091 = vld [vmem:[%s1326 + $0xe2] sm:$0xff]
  %v4092 = vld [vmem:[%s1326 + $0xf2] sm:$0xff]
  %v4093 = vld [vmem:[%s1326 + $0xfa] sm:$0xff]
  %v4094 = vld [vmem:[%s1326 + $0x10a] sm:$0xff]
  %v4095 = vld [vmem:[%s1326 + $0x112] sm:$0xff]
  %v4096 = vld [vmem:[%s1326 + $0x122] sm:$0xff]
  %v4097 = vld [vmem:[%s1326 + $0x12a] sm:$0xff]
  %v4098 = vld [vmem:[%s1326 + $0x13a] sm:$0xff]
  %v4099 = vld [vmem:[%s1326 + $0x142] sm:$0xff]
  %v4100 = vld [vmem:[%s1326 + $0x152] sm:$0xff]
  %v4101 = vld [vmem:[%s1326 + $0x15a] sm:$0xff]
  %v4102 = vld [vmem:[%s1326 + $0x16a] sm:$0xff]
  %v4103 = vld [vmem:[%s1326 + $0x172] sm:$0xff]
  %v4104 = vld [vmem:[%s1326 + $0x1b2] sm:$0xff]
  %v4105 = vld [vmem:[%s1326 + $0x1ba] sm:$0xff]
  %v4106 = vld [vmem:[%s1326 + $0x1ca] sm:$0xff]
  %v4107 = vld [vmem:[%s1326 + $0x1d2] sm:$0xff]
  %v4108 = vld [vmem:[%s1326 + $0x1e2] sm:$0xff]
  %v4109 = vld [vmem:[%s1326 + $0x1ea] sm:$0xff]
  %v4110 = vld [vmem:[%s1326 + $0x1fa] sm:$0xff]
  %v4111 = vld [vmem:[%s1326 + $0x202] sm:$0xff]
  %v4112 = vld [vmem:[%s1326 + $0x212] sm:$0xff]
  %v4113 = vld [vmem:[%s1326 + $0x21a] sm:$0xff]
  %v4114 = vld [vmem:[%s1326 + $0x22a] sm:$0xff]
  %v4115 = vld [vmem:[%s1326 + $0x232] sm:$0xff]
  %v4116 = vld [vmem:[%s1326 + $0x242] sm:$0xff]
  %v4117 = vld [vmem:[%s1326 + $0x24a] sm:$0xff]
  %v4118 = vld [vmem:[%s1326 + $0x25a] sm:$0xff]
  %v4119 = vld [vmem:[%s1326 + $0x262] sm:$0xff]
  %v4120 = vld [vmem:[%s1326 + $0x272] sm:$0xff]
  %v4121 = vld [vmem:[%s1326 + $0x27a] sm:$0xff]
  %v4122 = vld [vmem:[%s1326 + $0x28a] sm:$0xff]
  %v4123 = vld [vmem:[%s1326 + $0x292] sm:$0xff]
  %v4124 = vld [vmem:[%s1326 + $0x2a2] sm:$0xff]
  %v4125 = vld [vmem:[%s1326 + $0x2aa] sm:$0xff]
  %v4126 = vld [vmem:[%s1326 + $0x2ba] sm:$0xff]
  %v4127 = vld [vmem:[%s1326 + $0x2c2] sm:$0xff]
  %v4128 = vld [vmem:[%s1326 + $0x2d2] sm:$0xff]
  %v4129 = vld [vmem:[%s1326 + $0x2da] sm:$0xff]
  %v4130 = vld [vmem:[%s1326 + $0x2ea] sm:$0xff]
  %v4131 = vld [vmem:[%s1326 + $0x2f2] sm:$0xff]
  %v4132 = vld [vmem:[%s1326 + $0x302] sm:$0xff]
  %v4133 = vld [vmem:[%s1326 + $0x30a] sm:$0xff]
  %v4134 = vld [vmem:[%s1326 + $0x31a] sm:$0xff]
  %v4135 = vld [vmem:[%s1326 + $0x322] sm:$0xff]
  %v4136 = vpack.c.bf16 %v4073, %v4072
  %v4137 = vpack.c.bf16 %v4075, %v4074
  %v4138 = vpack.c.bf16 %v4077, %v4076
  %v4139 = vpack.c.bf16 %v4079, %v4078
  %v4140 = vpack.c.bf16 %v4081, %v4080
  %v4141 = vpack.c.bf16 %v4083, %v4082
  %v4142 = vpack.c.bf16 %v4085, %v4084
  %v4143 = vpack.c.bf16 %v4087, %v4086
  %v4144 = vpack.c.bf16 %v4089, %v4088
  %v4145 = vpack.c.bf16 %v4091, %v4090
  %v4146 = vpack.c.bf16 %v4093, %v4092
  %v4147 = vpack.c.bf16 %v4095, %v4094
  %v4148 = vpack.c.bf16 %v4097, %v4096
  %v4149 = vpack.c.bf16 %v4099, %v4098
  %v4150 = vpack.c.bf16 %v4101, %v4100
  %v4151 = vpack.c.bf16 %v4103, %v4102
  %v4152 = vpack.c.bf16 %v4105, %v4104
  %v4153 = vpack.c.bf16 %v4107, %v4106
  %v4154 = vpack.c.bf16 %v4109, %v4108
  %v4155 = vpack.c.bf16 %v4111, %v4110
  %v4156 = vpack.c.bf16 %v4113, %v4112
  %v4157 = vpack.c.bf16 %v4115, %v4114
  %v4158 = vpack.c.bf16 %v4117, %v4116
  %v4159 = vpack.c.bf16 %v4119, %v4118
  %v4160 = vpack.c.bf16 %v4121, %v4120
  %v4161 = vpack.c.bf16 %v4123, %v4122
  %v4162 = vpack.c.bf16 %v4125, %v4124
  %v4163 = vpack.c.bf16 %v4127, %v4126
  %v4164 = vpack.c.bf16 %v4129, %v4128
  %v4165 = vpack.c.bf16 %v4131, %v4130
  %v4166 = vpack.c.bf16 %v4133, %v4132
  %v4167 = vpack.c.bf16 %v4135, %v4134
  %s4168 = scalar_lea.vmem %s4, 80
  %v4169 = vld [vmem:[%s4168] sm:$0xf]
  %v4170 = vld [vmem:[%s4168 + $0x4] sm:$0xf]
  %v4171 = vld [vmem:[%s4168 + $0x8] sm:$0xf]
  %v4172 = vld [vmem:[%s4168 + $0xc] sm:$0xf]
  %v4177 = vunpack.c.l.b16 %v4169
  %v4178 = vunpack.c.l.b16 %v4170
  %v4179 = vunpack.c.l.b16 %v4171
  %v4180 = vunpack.c.l.b16 %v4172
  %v4181 = vpack.c.b16 %v4178, %v4177
  %v4182 = vpack.c.b16 %v4180, %v4179
  %v4186 = vsel %vm671, %v4136, 0
  %v4189 = vsel %vm671, %v4137, 0
  %v4192 = vsel %vm671, %v4138, 0
  %v4195 = vsel %vm671, %v4139, 0
  %v4198 = vsel %vm671, %v4140, 0
  %v4201 = vsel %vm671, %v4141, 0
  %v4204 = vsel %vm671, %v4142, 0
  %v4207 = vsel %vm671, %v4143, 0
  %v4210 = vsel %vm671, %v4144, 0
  %v4213 = vsel %vm671, %v4145, 0
  %v4216 = vsel %vm671, %v4146, 0
  %v4219 = vsel %vm671, %v4147, 0
  %v4222 = vsel %vm671, %v4148, 0
  %v4225 = vsel %vm671, %v4149, 0
  %v4228 = vsel %vm671, %v4150, 0
  %v4231 = vsel %vm671, %v4151, 0
  %v4234 = vsel %vm671, %v4152, 0
  %v4237 = vsel %vm671, %v4153, 0
  %v4240 = vsel %vm671, %v4154, 0
  %v4243 = vsel %vm671, %v4155, 0
  %v4246 = vsel %vm671, %v4156, 0
  %v4249 = vsel %vm671, %v4157, 0
  %v4252 = vsel %vm671, %v4158, 0
  %v4255 = vsel %vm671, %v4159, 0
  %v4258 = vsel %vm671, %v4160, 0
  %v4261 = vsel %vm671, %v4161, 0
  %v4264 = vsel %vm671, %v4162, 0
  %v4267 = vsel %vm671, %v4163, 0
  %v4270 = vsel %vm671, %v4164, 0
  %v4273 = vsel %vm671, %v4165, 0
  %v4276 = vsel %vm671, %v4166, 0
  %v4279 = vsel %vm671, %v4167, 0
  %4281 = vmatprep.subr.bf16.mxu0 0
  %4282 = vmatpush1.bf16.msra.mxu0 0
  %4283 = vmatprep.subr.bf16.mxu0 0
  %4284 = vmatpush1.bf16.msra.mxu0 0
  %4285 = vmatprep.subr.bf16.mxu0 0
  %4286 = vmatpush1.bf16.msra.mxu0 0
  %4287 = vmatprep.subr.bf16.mxu0 0
  %4288 = vmatpush1.bf16.msra.mxu0 0
  %4289 = vmatprep.subr.bf16.mxu0 0
  %4290 = vmatpush1.bf16.msra.mxu0 0
  %4291 = vmatprep.subr.bf16.mxu0 0
  %4292 = vmatpush1.bf16.msra.mxu0 0
  %4293 = vmatprep.subr.bf16.mxu0 0
  %4294 = vmatpush1.bf16.msra.mxu0 %v4182
  %4295 = vmatprep.subr.bf16.mxu0 0
  %4296 = vmatpush1.bf16.msra.mxu0 %v4181
  %4297 = vmatprep.subr.bf16.mxu0 0
  %4298 = vmatpush2.bf16.msra.mxu0 0
  %4299 = vmatprep.subr.bf16.mxu0 0
  %4300 = vmatpush2.bf16.msra.mxu0 0
  %4301 = vmatprep.subr.bf16.mxu0 0
  %4302 = vmatpush2.bf16.msra.mxu0 0
  %4303 = vmatprep.subr.bf16.mxu0 0
  %4304 = vmatpush2.bf16.msra.mxu0 0
  %4305 = vmatprep.subr.bf16.mxu0 0
  %4306 = vmatpush2.bf16.msra.mxu0 0
  %4307 = vmatprep.subr.bf16.mxu0 0
  %4308 = vmatpush2.bf16.msra.mxu0 0
  %4309 = vmatprep.subr.bf16.mxu0 0
  %4310 = vmatpush2.bf16.msra.mxu0 0
  %4311 = vmatprep.subr.bf16.mxu0 0
  %4312 = vmatpush2.bf16.msra.mxu0 0
  %4313 = vmatprep.mubr.bf16.mxu0 0
  %4314 = vmatmul.mubr.bf16.gmra.mxu0 %v4186
  %v4315 = vpop.f32.mrf.mxu0
  %v4316 = vadd.f32 0.0, %v4315
  %v4317 = vpop.f32.mrf.mxu0
  %v4318 = vpop.f32.mrf.mxu0
  %v4319 = vadd.f32 0.0, %v4318
  %v4320 = vpop.f32.mrf.mxu0
  %4321 = vmatprep.mubr.bf16.mxu0 0
  %4322 = vmatmul.mubr.bf16.gmra.mxu0 %v4189
  %v4323 = vpop.f32.mrf.mxu0
  %v4324 = vadd.f32 0.0, %v4323
  %v4325 = vpop.f32.mrf.mxu0
  %v4326 = vpop.f32.mrf.mxu0
  %v4327 = vadd.f32 0.0, %v4326
  %v4328 = vpop.f32.mrf.mxu0
  %4329 = vmatprep.mubr.bf16.mxu0 0
  %4330 = vmatmul.mubr.bf16.gmra.mxu0 %v4192
  %v4331 = vpop.f32.mrf.mxu0
  %v4332 = vadd.f32 0.0, %v4331
  %v4333 = vpop.f32.mrf.mxu0
  %v4334 = vpop.f32.mrf.mxu0
  %v4335 = vadd.f32 0.0, %v4334
  %v4336 = vpop.f32.mrf.mxu0
  %4337 = vmatprep.mubr.bf16.mxu0 0
  %4338 = vmatmul.mubr.bf16.gmra.mxu0 %v4195
  %v4339 = vpop.f32.mrf.mxu0
  %v4340 = vadd.f32 0.0, %v4339
  %v4341 = vpop.f32.mrf.mxu0
  %v4342 = vpop.f32.mrf.mxu0
  %v4343 = vadd.f32 0.0, %v4342
  %v4344 = vpop.f32.mrf.mxu0
  %4345 = vmatprep.mubr.bf16.mxu0 0
  %4346 = vmatmul.mubr.bf16.gmra.mxu0 %v4198
  %v4347 = vpop.f32.mrf.mxu0
  %v4348 = vadd.f32 0.0, %v4347
  %v4349 = vpop.f32.mrf.mxu0
  %v4350 = vpop.f32.mrf.mxu0
  %v4351 = vadd.f32 0.0, %v4350
  %v4352 = vpop.f32.mrf.mxu0
  %4353 = vmatprep.mubr.bf16.mxu0 0
  %4354 = vmatmul.mubr.bf16.gmra.mxu0 %v4201
  %v4355 = vpop.f32.mrf.mxu0
  %v4356 = vadd.f32 0.0, %v4355
  %v4357 = vpop.f32.mrf.mxu0
  %v4358 = vpop.f32.mrf.mxu0
  %v4359 = vadd.f32 0.0, %v4358
  %v4360 = vpop.f32.mrf.mxu0
  %4361 = vmatprep.mubr.bf16.mxu0 0
  %4362 = vmatmul.mubr.bf16.gmra.mxu0 %v4204
  %v4363 = vpop.f32.mrf.mxu0
  %v4364 = vadd.f32 0.0, %v4363
  %v4365 = vpop.f32.mrf.mxu0
  %v4366 = vpop.f32.mrf.mxu0
  %v4367 = vadd.f32 0.0, %v4366
  %v4368 = vpop.f32.mrf.mxu0
  %4369 = vmatprep.mubr.bf16.mxu0 0
  %4370 = vmatmul.mubr.bf16.gmra.mxu0 %v4207
  %v4371 = vpop.f32.mrf.mxu0
  %v4372 = vadd.f32 0.0, %v4371
  %v4373 = vpop.f32.mrf.mxu0
  %v4374 = vpop.f32.mrf.mxu0
  %v4375 = vadd.f32 0.0, %v4374
  %v4376 = vpop.f32.mrf.mxu0
  %4377 = vmatprep.mubr.bf16.mxu0 0
  %4378 = vmatmul.mubr.bf16.gmra.mxu0 %v4210
  %v4379 = vpop.f32.mrf.mxu0
  %v4380 = vadd.f32 0.0, %v4379
  %v4381 = vpop.f32.mrf.mxu0
  %v4382 = vpop.f32.mrf.mxu0
  %v4383 = vadd.f32 0.0, %v4382
  %v4384 = vpop.f32.mrf.mxu0
  %4385 = vmatprep.mubr.bf16.mxu0 0
  %4386 = vmatmul.mubr.bf16.gmra.mxu0 %v4213
  %v4387 = vpop.f32.mrf.mxu0
  %v4388 = vadd.f32 0.0, %v4387
  %v4389 = vpop.f32.mrf.mxu0
  %v4390 = vpop.f32.mrf.mxu0
  %v4391 = vadd.f32 0.0, %v4390
  %v4392 = vpop.f32.mrf.mxu0
  %4393 = vmatprep.mubr.bf16.mxu0 0
  %4394 = vmatmul.mubr.bf16.gmra.mxu0 %v4216
  %v4395 = vpop.f32.mrf.mxu0
  %v4396 = vadd.f32 0.0, %v4395
  %v4397 = vpop.f32.mrf.mxu0
  %v4398 = vpop.f32.mrf.mxu0
  %v4399 = vadd.f32 0.0, %v4398
  %v4400 = vpop.f32.mrf.mxu0
  %4401 = vmatprep.mubr.bf16.mxu0 0
  %4402 = vmatmul.mubr.bf16.gmra.mxu0 %v4219
  %v4403 = vpop.f32.mrf.mxu0
  %v4404 = vadd.f32 0.0, %v4403
  %v4405 = vpop.f32.mrf.mxu0
  %v4406 = vpop.f32.mrf.mxu0
  %v4407 = vadd.f32 0.0, %v4406
  %v4408 = vpop.f32.mrf.mxu0
  %4409 = vmatprep.mubr.bf16.mxu0 0
  %4410 = vmatmul.mubr.bf16.gmra.mxu0 %v4222
  %v4411 = vpop.f32.mrf.mxu0
  %v4412 = vadd.f32 0.0, %v4411
  %v4413 = vpop.f32.mrf.mxu0
  %v4414 = vpop.f32.mrf.mxu0
  %v4415 = vadd.f32 0.0, %v4414
  %v4416 = vpop.f32.mrf.mxu0
  %4417 = vmatprep.mubr.bf16.mxu0 0
  %4418 = vmatmul.mubr.bf16.gmra.mxu0 %v4225
  %v4419 = vpop.f32.mrf.mxu0
  %v4420 = vadd.f32 0.0, %v4419
  %v4421 = vpop.f32.mrf.mxu0
  %v4422 = vpop.f32.mrf.mxu0
  %v4423 = vadd.f32 0.0, %v4422
  %v4424 = vpop.f32.mrf.mxu0
  %4425 = vmatprep.mubr.bf16.mxu0 0
  %4426 = vmatmul.mubr.bf16.gmra.mxu0 %v4228
  %v4427 = vpop.f32.mrf.mxu0
  %v4428 = vadd.f32 0.0, %v4427
  %v4429 = vpop.f32.mrf.mxu0
  %v4430 = vpop.f32.mrf.mxu0
  %v4431 = vadd.f32 0.0, %v4430
  %v4432 = vpop.f32.mrf.mxu0
  %4433 = vmatprep.mubr.bf16.mxu0 0
  %4434 = vmatmul.mubr.bf16.gmra.mxu0 %v4231
  %v4435 = vpop.f32.mrf.mxu0
  %v4436 = vadd.f32 0.0, %v4435
  %v4437 = vpop.f32.mrf.mxu0
  %v4438 = vpop.f32.mrf.mxu0
  %v4439 = vadd.f32 0.0, %v4438
  %v4440 = vpop.f32.mrf.mxu0
  %4441 = vmatprep.mubr.bf16.mxu0 0
  %4442 = vmatmul.mubr.bf16.gmra.mxu0 %v4234
  %v4443 = vpop.f32.mrf.mxu0
  %v4444 = vadd.f32 0.0, %v4443
  %v4445 = vpop.f32.mrf.mxu0
  %v4446 = vpop.f32.mrf.mxu0
  %v4447 = vadd.f32 0.0, %v4446
  %v4448 = vpop.f32.mrf.mxu0
  %4449 = vmatprep.mubr.bf16.mxu0 0
  %4450 = vmatmul.mubr.bf16.gmra.mxu0 %v4237
  %v4451 = vpop.f32.mrf.mxu0
  %v4452 = vadd.f32 0.0, %v4451
  %v4453 = vpop.f32.mrf.mxu0
  %v4454 = vpop.f32.mrf.mxu0
  %v4455 = vadd.f32 0.0, %v4454
  %v4456 = vpop.f32.mrf.mxu0
  %4457 = vmatprep.mubr.bf16.mxu0 0
  %4458 = vmatmul.mubr.bf16.gmra.mxu0 %v4240
  %v4459 = vpop.f32.mrf.mxu0
  %v4460 = vadd.f32 0.0, %v4459
  %v4461 = vpop.f32.mrf.mxu0
  %v4462 = vpop.f32.mrf.mxu0
  %v4463 = vadd.f32 0.0, %v4462
  %v4464 = vpop.f32.mrf.mxu0
  %4465 = vmatprep.mubr.bf16.mxu0 0
  %4466 = vmatmul.mubr.bf16.gmra.mxu0 %v4243
  %v4467 = vpop.f32.mrf.mxu0
  %v4468 = vadd.f32 0.0, %v4467
  %v4469 = vpop.f32.mrf.mxu0
  %v4470 = vpop.f32.mrf.mxu0
  %v4471 = vadd.f32 0.0, %v4470
  %v4472 = vpop.f32.mrf.mxu0
  %4473 = vmatprep.mubr.bf16.mxu0 0
  %4474 = vmatmul.mubr.bf16.gmra.mxu0 %v4246
  %v4475 = vpop.f32.mrf.mxu0
  %v4476 = vadd.f32 0.0, %v4475
  %v4477 = vpop.f32.mrf.mxu0
  %v4478 = vpop.f32.mrf.mxu0
  %v4479 = vadd.f32 0.0, %v4478
  %v4480 = vpop.f32.mrf.mxu0
  %4481 = vmatprep.mubr.bf16.mxu0 0
  %4482 = vmatmul.mubr.bf16.gmra.mxu0 %v4249
  %v4483 = vpop.f32.mrf.mxu0
  %v4484 = vadd.f32 0.0, %v4483
  %v4485 = vpop.f32.mrf.mxu0
  %v4486 = vpop.f32.mrf.mxu0
  %v4487 = vadd.f32 0.0, %v4486
  %v4488 = vpop.f32.mrf.mxu0
  %4489 = vmatprep.mubr.bf16.mxu0 0
  %4490 = vmatmul.mubr.bf16.gmra.mxu0 %v4252
  %v4491 = vpop.f32.mrf.mxu0
  %v4492 = vadd.f32 0.0, %v4491
  %v4493 = vpop.f32.mrf.mxu0
  %v4494 = vpop.f32.mrf.mxu0
  %v4495 = vadd.f32 0.0, %v4494
  %v4496 = vpop.f32.mrf.mxu0
  %4497 = vmatprep.mubr.bf16.mxu0 0
  %4498 = vmatmul.mubr.bf16.gmra.mxu0 %v4255
  %v4499 = vpop.f32.mrf.mxu0
  %v4500 = vadd.f32 0.0, %v4499
  %v4501 = vpop.f32.mrf.mxu0
  %v4502 = vpop.f32.mrf.mxu0
  %v4503 = vadd.f32 0.0, %v4502
  %v4504 = vpop.f32.mrf.mxu0
  %4505 = vmatprep.mubr.bf16.mxu0 0
  %4506 = vmatmul.mubr.bf16.gmra.mxu0 %v4258
  %v4507 = vpop.f32.mrf.mxu0
  %v4508 = vadd.f32 0.0, %v4507
  %v4509 = vpop.f32.mrf.mxu0
  %v4510 = vpop.f32.mrf.mxu0
  %v4511 = vadd.f32 0.0, %v4510
  %v4512 = vpop.f32.mrf.mxu0
  %4513 = vmatprep.mubr.bf16.mxu0 0
  %4514 = vmatmul.mubr.bf16.gmra.mxu0 %v4261
  %v4515 = vpop.f32.mrf.mxu0
  %v4516 = vadd.f32 0.0, %v4515
  %v4517 = vpop.f32.mrf.mxu0
  %v4518 = vpop.f32.mrf.mxu0
  %v4519 = vadd.f32 0.0, %v4518
  %v4520 = vpop.f32.mrf.mxu0
  %4521 = vmatprep.mubr.bf16.mxu0 0
  %4522 = vmatmul.mubr.bf16.gmra.mxu0 %v4264
  %v4523 = vpop.f32.mrf.mxu0
  %v4524 = vadd.f32 0.0, %v4523
  %v4525 = vpop.f32.mrf.mxu0
  %v4526 = vpop.f32.mrf.mxu0
  %v4527 = vadd.f32 0.0, %v4526
  %v4528 = vpop.f32.mrf.mxu0
  %4529 = vmatprep.mubr.bf16.mxu0 0
  %4530 = vmatmul.mubr.bf16.gmra.mxu0 %v4267
  %v4531 = vpop.f32.mrf.mxu0
  %v4532 = vadd.f32 0.0, %v4531
  %v4533 = vpop.f32.mrf.mxu0
  %v4534 = vpop.f32.mrf.mxu0
  %v4535 = vadd.f32 0.0, %v4534
  %v4536 = vpop.f32.mrf.mxu0
  %4537 = vmatprep.mubr.bf16.mxu0 0
  %4538 = vmatmul.mubr.bf16.gmra.mxu0 %v4270
  %v4539 = vpop.f32.mrf.mxu0
  %v4540 = vadd.f32 0.0, %v4539
  %v4541 = vpop.f32.mrf.mxu0
  %v4542 = vpop.f32.mrf.mxu0
  %v4543 = vadd.f32 0.0, %v4542
  %v4544 = vpop.f32.mrf.mxu0
  %4545 = vmatprep.mubr.bf16.mxu0 0
  %4546 = vmatmul.mubr.bf16.gmra.mxu0 %v4273
  %v4547 = vpop.f32.mrf.mxu0
  %v4548 = vadd.f32 0.0, %v4547
  %v4549 = vpop.f32.mrf.mxu0
  %v4550 = vpop.f32.mrf.mxu0
  %v4551 = vadd.f32 0.0, %v4550
  %v4552 = vpop.f32.mrf.mxu0
  %4553 = vmatprep.mubr.bf16.mxu0 0
  %4554 = vmatmul.mubr.bf16.gmra.mxu0 %v4276
  %v4555 = vpop.f32.mrf.mxu0
  %v4556 = vadd.f32 0.0, %v4555
  %v4557 = vpop.f32.mrf.mxu0
  %v4558 = vpop.f32.mrf.mxu0
  %v4559 = vadd.f32 0.0, %v4558
  %v4560 = vpop.f32.mrf.mxu0
  %4561 = vmatprep.mubr.bf16.mxu0 0
  %4562 = vmatmul.mubr.bf16.gmra.mxu0 %v4279
  %v4563 = vpop.f32.mrf.mxu0
  %v4564 = vadd.f32 0.0, %v4563
  %v4565 = vpop.f32.mrf.mxu0
  %v4566 = vpop.f32.mrf.mxu0
  %v4567 = vadd.f32 0.0, %v4566
  %v4568 = vpop.f32.mrf.mxu0
  %4569 = vdwg.mxu0
  %v4570 = vadd.f32 %v4008, %v4316
  %v4571 = vadd.f32 %v4009, %v4319
  %v4572 = vadd.f32 %v4010, %v4324
  %v4573 = vadd.f32 %v4011, %v4327
  %v4574 = vadd.f32 %v4012, %v4332
  %v4575 = vadd.f32 %v4013, %v4335
  %v4576 = vadd.f32 %v4014, %v4340
  %v4577 = vadd.f32 %v4015, %v4343
  %v4578 = vadd.f32 %v4016, %v4348
  %v4579 = vadd.f32 %v4017, %v4351
  %v4580 = vadd.f32 %v4018, %v4356
  %v4581 = vadd.f32 %v4019, %v4359
  %v4582 = vadd.f32 %v4020, %v4364
  %v4583 = vadd.f32 %v4021, %v4367
  %v4584 = vadd.f32 %v4022, %v4372
  %v4585 = vadd.f32 %v4023, %v4375
  %v4586 = vadd.f32 %v4024, %v4380
  %v4587 = vadd.f32 %v4025, %v4383
  %v4588 = vadd.f32 %v4026, %v4388
  %v4589 = vadd.f32 %v4027, %v4391
  %v4590 = vadd.f32 %v4028, %v4396
  %v4591 = vadd.f32 %v4029, %v4399
  %v4592 = vadd.f32 %v4030, %v4404
  %v4593 = vadd.f32 %v4031, %v4407
  %v4594 = vadd.f32 %v4032, %v4412
  %v4595 = vadd.f32 %v4033, %v4415
  %v4596 = vadd.f32 %v4034, %v4420
  %v4597 = vadd.f32 %v4035, %v4423
  %v4598 = vadd.f32 %v4036, %v4428
  %v4599 = vadd.f32 %v4037, %v4431
  %v4600 = vadd.f32 %v4038, %v4436
  %v4601 = vadd.f32 %v4039, %v4439
  %v4602 = vadd.f32 %v4040, %v4444
  %v4603 = vadd.f32 %v4041, %v4447
  %v4604 = vadd.f32 %v4042, %v4452
  %v4605 = vadd.f32 %v4043, %v4455
  %v4606 = vadd.f32 %v4044, %v4460
  %v4607 = vadd.f32 %v4045, %v4463
  %v4608 = vadd.f32 %v4046, %v4468
  %v4609 = vadd.f32 %v4047, %v4471
  %v4610 = vadd.f32 %v4048, %v4476
  %v4611 = vadd.f32 %v4049, %v4479
  %v4612 = vadd.f32 %v4050, %v4484
  %v4613 = vadd.f32 %v4051, %v4487
  %v4614 = vadd.f32 %v4052, %v4492
  %v4615 = vadd.f32 %v4053, %v4495
  %v4616 = vadd.f32 %v4054, %v4500
  %v4617 = vadd.f32 %v4055, %v4503
  %v4618 = vadd.f32 %v4056, %v4508
  %v4619 = vadd.f32 %v4057, %v4511
  %v4620 = vadd.f32 %v4058, %v4516
  %v4621 = vadd.f32 %v4059, %v4519
  %v4622 = vadd.f32 %v4060, %v4524
  %v4623 = vadd.f32 %v4061, %v4527
  %v4624 = vadd.f32 %v4062, %v4532
  %v4625 = vadd.f32 %v4063, %v4535
  %v4626 = vadd.f32 %v4064, %v4540
  %v4627 = vadd.f32 %v4065, %v4543
  %v4628 = vadd.f32 %v4066, %v4548
  %v4629 = vadd.f32 %v4067, %v4551
  %v4630 = vadd.f32 %v4068, %v4556
  %v4631 = vadd.f32 %v4069, %v4559
  %v4632 = vadd.f32 %v4070, %v4564
  %v4633 = vadd.f32 %v4071, %v4567
  %s4634 = scalar_lea.vmem [#allocation2], 48
  %v4635 = vld [vmem:[%s4634] sm:$0xff]
  %v4636 = vld [vmem:[%s4634 + $0x8] sm:$0xff]
  %v4637 = vld [vmem:[%s4634 + $0x18] sm:$0xff]
  %v4638 = vld [vmem:[%s4634 + $0x20] sm:$0xff]
  %v4639 = vld [vmem:[%s4634 + $0x30] sm:$0xff]
  %v4640 = vld [vmem:[%s4634 + $0x38] sm:$0xff]
  %v4641 = vld [vmem:[%s4634 + $0x48] sm:$0xff]
  %v4642 = vld [vmem:[%s4634 + $0x50] sm:$0xff]
  %v4643 = vld [vmem:[%s4634 + $0x60] sm:$0xff]
  %v4644 = vld [vmem:[%s4634 + $0x68] sm:$0xff]
  %v4645 = vld [vmem:[%s4634 + $0x78] sm:$0xff]
  %v4646 = vld [vmem:[%s4634 + $0x80] sm:$0xff]
  %v4647 = vld [vmem:[%s4634 + $0x90] sm:$0xff]
  %v4648 = vld [vmem:[%s4634 + $0x98] sm:$0xff]
  %v4649 = vld [vmem:[%s4634 + $0xa8] sm:$0xff]
  %v4650 = vld [vmem:[%s4634 + $0xb0] sm:$0xff]
  %v4651 = vld [vmem:[%s4634 + $0xc0] sm:$0xff]
  %v4652 = vld [vmem:[%s4634 + $0xc8] sm:$0xff]
  %v4653 = vld [vmem:[%s4634 + $0xd8] sm:$0xff]
  %v4654 = vld [vmem:[%s4634 + $0xe0] sm:$0xff]
  %v4655 = vld [vmem:[%s4634 + $0xf0] sm:$0xff]
  %v4656 = vld [vmem:[%s4634 + $0xf8] sm:$0xff]
  %v4657 = vld [vmem:[%s4634 + $0x108] sm:$0xff]
  %v4658 = vld [vmem:[%s4634 + $0x110] sm:$0xff]
  %v4659 = vld [vmem:[%s4634 + $0x120] sm:$0xff]
  %v4660 = vld [vmem:[%s4634 + $0x128] sm:$0xff]
  %v4661 = vld [vmem:[%s4634 + $0x138] sm:$0xff]
  %v4662 = vld [vmem:[%s4634 + $0x140] sm:$0xff]
  %v4663 = vld [vmem:[%s4634 + $0x150] sm:$0xff]
  %v4664 = vld [vmem:[%s4634 + $0x158] sm:$0xff]
  %v4665 = vld [vmem:[%s4634 + $0x168] sm:$0xff]
  %v4666 = vld [vmem:[%s4634 + $0x170] sm:$0xff]
  %v4667 = vld [vmem:[%s4634 + $0x1b0] sm:$0xff]
  %v4668 = vld [vmem:[%s4634 + $0x1b8] sm:$0xff]
  %v4669 = vld [vmem:[%s4634 + $0x1c8] sm:$0xff]
  %v4670 = vld [vmem:[%s4634 + $0x1d0] sm:$0xff]
  %v4671 = vld [vmem:[%s4634 + $0x1e0] sm:$0xff]
  %v4672 = vld [vmem:[%s4634 + $0x1e8] sm:$0xff]
  %v4673 = vld [vmem:[%s4634 + $0x1f8] sm:$0xff]
  %v4674 = vld [vmem:[%s4634 + $0x200] sm:$0xff]
  %v4675 = vld [vmem:[%s4634 + $0x210] sm:$0xff]
  %v4676 = vld [vmem:[%s4634 + $0x218] sm:$0xff]
  %v4677 = vld [vmem:[%s4634 + $0x228] sm:$0xff]
  %v4678 = vld [vmem:[%s4634 + $0x230] sm:$0xff]
  %v4679 = vld [vmem:[%s4634 + $0x240] sm:$0xff]
  %v4680 = vld [vmem:[%s4634 + $0x248] sm:$0xff]
  %v4681 = vld [vmem:[%s4634 + $0x258] sm:$0xff]
  %v4682 = vld [vmem:[%s4634 + $0x260] sm:$0xff]
  %v4683 = vld [vmem:[%s4634 + $0x270] sm:$0xff]
  %v4684 = vld [vmem:[%s4634 + $0x278] sm:$0xff]
  %v4685 = vld [vmem:[%s4634 + $0x288] sm:$0xff]
  %v4686 = vld [vmem:[%s4634 + $0x290] sm:$0xff]
  %v4687 = vld [vmem:[%s4634 + $0x2a0] sm:$0xff]
  %v4688 = vld [vmem:[%s4634 + $0x2a8] sm:$0xff]
  %v4689 = vld [vmem:[%s4634 + $0x2b8] sm:$0xff]
  %v4690 = vld [vmem:[%s4634 + $0x2c0] sm:$0xff]
  %v4691 = vld [vmem:[%s4634 + $0x2d0] sm:$0xff]
  %v4692 = vld [vmem:[%s4634 + $0x2d8] sm:$0xff]
  %v4693 = vld [vmem:[%s4634 + $0x2e8] sm:$0xff]
  %v4694 = vld [vmem:[%s4634 + $0x2f0] sm:$0xff]
  %v4695 = vld [vmem:[%s4634 + $0x300] sm:$0xff]
  %v4696 = vld [vmem:[%s4634 + $0x308] sm:$0xff]
  %v4697 = vld [vmem:[%s4634 + $0x318] sm:$0xff]
  %v4698 = vld [vmem:[%s4634 + $0x320] sm:$0xff]
  %v4699 = vpack.c.bf16 %v4636, %v4635
  %v4700 = vpack.c.bf16 %v4638, %v4637
  %v4701 = vpack.c.bf16 %v4640, %v4639
  %v4702 = vpack.c.bf16 %v4642, %v4641
  %v4703 = vpack.c.bf16 %v4644, %v4643
  %v4704 = vpack.c.bf16 %v4646, %v4645
  %v4705 = vpack.c.bf16 %v4648, %v4647
  %v4706 = vpack.c.bf16 %v4650, %v4649
  %v4707 = vpack.c.bf16 %v4652, %v4651
  %v4708 = vpack.c.bf16 %v4654, %v4653
  %v4709 = vpack.c.bf16 %v4656, %v4655
  %v4710 = vpack.c.bf16 %v4658, %v4657
  %v4711 = vpack.c.bf16 %v4660, %v4659
  %v4712 = vpack.c.bf16 %v4662, %v4661
  %v4713 = vpack.c.bf16 %v4664, %v4663
  %v4714 = vpack.c.bf16 %v4666, %v4665
  %v4715 = vpack.c.bf16 %v4668, %v4667
  %v4716 = vpack.c.bf16 %v4670, %v4669
  %v4717 = vpack.c.bf16 %v4672, %v4671
  %v4718 = vpack.c.bf16 %v4674, %v4673
  %v4719 = vpack.c.bf16 %v4676, %v4675
  %v4720 = vpack.c.bf16 %v4678, %v4677
  %v4721 = vpack.c.bf16 %v4680, %v4679
  %v4722 = vpack.c.bf16 %v4682, %v4681
  %v4723 = vpack.c.bf16 %v4684, %v4683
  %v4724 = vpack.c.bf16 %v4686, %v4685
  %v4725 = vpack.c.bf16 %v4688, %v4687
  %v4726 = vpack.c.bf16 %v4690, %v4689
  %v4727 = vpack.c.bf16 %v4692, %v4691
  %v4728 = vpack.c.bf16 %v4694, %v4693
  %v4729 = vpack.c.bf16 %v4696, %v4695
  %v4730 = vpack.c.bf16 %v4698, %v4697
  %s4731 = scalar_lea.vmem %s4, 96
  %v4732 = vld [vmem:[%s4731] sm:$0xf]
  %v4733 = vld [vmem:[%s4731 + $0x4] sm:$0xf]
  %v4734 = vld [vmem:[%s4731 + $0x8] sm:$0xf]
  %v4735 = vld [vmem:[%s4731 + $0xc] sm:$0xf]
  %v4740 = vunpack.c.l.b16 %v4732
  %v4741 = vunpack.c.l.b16 %v4733
  %v4742 = vunpack.c.l.b16 %v4734
  %v4743 = vunpack.c.l.b16 %v4735
  %v4744 = vpack.c.b16 %v4741, %v4740
  %v4745 = vpack.c.b16 %v4743, %v4742
  %v4749 = vsel %vm671, %v4699, 0
  %v4752 = vsel %vm671, %v4700, 0
  %v4755 = vsel %vm671, %v4701, 0
  %v4758 = vsel %vm671, %v4702, 0
  %v4761 = vsel %vm671, %v4703, 0
  %v4764 = vsel %vm671, %v4704, 0
  %v4767 = vsel %vm671, %v4705, 0
  %v4770 = vsel %vm671, %v4706, 0
  %v4773 = vsel %vm671, %v4707, 0
  %v4776 = vsel %vm671, %v4708, 0
  %v4779 = vsel %vm671, %v4709, 0
  %v4782 = vsel %vm671, %v4710, 0
  %v4785 = vsel %vm671, %v4711, 0
  %v4788 = vsel %vm671, %v4712, 0
  %v4791 = vsel %vm671, %v4713, 0
  %v4794 = vsel %vm671, %v4714, 0
  %v4797 = vsel %vm671, %v4715, 0
  %v4800 = vsel %vm671, %v4716, 0
  %v4803 = vsel %vm671, %v4717, 0
  %v4806 = vsel %vm671, %v4718, 0
  %v4809 = vsel %vm671, %v4719, 0
  %v4812 = vsel %vm671, %v4720, 0
  %v4815 = vsel %vm671, %v4721, 0
  %v4818 = vsel %vm671, %v4722, 0
  %v4821 = vsel %vm671, %v4723, 0
  %v4824 = vsel %vm671, %v4724, 0
  %v4827 = vsel %vm671, %v4725, 0
  %v4830 = vsel %vm671, %v4726, 0
  %v4833 = vsel %vm671, %v4727, 0
  %v4836 = vsel %vm671, %v4728, 0
  %v4839 = vsel %vm671, %v4729, 0
  %v4842 = vsel %vm671, %v4730, 0
  %4844 = vmatprep.subr.bf16.mxu0 0
  %4845 = vmatpush1.bf16.msra.mxu0 0
  %4846 = vmatprep.subr.bf16.mxu0 0
  %4847 = vmatpush1.bf16.msra.mxu0 0
  %4848 = vmatprep.subr.bf16.mxu0 0
  %4849 = vmatpush1.bf16.msra.mxu0 0
  %4850 = vmatprep.subr.bf16.mxu0 0
  %4851 = vmatpush1.bf16.msra.mxu0 0
  %4852 = vmatprep.subr.bf16.mxu0 0
  %4853 = vmatpush1.bf16.msra.mxu0 0
  %4854 = vmatprep.subr.bf16.mxu0 0
  %4855 = vmatpush1.bf16.msra.mxu0 0
  %4856 = vmatprep.subr.bf16.mxu0 0
  %4857 = vmatpush1.bf16.msra.mxu0 %v4745
  %4858 = vmatprep.subr.bf16.mxu0 0
  %4859 = vmatpush1.bf16.msra.mxu0 %v4744
  %4860 = vmatprep.subr.bf16.mxu0 0
  %4861 = vmatpush2.bf16.msra.mxu0 0
  %4862 = vmatprep.subr.bf16.mxu0 0
  %4863 = vmatpush2.bf16.msra.mxu0 0
  %4864 = vmatprep.subr.bf16.mxu0 0
  %4865 = vmatpush2.bf16.msra.mxu0 0
  %4866 = vmatprep.subr.bf16.mxu0 0
  %4867 = vmatpush2.bf16.msra.mxu0 0
  %4868 = vmatprep.subr.bf16.mxu0 0
  %4869 = vmatpush2.bf16.msra.mxu0 0
  %4870 = vmatprep.subr.bf16.mxu0 0
  %4871 = vmatpush2.bf16.msra.mxu0 0
  %4872 = vmatprep.subr.bf16.mxu0 0
  %4873 = vmatpush2.bf16.msra.mxu0 0
  %4874 = vmatprep.subr.bf16.mxu0 0
  %4875 = vmatpush2.bf16.msra.mxu0 0
  %4876 = vmatprep.mubr.bf16.mxu0 0
  %4877 = vmatmul.mubr.bf16.gmra.mxu0 %v4749
  %v4878 = vpop.f32.mrf.mxu0
  %v4879 = vadd.f32 0.0, %v4878
  %v4880 = vpop.f32.mrf.mxu0
  %v4881 = vpop.f32.mrf.mxu0
  %v4882 = vadd.f32 0.0, %v4881
  %v4883 = vpop.f32.mrf.mxu0
  %4884 = vmatprep.mubr.bf16.mxu0 0
  %4885 = vmatmul.mubr.bf16.gmra.mxu0 %v4752
  %v4886 = vpop.f32.mrf.mxu0
  %v4887 = vadd.f32 0.0, %v4886
  %v4888 = vpop.f32.mrf.mxu0
  %v4889 = vpop.f32.mrf.mxu0
  %v4890 = vadd.f32 0.0, %v4889
  %v4891 = vpop.f32.mrf.mxu0
  %4892 = vmatprep.mubr.bf16.mxu0 0
  %4893 = vmatmul.mubr.bf16.gmra.mxu0 %v4755
  %v4894 = vpop.f32.mrf.mxu0
  %v4895 = vadd.f32 0.0, %v4894
  %v4896 = vpop.f32.mrf.mxu0
  %v4897 = vpop.f32.mrf.mxu0
  %v4898 = vadd.f32 0.0, %v4897
  %v4899 = vpop.f32.mrf.mxu0
  %4900 = vmatprep.mubr.bf16.mxu0 0
  %4901 = vmatmul.mubr.bf16.gmra.mxu0 %v4758
  %v4902 = vpop.f32.mrf.mxu0
  %v4903 = vadd.f32 0.0, %v4902
  %v4904 = vpop.f32.mrf.mxu0
  %v4905 = vpop.f32.mrf.mxu0
  %v4906 = vadd.f32 0.0, %v4905
  %v4907 = vpop.f32.mrf.mxu0
  %4908 = vmatprep.mubr.bf16.mxu0 0
  %4909 = vmatmul.mubr.bf16.gmra.mxu0 %v4761
  %v4910 = vpop.f32.mrf.mxu0
  %v4911 = vadd.f32 0.0, %v4910
  %v4912 = vpop.f32.mrf.mxu0
  %v4913 = vpop.f32.mrf.mxu0
  %v4914 = vadd.f32 0.0, %v4913
  %v4915 = vpop.f32.mrf.mxu0
  %4916 = vmatprep.mubr.bf16.mxu0 0
  %4917 = vmatmul.mubr.bf16.gmra.mxu0 %v4764
  %v4918 = vpop.f32.mrf.mxu0
  %v4919 = vadd.f32 0.0, %v4918
  %v4920 = vpop.f32.mrf.mxu0
  %v4921 = vpop.f32.mrf.mxu0
  %v4922 = vadd.f32 0.0, %v4921
  %v4923 = vpop.f32.mrf.mxu0
  %4924 = vmatprep.mubr.bf16.mxu0 0
  %4925 = vmatmul.mubr.bf16.gmra.mxu0 %v4767
  %v4926 = vpop.f32.mrf.mxu0
  %v4927 = vadd.f32 0.0, %v4926
  %v4928 = vpop.f32.mrf.mxu0
  %v4929 = vpop.f32.mrf.mxu0
  %v4930 = vadd.f32 0.0, %v4929
  %v4931 = vpop.f32.mrf.mxu0
  %4932 = vmatprep.mubr.bf16.mxu0 0
  %4933 = vmatmul.mubr.bf16.gmra.mxu0 %v4770
  %v4934 = vpop.f32.mrf.mxu0
  %v4935 = vadd.f32 0.0, %v4934
  %v4936 = vpop.f32.mrf.mxu0
  %v4937 = vpop.f32.mrf.mxu0
  %v4938 = vadd.f32 0.0, %v4937
  %v4939 = vpop.f32.mrf.mxu0
  %4940 = vmatprep.mubr.bf16.mxu0 0
  %4941 = vmatmul.mubr.bf16.gmra.mxu0 %v4773
  %v4942 = vpop.f32.mrf.mxu0
  %v4943 = vadd.f32 0.0, %v4942
  %v4944 = vpop.f32.mrf.mxu0
  %v4945 = vpop.f32.mrf.mxu0
  %v4946 = vadd.f32 0.0, %v4945
  %v4947 = vpop.f32.mrf.mxu0
  %4948 = vmatprep.mubr.bf16.mxu0 0
  %4949 = vmatmul.mubr.bf16.gmra.mxu0 %v4776
  %v4950 = vpop.f32.mrf.mxu0
  %v4951 = vadd.f32 0.0, %v4950
  %v4952 = vpop.f32.mrf.mxu0
  %v4953 = vpop.f32.mrf.mxu0
  %v4954 = vadd.f32 0.0, %v4953
  %v4955 = vpop.f32.mrf.mxu0
  %4956 = vmatprep.mubr.bf16.mxu0 0
  %4957 = vmatmul.mubr.bf16.gmra.mxu0 %v4779
  %v4958 = vpop.f32.mrf.mxu0
  %v4959 = vadd.f32 0.0, %v4958
  %v4960 = vpop.f32.mrf.mxu0
  %v4961 = vpop.f32.mrf.mxu0
  %v4962 = vadd.f32 0.0, %v4961
  %v4963 = vpop.f32.mrf.mxu0
  %4964 = vmatprep.mubr.bf16.mxu0 0
  %4965 = vmatmul.mubr.bf16.gmra.mxu0 %v4782
  %v4966 = vpop.f32.mrf.mxu0
  %v4967 = vadd.f32 0.0, %v4966
  %v4968 = vpop.f32.mrf.mxu0
  %v4969 = vpop.f32.mrf.mxu0
  %v4970 = vadd.f32 0.0, %v4969
  %v4971 = vpop.f32.mrf.mxu0
  %4972 = vmatprep.mubr.bf16.mxu0 0
  %4973 = vmatmul.mubr.bf16.gmra.mxu0 %v4785
  %v4974 = vpop.f32.mrf.mxu0
  %v4975 = vadd.f32 0.0, %v4974
  %v4976 = vpop.f32.mrf.mxu0
  %v4977 = vpop.f32.mrf.mxu0
  %v4978 = vadd.f32 0.0, %v4977
  %v4979 = vpop.f32.mrf.mxu0
  %4980 = vmatprep.mubr.bf16.mxu0 0
  %4981 = vmatmul.mubr.bf16.gmra.mxu0 %v4788
  %v4982 = vpop.f32.mrf.mxu0
  %v4983 = vadd.f32 0.0, %v4982
  %v4984 = vpop.f32.mrf.mxu0
  %v4985 = vpop.f32.mrf.mxu0
  %v4986 = vadd.f32 0.0, %v4985
  %v4987 = vpop.f32.mrf.mxu0
  %4988 = vmatprep.mubr.bf16.mxu0 0
  %4989 = vmatmul.mubr.bf16.gmra.mxu0 %v4791
  %v4990 = vpop.f32.mrf.mxu0
  %v4991 = vadd.f32 0.0, %v4990
  %v4992 = vpop.f32.mrf.mxu0
  %v4993 = vpop.f32.mrf.mxu0
  %v4994 = vadd.f32 0.0, %v4993
  %v4995 = vpop.f32.mrf.mxu0
  %4996 = vmatprep.mubr.bf16.mxu0 0
  %4997 = vmatmul.mubr.bf16.gmra.mxu0 %v4794
  %v4998 = vpop.f32.mrf.mxu0
  %v4999 = vadd.f32 0.0, %v4998
  %v5000 = vpop.f32.mrf.mxu0
  %v5001 = vpop.f32.mrf.mxu0
  %v5002 = vadd.f32 0.0, %v5001
  %v5003 = vpop.f32.mrf.mxu0
  %5004 = vmatprep.mubr.bf16.mxu0 0
  %5005 = vmatmul.mubr.bf16.gmra.mxu0 %v4797
  %v5006 = vpop.f32.mrf.mxu0
  %v5007 = vadd.f32 0.0, %v5006
  %v5008 = vpop.f32.mrf.mxu0
  %v5009 = vpop.f32.mrf.mxu0
  %v5010 = vadd.f32 0.0, %v5009
  %v5011 = vpop.f32.mrf.mxu0
  %5012 = vmatprep.mubr.bf16.mxu0 0
  %5013 = vmatmul.mubr.bf16.gmra.mxu0 %v4800
  %v5014 = vpop.f32.mrf.mxu0
  %v5015 = vadd.f32 0.0, %v5014
  %v5016 = vpop.f32.mrf.mxu0
  %v5017 = vpop.f32.mrf.mxu0
  %v5018 = vadd.f32 0.0, %v5017
  %v5019 = vpop.f32.mrf.mxu0
  %5020 = vmatprep.mubr.bf16.mxu0 0
  %5021 = vmatmul.mubr.bf16.gmra.mxu0 %v4803
  %v5022 = vpop.f32.mrf.mxu0
  %v5023 = vadd.f32 0.0, %v5022
  %v5024 = vpop.f32.mrf.mxu0
  %v5025 = vpop.f32.mrf.mxu0
  %v5026 = vadd.f32 0.0, %v5025
  %v5027 = vpop.f32.mrf.mxu0
  %5028 = vmatprep.mubr.bf16.mxu0 0
  %5029 = vmatmul.mubr.bf16.gmra.mxu0 %v4806
  %v5030 = vpop.f32.mrf.mxu0
  %v5031 = vadd.f32 0.0, %v5030
  %v5032 = vpop.f32.mrf.mxu0
  %v5033 = vpop.f32.mrf.mxu0
  %v5034 = vadd.f32 0.0, %v5033
  %v5035 = vpop.f32.mrf.mxu0
  %5036 = vmatprep.mubr.bf16.mxu0 0
  %5037 = vmatmul.mubr.bf16.gmra.mxu0 %v4809
  %v5038 = vpop.f32.mrf.mxu0
  %v5039 = vadd.f32 0.0, %v5038
  %v5040 = vpop.f32.mrf.mxu0
  %v5041 = vpop.f32.mrf.mxu0
  %v5042 = vadd.f32 0.0, %v5041
  %v5043 = vpop.f32.mrf.mxu0
  %5044 = vmatprep.mubr.bf16.mxu0 0
  %5045 = vmatmul.mubr.bf16.gmra.mxu0 %v4812
  %v5046 = vpop.f32.mrf.mxu0
  %v5047 = vadd.f32 0.0, %v5046
  %v5048 = vpop.f32.mrf.mxu0
  %v5049 = vpop.f32.mrf.mxu0
  %v5050 = vadd.f32 0.0, %v5049
  %v5051 = vpop.f32.mrf.mxu0
  %5052 = vmatprep.mubr.bf16.mxu0 0
  %5053 = vmatmul.mubr.bf16.gmra.mxu0 %v4815
  %v5054 = vpop.f32.mrf.mxu0
  %v5055 = vadd.f32 0.0, %v5054
  %v5056 = vpop.f32.mrf.mxu0
  %v5057 = vpop.f32.mrf.mxu0
  %v5058 = vadd.f32 0.0, %v5057
  %v5059 = vpop.f32.mrf.mxu0
  %5060 = vmatprep.mubr.bf16.mxu0 0
  %5061 = vmatmul.mubr.bf16.gmra.mxu0 %v4818
  %v5062 = vpop.f32.mrf.mxu0
  %v5063 = vadd.f32 0.0, %v5062
  %v5064 = vpop.f32.mrf.mxu0
  %v5065 = vpop.f32.mrf.mxu0
  %v5066 = vadd.f32 0.0, %v5065
  %v5067 = vpop.f32.mrf.mxu0
  %5068 = vmatprep.mubr.bf16.mxu0 0
  %5069 = vmatmul.mubr.bf16.gmra.mxu0 %v4821
  %v5070 = vpop.f32.mrf.mxu0
  %v5071 = vadd.f32 0.0, %v5070
  %v5072 = vpop.f32.mrf.mxu0
  %v5073 = vpop.f32.mrf.mxu0
  %v5074 = vadd.f32 0.0, %v5073
  %v5075 = vpop.f32.mrf.mxu0
  %5076 = vmatprep.mubr.bf16.mxu0 0
  %5077 = vmatmul.mubr.bf16.gmra.mxu0 %v4824
  %v5078 = vpop.f32.mrf.mxu0
  %v5079 = vadd.f32 0.0, %v5078
  %v5080 = vpop.f32.mrf.mxu0
  %v5081 = vpop.f32.mrf.mxu0
  %v5082 = vadd.f32 0.0, %v5081
  %v5083 = vpop.f32.mrf.mxu0
  %5084 = vmatprep.mubr.bf16.mxu0 0
  %5085 = vmatmul.mubr.bf16.gmra.mxu0 %v4827
  %v5086 = vpop.f32.mrf.mxu0
  %v5087 = vadd.f32 0.0, %v5086
  %v5088 = vpop.f32.mrf.mxu0
  %v5089 = vpop.f32.mrf.mxu0
  %v5090 = vadd.f32 0.0, %v5089
  %v5091 = vpop.f32.mrf.mxu0
  %5092 = vmatprep.mubr.bf16.mxu0 0
  %5093 = vmatmul.mubr.bf16.gmra.mxu0 %v4830
  %v5094 = vpop.f32.mrf.mxu0
  %v5095 = vadd.f32 0.0, %v5094
  %v5096 = vpop.f32.mrf.mxu0
  %v5097 = vpop.f32.mrf.mxu0
  %v5098 = vadd.f32 0.0, %v5097
  %v5099 = vpop.f32.mrf.mxu0
  %5100 = vmatprep.mubr.bf16.mxu0 0
  %5101 = vmatmul.mubr.bf16.gmra.mxu0 %v4833
  %v5102 = vpop.f32.mrf.mxu0
  %v5103 = vadd.f32 0.0, %v5102
  %v5104 = vpop.f32.mrf.mxu0
  %v5105 = vpop.f32.mrf.mxu0
  %v5106 = vadd.f32 0.0, %v5105
  %v5107 = vpop.f32.mrf.mxu0
  %5108 = vmatprep.mubr.bf16.mxu0 0
  %5109 = vmatmul.mubr.bf16.gmra.mxu0 %v4836
  %v5110 = vpop.f32.mrf.mxu0
  %v5111 = vadd.f32 0.0, %v5110
  %v5112 = vpop.f32.mrf.mxu0
  %v5113 = vpop.f32.mrf.mxu0
  %v5114 = vadd.f32 0.0, %v5113
  %v5115 = vpop.f32.mrf.mxu0
  %5116 = vmatprep.mubr.bf16.mxu0 0
  %5117 = vmatmul.mubr.bf16.gmra.mxu0 %v4839
  %v5118 = vpop.f32.mrf.mxu0
  %v5119 = vadd.f32 0.0, %v5118
  %v5120 = vpop.f32.mrf.mxu0
  %v5121 = vpop.f32.mrf.mxu0
  %v5122 = vadd.f32 0.0, %v5121
  %v5123 = vpop.f32.mrf.mxu0
  %5124 = vmatprep.mubr.bf16.mxu0 0
  %5125 = vmatmul.mubr.bf16.gmra.mxu0 %v4842
  %v5126 = vpop.f32.mrf.mxu0
  %v5127 = vadd.f32 0.0, %v5126
  %v5128 = vpop.f32.mrf.mxu0
  %v5129 = vpop.f32.mrf.mxu0
  %v5130 = vadd.f32 0.0, %v5129
  %v5131 = vpop.f32.mrf.mxu0
  %5132 = vdwg.mxu0
  %v5133 = vadd.f32 %v4570, %v4879
  %v5134 = vadd.f32 %v4571, %v4882
  %v5135 = vadd.f32 %v4572, %v4887
  %v5136 = vadd.f32 %v4573, %v4890
  %v5137 = vadd.f32 %v4574, %v4895
  %v5138 = vadd.f32 %v4575, %v4898
  %v5139 = vadd.f32 %v4576, %v4903
  %v5140 = vadd.f32 %v4577, %v4906
  %v5141 = vadd.f32 %v4578, %v4911
  %v5142 = vadd.f32 %v4579, %v4914
  %v5143 = vadd.f32 %v4580, %v4919
  %v5144 = vadd.f32 %v4581, %v4922
  %v5145 = vadd.f32 %v4582, %v4927
  %v5146 = vadd.f32 %v4583, %v4930
  %v5147 = vadd.f32 %v4584, %v4935
  %v5148 = vadd.f32 %v4585, %v4938
  %v5149 = vadd.f32 %v4586, %v4943
  %v5150 = vadd.f32 %v4587, %v4946
  %v5151 = vadd.f32 %v4588, %v4951
  %v5152 = vadd.f32 %v4589, %v4954
  %v5153 = vadd.f32 %v4590, %v4959
  %v5154 = vadd.f32 %v4591, %v4962
  %v5155 = vadd.f32 %v4592, %v4967
  %v5156 = vadd.f32 %v4593, %v4970
  %v5157 = vadd.f32 %v4594, %v4975
  %v5158 = vadd.f32 %v4595, %v4978
  %v5159 = vadd.f32 %v4596, %v4983
  %v5160 = vadd.f32 %v4597, %v4986
  %v5161 = vadd.f32 %v4598, %v4991
  %v5162 = vadd.f32 %v4599, %v4994
  %v5163 = vadd.f32 %v4600, %v4999
  %v5164 = vadd.f32 %v4601, %v5002
  %v5165 = vadd.f32 %v4602, %v5007
  %v5166 = vadd.f32 %v4603, %v5010
  %v5167 = vadd.f32 %v4604, %v5015
  %v5168 = vadd.f32 %v4605, %v5018
  %v5169 = vadd.f32 %v4606, %v5023
  %v5170 = vadd.f32 %v4607, %v5026
  %v5171 = vadd.f32 %v4608, %v5031
  %v5172 = vadd.f32 %v4609, %v5034
  %v5173 = vadd.f32 %v4610, %v5039
  %v5174 = vadd.f32 %v4611, %v5042
  %v5175 = vadd.f32 %v4612, %v5047
  %v5176 = vadd.f32 %v4613, %v5050
  %v5177 = vadd.f32 %v4614, %v5055
  %v5178 = vadd.f32 %v4615, %v5058
  %v5179 = vadd.f32 %v4616, %v5063
  %v5180 = vadd.f32 %v4617, %v5066
  %v5181 = vadd.f32 %v4618, %v5071
  %v5182 = vadd.f32 %v4619, %v5074
  %v5183 = vadd.f32 %v4620, %v5079
  %v5184 = vadd.f32 %v4621, %v5082
  %v5185 = vadd.f32 %v4622, %v5087
  %v5186 = vadd.f32 %v4623, %v5090
  %v5187 = vadd.f32 %v4624, %v5095
  %v5188 = vadd.f32 %v4625, %v5098
  %v5189 = vadd.f32 %v4626, %v5103
  %v5190 = vadd.f32 %v4627, %v5106
  %v5191 = vadd.f32 %v4628, %v5111
  %v5192 = vadd.f32 %v4629, %v5114
  %v5193 = vadd.f32 %v4630, %v5119
  %v5194 = vadd.f32 %v4631, %v5122
  %v5195 = vadd.f32 %v4632, %v5127
  %v5196 = vadd.f32 %v4633, %v5130
  %v5197 = vld [vmem:[%s4634 + $0x1] sm:$0xff]
  %v5198 = vld [vmem:[%s4634 + $0x9] sm:$0xff]
  %v5199 = vld [vmem:[%s4634 + $0x19] sm:$0xff]
  %v5200 = vld [vmem:[%s4634 + $0x21] sm:$0xff]
  %v5201 = vld [vmem:[%s4634 + $0x31] sm:$0xff]
  %v5202 = vld [vmem:[%s4634 + $0x39] sm:$0xff]
  %v5203 = vld [vmem:[%s4634 + $0x49] sm:$0xff]
  %v5204 = vld [vmem:[%s4634 + $0x51] sm:$0xff]
  %v5205 = vld [vmem:[%s4634 + $0x61] sm:$0xff]
  %v5206 = vld [vmem:[%s4634 + $0x69] sm:$0xff]
  %v5207 = vld [vmem:[%s4634 + $0x79] sm:$0xff]
  %v5208 = vld [vmem:[%s4634 + $0x81] sm:$0xff]
  %v5209 = vld [vmem:[%s4634 + $0x91] sm:$0xff]
  %v5210 = vld [vmem:[%s4634 + $0x99] sm:$0xff]
  %v5211 = vld [vmem:[%s4634 + $0xa9] sm:$0xff]
  %v5212 = vld [vmem:[%s4634 + $0xb1] sm:$0xff]
  %v5213 = vld [vmem:[%s4634 + $0xc1] sm:$0xff]
  %v5214 = vld [vmem:[%s4634 + $0xc9] sm:$0xff]
  %v5215 = vld [vmem:[%s4634 + $0xd9] sm:$0xff]
  %v5216 = vld [vmem:[%s4634 + $0xe1] sm:$0xff]
  %v5217 = vld [vmem:[%s4634 + $0xf1] sm:$0xff]
  %v5218 = vld [vmem:[%s4634 + $0xf9] sm:$0xff]
  %v5219 = vld [vmem:[%s4634 + $0x109] sm:$0xff]
  %v5220 = vld [vmem:[%s4634 + $0x111] sm:$0xff]
  %v5221 = vld [vmem:[%s4634 + $0x121] sm:$0xff]
  %v5222 = vld [vmem:[%s4634 + $0x129] sm:$0xff]
  %v5223 = vld [vmem:[%s4634 + $0x139] sm:$0xff]
  %v5224 = vld [vmem:[%s4634 + $0x141] sm:$0xff]
  %v5225 = vld [vmem:[%s4634 + $0x151] sm:$0xff]
  %v5226 = vld [vmem:[%s4634 + $0x159] sm:$0xff]
  %v5227 = vld [vmem:[%s4634 + $0x169] sm:$0xff]
  %v5228 = vld [vmem:[%s4634 + $0x171] sm:$0xff]
  %v5229 = vld [vmem:[%s4634 + $0x1b1] sm:$0xff]
  %v5230 = vld [vmem:[%s4634 + $0x1b9] sm:$0xff]
  %v5231 = vld [vmem:[%s4634 + $0x1c9] sm:$0xff]
  %v5232 = vld [vmem:[%s4634 + $0x1d1] sm:$0xff]
  %v5233 = vld [vmem:[%s4634 + $0x1e1] sm:$0xff]
  %v5234 = vld [vmem:[%s4634 + $0x1e9] sm:$0xff]
  %v5235 = vld [vmem:[%s4634 + $0x1f9] sm:$0xff]
  %v5236 = vld [vmem:[%s4634 + $0x201] sm:$0xff]
  %v5237 = vld [vmem:[%s4634 + $0x211] sm:$0xff]
  %v5238 = vld [vmem:[%s4634 + $0x219] sm:$0xff]
  %v5239 = vld [vmem:[%s4634 + $0x229] sm:$0xff]
  %v5240 = vld [vmem:[%s4634 + $0x231] sm:$0xff]
  %v5241 = vld [vmem:[%s4634 + $0x241] sm:$0xff]
  %v5242 = vld [vmem:[%s4634 + $0x249] sm:$0xff]
  %v5243 = vld [vmem:[%s4634 + $0x259] sm:$0xff]
  %v5244 = vld [vmem:[%s4634 + $0x261] sm:$0xff]
  %v5245 = vld [vmem:[%s4634 + $0x271] sm:$0xff]
  %v5246 = vld [vmem:[%s4634 + $0x279] sm:$0xff]
  %v5247 = vld [vmem:[%s4634 + $0x289] sm:$0xff]
  %v5248 = vld [vmem:[%s4634 + $0x291] sm:$0xff]
  %v5249 = vld [vmem:[%s4634 + $0x2a1] sm:$0xff]
  %v5250 = vld [vmem:[%s4634 + $0x2a9] sm:$0xff]
  %v5251 = vld [vmem:[%s4634 + $0x2b9] sm:$0xff]
  %v5252 = vld [vmem:[%s4634 + $0x2c1] sm:$0xff]
  %v5253 = vld [vmem:[%s4634 + $0x2d1] sm:$0xff]
  %v5254 = vld [vmem:[%s4634 + $0x2d9] sm:$0xff]
  %v5255 = vld [vmem:[%s4634 + $0x2e9] sm:$0xff]
  %v5256 = vld [vmem:[%s4634 + $0x2f1] sm:$0xff]
  %v5257 = vld [vmem:[%s4634 + $0x301] sm:$0xff]
  %v5258 = vld [vmem:[%s4634 + $0x309] sm:$0xff]
  %v5259 = vld [vmem:[%s4634 + $0x319] sm:$0xff]
  %v5260 = vld [vmem:[%s4634 + $0x321] sm:$0xff]
  %v5261 = vpack.c.bf16 %v5198, %v5197
  %v5262 = vpack.c.bf16 %v5200, %v5199
  %v5263 = vpack.c.bf16 %v5202, %v5201
  %v5264 = vpack.c.bf16 %v5204, %v5203
  %v5265 = vpack.c.bf16 %v5206, %v5205
  %v5266 = vpack.c.bf16 %v5208, %v5207
  %v5267 = vpack.c.bf16 %v5210, %v5209
  %v5268 = vpack.c.bf16 %v5212, %v5211
  %v5269 = vpack.c.bf16 %v5214, %v5213
  %v5270 = vpack.c.bf16 %v5216, %v5215
  %v5271 = vpack.c.bf16 %v5218, %v5217
  %v5272 = vpack.c.bf16 %v5220, %v5219
  %v5273 = vpack.c.bf16 %v5222, %v5221
  %v5274 = vpack.c.bf16 %v5224, %v5223
  %v5275 = vpack.c.bf16 %v5226, %v5225
  %v5276 = vpack.c.bf16 %v5228, %v5227
  %v5277 = vpack.c.bf16 %v5230, %v5229
  %v5278 = vpack.c.bf16 %v5232, %v5231
  %v5279 = vpack.c.bf16 %v5234, %v5233
  %v5280 = vpack.c.bf16 %v5236, %v5235
  %v5281 = vpack.c.bf16 %v5238, %v5237
  %v5282 = vpack.c.bf16 %v5240, %v5239
  %v5283 = vpack.c.bf16 %v5242, %v5241
  %v5284 = vpack.c.bf16 %v5244, %v5243
  %v5285 = vpack.c.bf16 %v5246, %v5245
  %v5286 = vpack.c.bf16 %v5248, %v5247
  %v5287 = vpack.c.bf16 %v5250, %v5249
  %v5288 = vpack.c.bf16 %v5252, %v5251
  %v5289 = vpack.c.bf16 %v5254, %v5253
  %v5290 = vpack.c.bf16 %v5256, %v5255
  %v5291 = vpack.c.bf16 %v5258, %v5257
  %v5292 = vpack.c.bf16 %v5260, %v5259
  %s5293 = scalar_lea.vmem %s4, 112
  %v5294 = vld [vmem:[%s5293] sm:$0xf]
  %v5295 = vld [vmem:[%s5293 + $0x4] sm:$0xf]
  %v5296 = vld [vmem:[%s5293 + $0x8] sm:$0xf]
  %v5297 = vld [vmem:[%s5293 + $0xc] sm:$0xf]
  %v5302 = vunpack.c.l.b16 %v5294
  %v5303 = vunpack.c.l.b16 %v5295
  %v5304 = vunpack.c.l.b16 %v5296
  %v5305 = vunpack.c.l.b16 %v5297
  %v5306 = vpack.c.b16 %v5303, %v5302
  %v5307 = vpack.c.b16 %v5305, %v5304
  %v5311 = vsel %vm671, %v5261, 0
  %v5314 = vsel %vm671, %v5262, 0
  %v5317 = vsel %vm671, %v5263, 0
  %v5320 = vsel %vm671, %v5264, 0
  %v5323 = vsel %vm671, %v5265, 0
  %v5326 = vsel %vm671, %v5266, 0
  %v5329 = vsel %vm671, %v5267, 0
  %v5332 = vsel %vm671, %v5268, 0
  %v5335 = vsel %vm671, %v5269, 0
  %v5338 = vsel %vm671, %v5270, 0
  %v5341 = vsel %vm671, %v5271, 0
  %v5344 = vsel %vm671, %v5272, 0
  %v5347 = vsel %vm671, %v5273, 0
  %v5350 = vsel %vm671, %v5274, 0
  %v5353 = vsel %vm671, %v5275, 0
  %v5356 = vsel %vm671, %v5276, 0
  %v5359 = vsel %vm671, %v5277, 0
  %v5362 = vsel %vm671, %v5278, 0
  %v5365 = vsel %vm671, %v5279, 0
  %v5368 = vsel %vm671, %v5280, 0
  %v5371 = vsel %vm671, %v5281, 0
  %v5374 = vsel %vm671, %v5282, 0
  %v5377 = vsel %vm671, %v5283, 0
  %v5380 = vsel %vm671, %v5284, 0
  %v5383 = vsel %vm671, %v5285, 0
  %v5386 = vsel %vm671, %v5286, 0
  %v5389 = vsel %vm671, %v5287, 0
  %v5392 = vsel %vm671, %v5288, 0
  %v5395 = vsel %vm671, %v5289, 0
  %v5398 = vsel %vm671, %v5290, 0
  %v5401 = vsel %vm671, %v5291, 0
  %v5404 = vsel %vm671, %v5292, 0
  %5406 = vmatprep.subr.bf16.mxu0 0
  %5407 = vmatpush1.bf16.msra.mxu0 0
  %5408 = vmatprep.subr.bf16.mxu0 0
  %5409 = vmatpush1.bf16.msra.mxu0 0
  %5410 = vmatprep.subr.bf16.mxu0 0
  %5411 = vmatpush1.bf16.msra.mxu0 0
  %5412 = vmatprep.subr.bf16.mxu0 0
  %5413 = vmatpush1.bf16.msra.mxu0 0
  %5414 = vmatprep.subr.bf16.mxu0 0
  %5415 = vmatpush1.bf16.msra.mxu0 0
  %5416 = vmatprep.subr.bf16.mxu0 0
  %5417 = vmatpush1.bf16.msra.mxu0 0
  %5418 = vmatprep.subr.bf16.mxu0 0
  %5419 = vmatpush1.bf16.msra.mxu0 %v5307
  %5420 = vmatprep.subr.bf16.mxu0 0
  %5421 = vmatpush1.bf16.msra.mxu0 %v5306
  %5422 = vmatprep.subr.bf16.mxu0 0
  %5423 = vmatpush2.bf16.msra.mxu0 0
  %5424 = vmatprep.subr.bf16.mxu0 0
  %5425 = vmatpush2.bf16.msra.mxu0 0
  %5426 = vmatprep.subr.bf16.mxu0 0
  %5427 = vmatpush2.bf16.msra.mxu0 0
  %5428 = vmatprep.subr.bf16.mxu0 0
  %5429 = vmatpush2.bf16.msra.mxu0 0
  %5430 = vmatprep.subr.bf16.mxu0 0
  %5431 = vmatpush2.bf16.msra.mxu0 0
  %5432 = vmatprep.subr.bf16.mxu0 0
  %5433 = vmatpush2.bf16.msra.mxu0 0
  %5434 = vmatprep.subr.bf16.mxu0 0
  %5435 = vmatpush2.bf16.msra.mxu0 0
  %5436 = vmatprep.subr.bf16.mxu0 0
  %5437 = vmatpush2.bf16.msra.mxu0 0
  %5438 = vmatprep.mubr.bf16.mxu0 0
  %5439 = vmatmul.mubr.bf16.gmra.mxu0 %v5311
  %v5440 = vpop.f32.mrf.mxu0
  %v5441 = vadd.f32 0.0, %v5440
  %v5442 = vpop.f32.mrf.mxu0
  %v5443 = vpop.f32.mrf.mxu0
  %v5444 = vadd.f32 0.0, %v5443
  %v5445 = vpop.f32.mrf.mxu0
  %5446 = vmatprep.mubr.bf16.mxu0 0
  %5447 = vmatmul.mubr.bf16.gmra.mxu0 %v5314
  %v5448 = vpop.f32.mrf.mxu0
  %v5449 = vadd.f32 0.0, %v5448
  %v5450 = vpop.f32.mrf.mxu0
  %v5451 = vpop.f32.mrf.mxu0
  %v5452 = vadd.f32 0.0, %v5451
  %v5453 = vpop.f32.mrf.mxu0
  %5454 = vmatprep.mubr.bf16.mxu0 0
  %5455 = vmatmul.mubr.bf16.gmra.mxu0 %v5317
  %v5456 = vpop.f32.mrf.mxu0
  %v5457 = vadd.f32 0.0, %v5456
  %v5458 = vpop.f32.mrf.mxu0
  %v5459 = vpop.f32.mrf.mxu0
  %v5460 = vadd.f32 0.0, %v5459
  %v5461 = vpop.f32.mrf.mxu0
  %5462 = vmatprep.mubr.bf16.mxu0 0
  %5463 = vmatmul.mubr.bf16.gmra.mxu0 %v5320
  %v5464 = vpop.f32.mrf.mxu0
  %v5465 = vadd.f32 0.0, %v5464
  %v5466 = vpop.f32.mrf.mxu0
  %v5467 = vpop.f32.mrf.mxu0
  %v5468 = vadd.f32 0.0, %v5467
  %v5469 = vpop.f32.mrf.mxu0
  %5470 = vmatprep.mubr.bf16.mxu0 0
  %5471 = vmatmul.mubr.bf16.gmra.mxu0 %v5323
  %v5472 = vpop.f32.mrf.mxu0
  %v5473 = vadd.f32 0.0, %v5472
  %v5474 = vpop.f32.mrf.mxu0
  %v5475 = vpop.f32.mrf.mxu0
  %v5476 = vadd.f32 0.0, %v5475
  %v5477 = vpop.f32.mrf.mxu0
  %5478 = vmatprep.mubr.bf16.mxu0 0
  %5479 = vmatmul.mubr.bf16.gmra.mxu0 %v5326
  %v5480 = vpop.f32.mrf.mxu0
  %v5481 = vadd.f32 0.0, %v5480
  %v5482 = vpop.f32.mrf.mxu0
  %v5483 = vpop.f32.mrf.mxu0
  %v5484 = vadd.f32 0.0, %v5483
  %v5485 = vpop.f32.mrf.mxu0
  %5486 = vmatprep.mubr.bf16.mxu0 0
  %5487 = vmatmul.mubr.bf16.gmra.mxu0 %v5329
  %v5488 = vpop.f32.mrf.mxu0
  %v5489 = vadd.f32 0.0, %v5488
  %v5490 = vpop.f32.mrf.mxu0
  %v5491 = vpop.f32.mrf.mxu0
  %v5492 = vadd.f32 0.0, %v5491
  %v5493 = vpop.f32.mrf.mxu0
  %5494 = vmatprep.mubr.bf16.mxu0 0
  %5495 = vmatmul.mubr.bf16.gmra.mxu0 %v5332
  %v5496 = vpop.f32.mrf.mxu0
  %v5497 = vadd.f32 0.0, %v5496
  %v5498 = vpop.f32.mrf.mxu0
  %v5499 = vpop.f32.mrf.mxu0
  %v5500 = vadd.f32 0.0, %v5499
  %v5501 = vpop.f32.mrf.mxu0
  %5502 = vmatprep.mubr.bf16.mxu0 0
  %5503 = vmatmul.mubr.bf16.gmra.mxu0 %v5335
  %v5504 = vpop.f32.mrf.mxu0
  %v5505 = vadd.f32 0.0, %v5504
  %v5506 = vpop.f32.mrf.mxu0
  %v5507 = vpop.f32.mrf.mxu0
  %v5508 = vadd.f32 0.0, %v5507
  %v5509 = vpop.f32.mrf.mxu0
  %5510 = vmatprep.mubr.bf16.mxu0 0
  %5511 = vmatmul.mubr.bf16.gmra.mxu0 %v5338
  %v5512 = vpop.f32.mrf.mxu0
  %v5513 = vadd.f32 0.0, %v5512
  %v5514 = vpop.f32.mrf.mxu0
  %v5515 = vpop.f32.mrf.mxu0
  %v5516 = vadd.f32 0.0, %v5515
  %v5517 = vpop.f32.mrf.mxu0
  %5518 = vmatprep.mubr.bf16.mxu0 0
  %5519 = vmatmul.mubr.bf16.gmra.mxu0 %v5341
  %v5520 = vpop.f32.mrf.mxu0
  %v5521 = vadd.f32 0.0, %v5520
  %v5522 = vpop.f32.mrf.mxu0
  %v5523 = vpop.f32.mrf.mxu0
  %v5524 = vadd.f32 0.0, %v5523
  %v5525 = vpop.f32.mrf.mxu0
  %5526 = vmatprep.mubr.bf16.mxu0 0
  %5527 = vmatmul.mubr.bf16.gmra.mxu0 %v5344
  %v5528 = vpop.f32.mrf.mxu0
  %v5529 = vadd.f32 0.0, %v5528
  %v5530 = vpop.f32.mrf.mxu0
  %v5531 = vpop.f32.mrf.mxu0
  %v5532 = vadd.f32 0.0, %v5531
  %v5533 = vpop.f32.mrf.mxu0
  %5534 = vmatprep.mubr.bf16.mxu0 0
  %5535 = vmatmul.mubr.bf16.gmra.mxu0 %v5347
  %v5536 = vpop.f32.mrf.mxu0
  %v5537 = vadd.f32 0.0, %v5536
  %v5538 = vpop.f32.mrf.mxu0
  %v5539 = vpop.f32.mrf.mxu0
  %v5540 = vadd.f32 0.0, %v5539
  %v5541 = vpop.f32.mrf.mxu0
  %5542 = vmatprep.mubr.bf16.mxu0 0
  %5543 = vmatmul.mubr.bf16.gmra.mxu0 %v5350
  %v5544 = vpop.f32.mrf.mxu0
  %v5545 = vadd.f32 0.0, %v5544
  %v5546 = vpop.f32.mrf.mxu0
  %v5547 = vpop.f32.mrf.mxu0
  %v5548 = vadd.f32 0.0, %v5547
  %v5549 = vpop.f32.mrf.mxu0
  %5550 = vmatprep.mubr.bf16.mxu0 0
  %5551 = vmatmul.mubr.bf16.gmra.mxu0 %v5353
  %v5552 = vpop.f32.mrf.mxu0
  %v5553 = vadd.f32 0.0, %v5552
  %v5554 = vpop.f32.mrf.mxu0
  %v5555 = vpop.f32.mrf.mxu0
  %v5556 = vadd.f32 0.0, %v5555
  %v5557 = vpop.f32.mrf.mxu0
  %5558 = vmatprep.mubr.bf16.mxu0 0
  %5559 = vmatmul.mubr.bf16.gmra.mxu0 %v5356
  %v5560 = vpop.f32.mrf.mxu0
  %v5561 = vadd.f32 0.0, %v5560
  %v5562 = vpop.f32.mrf.mxu0
  %v5563 = vpop.f32.mrf.mxu0
  %v5564 = vadd.f32 0.0, %v5563
  %v5565 = vpop.f32.mrf.mxu0
  %5566 = vmatprep.mubr.bf16.mxu0 0
  %5567 = vmatmul.mubr.bf16.gmra.mxu0 %v5359
  %v5568 = vpop.f32.mrf.mxu0
  %v5569 = vadd.f32 0.0, %v5568
  %v5570 = vpop.f32.mrf.mxu0
  %v5571 = vpop.f32.mrf.mxu0
  %v5572 = vadd.f32 0.0, %v5571
  %v5573 = vpop.f32.mrf.mxu0
  %5574 = vmatprep.mubr.bf16.mxu0 0
  %5575 = vmatmul.mubr.bf16.gmra.mxu0 %v5362
  %v5576 = vpop.f32.mrf.mxu0
  %v5577 = vadd.f32 0.0, %v5576
  %v5578 = vpop.f32.mrf.mxu0
  %v5579 = vpop.f32.mrf.mxu0
  %v5580 = vadd.f32 0.0, %v5579
  %v5581 = vpop.f32.mrf.mxu0
  %5582 = vmatprep.mubr.bf16.mxu0 0
  %5583 = vmatmul.mubr.bf16.gmra.mxu0 %v5365
  %v5584 = vpop.f32.mrf.mxu0
  %v5585 = vadd.f32 0.0, %v5584
  %v5586 = vpop.f32.mrf.mxu0
  %v5587 = vpop.f32.mrf.mxu0
  %v5588 = vadd.f32 0.0, %v5587
  %v5589 = vpop.f32.mrf.mxu0
  %5590 = vmatprep.mubr.bf16.mxu0 0
  %5591 = vmatmul.mubr.bf16.gmra.mxu0 %v5368
  %v5592 = vpop.f32.mrf.mxu0
  %v5593 = vadd.f32 0.0, %v5592
  %v5594 = vpop.f32.mrf.mxu0
  %v5595 = vpop.f32.mrf.mxu0
  %v5596 = vadd.f32 0.0, %v5595
  %v5597 = vpop.f32.mrf.mxu0
  %5598 = vmatprep.mubr.bf16.mxu0 0
  %5599 = vmatmul.mubr.bf16.gmra.mxu0 %v5371
  %v5600 = vpop.f32.mrf.mxu0
  %v5601 = vadd.f32 0.0, %v5600
  %v5602 = vpop.f32.mrf.mxu0
  %v5603 = vpop.f32.mrf.mxu0
  %v5604 = vadd.f32 0.0, %v5603
  %v5605 = vpop.f32.mrf.mxu0
  %5606 = vmatprep.mubr.bf16.mxu0 0
  %5607 = vmatmul.mubr.bf16.gmra.mxu0 %v5374
  %v5608 = vpop.f32.mrf.mxu0
  %v5609 = vadd.f32 0.0, %v5608
  %v5610 = vpop.f32.mrf.mxu0
  %v5611 = vpop.f32.mrf.mxu0
  %v5612 = vadd.f32 0.0, %v5611
  %v5613 = vpop.f32.mrf.mxu0
  %5614 = vmatprep.mubr.bf16.mxu0 0
  %5615 = vmatmul.mubr.bf16.gmra.mxu0 %v5377
  %v5616 = vpop.f32.mrf.mxu0
  %v5617 = vadd.f32 0.0, %v5616
  %v5618 = vpop.f32.mrf.mxu0
  %v5619 = vpop.f32.mrf.mxu0
  %v5620 = vadd.f32 0.0, %v5619
  %v5621 = vpop.f32.mrf.mxu0
  %5622 = vmatprep.mubr.bf16.mxu0 0
  %5623 = vmatmul.mubr.bf16.gmra.mxu0 %v5380
  %v5624 = vpop.f32.mrf.mxu0
  %v5625 = vadd.f32 0.0, %v5624
  %v5626 = vpop.f32.mrf.mxu0
  %v5627 = vpop.f32.mrf.mxu0
  %v5628 = vadd.f32 0.0, %v5627
  %v5629 = vpop.f32.mrf.mxu0
  %5630 = vmatprep.mubr.bf16.mxu0 0
  %5631 = vmatmul.mubr.bf16.gmra.mxu0 %v5383
  %v5632 = vpop.f32.mrf.mxu0
  %v5633 = vadd.f32 0.0, %v5632
  %v5634 = vpop.f32.mrf.mxu0
  %v5635 = vpop.f32.mrf.mxu0
  %v5636 = vadd.f32 0.0, %v5635
  %v5637 = vpop.f32.mrf.mxu0
  %5638 = vmatprep.mubr.bf16.mxu0 0
  %5639 = vmatmul.mubr.bf16.gmra.mxu0 %v5386
  %v5640 = vpop.f32.mrf.mxu0
  %v5641 = vadd.f32 0.0, %v5640
  %v5642 = vpop.f32.mrf.mxu0
  %v5643 = vpop.f32.mrf.mxu0
  %v5644 = vadd.f32 0.0, %v5643
  %v5645 = vpop.f32.mrf.mxu0
  %5646 = vmatprep.mubr.bf16.mxu0 0
  %5647 = vmatmul.mubr.bf16.gmra.mxu0 %v5389
  %v5648 = vpop.f32.mrf.mxu0
  %v5649 = vadd.f32 0.0, %v5648
  %v5650 = vpop.f32.mrf.mxu0
  %v5651 = vpop.f32.mrf.mxu0
  %v5652 = vadd.f32 0.0, %v5651
  %v5653 = vpop.f32.mrf.mxu0
  %5654 = vmatprep.mubr.bf16.mxu0 0
  %5655 = vmatmul.mubr.bf16.gmra.mxu0 %v5392
  %v5656 = vpop.f32.mrf.mxu0
  %v5657 = vadd.f32 0.0, %v5656
  %v5658 = vpop.f32.mrf.mxu0
  %v5659 = vpop.f32.mrf.mxu0
  %v5660 = vadd.f32 0.0, %v5659
  %v5661 = vpop.f32.mrf.mxu0
  %5662 = vmatprep.mubr.bf16.mxu0 0
  %5663 = vmatmul.mubr.bf16.gmra.mxu0 %v5395
  %v5664 = vpop.f32.mrf.mxu0
  %v5665 = vadd.f32 0.0, %v5664
  %v5666 = vpop.f32.mrf.mxu0
  %v5667 = vpop.f32.mrf.mxu0
  %v5668 = vadd.f32 0.0, %v5667
  %v5669 = vpop.f32.mrf.mxu0
  %5670 = vmatprep.mubr.bf16.mxu0 0
  %5671 = vmatmul.mubr.bf16.gmra.mxu0 %v5398
  %v5672 = vpop.f32.mrf.mxu0
  %v5673 = vadd.f32 0.0, %v5672
  %v5674 = vpop.f32.mrf.mxu0
  %v5675 = vpop.f32.mrf.mxu0
  %v5676 = vadd.f32 0.0, %v5675
  %v5677 = vpop.f32.mrf.mxu0
  %5678 = vmatprep.mubr.bf16.mxu0 0
  %5679 = vmatmul.mubr.bf16.gmra.mxu0 %v5401
  %v5680 = vpop.f32.mrf.mxu0
  %v5681 = vadd.f32 0.0, %v5680
  %v5682 = vpop.f32.mrf.mxu0
  %v5683 = vpop.f32.mrf.mxu0
  %v5684 = vadd.f32 0.0, %v5683
  %v5685 = vpop.f32.mrf.mxu0
  %5686 = vmatprep.mubr.bf16.mxu0 0
  %5687 = vmatmul.mubr.bf16.gmra.mxu0 %v5404
  %v5688 = vpop.f32.mrf.mxu0
  %v5689 = vadd.f32 0.0, %v5688
  %v5690 = vpop.f32.mrf.mxu0
  %v5691 = vpop.f32.mrf.mxu0
  %v5692 = vadd.f32 0.0, %v5691
  %v5693 = vpop.f32.mrf.mxu0
  %5694 = vdwg.mxu0
  %v5695 = vadd.f32 %v5133, %v5441
  %v5696 = vadd.f32 %v5134, %v5444
  %v5697 = vadd.f32 %v5135, %v5449
  %v5698 = vadd.f32 %v5136, %v5452
  %v5699 = vadd.f32 %v5137, %v5457
  %v5700 = vadd.f32 %v5138, %v5460
  %v5701 = vadd.f32 %v5139, %v5465
  %v5702 = vadd.f32 %v5140, %v5468
  %v5703 = vadd.f32 %v5141, %v5473
  %v5704 = vadd.f32 %v5142, %v5476
  %v5705 = vadd.f32 %v5143, %v5481
  %v5706 = vadd.f32 %v5144, %v5484
  %v5707 = vadd.f32 %v5145, %v5489
  %v5708 = vadd.f32 %v5146, %v5492
  %v5709 = vadd.f32 %v5147, %v5497
  %v5710 = vadd.f32 %v5148, %v5500
  %v5711 = vadd.f32 %v5149, %v5505
  %v5712 = vadd.f32 %v5150, %v5508
  %v5713 = vadd.f32 %v5151, %v5513
  %v5714 = vadd.f32 %v5152, %v5516
  %v5715 = vadd.f32 %v5153, %v5521
  %v5716 = vadd.f32 %v5154, %v5524
  %v5717 = vadd.f32 %v5155, %v5529
  %v5718 = vadd.f32 %v5156, %v5532
  %v5719 = vadd.f32 %v5157, %v5537
  %v5720 = vadd.f32 %v5158, %v5540
  %v5721 = vadd.f32 %v5159, %v5545
  %v5722 = vadd.f32 %v5160, %v5548
  %v5723 = vadd.f32 %v5161, %v5553
  %v5724 = vadd.f32 %v5162, %v5556
  %v5725 = vadd.f32 %v5163, %v5561
  %v5726 = vadd.f32 %v5164, %v5564
  %v5727 = vadd.f32 %v5165, %v5569
  %v5728 = vadd.f32 %v5166, %v5572
  %v5729 = vadd.f32 %v5167, %v5577
  %v5730 = vadd.f32 %v5168, %v5580
  %v5731 = vadd.f32 %v5169, %v5585
  %v5732 = vadd.f32 %v5170, %v5588
  %v5733 = vadd.f32 %v5171, %v5593
  %v5734 = vadd.f32 %v5172, %v5596
  %v5735 = vadd.f32 %v5173, %v5601
  %v5736 = vadd.f32 %v5174, %v5604
  %v5737 = vadd.f32 %v5175, %v5609
  %v5738 = vadd.f32 %v5176, %v5612
  %v5739 = vadd.f32 %v5177, %v5617
  %v5740 = vadd.f32 %v5178, %v5620
  %v5741 = vadd.f32 %v5179, %v5625
  %v5742 = vadd.f32 %v5180, %v5628
  %v5743 = vadd.f32 %v5181, %v5633
  %v5744 = vadd.f32 %v5182, %v5636
  %v5745 = vadd.f32 %v5183, %v5641
  %v5746 = vadd.f32 %v5184, %v5644
  %v5747 = vadd.f32 %v5185, %v5649
  %v5748 = vadd.f32 %v5186, %v5652
  %v5749 = vadd.f32 %v5187, %v5657
  %v5750 = vadd.f32 %v5188, %v5660
  %v5751 = vadd.f32 %v5189, %v5665
  %v5752 = vadd.f32 %v5190, %v5668
  %v5753 = vadd.f32 %v5191, %v5673
  %v5754 = vadd.f32 %v5192, %v5676
  %v5755 = vadd.f32 %v5193, %v5681
  %v5756 = vadd.f32 %v5194, %v5684
  %v5757 = vadd.f32 %v5195, %v5689
  %v5758 = vadd.f32 %v5196, %v5692
  %v5759 = vld [vmem:[%s4634 + $0x2] sm:$0xff]
  %v5760 = vld [vmem:[%s4634 + $0xa] sm:$0xff]
  %v5761 = vld [vmem:[%s4634 + $0x1a] sm:$0xff]
  %v5762 = vld [vmem:[%s4634 + $0x22] sm:$0xff]
  %v5763 = vld [vmem:[%s4634 + $0x32] sm:$0xff]
  %v5764 = vld [vmem:[%s4634 + $0x3a] sm:$0xff]
  %v5765 = vld [vmem:[%s4634 + $0x4a] sm:$0xff]
  %v5766 = vld [vmem:[%s4634 + $0x52] sm:$0xff]
  %v5767 = vld [vmem:[%s4634 + $0x62] sm:$0xff]
  %v5768 = vld [vmem:[%s4634 + $0x6a] sm:$0xff]
  %v5769 = vld [vmem:[%s4634 + $0x7a] sm:$0xff]
  %v5770 = vld [vmem:[%s4634 + $0x82] sm:$0xff]
  %v5771 = vld [vmem:[%s4634 + $0x92] sm:$0xff]
  %v5772 = vld [vmem:[%s4634 + $0x9a] sm:$0xff]
  %v5773 = vld [vmem:[%s4634 + $0xaa] sm:$0xff]
  %v5774 = vld [vmem:[%s4634 + $0xb2] sm:$0xff]
  %v5775 = vld [vmem:[%s4634 + $0xc2] sm:$0xff]
  %v5776 = vld [vmem:[%s4634 + $0xca] sm:$0xff]
  %v5777 = vld [vmem:[%s4634 + $0xda] sm:$0xff]
  %v5778 = vld [vmem:[%s4634 + $0xe2] sm:$0xff]
  %v5779 = vld [vmem:[%s4634 + $0xf2] sm:$0xff]
  %v5780 = vld [vmem:[%s4634 + $0xfa] sm:$0xff]
  %v5781 = vld [vmem:[%s4634 + $0x10a] sm:$0xff]
  %v5782 = vld [vmem:[%s4634 + $0x112] sm:$0xff]
  %v5783 = vld [vmem:[%s4634 + $0x122] sm:$0xff]
  %v5784 = vld [vmem:[%s4634 + $0x12a] sm:$0xff]
  %v5785 = vld [vmem:[%s4634 + $0x13a] sm:$0xff]
  %v5786 = vld [vmem:[%s4634 + $0x142] sm:$0xff]
  %v5787 = vld [vmem:[%s4634 + $0x152] sm:$0xff]
  %v5788 = vld [vmem:[%s4634 + $0x15a] sm:$0xff]
  %v5789 = vld [vmem:[%s4634 + $0x16a] sm:$0xff]
  %v5790 = vld [vmem:[%s4634 + $0x172] sm:$0xff]
  %v5791 = vld [vmem:[%s4634 + $0x1b2] sm:$0xff]
  %v5792 = vld [vmem:[%s4634 + $0x1ba] sm:$0xff]
  %v5793 = vld [vmem:[%s4634 + $0x1ca] sm:$0xff]
  %v5794 = vld [vmem:[%s4634 + $0x1d2] sm:$0xff]
  %v5795 = vld [vmem:[%s4634 + $0x1e2] sm:$0xff]
  %v5796 = vld [vmem:[%s4634 + $0x1ea] sm:$0xff]
  %v5797 = vld [vmem:[%s4634 + $0x1fa] sm:$0xff]
  %v5798 = vld [vmem:[%s4634 + $0x202] sm:$0xff]
  %v5799 = vld [vmem:[%s4634 + $0x212] sm:$0xff]
  %v5800 = vld [vmem:[%s4634 + $0x21a] sm:$0xff]
  %v5801 = vld [vmem:[%s4634 + $0x22a] sm:$0xff]
  %v5802 = vld [vmem:[%s4634 + $0x232] sm:$0xff]
  %v5803 = vld [vmem:[%s4634 + $0x242] sm:$0xff]
  %v5804 = vld [vmem:[%s4634 + $0x24a] sm:$0xff]
  %v5805 = vld [vmem:[%s4634 + $0x25a] sm:$0xff]
  %v5806 = vld [vmem:[%s4634 + $0x262] sm:$0xff]
  %v5807 = vld [vmem:[%s4634 + $0x272] sm:$0xff]
  %v5808 = vld [vmem:[%s4634 + $0x27a] sm:$0xff]
  %v5809 = vld [vmem:[%s4634 + $0x28a] sm:$0xff]
  %v5810 = vld [vmem:[%s4634 + $0x292] sm:$0xff]
  %v5811 = vld [vmem:[%s4634 + $0x2a2] sm:$0xff]
  %v5812 = vld [vmem:[%s4634 + $0x2aa] sm:$0xff]
  %v5813 = vld [vmem:[%s4634 + $0x2ba] sm:$0xff]
  %v5814 = vld [vmem:[%s4634 + $0x2c2] sm:$0xff]
  %v5815 = vld [vmem:[%s4634 + $0x2d2] sm:$0xff]
  %v5816 = vld [vmem:[%s4634 + $0x2da] sm:$0xff]
  %v5817 = vld [vmem:[%s4634 + $0x2ea] sm:$0xff]
  %v5818 = vld [vmem:[%s4634 + $0x2f2] sm:$0xff]
  %v5819 = vld [vmem:[%s4634 + $0x302] sm:$0xff]
  %v5820 = vld [vmem:[%s4634 + $0x30a] sm:$0xff]
  %v5821 = vld [vmem:[%s4634 + $0x31a] sm:$0xff]
  %v5822 = vld [vmem:[%s4634 + $0x322] sm:$0xff]
  %v5823 = vpack.c.bf16 %v5760, %v5759
  %v5824 = vpack.c.bf16 %v5762, %v5761
  %v5825 = vpack.c.bf16 %v5764, %v5763
  %v5826 = vpack.c.bf16 %v5766, %v5765
  %v5827 = vpack.c.bf16 %v5768, %v5767
  %v5828 = vpack.c.bf16 %v5770, %v5769
  %v5829 = vpack.c.bf16 %v5772, %v5771
  %v5830 = vpack.c.bf16 %v5774, %v5773
  %v5831 = vpack.c.bf16 %v5776, %v5775
  %v5832 = vpack.c.bf16 %v5778, %v5777
  %v5833 = vpack.c.bf16 %v5780, %v5779
  %v5834 = vpack.c.bf16 %v5782, %v5781
  %v5835 = vpack.c.bf16 %v5784, %v5783
  %v5836 = vpack.c.bf16 %v5786, %v5785
  %v5837 = vpack.c.bf16 %v5788, %v5787
  %v5838 = vpack.c.bf16 %v5790, %v5789
  %v5839 = vpack.c.bf16 %v5792, %v5791
  %v5840 = vpack.c.bf16 %v5794, %v5793
  %v5841 = vpack.c.bf16 %v5796, %v5795
  %v5842 = vpack.c.bf16 %v5798, %v5797
  %v5843 = vpack.c.bf16 %v5800, %v5799
  %v5844 = vpack.c.bf16 %v5802, %v5801
  %v5845 = vpack.c.bf16 %v5804, %v5803
  %v5846 = vpack.c.bf16 %v5806, %v5805
  %v5847 = vpack.c.bf16 %v5808, %v5807
  %v5848 = vpack.c.bf16 %v5810, %v5809
  %v5849 = vpack.c.bf16 %v5812, %v5811
  %v5850 = vpack.c.bf16 %v5814, %v5813
  %v5851 = vpack.c.bf16 %v5816, %v5815
  %v5852 = vpack.c.bf16 %v5818, %v5817
  %v5853 = vpack.c.bf16 %v5820, %v5819
  %v5854 = vpack.c.bf16 %v5822, %v5821
  %s5855 = scalar_lea.vmem %s4, 128
  %v5856 = vld [vmem:[%s5855] sm:$0xf]
  %v5857 = vld [vmem:[%s5855 + $0x4] sm:$0xf]
  %v5858 = vld [vmem:[%s5855 + $0x8] sm:$0xf]
  %v5859 = vld [vmem:[%s5855 + $0xc] sm:$0xf]
  %v5864 = vunpack.c.l.b16 %v5856
  %v5865 = vunpack.c.l.b16 %v5857
  %v5866 = vunpack.c.l.b16 %v5858
  %v5867 = vunpack.c.l.b16 %v5859
  %v5868 = vpack.c.b16 %v5865, %v5864
  %v5869 = vpack.c.b16 %v5867, %v5866
  %v5873 = vsel %vm671, %v5823, 0
  %v5876 = vsel %vm671, %v5824, 0
  %v5879 = vsel %vm671, %v5825, 0
  %v5882 = vsel %vm671, %v5826, 0
  %v5885 = vsel %vm671, %v5827, 0
  %v5888 = vsel %vm671, %v5828, 0
  %v5891 = vsel %vm671, %v5829, 0
  %v5894 = vsel %vm671, %v5830, 0
  %v5897 = vsel %vm671, %v5831, 0
  %v5900 = vsel %vm671, %v5832, 0
  %v5903 = vsel %vm671, %v5833, 0
  %v5906 = vsel %vm671, %v5834, 0
  %v5909 = vsel %vm671, %v5835, 0
  %v5912 = vsel %vm671, %v5836, 0
  %v5915 = vsel %vm671, %v5837, 0
  %v5918 = vsel %vm671, %v5838, 0
  %v5921 = vsel %vm671, %v5839, 0
  %v5924 = vsel %vm671, %v5840, 0
  %v5927 = vsel %vm671, %v5841, 0
  %v5930 = vsel %vm671, %v5842, 0
  %v5933 = vsel %vm671, %v5843, 0
  %v5936 = vsel %vm671, %v5844, 0
  %v5939 = vsel %vm671, %v5845, 0
  %v5942 = vsel %vm671, %v5846, 0
  %v5945 = vsel %vm671, %v5847, 0
  %v5948 = vsel %vm671, %v5848, 0
  %v5951 = vsel %vm671, %v5849, 0
  %v5954 = vsel %vm671, %v5850, 0
  %v5957 = vsel %vm671, %v5851, 0
  %v5960 = vsel %vm671, %v5852, 0
  %v5963 = vsel %vm671, %v5853, 0
  %v5966 = vsel %vm671, %v5854, 0
  %5968 = vmatprep.subr.bf16.mxu0 0
  %5969 = vmatpush1.bf16.msra.mxu0 0
  %5970 = vmatprep.subr.bf16.mxu0 0
  %5971 = vmatpush1.bf16.msra.mxu0 0
  %5972 = vmatprep.subr.bf16.mxu0 0
  %5973 = vmatpush1.bf16.msra.mxu0 0
  %5974 = vmatprep.subr.bf16.mxu0 0
  %5975 = vmatpush1.bf16.msra.mxu0 0
  %5976 = vmatprep.subr.bf16.mxu0 0
  %5977 = vmatpush1.bf16.msra.mxu0 0
  %5978 = vmatprep.subr.bf16.mxu0 0
  %5979 = vmatpush1.bf16.msra.mxu0 0
  %5980 = vmatprep.subr.bf16.mxu0 0
  %5981 = vmatpush1.bf16.msra.mxu0 %v5869
  %5982 = vmatprep.subr.bf16.mxu0 0
  %5983 = vmatpush1.bf16.msra.mxu0 %v5868
  %5984 = vmatprep.subr.bf16.mxu0 0
  %5985 = vmatpush2.bf16.msra.mxu0 0
  %5986 = vmatprep.subr.bf16.mxu0 0
  %5987 = vmatpush2.bf16.msra.mxu0 0
  %5988 = vmatprep.subr.bf16.mxu0 0
  %5989 = vmatpush2.bf16.msra.mxu0 0
  %5990 = vmatprep.subr.bf16.mxu0 0
  %5991 = vmatpush2.bf16.msra.mxu0 0
  %5992 = vmatprep.subr.bf16.mxu0 0
  %5993 = vmatpush2.bf16.msra.mxu0 0
  %5994 = vmatprep.subr.bf16.mxu0 0
  %5995 = vmatpush2.bf16.msra.mxu0 0
  %5996 = vmatprep.subr.bf16.mxu0 0
  %5997 = vmatpush2.bf16.msra.mxu0 0
  %5998 = vmatprep.subr.bf16.mxu0 0
  %5999 = vmatpush2.bf16.msra.mxu0 0
  %6000 = vmatprep.mubr.bf16.mxu0 0
  %6001 = vmatmul.mubr.bf16.gmra.mxu0 %v5873
  %v6002 = vpop.f32.mrf.mxu0
  %v6003 = vadd.f32 0.0, %v6002
  %v6004 = vpop.f32.mrf.mxu0
  %v6005 = vpop.f32.mrf.mxu0
  %v6006 = vadd.f32 0.0, %v6005
  %v6007 = vpop.f32.mrf.mxu0
  %6008 = vmatprep.mubr.bf16.mxu0 0
  %6009 = vmatmul.mubr.bf16.gmra.mxu0 %v5876
  %v6010 = vpop.f32.mrf.mxu0
  %v6011 = vadd.f32 0.0, %v6010
  %v6012 = vpop.f32.mrf.mxu0
  %v6013 = vpop.f32.mrf.mxu0
  %v6014 = vadd.f32 0.0, %v6013
  %v6015 = vpop.f32.mrf.mxu0
  %6016 = vmatprep.mubr.bf16.mxu0 0
  %6017 = vmatmul.mubr.bf16.gmra.mxu0 %v5879
  %v6018 = vpop.f32.mrf.mxu0
  %v6019 = vadd.f32 0.0, %v6018
  %v6020 = vpop.f32.mrf.mxu0
  %v6021 = vpop.f32.mrf.mxu0
  %v6022 = vadd.f32 0.0, %v6021
  %v6023 = vpop.f32.mrf.mxu0
  %6024 = vmatprep.mubr.bf16.mxu0 0
  %6025 = vmatmul.mubr.bf16.gmra.mxu0 %v5882
  %v6026 = vpop.f32.mrf.mxu0
  %v6027 = vadd.f32 0.0, %v6026
  %v6028 = vpop.f32.mrf.mxu0
  %v6029 = vpop.f32.mrf.mxu0
  %v6030 = vadd.f32 0.0, %v6029
  %v6031 = vpop.f32.mrf.mxu0
  %6032 = vmatprep.mubr.bf16.mxu0 0
  %6033 = vmatmul.mubr.bf16.gmra.mxu0 %v5885
  %v6034 = vpop.f32.mrf.mxu0
  %v6035 = vadd.f32 0.0, %v6034
  %v6036 = vpop.f32.mrf.mxu0
  %v6037 = vpop.f32.mrf.mxu0
  %v6038 = vadd.f32 0.0, %v6037
  %v6039 = vpop.f32.mrf.mxu0
  %6040 = vmatprep.mubr.bf16.mxu0 0
  %6041 = vmatmul.mubr.bf16.gmra.mxu0 %v5888
  %v6042 = vpop.f32.mrf.mxu0
  %v6043 = vadd.f32 0.0, %v6042
  %v6044 = vpop.f32.mrf.mxu0
  %v6045 = vpop.f32.mrf.mxu0
  %v6046 = vadd.f32 0.0, %v6045
  %v6047 = vpop.f32.mrf.mxu0
  %6048 = vmatprep.mubr.bf16.mxu0 0
  %6049 = vmatmul.mubr.bf16.gmra.mxu0 %v5891
  %v6050 = vpop.f32.mrf.mxu0
  %v6051 = vadd.f32 0.0, %v6050
  %v6052 = vpop.f32.mrf.mxu0
  %v6053 = vpop.f32.mrf.mxu0
  %v6054 = vadd.f32 0.0, %v6053
  %v6055 = vpop.f32.mrf.mxu0
  %6056 = vmatprep.mubr.bf16.mxu0 0
  %6057 = vmatmul.mubr.bf16.gmra.mxu0 %v5894
  %v6058 = vpop.f32.mrf.mxu0
  %v6059 = vadd.f32 0.0, %v6058
  %v6060 = vpop.f32.mrf.mxu0
  %v6061 = vpop.f32.mrf.mxu0
  %v6062 = vadd.f32 0.0, %v6061
  %v6063 = vpop.f32.mrf.mxu0
  %6064 = vmatprep.mubr.bf16.mxu0 0
  %6065 = vmatmul.mubr.bf16.gmra.mxu0 %v5897
  %v6066 = vpop.f32.mrf.mxu0
  %v6067 = vadd.f32 0.0, %v6066
  %v6068 = vpop.f32.mrf.mxu0
  %v6069 = vpop.f32.mrf.mxu0
  %v6070 = vadd.f32 0.0, %v6069
  %v6071 = vpop.f32.mrf.mxu0
  %6072 = vmatprep.mubr.bf16.mxu0 0
  %6073 = vmatmul.mubr.bf16.gmra.mxu0 %v5900
  %v6074 = vpop.f32.mrf.mxu0
  %v6075 = vadd.f32 0.0, %v6074
  %v6076 = vpop.f32.mrf.mxu0
  %v6077 = vpop.f32.mrf.mxu0
  %v6078 = vadd.f32 0.0, %v6077
  %v6079 = vpop.f32.mrf.mxu0
  %6080 = vmatprep.mubr.bf16.mxu0 0
  %6081 = vmatmul.mubr.bf16.gmra.mxu0 %v5903
  %v6082 = vpop.f32.mrf.mxu0
  %v6083 = vadd.f32 0.0, %v6082
  %v6084 = vpop.f32.mrf.mxu0
  %v6085 = vpop.f32.mrf.mxu0
  %v6086 = vadd.f32 0.0, %v6085
  %v6087 = vpop.f32.mrf.mxu0
  %6088 = vmatprep.mubr.bf16.mxu0 0
  %6089 = vmatmul.mubr.bf16.gmra.mxu0 %v5906
  %v6090 = vpop.f32.mrf.mxu0
  %v6091 = vadd.f32 0.0, %v6090
  %v6092 = vpop.f32.mrf.mxu0
  %v6093 = vpop.f32.mrf.mxu0
  %v6094 = vadd.f32 0.0, %v6093
  %v6095 = vpop.f32.mrf.mxu0
  %6096 = vmatprep.mubr.bf16.mxu0 0
  %6097 = vmatmul.mubr.bf16.gmra.mxu0 %v5909
  %v6098 = vpop.f32.mrf.mxu0
  %v6099 = vadd.f32 0.0, %v6098
  %v6100 = vpop.f32.mrf.mxu0
  %v6101 = vpop.f32.mrf.mxu0
  %v6102 = vadd.f32 0.0, %v6101
  %v6103 = vpop.f32.mrf.mxu0
  %6104 = vmatprep.mubr.bf16.mxu0 0
  %6105 = vmatmul.mubr.bf16.gmra.mxu0 %v5912
  %v6106 = vpop.f32.mrf.mxu0
  %v6107 = vadd.f32 0.0, %v6106
  %v6108 = vpop.f32.mrf.mxu0
  %v6109 = vpop.f32.mrf.mxu0
  %v6110 = vadd.f32 0.0, %v6109
  %v6111 = vpop.f32.mrf.mxu0
  %6112 = vmatprep.mubr.bf16.mxu0 0
  %6113 = vmatmul.mubr.bf16.gmra.mxu0 %v5915
  %v6114 = vpop.f32.mrf.mxu0
  %v6115 = vadd.f32 0.0, %v6114
  %v6116 = vpop.f32.mrf.mxu0
  %v6117 = vpop.f32.mrf.mxu0
  %v6118 = vadd.f32 0.0, %v6117
  %v6119 = vpop.f32.mrf.mxu0
  %6120 = vmatprep.mubr.bf16.mxu0 0
  %6121 = vmatmul.mubr.bf16.gmra.mxu0 %v5918
  %v6122 = vpop.f32.mrf.mxu0
  %v6123 = vadd.f32 0.0, %v6122
  %v6124 = vpop.f32.mrf.mxu0
  %v6125 = vpop.f32.mrf.mxu0
  %v6126 = vadd.f32 0.0, %v6125
  %v6127 = vpop.f32.mrf.mxu0
  %6128 = vmatprep.mubr.bf16.mxu0 0
  %6129 = vmatmul.mubr.bf16.gmra.mxu0 %v5921
  %v6130 = vpop.f32.mrf.mxu0
  %v6131 = vadd.f32 0.0, %v6130
  %v6132 = vpop.f32.mrf.mxu0
  %v6133 = vpop.f32.mrf.mxu0
  %v6134 = vadd.f32 0.0, %v6133
  %v6135 = vpop.f32.mrf.mxu0
  %6136 = vmatprep.mubr.bf16.mxu0 0
  %6137 = vmatmul.mubr.bf16.gmra.mxu0 %v5924
  %v6138 = vpop.f32.mrf.mxu0
  %v6139 = vadd.f32 0.0, %v6138
  %v6140 = vpop.f32.mrf.mxu0
  %v6141 = vpop.f32.mrf.mxu0
  %v6142 = vadd.f32 0.0, %v6141
  %v6143 = vpop.f32.mrf.mxu0
  %6144 = vmatprep.mubr.bf16.mxu0 0
  %6145 = vmatmul.mubr.bf16.gmra.mxu0 %v5927
  %v6146 = vpop.f32.mrf.mxu0
  %v6147 = vadd.f32 0.0, %v6146
  %v6148 = vpop.f32.mrf.mxu0
  %v6149 = vpop.f32.mrf.mxu0
  %v6150 = vadd.f32 0.0, %v6149
  %v6151 = vpop.f32.mrf.mxu0
  %6152 = vmatprep.mubr.bf16.mxu0 0
  %6153 = vmatmul.mubr.bf16.gmra.mxu0 %v5930
  %v6154 = vpop.f32.mrf.mxu0
  %v6155 = vadd.f32 0.0, %v6154
  %v6156 = vpop.f32.mrf.mxu0
  %v6157 = vpop.f32.mrf.mxu0
  %v6158 = vadd.f32 0.0, %v6157
  %v6159 = vpop.f32.mrf.mxu0
  %6160 = vmatprep.mubr.bf16.mxu0 0
  %6161 = vmatmul.mubr.bf16.gmra.mxu0 %v5933
  %v6162 = vpop.f32.mrf.mxu0
  %v6163 = vadd.f32 0.0, %v6162
  %v6164 = vpop.f32.mrf.mxu0
  %v6165 = vpop.f32.mrf.mxu0
  %v6166 = vadd.f32 0.0, %v6165
  %v6167 = vpop.f32.mrf.mxu0
  %6168 = vmatprep.mubr.bf16.mxu0 0
  %6169 = vmatmul.mubr.bf16.gmra.mxu0 %v5936
  %v6170 = vpop.f32.mrf.mxu0
  %v6171 = vadd.f32 0.0, %v6170
  %v6172 = vpop.f32.mrf.mxu0
  %v6173 = vpop.f32.mrf.mxu0
  %v6174 = vadd.f32 0.0, %v6173
  %v6175 = vpop.f32.mrf.mxu0
  %6176 = vmatprep.mubr.bf16.mxu0 0
  %6177 = vmatmul.mubr.bf16.gmra.mxu0 %v5939
  %v6178 = vpop.f32.mrf.mxu0
  %v6179 = vadd.f32 0.0, %v6178
  %v6180 = vpop.f32.mrf.mxu0
  %v6181 = vpop.f32.mrf.mxu0
  %v6182 = vadd.f32 0.0, %v6181
  %v6183 = vpop.f32.mrf.mxu0
  %6184 = vmatprep.mubr.bf16.mxu0 0
  %6185 = vmatmul.mubr.bf16.gmra.mxu0 %v5942
  %v6186 = vpop.f32.mrf.mxu0
  %v6187 = vadd.f32 0.0, %v6186
  %v6188 = vpop.f32.mrf.mxu0
  %v6189 = vpop.f32.mrf.mxu0
  %v6190 = vadd.f32 0.0, %v6189
  %v6191 = vpop.f32.mrf.mxu0
  %6192 = vmatprep.mubr.bf16.mxu0 0
  %6193 = vmatmul.mubr.bf16.gmra.mxu0 %v5945
  %v6194 = vpop.f32.mrf.mxu0
  %v6195 = vadd.f32 0.0, %v6194
  %v6196 = vpop.f32.mrf.mxu0
  %v6197 = vpop.f32.mrf.mxu0
  %v6198 = vadd.f32 0.0, %v6197
  %v6199 = vpop.f32.mrf.mxu0
  %6200 = vmatprep.mubr.bf16.mxu0 0
  %6201 = vmatmul.mubr.bf16.gmra.mxu0 %v5948
  %v6202 = vpop.f32.mrf.mxu0
  %v6203 = vadd.f32 0.0, %v6202
  %v6204 = vpop.f32.mrf.mxu0
  %v6205 = vpop.f32.mrf.mxu0
  %v6206 = vadd.f32 0.0, %v6205
  %v6207 = vpop.f32.mrf.mxu0
  %6208 = vmatprep.mubr.bf16.mxu0 0
  %6209 = vmatmul.mubr.bf16.gmra.mxu0 %v5951
  %v6210 = vpop.f32.mrf.mxu0
  %v6211 = vadd.f32 0.0, %v6210
  %v6212 = vpop.f32.mrf.mxu0
  %v6213 = vpop.f32.mrf.mxu0
  %v6214 = vadd.f32 0.0, %v6213
  %v6215 = vpop.f32.mrf.mxu0
  %6216 = vmatprep.mubr.bf16.mxu0 0
  %6217 = vmatmul.mubr.bf16.gmra.mxu0 %v5954
  %v6218 = vpop.f32.mrf.mxu0
  %v6219 = vadd.f32 0.0, %v6218
  %v6220 = vpop.f32.mrf.mxu0
  %v6221 = vpop.f32.mrf.mxu0
  %v6222 = vadd.f32 0.0, %v6221
  %v6223 = vpop.f32.mrf.mxu0
  %6224 = vmatprep.mubr.bf16.mxu0 0
  %6225 = vmatmul.mubr.bf16.gmra.mxu0 %v5957
  %v6226 = vpop.f32.mrf.mxu0
  %v6227 = vadd.f32 0.0, %v6226
  %v6228 = vpop.f32.mrf.mxu0
  %v6229 = vpop.f32.mrf.mxu0
  %v6230 = vadd.f32 0.0, %v6229
  %v6231 = vpop.f32.mrf.mxu0
  %6232 = vmatprep.mubr.bf16.mxu0 0
  %6233 = vmatmul.mubr.bf16.gmra.mxu0 %v5960
  %v6234 = vpop.f32.mrf.mxu0
  %v6235 = vadd.f32 0.0, %v6234
  %v6236 = vpop.f32.mrf.mxu0
  %v6237 = vpop.f32.mrf.mxu0
  %v6238 = vadd.f32 0.0, %v6237
  %v6239 = vpop.f32.mrf.mxu0
  %6240 = vmatprep.mubr.bf16.mxu0 0
  %6241 = vmatmul.mubr.bf16.gmra.mxu0 %v5963
  %v6242 = vpop.f32.mrf.mxu0
  %v6243 = vadd.f32 0.0, %v6242
  %v6244 = vpop.f32.mrf.mxu0
  %v6245 = vpop.f32.mrf.mxu0
  %v6246 = vadd.f32 0.0, %v6245
  %v6247 = vpop.f32.mrf.mxu0
  %6248 = vmatprep.mubr.bf16.mxu0 0
  %6249 = vmatmul.mubr.bf16.gmra.mxu0 %v5966
  %v6250 = vpop.f32.mrf.mxu0
  %v6251 = vadd.f32 0.0, %v6250
  %v6252 = vpop.f32.mrf.mxu0
  %v6253 = vpop.f32.mrf.mxu0
  %v6254 = vadd.f32 0.0, %v6253
  %v6255 = vpop.f32.mrf.mxu0
  %6256 = vdwg.mxu0
  %v6257 = vadd.f32 %v5695, %v6003
  %v6258 = vadd.f32 %v5696, %v6006
  %v6259 = vadd.f32 %v5697, %v6011
  %v6260 = vadd.f32 %v5698, %v6014
  %v6261 = vadd.f32 %v5699, %v6019
  %v6262 = vadd.f32 %v5700, %v6022
  %v6263 = vadd.f32 %v5701, %v6027
  %v6264 = vadd.f32 %v5702, %v6030
  %v6265 = vadd.f32 %v5703, %v6035
  %v6266 = vadd.f32 %v5704, %v6038
  %v6267 = vadd.f32 %v5705, %v6043
  %v6268 = vadd.f32 %v5706, %v6046
  %v6269 = vadd.f32 %v5707, %v6051
  %v6270 = vadd.f32 %v5708, %v6054
  %v6271 = vadd.f32 %v5709, %v6059
  %v6272 = vadd.f32 %v5710, %v6062
  %v6273 = vadd.f32 %v5711, %v6067
  %v6274 = vadd.f32 %v5712, %v6070
  %v6275 = vadd.f32 %v5713, %v6075
  %v6276 = vadd.f32 %v5714, %v6078
  %v6277 = vadd.f32 %v5715, %v6083
  %v6278 = vadd.f32 %v5716, %v6086
  %v6279 = vadd.f32 %v5717, %v6091
  %v6280 = vadd.f32 %v5718, %v6094
  %v6281 = vadd.f32 %v5719, %v6099
  %v6282 = vadd.f32 %v5720, %v6102
  %v6283 = vadd.f32 %v5721, %v6107
  %v6284 = vadd.f32 %v5722, %v6110
  %v6285 = vadd.f32 %v5723, %v6115
  %v6286 = vadd.f32 %v5724, %v6118
  %v6287 = vadd.f32 %v5725, %v6123
  %v6288 = vadd.f32 %v5726, %v6126
  %v6289 = vadd.f32 %v5727, %v6131
  %v6290 = vadd.f32 %v5728, %v6134
  %v6291 = vadd.f32 %v5729, %v6139
  %v6292 = vadd.f32 %v5730, %v6142
  %v6293 = vadd.f32 %v5731, %v6147
  %v6294 = vadd.f32 %v5732, %v6150
  %v6295 = vadd.f32 %v5733, %v6155
  %v6296 = vadd.f32 %v5734, %v6158
  %v6297 = vadd.f32 %v5735, %v6163
  %v6298 = vadd.f32 %v5736, %v6166
  %v6299 = vadd.f32 %v5737, %v6171
  %v6300 = vadd.f32 %v5738, %v6174
  %v6301 = vadd.f32 %v5739, %v6179
  %v6302 = vadd.f32 %v5740, %v6182
  %v6303 = vadd.f32 %v5741, %v6187
  %v6304 = vadd.f32 %v5742, %v6190
  %v6305 = vadd.f32 %v5743, %v6195
  %v6306 = vadd.f32 %v5744, %v6198
  %v6307 = vadd.f32 %v5745, %v6203
  %v6308 = vadd.f32 %v5746, %v6206
  %v6309 = vadd.f32 %v5747, %v6211
  %v6310 = vadd.f32 %v5748, %v6214
  %v6311 = vadd.f32 %v5749, %v6219
  %v6312 = vadd.f32 %v5750, %v6222
  %v6313 = vadd.f32 %v5751, %v6227
  %v6314 = vadd.f32 %v5752, %v6230
  %v6315 = vadd.f32 %v5753, %v6235
  %v6316 = vadd.f32 %v5754, %v6238
  %v6317 = vadd.f32 %v5755, %v6243
  %v6318 = vadd.f32 %v5756, %v6246
  %v6319 = vadd.f32 %v5757, %v6251
  %v6320 = vadd.f32 %v5758, %v6254
  %v6321 = vld [vmem:[%s5] sm:$0x1]
  %v6322 = vld [vmem:[%s6] sm:$0x1]
  %v6323 = vsel %vm671, %v6257, 0.0
  %v6324 = vsel %vm671, %v6258, 0.0
  %v6325 = vadd.f32 %v6323, %v6324
  %v6326 = vsel %vm671, %v6259, 0.0
  %v6327 = vadd.f32 %v6325, %v6326
  %v6328 = vsel %vm671, %v6260, 0.0
  %v6329 = vadd.f32 %v6327, %v6328
  %v6330 = vsel %vm671, %v6261, 0.0
  %v6331 = vadd.f32 %v6329, %v6330
  %v6332 = vsel %vm671, %v6262, 0.0
  %v6333 = vadd.f32 %v6331, %v6332
  %v6334 = vsel %vm671, %v6263, 0.0
  %v6335 = vadd.f32 %v6333, %v6334
  %v6336 = vsel %vm671, %v6264, 0.0
  %v6337 = vadd.f32 %v6335, %v6336
  %v6338 = vsel %vm671, %v6265, 0.0
  %v6339 = vadd.f32 %v6337, %v6338
  %v6340 = vsel %vm671, %v6266, 0.0
  %v6341 = vadd.f32 %v6339, %v6340
  %v6342 = vsel %vm671, %v6267, 0.0
  %v6343 = vadd.f32 %v6341, %v6342
  %v6344 = vsel %vm671, %v6268, 0.0
  %v6345 = vadd.f32 %v6343, %v6344
  %v6346 = vsel %vm671, %v6269, 0.0
  %v6347 = vadd.f32 %v6345, %v6346
  %v6348 = vsel %vm671, %v6270, 0.0
  %v6349 = vadd.f32 %v6347, %v6348
  %v6350 = vsel %vm671, %v6271, 0.0
  %v6351 = vadd.f32 %v6349, %v6350
  %v6352 = vsel %vm671, %v6272, 0.0
  %v6353 = vadd.f32 %v6351, %v6352
  %v6354 = vsel %vm671, %v6273, 0.0
  %v6355 = vadd.f32 %v6353, %v6354
  %v6356 = vsel %vm671, %v6274, 0.0
  %v6357 = vadd.f32 %v6355, %v6356
  %v6358 = vsel %vm671, %v6275, 0.0
  %v6359 = vadd.f32 %v6357, %v6358
  %v6360 = vsel %vm671, %v6276, 0.0
  %v6361 = vadd.f32 %v6359, %v6360
  %v6362 = vsel %vm671, %v6277, 0.0
  %v6363 = vadd.f32 %v6361, %v6362
  %v6364 = vsel %vm671, %v6278, 0.0
  %v6365 = vadd.f32 %v6363, %v6364
  %v6366 = vsel %vm671, %v6279, 0.0
  %v6367 = vadd.f32 %v6365, %v6366
  %v6368 = vsel %vm671, %v6280, 0.0
  %v6369 = vadd.f32 %v6367, %v6368
  %v6370 = vsel %vm671, %v6281, 0.0
  %v6371 = vadd.f32 %v6369, %v6370
  %v6372 = vsel %vm671, %v6282, 0.0
  %v6373 = vadd.f32 %v6371, %v6372
  %v6374 = vsel %vm671, %v6283, 0.0
  %v6375 = vadd.f32 %v6373, %v6374
  %v6376 = vsel %vm671, %v6284, 0.0
  %v6377 = vadd.f32 %v6375, %v6376
  %v6378 = vsel %vm671, %v6285, 0.0
  %v6379 = vadd.f32 %v6377, %v6378
  %v6380 = vsel %vm671, %v6286, 0.0
  %v6381 = vadd.f32 %v6379, %v6380
  %v6382 = vsel %vm671, %v6287, 0.0
  %v6383 = vadd.f32 %v6381, %v6382
  %v6384 = vsel %vm671, %v6288, 0.0
  %v6385 = vadd.f32 %v6383, %v6384
  %v6386 = vsel %vm671, %v6289, 0.0
  %v6387 = vadd.f32 %v6385, %v6386
  %v6388 = vsel %vm671, %v6290, 0.0
  %v6389 = vadd.f32 %v6387, %v6388
  %v6390 = vsel %vm671, %v6291, 0.0
  %v6391 = vadd.f32 %v6389, %v6390
  %v6392 = vsel %vm671, %v6292, 0.0
  %v6393 = vadd.f32 %v6391, %v6392
  %v6394 = vsel %vm671, %v6293, 0.0
  %v6395 = vadd.f32 %v6393, %v6394
  %v6396 = vsel %vm671, %v6294, 0.0
  %v6397 = vadd.f32 %v6395, %v6396
  %v6398 = vsel %vm671, %v6295, 0.0
  %v6399 = vadd.f32 %v6397, %v6398
  %v6400 = vsel %vm671, %v6296, 0.0
  %v6401 = vadd.f32 %v6399, %v6400
  %v6402 = vsel %vm671, %v6297, 0.0
  %v6403 = vadd.f32 %v6401, %v6402
  %v6404 = vsel %vm671, %v6298, 0.0
  %v6405 = vadd.f32 %v6403, %v6404
  %v6406 = vsel %vm671, %v6299, 0.0
  %v6407 = vadd.f32 %v6405, %v6406
  %v6408 = vsel %vm671, %v6300, 0.0
  %v6409 = vadd.f32 %v6407, %v6408
  %v6410 = vsel %vm671, %v6301, 0.0
  %v6411 = vadd.f32 %v6409, %v6410
  %v6412 = vsel %vm671, %v6302, 0.0
  %v6413 = vadd.f32 %v6411, %v6412
  %v6414 = vsel %vm671, %v6303, 0.0
  %v6415 = vadd.f32 %v6413, %v6414
  %v6416 = vsel %vm671, %v6304, 0.0
  %v6417 = vadd.f32 %v6415, %v6416
  %v6418 = vsel %vm671, %v6305, 0.0
  %v6419 = vadd.f32 %v6417, %v6418
  %v6420 = vsel %vm671, %v6306, 0.0
  %v6421 = vadd.f32 %v6419, %v6420
  %v6422 = vsel %vm671, %v6307, 0.0
  %v6423 = vadd.f32 %v6421, %v6422
  %v6424 = vsel %vm671, %v6308, 0.0
  %v6425 = vadd.f32 %v6423, %v6424
  %v6426 = vsel %vm671, %v6309, 0.0
  %v6427 = vadd.f32 %v6425, %v6426
  %v6428 = vsel %vm671, %v6310, 0.0
  %v6429 = vadd.f32 %v6427, %v6428
  %v6430 = vsel %vm671, %v6311, 0.0
  %v6431 = vadd.f32 %v6429, %v6430
  %v6432 = vsel %vm671, %v6312, 0.0
  %v6433 = vadd.f32 %v6431, %v6432
  %v6434 = vsel %vm671, %v6313, 0.0
  %v6435 = vadd.f32 %v6433, %v6434
  %v6436 = vsel %vm671, %v6314, 0.0
  %v6437 = vadd.f32 %v6435, %v6436
  %v6438 = vsel %vm671, %v6315, 0.0
  %v6439 = vadd.f32 %v6437, %v6438
  %v6440 = vsel %vm671, %v6316, 0.0
  %v6441 = vadd.f32 %v6439, %v6440
  %v6442 = vsel %vm671, %v6317, 0.0
  %v6443 = vadd.f32 %v6441, %v6442
  %v6444 = vsel %vm671, %v6318, 0.0
  %v6445 = vadd.f32 %v6443, %v6444
  %v6446 = vsel %vm671, %v6319, 0.0
  %v6447 = vadd.f32 %v6445, %v6446
  %v6448 = vsel %vm671, %v6320, 0.0
  %v6449 = vadd.f32 %v6447, %v6448
  %v6450 = vrot.slane %v6449, 4
  %v6451 = vadd.f32 %v6449, %v6450
  %v6452 = vrot.slane %v6451, 2
  %v6453 = vadd.f32 %v6451, %v6452
  %v6454 = vrot.slane %v6453, 1
  %v6455 = vadd.f32 %v6453, %v6454
  %v6456 = vmul.f32 %v6455, %v805
  %v6457 = vmul.f32 %v6257, %v6257
  %v6458 = vmul.f32 %v6258, %v6258
  %v6459 = vmul.f32 %v6259, %v6259
  %v6460 = vmul.f32 %v6260, %v6260
  %v6461 = vmul.f32 %v6261, %v6261
  %v6462 = vmul.f32 %v6262, %v6262
  %v6463 = vmul.f32 %v6263, %v6263
  %v6464 = vmul.f32 %v6264, %v6264
  %v6465 = vmul.f32 %v6265, %v6265
  %v6466 = vmul.f32 %v6266, %v6266
  %v6467 = vmul.f32 %v6267, %v6267
  %v6468 = vmul.f32 %v6268, %v6268
  %v6469 = vmul.f32 %v6269, %v6269
  %v6470 = vmul.f32 %v6270, %v6270
  %v6471 = vmul.f32 %v6271, %v6271
  %v6472 = vmul.f32 %v6272, %v6272
  %v6473 = vmul.f32 %v6273, %v6273
  %v6474 = vmul.f32 %v6274, %v6274
  %v6475 = vmul.f32 %v6275, %v6275
  %v6476 = vmul.f32 %v6276, %v6276
  %v6477 = vmul.f32 %v6277, %v6277
  %v6478 = vmul.f32 %v6278, %v6278
  %v6479 = vmul.f32 %v6279, %v6279
  %v6480 = vmul.f32 %v6280, %v6280
  %v6481 = vmul.f32 %v6281, %v6281
  %v6482 = vmul.f32 %v6282, %v6282
  %v6483 = vmul.f32 %v6283, %v6283
  %v6484 = vmul.f32 %v6284, %v6284
  %v6485 = vmul.f32 %v6285, %v6285
  %v6486 = vmul.f32 %v6286, %v6286
  %v6487 = vmul.f32 %v6287, %v6287
  %v6488 = vmul.f32 %v6288, %v6288
  %v6489 = vmul.f32 %v6289, %v6289
  %v6490 = vmul.f32 %v6290, %v6290
  %v6491 = vmul.f32 %v6291, %v6291
  %v6492 = vmul.f32 %v6292, %v6292
  %v6493 = vmul.f32 %v6293, %v6293
  %v6494 = vmul.f32 %v6294, %v6294
  %v6495 = vmul.f32 %v6295, %v6295
  %v6496 = vmul.f32 %v6296, %v6296
  %v6497 = vmul.f32 %v6297, %v6297
  %v6498 = vmul.f32 %v6298, %v6298
  %v6499 = vmul.f32 %v6299, %v6299
  %v6500 = vmul.f32 %v6300, %v6300
  %v6501 = vmul.f32 %v6301, %v6301
  %v6502 = vmul.f32 %v6302, %v6302
  %v6503 = vmul.f32 %v6303, %v6303
  %v6504 = vmul.f32 %v6304, %v6304
  %v6505 = vmul.f32 %v6305, %v6305
  %v6506 = vmul.f32 %v6306, %v6306
  %v6507 = vmul.f32 %v6307, %v6307
  %v6508 = vmul.f32 %v6308, %v6308
  %v6509 = vmul.f32 %v6309, %v6309
  %v6510 = vmul.f32 %v6310, %v6310
  %v6511 = vmul.f32 %v6311, %v6311
  %v6512 = vmul.f32 %v6312, %v6312
  %v6513 = vmul.f32 %v6313, %v6313
  %v6514 = vmul.f32 %v6314, %v6314
  %v6515 = vmul.f32 %v6315, %v6315
  %v6516 = vmul.f32 %v6316, %v6316
  %v6517 = vmul.f32 %v6317, %v6317
  %v6518 = vmul.f32 %v6318, %v6318
  %v6519 = vmul.f32 %v6319, %v6319
  %v6520 = vmul.f32 %v6320, %v6320
  %v6521 = vsel %vm671, %v6457, 0.0
  %v6522 = vsel %vm671, %v6458, 0.0
  %v6523 = vadd.f32 %v6521, %v6522
  %v6524 = vsel %vm671, %v6459, 0.0
  %v6525 = vadd.f32 %v6523, %v6524
  %v6526 = vsel %vm671, %v6460, 0.0
  %v6527 = vadd.f32 %v6525, %v6526
  %v6528 = vsel %vm671, %v6461, 0.0
  %v6529 = vadd.f32 %v6527, %v6528
  %v6530 = vsel %vm671, %v6462, 0.0
  %v6531 = vadd.f32 %v6529, %v6530
  %v6532 = vsel %vm671, %v6463, 0.0
  %v6533 = vadd.f32 %v6531, %v6532
  %v6534 = vsel %vm671, %v6464, 0.0
  %v6535 = vadd.f32 %v6533, %v6534
  %v6536 = vsel %vm671, %v6465, 0.0
  %v6537 = vadd.f32 %v6535, %v6536
  %v6538 = vsel %vm671, %v6466, 0.0
  %v6539 = vadd.f32 %v6537, %v6538
  %v6540 = vsel %vm671, %v6467, 0.0
  %v6541 = vadd.f32 %v6539, %v6540
  %v6542 = vsel %vm671, %v6468, 0.0
  %v6543 = vadd.f32 %v6541, %v6542
  %v6544 = vsel %vm671, %v6469, 0.0
  %v6545 = vadd.f32 %v6543, %v6544
  %v6546 = vsel %vm671, %v6470, 0.0
  %v6547 = vadd.f32 %v6545, %v6546
  %v6548 = vsel %vm671, %v6471, 0.0
  %v6549 = vadd.f32 %v6547, %v6548
  %v6550 = vsel %vm671, %v6472, 0.0
  %v6551 = vadd.f32 %v6549, %v6550
  %v6552 = vsel %vm671, %v6473, 0.0
  %v6553 = vadd.f32 %v6551, %v6552
  %v6554 = vsel %vm671, %v6474, 0.0
  %v6555 = vadd.f32 %v6553, %v6554
  %v6556 = vsel %vm671, %v6475, 0.0
  %v6557 = vadd.f32 %v6555, %v6556
  %v6558 = vsel %vm671, %v6476, 0.0
  %v6559 = vadd.f32 %v6557, %v6558
  %v6560 = vsel %vm671, %v6477, 0.0
  %v6561 = vadd.f32 %v6559, %v6560
  %v6562 = vsel %vm671, %v6478, 0.0
  %v6563 = vadd.f32 %v6561, %v6562
  %v6564 = vsel %vm671, %v6479, 0.0
  %v6565 = vadd.f32 %v6563, %v6564
  %v6566 = vsel %vm671, %v6480, 0.0
  %v6567 = vadd.f32 %v6565, %v6566
  %v6568 = vsel %vm671, %v6481, 0.0
  %v6569 = vadd.f32 %v6567, %v6568
  %v6570 = vsel %vm671, %v6482, 0.0
  %v6571 = vadd.f32 %v6569, %v6570
  %v6572 = vsel %vm671, %v6483, 0.0
  %v6573 = vadd.f32 %v6571, %v6572
  %v6574 = vsel %vm671, %v6484, 0.0
  %v6575 = vadd.f32 %v6573, %v6574
  %v6576 = vsel %vm671, %v6485, 0.0
  %v6577 = vadd.f32 %v6575, %v6576
  %v6578 = vsel %vm671, %v6486, 0.0
  %v6579 = vadd.f32 %v6577, %v6578
  %v6580 = vsel %vm671, %v6487, 0.0
  %v6581 = vadd.f32 %v6579, %v6580
  %v6582 = vsel %vm671, %v6488, 0.0
  %v6583 = vadd.f32 %v6581, %v6582
  %v6584 = vsel %vm671, %v6489, 0.0
  %v6585 = vadd.f32 %v6583, %v6584
  %v6586 = vsel %vm671, %v6490, 0.0
  %v6587 = vadd.f32 %v6585, %v6586
  %v6588 = vsel %vm671, %v6491, 0.0
  %v6589 = vadd.f32 %v6587, %v6588
  %v6590 = vsel %vm671, %v6492, 0.0
  %v6591 = vadd.f32 %v6589, %v6590
  %v6592 = vsel %vm671, %v6493, 0.0
  %v6593 = vadd.f32 %v6591, %v6592
  %v6594 = vsel %vm671, %v6494, 0.0
  %v6595 = vadd.f32 %v6593, %v6594
  %v6596 = vsel %vm671, %v6495, 0.0
  %v6597 = vadd.f32 %v6595, %v6596
  %v6598 = vsel %vm671, %v6496, 0.0
  %v6599 = vadd.f32 %v6597, %v6598
  %v6600 = vsel %vm671, %v6497, 0.0
  %v6601 = vadd.f32 %v6599, %v6600
  %v6602 = vsel %vm671, %v6498, 0.0
  %v6603 = vadd.f32 %v6601, %v6602
  %v6604 = vsel %vm671, %v6499, 0.0
  %v6605 = vadd.f32 %v6603, %v6604
  %v6606 = vsel %vm671, %v6500, 0.0
  %v6607 = vadd.f32 %v6605, %v6606
  %v6608 = vsel %vm671, %v6501, 0.0
  %v6609 = vadd.f32 %v6607, %v6608
  %v6610 = vsel %vm671, %v6502, 0.0
  %v6611 = vadd.f32 %v6609, %v6610
  %v6612 = vsel %vm671, %v6503, 0.0
  %v6613 = vadd.f32 %v6611, %v6612
  %v6614 = vsel %vm671, %v6504, 0.0
  %v6615 = vadd.f32 %v6613, %v6614
  %v6616 = vsel %vm671, %v6505, 0.0
  %v6617 = vadd.f32 %v6615, %v6616
  %v6618 = vsel %vm671, %v6506, 0.0
  %v6619 = vadd.f32 %v6617, %v6618
  %v6620 = vsel %vm671, %v6507, 0.0
  %v6621 = vadd.f32 %v6619, %v6620
  %v6622 = vsel %vm671, %v6508, 0.0
  %v6623 = vadd.f32 %v6621, %v6622
  %v6624 = vsel %vm671, %v6509, 0.0
  %v6625 = vadd.f32 %v6623, %v6624
  %v6626 = vsel %vm671, %v6510, 0.0
  %v6627 = vadd.f32 %v6625, %v6626
  %v6628 = vsel %vm671, %v6511, 0.0
  %v6629 = vadd.f32 %v6627, %v6628
  %v6630 = vsel %vm671, %v6512, 0.0
  %v6631 = vadd.f32 %v6629, %v6630
  %v6632 = vsel %vm671, %v6513, 0.0
  %v6633 = vadd.f32 %v6631, %v6632
  %v6634 = vsel %vm671, %v6514, 0.0
  %v6635 = vadd.f32 %v6633, %v6634
  %v6636 = vsel %vm671, %v6515, 0.0
  %v6637 = vadd.f32 %v6635, %v6636
  %v6638 = vsel %vm671, %v6516, 0.0
  %v6639 = vadd.f32 %v6637, %v6638
  %v6640 = vsel %vm671, %v6517, 0.0
  %v6641 = vadd.f32 %v6639, %v6640
  %v6642 = vsel %vm671, %v6518, 0.0
  %v6643 = vadd.f32 %v6641, %v6642
  %v6644 = vsel %vm671, %v6519, 0.0
  %v6645 = vadd.f32 %v6643, %v6644
  %v6646 = vsel %vm671, %v6520, 0.0
  %v6647 = vadd.f32 %v6645, %v6646
  %v6648 = vrot.slane %v6647, 4
  %v6649 = vadd.f32 %v6647, %v6648
  %v6650 = vrot.slane %v6649, 2
  %v6651 = vadd.f32 %v6649, %v6650
  %v6652 = vrot.slane %v6651, 1
  %v6653 = vadd.f32 %v6651, %v6652
  %v6654 = vmul.f32 %v6653, %v805
  %v6655 = vmul.f32 %v6456, %v6456
  %v6656 = vsub.f32 %v6654, %v6655
  %v6657 = vmax.f32 %v6656, 0.0
  %v6658 = vadd.f32 %v6657, 1e-05
  %v6659 = vrsqrt.pop %v6658
  %v6660 = vmul.f32 %v6321, %v6659
  %v6661 = vmul.f32 %v6456, %v6660
  %v6662 = vsub.f32 %v6322, %v6661
  %v6664 = vlaneseq
  %v6665 = vshrl.u32 %v6664, 7
  %v6666 = vsub.s32 0, %v6665
  %v6667 = vrot.slane %v6660, %v6666
  %v6669 = vmul.f32 %v6257, %v6667
  %v6670 = vmul.f32 %v6258, %v6667
  %v6671 = vmul.f32 %v6259, %v6667
  %v6672 = vmul.f32 %v6260, %v6667
  %v6673 = vmul.f32 %v6261, %v6667
  %v6674 = vmul.f32 %v6262, %v6667
  %v6675 = vmul.f32 %v6263, %v6667
  %v6676 = vmul.f32 %v6264, %v6667
  %v6677 = vmul.f32 %v6265, %v6667
  %v6678 = vmul.f32 %v6266, %v6667
  %v6679 = vmul.f32 %v6267, %v6667
  %v6680 = vmul.f32 %v6268, %v6667
  %v6681 = vmul.f32 %v6269, %v6667
  %v6682 = vmul.f32 %v6270, %v6667
  %v6683 = vmul.f32 %v6271, %v6667
  %v6684 = vmul.f32 %v6272, %v6667
  %v6685 = vmul.f32 %v6273, %v6667
  %v6686 = vmul.f32 %v6274, %v6667
  %v6687 = vmul.f32 %v6275, %v6667
  %v6688 = vmul.f32 %v6276, %v6667
  %v6689 = vmul.f32 %v6277, %v6667
  %v6690 = vmul.f32 %v6278, %v6667
  %v6691 = vmul.f32 %v6279, %v6667
  %v6692 = vmul.f32 %v6280, %v6667
  %v6693 = vmul.f32 %v6281, %v6667
  %v6694 = vmul.f32 %v6282, %v6667
  %v6695 = vmul.f32 %v6283, %v6667
  %v6696 = vmul.f32 %v6284, %v6667
  %v6697 = vmul.f32 %v6285, %v6667
  %v6698 = vmul.f32 %v6286, %v6667
  %v6699 = vmul.f32 %v6287, %v6667
  %v6700 = vmul.f32 %v6288, %v6667
  %v6701 = vmul.f32 %v6289, %v6667
  %v6702 = vmul.f32 %v6290, %v6667
  %v6703 = vmul.f32 %v6291, %v6667
  %v6704 = vmul.f32 %v6292, %v6667
  %v6705 = vmul.f32 %v6293, %v6667
  %v6706 = vmul.f32 %v6294, %v6667
  %v6707 = vmul.f32 %v6295, %v6667
  %v6708 = vmul.f32 %v6296, %v6667
  %v6709 = vmul.f32 %v6297, %v6667
  %v6710 = vmul.f32 %v6298, %v6667
  %v6711 = vmul.f32 %v6299, %v6667
  %v6712 = vmul.f32 %v6300, %v6667
  %v6713 = vmul.f32 %v6301, %v6667
  %v6714 = vmul.f32 %v6302, %v6667
  %v6715 = vmul.f32 %v6303, %v6667
  %v6716 = vmul.f32 %v6304, %v6667
  %v6717 = vmul.f32 %v6305, %v6667
  %v6718 = vmul.f32 %v6306, %v6667
  %v6719 = vmul.f32 %v6307, %v6667
  %v6720 = vmul.f32 %v6308, %v6667
  %v6721 = vmul.f32 %v6309, %v6667
  %v6722 = vmul.f32 %v6310, %v6667
  %v6723 = vmul.f32 %v6311, %v6667
  %v6724 = vmul.f32 %v6312, %v6667
  %v6725 = vmul.f32 %v6313, %v6667
  %v6726 = vmul.f32 %v6314, %v6667
  %v6727 = vmul.f32 %v6315, %v6667
  %v6728 = vmul.f32 %v6316, %v6667
  %v6729 = vmul.f32 %v6317, %v6667
  %v6730 = vmul.f32 %v6318, %v6667
  %v6731 = vmul.f32 %v6319, %v6667
  %v6732 = vmul.f32 %v6320, %v6667
  %v6734 = vlaneseq
  %v6735 = vshrl.u32 %v6734, 7
  %v6736 = vsub.s32 0, %v6735
  %v6737 = vrot.slane %v6662, %v6736
  %v6739 = vadd.f32 %v6669, %v6737
  %v6740 = vadd.f32 %v6670, %v6737
  %v6741 = vadd.f32 %v6671, %v6737
  %v6742 = vadd.f32 %v6672, %v6737
  %v6743 = vadd.f32 %v6673, %v6737
  %v6744 = vadd.f32 %v6674, %v6737
  %v6745 = vadd.f32 %v6675, %v6737
  %v6746 = vadd.f32 %v6676, %v6737
  %v6747 = vadd.f32 %v6677, %v6737
  %v6748 = vadd.f32 %v6678, %v6737
  %v6749 = vadd.f32 %v6679, %v6737
  %v6750 = vadd.f32 %v6680, %v6737
  %v6751 = vadd.f32 %v6681, %v6737
  %v6752 = vadd.f32 %v6682, %v6737
  %v6753 = vadd.f32 %v6683, %v6737
  %v6754 = vadd.f32 %v6684, %v6737
  %v6755 = vadd.f32 %v6685, %v6737
  %v6756 = vadd.f32 %v6686, %v6737
  %v6757 = vadd.f32 %v6687, %v6737
  %v6758 = vadd.f32 %v6688, %v6737
  %v6759 = vadd.f32 %v6689, %v6737
  %v6760 = vadd.f32 %v6690, %v6737
  %v6761 = vadd.f32 %v6691, %v6737
  %v6762 = vadd.f32 %v6692, %v6737
  %v6763 = vadd.f32 %v6693, %v6737
  %v6764 = vadd.f32 %v6694, %v6737
  %v6765 = vadd.f32 %v6695, %v6737
  %v6766 = vadd.f32 %v6696, %v6737
  %v6767 = vadd.f32 %v6697, %v6737
  %v6768 = vadd.f32 %v6698, %v6737
  %v6769 = vadd.f32 %v6699, %v6737
  %v6770 = vadd.f32 %v6700, %v6737
  %v6771 = vadd.f32 %v6701, %v6737
  %v6772 = vadd.f32 %v6702, %v6737
  %v6773 = vadd.f32 %v6703, %v6737
  %v6774 = vadd.f32 %v6704, %v6737
  %v6775 = vadd.f32 %v6705, %v6737
  %v6776 = vadd.f32 %v6706, %v6737
  %v6777 = vadd.f32 %v6707, %v6737
  %v6778 = vadd.f32 %v6708, %v6737
  %v6779 = vadd.f32 %v6709, %v6737
  %v6780 = vadd.f32 %v6710, %v6737
  %v6781 = vadd.f32 %v6711, %v6737
  %v6782 = vadd.f32 %v6712, %v6737
  %v6783 = vadd.f32 %v6713, %v6737
  %v6784 = vadd.f32 %v6714, %v6737
  %v6785 = vadd.f32 %v6715, %v6737
  %v6786 = vadd.f32 %v6716, %v6737
  %v6787 = vadd.f32 %v6717, %v6737
  %v6788 = vadd.f32 %v6718, %v6737
  %v6789 = vadd.f32 %v6719, %v6737
  %v6790 = vadd.f32 %v6720, %v6737
  %v6791 = vadd.f32 %v6721, %v6737
  %v6792 = vadd.f32 %v6722, %v6737
  %v6793 = vadd.f32 %v6723, %v6737
  %v6794 = vadd.f32 %v6724, %v6737
  %v6795 = vadd.f32 %v6725, %v6737
  %v6796 = vadd.f32 %v6726, %v6737
  %v6797 = vadd.f32 %v6727, %v6737
  %v6798 = vadd.f32 %v6728, %v6737
  %v6799 = vadd.f32 %v6729, %v6737
  %v6800 = vadd.f32 %v6730, %v6737
  %v6801 = vadd.f32 %v6731, %v6737
  %v6802 = vadd.f32 %v6732, %v6737
  %v6803 = vmax.f32 %v6739, 0.0
  %v6804 = vmax.f32 %v6740, 0.0
  %v6805 = vmax.f32 %v6741, 0.0
  %v6806 = vmax.f32 %v6742, 0.0
  %v6807 = vmax.f32 %v6743, 0.0
  %v6808 = vmax.f32 %v6744, 0.0
  %v6809 = vmax.f32 %v6745, 0.0
  %v6810 = vmax.f32 %v6746, 0.0
  %v6811 = vmax.f32 %v6747, 0.0
  %v6812 = vmax.f32 %v6748, 0.0
  %v6813 = vmax.f32 %v6749, 0.0
  %v6814 = vmax.f32 %v6750, 0.0
  %v6815 = vmax.f32 %v6751, 0.0
  %v6816 = vmax.f32 %v6752, 0.0
  %v6817 = vmax.f32 %v6753, 0.0
  %v6818 = vmax.f32 %v6754, 0.0
  %v6819 = vmax.f32 %v6755, 0.0
  %v6820 = vmax.f32 %v6756, 0.0
  %v6821 = vmax.f32 %v6757, 0.0
  %v6822 = vmax.f32 %v6758, 0.0
  %v6823 = vmax.f32 %v6759, 0.0
  %v6824 = vmax.f32 %v6760, 0.0
  %v6825 = vmax.f32 %v6761, 0.0
  %v6826 = vmax.f32 %v6762, 0.0
  %v6827 = vmax.f32 %v6763, 0.0
  %v6828 = vmax.f32 %v6764, 0.0
  %v6829 = vmax.f32 %v6765, 0.0
  %v6830 = vmax.f32 %v6766, 0.0
  %v6831 = vmax.f32 %v6767, 0.0
  %v6832 = vmax.f32 %v6768, 0.0
  %v6833 = vmax.f32 %v6769, 0.0
  %v6834 = vmax.f32 %v6770, 0.0
  %v6835 = vmax.f32 %v6771, 0.0
  %v6836 = vmax.f32 %v6772, 0.0
  %v6837 = vmax.f32 %v6773, 0.0
  %v6838 = vmax.f32 %v6774, 0.0
  %v6839 = vmax.f32 %v6775, 0.0
  %v6840 = vmax.f32 %v6776, 0.0
  %v6841 = vmax.f32 %v6777, 0.0
  %v6842 = vmax.f32 %v6778, 0.0
  %v6843 = vmax.f32 %v6779, 0.0
  %v6844 = vmax.f32 %v6780, 0.0
  %v6845 = vmax.f32 %v6781, 0.0
  %v6846 = vmax.f32 %v6782, 0.0
  %v6847 = vmax.f32 %v6783, 0.0
  %v6848 = vmax.f32 %v6784, 0.0
  %v6849 = vmax.f32 %v6785, 0.0
  %v6850 = vmax.f32 %v6786, 0.0
  %v6851 = vmax.f32 %v6787, 0.0
  %v6852 = vmax.f32 %v6788, 0.0
  %v6853 = vmax.f32 %v6789, 0.0
  %v6854 = vmax.f32 %v6790, 0.0
  %v6855 = vmax.f32 %v6791, 0.0
  %v6856 = vmax.f32 %v6792, 0.0
  %v6857 = vmax.f32 %v6793, 0.0
  %v6858 = vmax.f32 %v6794, 0.0
  %v6859 = vmax.f32 %v6795, 0.0
  %v6860 = vmax.f32 %v6796, 0.0
  %v6861 = vmax.f32 %v6797, 0.0
  %v6862 = vmax.f32 %v6798, 0.0
  %v6863 = vmax.f32 %v6799, 0.0
  %v6864 = vmax.f32 %v6800, 0.0
  %v6865 = vmax.f32 %v6801, 0.0
  %v6866 = vmax.f32 %v6802, 0.0
  %v6867 = vmax.f32 %v6803, %v6805
  %v6868 = vmax.f32 %v6804, %v6806
  %v6869 = vmax.f32 %v6807, %v6809
  %v6870 = vmax.f32 %v6808, %v6810
  %v6871 = vmax.f32 %v6811, %v6813
  %v6872 = vmax.f32 %v6812, %v6814
  %v6873 = vmax.f32 %v6815, %v6817
  %v6874 = vmax.f32 %v6816, %v6818
  %v6875 = vmax.f32 %v6819, %v6821
  %v6876 = vmax.f32 %v6820, %v6822
  %v6877 = vmax.f32 %v6823, %v6825
  %v6878 = vmax.f32 %v6824, %v6826
  %v6879 = vmax.f32 %v6827, %v6829
  %v6880 = vmax.f32 %v6828, %v6830
  %v6881 = vmax.f32 %v6831, %v6833
  %v6882 = vmax.f32 %v6832, %v6834
  %v6883 = vmax.f32 %v6835, %v6837
  %v6884 = vmax.f32 %v6836, %v6838
  %v6885 = vmax.f32 %v6839, %v6841
  %v6886 = vmax.f32 %v6840, %v6842
  %v6887 = vmax.f32 %v6843, %v6845
  %v6888 = vmax.f32 %v6844, %v6846
  %v6889 = vmax.f32 %v6847, %v6849
  %v6890 = vmax.f32 %v6848, %v6850
  %v6891 = vmax.f32 %v6851, %v6853
  %v6892 = vmax.f32 %v6852, %v6854
  %v6893 = vmax.f32 %v6855, %v6857
  %v6894 = vmax.f32 %v6856, %v6858
  %v6895 = vmax.f32 %v6859, %v6861
  %v6896 = vmax.f32 %v6860, %v6862
  %v6897 = vmax.f32 %v6863, %v6865
  %v6898 = vmax.f32 %v6864, %v6866
  %6899 = vst.msk [vmem:[#allocation5] sm:$0xff] %vm671, %v6867
  %6900 = vst.msk [vmem:[#allocation5 + $0x8] sm:$0xff] %vm671, %v6868
  %6901 = vst.msk [vmem:[#allocation5 + $0x10] sm:$0xff] %vm671, %v6869
  %6902 = vst.msk [vmem:[#allocation5 + $0x18] sm:$0xff] %vm671, %v6870
  %6903 = vst.msk [vmem:[#allocation5 + $0x20] sm:$0xff] %vm671, %v6871
  %6904 = vst.msk [vmem:[#allocation5 + $0x28] sm:$0xff] %vm671, %v6872
  %6905 = vst.msk [vmem:[#allocation5 + $0x30] sm:$0xff] %vm671, %v6873
  %6906 = vst.msk [vmem:[#allocation5 + $0x38] sm:$0xff] %vm671, %v6874
  %6907 = vst.msk [vmem:[#allocation5 + $0x40] sm:$0xff] %vm671, %v6875
  %6908 = vst.msk [vmem:[#allocation5 + $0x48] sm:$0xff] %vm671, %v6876
  %6909 = vst.msk [vmem:[#allocation5 + $0x50] sm:$0xff] %vm671, %v6877
  %6910 = vst.msk [vmem:[#allocation5 + $0x58] sm:$0xff] %vm671, %v6878
  %6911 = vst.msk [vmem:[#allocation5 + $0x60] sm:$0xff] %vm671, %v6879
  %6912 = vst.msk [vmem:[#allocation5 + $0x68] sm:$0xff] %vm671, %v6880
  %6913 = vst.msk [vmem:[#allocation5 + $0x70] sm:$0xff] %vm671, %v6881
  %6914 = vst.msk [vmem:[#allocation5 + $0x78] sm:$0xff] %vm671, %v6882
  %6915 = vst.msk [vmem:[#allocation5 + $0x80] sm:$0xff] %vm671, %v6883
  %6916 = vst.msk [vmem:[#allocation5 + $0x88] sm:$0xff] %vm671, %v6884
  %6917 = vst.msk [vmem:[#allocation5 + $0x90] sm:$0xff] %vm671, %v6885
  %6918 = vst.msk [vmem:[#allocation5 + $0x98] sm:$0xff] %vm671, %v6886
  %6919 = vst.msk [vmem:[#allocation5 + $0xa0] sm:$0xff] %vm671, %v6887
  %6920 = vst.msk [vmem:[#allocation5 + $0xa8] sm:$0xff] %vm671, %v6888
  %6921 = vst.msk [vmem:[#allocation5 + $0xb0] sm:$0xff] %vm671, %v6889
  %6922 = vst.msk [vmem:[#allocation5 + $0xb8] sm:$0xff] %vm671, %v6890
  %6923 = vst.msk [vmem:[#allocation5 + $0xc0] sm:$0xff] %vm671, %v6891
  %6924 = vst.msk [vmem:[#allocation5 + $0xc8] sm:$0xff] %vm671, %v6892
  %6925 = vst.msk [vmem:[#allocation5 + $0xd0] sm:$0xff] %vm671, %v6893
  %6926 = vst.msk [vmem:[#allocation5 + $0xd8] sm:$0xff] %vm671, %v6894
  %6927 = vst.msk [vmem:[#allocation5 + $0xe0] sm:$0xff] %vm671, %v6895
  %6928 = vst.msk [vmem:[#allocation5 + $0xe8] sm:$0xff] %vm671, %v6896
  %6929 = vst.msk [vmem:[#allocation5 + $0xf0] sm:$0xff] %vm671, %v6897
  %6930 = vst.msk [vmem:[#allocation5 + $0xf8] sm:$0xff] %vm671, %v6898
  %v6931 = vld [vmem:[#allocation5] ss:$2 sm:$0xff]
  %s6932 = scalar_lea.vmem [#allocation5], 16
  %v6933 = vld [vmem:[%s6932] ss:$2 sm:$0xff]
  %s6934 = scalar_lea.vmem [#allocation5], 32
  %v6935 = vld [vmem:[%s6934] ss:$2 sm:$0xff]
  %s6936 = scalar_lea.vmem [#allocation5], 48
  %v6937 = vld [vmem:[%s6936] ss:$2 sm:$0xff]
  %s6938 = scalar_lea.vmem [#allocation5], 64
  %v6939 = vld [vmem:[%s6938] ss:$2 sm:$0xff]
  %s6940 = scalar_lea.vmem [#allocation5], 80
  %v6941 = vld [vmem:[%s6940] ss:$2 sm:$0xff]
  %s6942 = scalar_lea.vmem [#allocation5], 96
  %v6943 = vld [vmem:[%s6942] ss:$2 sm:$0xff]
  %s6944 = scalar_lea.vmem [#allocation5], 112
  %v6945 = vld [vmem:[%s6944] ss:$2 sm:$0xff]
  %s6946 = scalar_lea.vmem [#allocation5], 128
  %v6947 = vld [vmem:[%s6946] ss:$2 sm:$0xff]
  %s6948 = scalar_lea.vmem [#allocation5], 144
  %v6949 = vld [vmem:[%s6948] ss:$2 sm:$0xff]
  %s6950 = scalar_lea.vmem [#allocation5], 160
  %v6951 = vld [vmem:[%s6950] ss:$2 sm:$0xff]
  %s6952 = scalar_lea.vmem [#allocation5], 176
  %v6953 = vld [vmem:[%s6952] ss:$2 sm:$0xff]
  %s6954 = scalar_lea.vmem [#allocation5], 192
  %v6955 = vld [vmem:[%s6954] ss:$2 sm:$0xff]
  %s6956 = scalar_lea.vmem [#allocation5], 208
  %v6957 = vld [vmem:[%s6956] ss:$2 sm:$0xff]
  %s6958 = scalar_lea.vmem [#allocation5], 224
  %v6959 = vld [vmem:[%s6958] ss:$2 sm:$0xff]
  %s6960 = scalar_lea.vmem [#allocation5], 240
  %v6961 = vld [vmem:[%s6960] ss:$2 sm:$0xff]
  %s6962 = scalar_lea.vmem [#allocation5], 1
  %v6963 = vld [vmem:[%s6962] ss:$2 sm:$0xff]
  %s6964 = scalar_lea.vmem [#allocation5], 17
  %v6965 = vld [vmem:[%s6964] ss:$2 sm:$0xff]
  %s6966 = scalar_lea.vmem [#allocation5], 33
  %v6967 = vld [vmem:[%s6966] ss:$2 sm:$0xff]
  %s6968 = scalar_lea.vmem [#allocation5], 49
  %v6969 = vld [vmem:[%s6968] ss:$2 sm:$0xff]
  %s6970 = scalar_lea.vmem [#allocation5], 65
  %v6971 = vld [vmem:[%s6970] ss:$2 sm:$0xff]
  %s6972 = scalar_lea.vmem [#allocation5], 81
  %v6973 = vld [vmem:[%s6972] ss:$2 sm:$0xff]
  %s6974 = scalar_lea.vmem [#allocation5], 97
  %v6975 = vld [vmem:[%s6974] ss:$2 sm:$0xff]
  %s6976 = scalar_lea.vmem [#allocation5], 113
  %v6977 = vld [vmem:[%s6976] ss:$2 sm:$0xff]
  %s6978 = scalar_lea.vmem [#allocation5], 129
  %v6979 = vld [vmem:[%s6978] ss:$2 sm:$0xff]
  %s6980 = scalar_lea.vmem [#allocation5], 145
  %v6981 = vld [vmem:[%s6980] ss:$2 sm:$0xff]
  %s6982 = scalar_lea.vmem [#allocation5], 161
  %v6983 = vld [vmem:[%s6982] ss:$2 sm:$0xff]
  %s6984 = scalar_lea.vmem [#allocation5], 177
  %v6985 = vld [vmem:[%s6984] ss:$2 sm:$0xff]
  %s6986 = scalar_lea.vmem [#allocation5], 193
  %v6987 = vld [vmem:[%s6986] ss:$2 sm:$0xff]
  %s6988 = scalar_lea.vmem [#allocation5], 209
  %v6989 = vld [vmem:[%s6988] ss:$2 sm:$0xff]
  %s6990 = scalar_lea.vmem [#allocation5], 225
  %v6991 = vld [vmem:[%s6990] ss:$2 sm:$0xff]
  %s6992 = scalar_lea.vmem [#allocation5], 241
  %v6993 = vld [vmem:[%s6992] ss:$2 sm:$0xff]
  %v6994 = vmax.f32 %v6931, %v6963
  %v6995 = vmax.f32 %v6933, %v6965
  %v6996 = vmax.f32 %v6935, %v6967
  %v6997 = vmax.f32 %v6937, %v6969
  %v6998 = vmax.f32 %v6939, %v6971
  %v6999 = vmax.f32 %v6941, %v6973
  %v7000 = vmax.f32 %v6943, %v6975
  %v7001 = vmax.f32 %v6945, %v6977
  %v7002 = vmax.f32 %v6947, %v6979
  %v7003 = vmax.f32 %v6949, %v6981
  %v7004 = vmax.f32 %v6951, %v6983
  %v7005 = vmax.f32 %v6953, %v6985
  %v7006 = vmax.f32 %v6955, %v6987
  %v7007 = vmax.f32 %v6957, %v6989
  %v7008 = vmax.f32 %v6959, %v6991
  %v7009 = vmax.f32 %v6961, %v6993
  %7010 = vst.msk [vmem:[#allocation3] sm:$0xff] %vm671, 0.0
  %7011 = vst.msk [vmem:[#allocation3 + $0x8] sm:$0x3] %vm1219, 0.0
  %7012 = vst.msk [vmem:[#allocation3 + $0x10] sm:$0xff] %vm671, 0.0
  %7013 = vst.msk [vmem:[#allocation3 + $0x18] sm:$0x3] %vm1219, 0.0
  %7014 = vst.msk [vmem:[#allocation3 + $0x20] sm:$0xff] %vm671, 0.0
  %7015 = vst.msk [vmem:[#allocation3 + $0x28] sm:$0x3] %vm1219, 0.0
  %7016 = vst.msk [vmem:[#allocation3 + $0x30] sm:$0xff] %vm671, 0.0
  %7017 = vst.msk [vmem:[#allocation3 + $0x38] sm:$0x3] %vm1219, 0.0
  %7018 = vst.msk [vmem:[#allocation3 + $0x40] sm:$0xff] %vm671, 0.0
  %7019 = vst.msk [vmem:[#allocation3 + $0x48] sm:$0x3] %vm1219, 0.0
  %7020 = vst.msk [vmem:[#allocation3 + $0x50] sm:$0xff] %vm671, 0.0
  %7021 = vst.msk [vmem:[#allocation3 + $0x58] sm:$0x3] %vm1219, 0.0
  %7022 = vst.msk [vmem:[#allocation3 + $0x60] sm:$0xff] %vm671, 0.0
  %7023 = vst.msk [vmem:[#allocation3 + $0x68] sm:$0x3] %vm1219, 0.0
  %7024 = vst.msk [vmem:[#allocation3 + $0x70] sm:$0xff] %vm671, 0.0
  %7025 = vst.msk [vmem:[#allocation3 + $0x78] sm:$0x3] %vm1219, 0.0
  %7026 = vst.msk [vmem:[#allocation3 + $0x80] sm:$0xff] %vm671, 0.0
  %7027 = vst.msk [vmem:[#allocation3 + $0x88] sm:$0x3] %vm1219, 0.0
  %7028 = vst.msk [vmem:[#allocation3 + $0x90] sm:$0xff] %vm671, 0.0
  %7029 = vst.msk [vmem:[#allocation3 + $0x98] sm:$0x3] %vm1219, 0.0
  %7030 = vst.msk [vmem:[#allocation3 + $0xa0] sm:$0xff] %vm671, 0.0
  %7031 = vst.msk [vmem:[#allocation3 + $0xa8] sm:$0x3] %vm1219, 0.0
  %7032 = vst.msk [vmem:[#allocation3 + $0xb0] sm:$0xff] %vm671, 0.0
  %7033 = vst.msk [vmem:[#allocation3 + $0xb8] sm:$0x3] %vm1219, 0.0
  %7034 = vst.msk [vmem:[#allocation3 + $0xc0] sm:$0xff] %vm671, 0.0
  %7035 = vst.msk [vmem:[#allocation3 + $0xc8] sm:$0x3] %vm1219, 0.0
  %7036 = vst.msk [vmem:[#allocation3 + $0xd0] sm:$0xff] %vm671, 0.0
  %7037 = vst.msk [vmem:[#allocation3 + $0xd8] sm:$0x3] %vm1219, 0.0
  %7038 = vst.msk [vmem:[#allocation3 + $0xe0] sm:$0xff] %vm671, 0.0
  %7039 = vst.msk [vmem:[#allocation3 + $0xe8] sm:$0x3] %vm1219, 0.0
  %7040 = vst.msk [vmem:[#allocation3 + $0xf0] sm:$0xff] %vm671, 0.0
  %7041 = vst.msk [vmem:[#allocation3 + $0xf8] sm:$0x3] %vm1219, 0.0
  %7042 = vst.msk [vmem:[#allocation3 + $0x100] sm:$0xff] %vm671, 0.0
  %7043 = vst.msk [vmem:[#allocation3 + $0x108] sm:$0x3] %vm1219, 0.0
  %7044 = vst.msk [vmem:[#allocation3 + $0x110] sm:$0xff] %vm671, 0.0
  %7045 = vst.msk [vmem:[#allocation3 + $0x118] sm:$0x3] %vm1219, 0.0
  %7046 = vst.msk [vmem:[#allocation3 + $0x120] sm:$0xff] %vm671, 0.0
  %7047 = vst.msk [vmem:[#allocation3 + $0x128] sm:$0x3] %vm1219, 0.0
  %7048 = vst.msk [vmem:[#allocation3 + $0x130] sm:$0xff] %vm671, 0.0
  %7049 = vst.msk [vmem:[#allocation3 + $0x138] sm:$0x3] %vm1219, 0.0
  %s7050 = scalar_lea.vmem [#allocation3], 16
  %7051 = vst.msk [vmem:[%s7050 + $0x1] sm:$0xff] %vm671, %v6994
  %7052 = vst.msk [vmem:[%s7050 + $0x11] sm:$0xff] %vm671, %v6995
  %7053 = vst.msk [vmem:[%s7050 + $0x21] sm:$0xff] %vm671, %v6996
  %7054 = vst.msk [vmem:[%s7050 + $0x31] sm:$0xff] %vm671, %v6997
  %7055 = vst.msk [vmem:[%s7050 + $0x41] sm:$0xff] %vm671, %v6998
  %7056 = vst.msk [vmem:[%s7050 + $0x51] sm:$0xff] %vm671, %v6999
  %7057 = vst.msk [vmem:[%s7050 + $0x61] sm:$0xff] %vm671, %v7000
  %7058 = vst.msk [vmem:[%s7050 + $0x71] sm:$0xff] %vm671, %v7001
  %7059 = vst.msk [vmem:[%s7050 + $0xa1] sm:$0xff] %vm671, %v7002
  %7060 = vst.msk [vmem:[%s7050 + $0xb1] sm:$0xff] %vm671, %v7003
  %7061 = vst.msk [vmem:[%s7050 + $0xc1] sm:$0xff] %vm671, %v7004
  %7062 = vst.msk [vmem:[%s7050 + $0xd1] sm:$0xff] %vm671, %v7005
  %7063 = vst.msk [vmem:[%s7050 + $0xe1] sm:$0xff] %vm671, %v7006
  %7064 = vst.msk [vmem:[%s7050 + $0xf1] sm:$0xff] %vm671, %v7007
  %7065 = vst.msk [vmem:[%s7050 + $0x101] sm:$0xff] %vm671, %v7008
  %7066 = vst.msk [vmem:[%s7050 + $0x111] sm:$0xff] %vm671, %v7009
  %v7067 = vld [vmem:[#allocation3] sm:$0xff]
  %v7068 = vld [vmem:[#allocation3 + $0x10] sm:$0xff]
  %v7069 = vld [vmem:[#allocation3 + $0x20] sm:$0xff]
  %v7070 = vld [vmem:[#allocation3 + $0x30] sm:$0xff]
  %v7071 = vld [vmem:[#allocation3 + $0x40] sm:$0xff]
  %v7072 = vld [vmem:[#allocation3 + $0x50] sm:$0xff]
  %v7073 = vld [vmem:[#allocation3 + $0x60] sm:$0xff]
  %v7074 = vld [vmem:[#allocation3 + $0x70] sm:$0xff]
  %v7075 = vld [vmem:[#allocation3 + $0xa0] sm:$0xff]
  %v7076 = vld [vmem:[#allocation3 + $0xb0] sm:$0xff]
  %v7077 = vld [vmem:[#allocation3 + $0xc0] sm:$0xff]
  %v7078 = vld [vmem:[#allocation3 + $0xd0] sm:$0xff]
  %v7079 = vld [vmem:[#allocation3 + $0xe0] sm:$0xff]
  %v7080 = vld [vmem:[#allocation3 + $0xf0] sm:$0xff]
  %v7081 = vld [vmem:[#allocation3 + $0x100] sm:$0xff]
  %v7082 = vld [vmem:[#allocation3 + $0x110] sm:$0xff]
  %v7083 = vpack.c.bf16 %v7068, %v7067
  %v7084 = vpack.c.bf16 %v7070, %v7069
  %v7085 = vpack.c.bf16 %v7072, %v7071
  %v7086 = vpack.c.bf16 %v7074, %v7073
  %v7087 = vpack.c.bf16 %v7076, %v7075
  %v7088 = vpack.c.bf16 %v7078, %v7077
  %v7089 = vpack.c.bf16 %v7080, %v7079
  %v7090 = vpack.c.bf16 %v7082, %v7081
  %v7091 = vld [vmem:[%s7] sm:$0xf]
  %v7092 = vld [vmem:[%s7 + $0x4] sm:$0xf]
  %v7093 = vld [vmem:[%s7 + $0x8] sm:$0xf]
  %v7094 = vld [vmem:[%s7 + $0xc] sm:$0xf]
  %v7095 = vld [vmem:[#allocation3 + $0x1] sm:$0xff]
  %v7096 = vld [vmem:[#allocation3 + $0x11] sm:$0xff]
  %v7097 = vld [vmem:[#allocation3 + $0x21] sm:$0xff]
  %v7098 = vld [vmem:[#allocation3 + $0x31] sm:$0xff]
  %v7099 = vld [vmem:[#allocation3 + $0x41] sm:$0xff]
  %v7100 = vld [vmem:[#allocation3 + $0x51] sm:$0xff]
  %v7101 = vld [vmem:[#allocation3 + $0x61] sm:$0xff]
  %v7102 = vld [vmem:[#allocation3 + $0x71] sm:$0xff]
  %v7103 = vld [vmem:[#allocation3 + $0xa1] sm:$0xff]
  %v7104 = vld [vmem:[#allocation3 + $0xb1] sm:$0xff]
  %v7105 = vld [vmem:[#allocation3 + $0xc1] sm:$0xff]
  %v7106 = vld [vmem:[#allocation3 + $0xd1] sm:$0xff]
  %v7107 = vld [vmem:[#allocation3 + $0xe1] sm:$0xff]
  %v7108 = vld [vmem:[#allocation3 + $0xf1] sm:$0xff]
  %v7109 = vld [vmem:[#allocation3 + $0x101] sm:$0xff]
  %v7110 = vld [vmem:[#allocation3 + $0x111] sm:$0xff]
  %v7111 = vpack.c.bf16 %v7096, %v7095
  %v7112 = vpack.c.bf16 %v7098, %v7097
  %v7113 = vpack.c.bf16 %v7100, %v7099
  %v7114 = vpack.c.bf16 %v7102, %v7101
  %v7115 = vpack.c.bf16 %v7104, %v7103
  %v7116 = vpack.c.bf16 %v7106, %v7105
  %v7117 = vpack.c.bf16 %v7108, %v7107
  %v7118 = vpack.c.bf16 %v7110, %v7109
  %s7119 = scalar_lea.vmem %s7, 16
  %v7120 = vld [vmem:[%s7119] sm:$0xf]
  %v7121 = vld [vmem:[%s7119 + $0x4] sm:$0xf]
  %v7122 = vld [vmem:[%s7119 + $0x8] sm:$0xf]
  %v7123 = vld [vmem:[%s7119 + $0xc] sm:$0xf]
  %v7128 = vunpack.c.l.b16 %v7120
  %v7129 = vunpack.c.l.b16 %v7121
  %v7130 = vunpack.c.l.b16 %v7122
  %v7131 = vunpack.c.l.b16 %v7123
  %v7132 = vpack.c.b16 %v7129, %v7128
  %v7133 = vpack.c.b16 %v7131, %v7130
  %v7137 = vsel %vm671, %v7111, 0
  %v7140 = vsel %vm671, %v7112, 0
  %v7143 = vsel %vm671, %v7113, 0
  %v7146 = vsel %vm671, %v7114, 0
  %v7149 = vsel %vm671, %v7115, 0
  %v7152 = vsel %vm671, %v7116, 0
  %v7155 = vsel %vm671, %v7117, 0
  %v7158 = vsel %vm671, %v7118, 0
  %7160 = vmatprep.subr.bf16.mxu0 0
  %7161 = vmatpush1.bf16.msra.mxu0 0
  %7162 = vmatprep.subr.bf16.mxu0 0
  %7163 = vmatpush1.bf16.msra.mxu0 0
  %7164 = vmatprep.subr.bf16.mxu0 0
  %7165 = vmatpush1.bf16.msra.mxu0 0
  %7166 = vmatprep.subr.bf16.mxu0 0
  %7167 = vmatpush1.bf16.msra.mxu0 0
  %7168 = vmatprep.subr.bf16.mxu0 0
  %7169 = vmatpush1.bf16.msra.mxu0 0
  %7170 = vmatprep.subr.bf16.mxu0 0
  %7171 = vmatpush1.bf16.msra.mxu0 0
  %7172 = vmatprep.subr.bf16.mxu0 0
  %7173 = vmatpush1.bf16.msra.mxu0 %v7133
  %7174 = vmatprep.subr.bf16.mxu0 0
  %7175 = vmatpush1.bf16.msra.mxu0 %v7132
  %7176 = vmatprep.subr.bf16.mxu0 0
  %7177 = vmatpush2.bf16.msra.mxu0 0
  %7178 = vmatprep.subr.bf16.mxu0 0
  %7179 = vmatpush2.bf16.msra.mxu0 0
  %7180 = vmatprep.subr.bf16.mxu0 0
  %7181 = vmatpush2.bf16.msra.mxu0 0
  %7182 = vmatprep.subr.bf16.mxu0 0
  %7183 = vmatpush2.bf16.msra.mxu0 0
  %7184 = vmatprep.subr.bf16.mxu0 0
  %7185 = vmatpush2.bf16.msra.mxu0 0
  %7186 = vmatprep.subr.bf16.mxu0 0
  %7187 = vmatpush2.bf16.msra.mxu0 0
  %7188 = vmatprep.subr.bf16.mxu0 0
  %7189 = vmatpush2.bf16.msra.mxu0 0
  %7190 = vmatprep.subr.bf16.mxu0 0
  %7191 = vmatpush2.bf16.msra.mxu0 0
  %7192 = vmatprep.mubr.bf16.mxu0 0
  %7193 = vmatmul.mubr.bf16.gmra.mxu0 %v7137
  %v7194 = vpop.f32.mrf.mxu0
  %v7195 = vadd.f32 0.0, %v7194
  %v7196 = vpop.f32.mrf.mxu0
  %v7197 = vpop.f32.mrf.mxu0
  %v7198 = vadd.f32 0.0, %v7197
  %v7199 = vpop.f32.mrf.mxu0
  %7200 = vmatprep.mubr.bf16.mxu0 0
  %7201 = vmatmul.mubr.bf16.gmra.mxu0 %v7140
  %v7202 = vpop.f32.mrf.mxu0
  %v7203 = vadd.f32 0.0, %v7202
  %v7204 = vpop.f32.mrf.mxu0
  %v7205 = vpop.f32.mrf.mxu0
  %v7206 = vadd.f32 0.0, %v7205
  %v7207 = vpop.f32.mrf.mxu0
  %7208 = vmatprep.mubr.bf16.mxu0 0
  %7209 = vmatmul.mubr.bf16.gmra.mxu0 %v7143
  %v7210 = vpop.f32.mrf.mxu0
  %v7211 = vadd.f32 0.0, %v7210
  %v7212 = vpop.f32.mrf.mxu0
  %v7213 = vpop.f32.mrf.mxu0
  %v7214 = vadd.f32 0.0, %v7213
  %v7215 = vpop.f32.mrf.mxu0
  %7216 = vmatprep.mubr.bf16.mxu0 0
  %7217 = vmatmul.mubr.bf16.gmra.mxu0 %v7146
  %v7218 = vpop.f32.mrf.mxu0
  %v7219 = vadd.f32 0.0, %v7218
  %v7220 = vpop.f32.mrf.mxu0
  %v7221 = vpop.f32.mrf.mxu0
  %v7222 = vadd.f32 0.0, %v7221
  %v7223 = vpop.f32.mrf.mxu0
  %7224 = vmatprep.mubr.bf16.mxu0 0
  %7225 = vmatmul.mubr.bf16.gmra.mxu0 %v7149
  %v7226 = vpop.f32.mrf.mxu0
  %v7227 = vadd.f32 0.0, %v7226
  %v7228 = vpop.f32.mrf.mxu0
  %v7229 = vpop.f32.mrf.mxu0
  %v7230 = vadd.f32 0.0, %v7229
  %v7231 = vpop.f32.mrf.mxu0
  %7232 = vmatprep.mubr.bf16.mxu0 0
  %7233 = vmatmul.mubr.bf16.gmra.mxu0 %v7152
  %v7234 = vpop.f32.mrf.mxu0
  %v7235 = vadd.f32 0.0, %v7234
  %v7236 = vpop.f32.mrf.mxu0
  %v7237 = vpop.f32.mrf.mxu0
  %v7238 = vadd.f32 0.0, %v7237
  %v7239 = vpop.f32.mrf.mxu0
  %7240 = vmatprep.mubr.bf16.mxu0 0
  %7241 = vmatmul.mubr.bf16.gmra.mxu0 %v7155
  %v7242 = vpop.f32.mrf.mxu0
  %v7243 = vadd.f32 0.0, %v7242
  %v7244 = vpop.f32.mrf.mxu0
  %v7245 = vpop.f32.mrf.mxu0
  %v7246 = vadd.f32 0.0, %v7245
  %v7247 = vpop.f32.mrf.mxu0
  %7248 = vmatprep.mubr.bf16.mxu0 0
  %7249 = vmatmul.mubr.bf16.gmra.mxu0 %v7158
  %v7250 = vpop.f32.mrf.mxu0
  %v7251 = vadd.f32 0.0, %v7250
  %v7252 = vpop.f32.mrf.mxu0
  %v7253 = vpop.f32.mrf.mxu0
  %v7254 = vadd.f32 0.0, %v7253
  %v7255 = vpop.f32.mrf.mxu0
  %7256 = vdwg.mxu0
  %v7261 = vunpack.c.l.b16 %v7091
  %v7262 = vunpack.c.l.b16 %v7092
  %v7263 = vunpack.c.l.b16 %v7093
  %v7264 = vunpack.c.l.b16 %v7094
  %v7265 = vpack.c.b16 %v7262, %v7261
  %v7266 = vpack.c.b16 %v7264, %v7263
  %v7270 = vsel %vm671, %v7083, 0
  %v7273 = vsel %vm671, %v7084, 0
  %v7276 = vsel %vm671, %v7085, 0
  %v7279 = vsel %vm671, %v7086, 0
  %v7282 = vsel %vm671, %v7087, 0
  %v7285 = vsel %vm671, %v7088, 0
  %v7288 = vsel %vm671, %v7089, 0
  %v7291 = vsel %vm671, %v7090, 0
  %7293 = vmatprep.subr.bf16.mxu0 0
  %7294 = vmatpush1.bf16.msra.mxu0 0
  %7295 = vmatprep.subr.bf16.mxu0 0
  %7296 = vmatpush1.bf16.msra.mxu0 0
  %7297 = vmatprep.subr.bf16.mxu0 0
  %7298 = vmatpush1.bf16.msra.mxu0 0
  %7299 = vmatprep.subr.bf16.mxu0 0
  %7300 = vmatpush1.bf16.msra.mxu0 0
  %7301 = vmatprep.subr.bf16.mxu0 0
  %7302 = vmatpush1.bf16.msra.mxu0 0
  %7303 = vmatprep.subr.bf16.mxu0 0
  %7304 = vmatpush1.bf16.msra.mxu0 0
  %7305 = vmatprep.subr.bf16.mxu0 0
  %7306 = vmatpush1.bf16.msra.mxu0 %v7266
  %7307 = vmatprep.subr.bf16.mxu0 0
  %7308 = vmatpush1.bf16.msra.mxu0 %v7265
  %7309 = vmatprep.subr.bf16.mxu0 0
  %7310 = vmatpush2.bf16.msra.mxu0 0
  %7311 = vmatprep.subr.bf16.mxu0 0
  %7312 = vmatpush2.bf16.msra.mxu0 0
  %7313 = vmatprep.subr.bf16.mxu0 0
  %7314 = vmatpush2.bf16.msra.mxu0 0
  %7315 = vmatprep.subr.bf16.mxu0 0
  %7316 = vmatpush2.bf16.msra.mxu0 0
  %7317 = vmatprep.subr.bf16.mxu0 0
  %7318 = vmatpush2.bf16.msra.mxu0 0
  %7319 = vmatprep.subr.bf16.mxu0 0
  %7320 = vmatpush2.bf16.msra.mxu0 0
  %7321 = vmatprep.subr.bf16.mxu0 0
  %7322 = vmatpush2.bf16.msra.mxu0 0
  %7323 = vmatprep.subr.bf16.mxu0 0
  %7324 = vmatpush2.bf16.msra.mxu0 0
  %7325 = vmatprep.mubr.bf16.mxu0 0
  %7326 = vmatmul.mubr.bf16.gmra.mxu0 %v7270
  %v7327 = vpop.f32.mrf.mxu0
  %v7328 = vadd.f32 %v7195, %v7327
  %v7329 = vpop.f32.mrf.mxu0
  %v7330 = vpop.f32.mrf.mxu0
  %v7331 = vadd.f32 %v7198, %v7330
  %v7332 = vpop.f32.mrf.mxu0
  %7333 = vmatprep.mubr.bf16.mxu0 0
  %7334 = vmatmul.mubr.bf16.gmra.mxu0 %v7273
  %v7335 = vpop.f32.mrf.mxu0
  %v7336 = vadd.f32 %v7203, %v7335
  %v7337 = vpop.f32.mrf.mxu0
  %v7338 = vpop.f32.mrf.mxu0
  %v7339 = vadd.f32 %v7206, %v7338
  %v7340 = vpop.f32.mrf.mxu0
  %7341 = vmatprep.mubr.bf16.mxu0 0
  %7342 = vmatmul.mubr.bf16.gmra.mxu0 %v7276
  %v7343 = vpop.f32.mrf.mxu0
  %v7344 = vadd.f32 %v7211, %v7343
  %v7345 = vpop.f32.mrf.mxu0
  %v7346 = vpop.f32.mrf.mxu0
  %v7347 = vadd.f32 %v7214, %v7346
  %v7348 = vpop.f32.mrf.mxu0
  %7349 = vmatprep.mubr.bf16.mxu0 0
  %7350 = vmatmul.mubr.bf16.gmra.mxu0 %v7279
  %v7351 = vpop.f32.mrf.mxu0
  %v7352 = vadd.f32 %v7219, %v7351
  %v7353 = vpop.f32.mrf.mxu0
  %v7354 = vpop.f32.mrf.mxu0
  %v7355 = vadd.f32 %v7222, %v7354
  %v7356 = vpop.f32.mrf.mxu0
  %7357 = vmatprep.mubr.bf16.mxu0 0
  %7358 = vmatmul.mubr.bf16.gmra.mxu0 %v7282
  %v7359 = vpop.f32.mrf.mxu0
  %v7360 = vadd.f32 %v7227, %v7359
  %v7361 = vpop.f32.mrf.mxu0
  %v7362 = vpop.f32.mrf.mxu0
  %v7363 = vadd.f32 %v7230, %v7362
  %v7364 = vpop.f32.mrf.mxu0
  %7365 = vmatprep.mubr.bf16.mxu0 0
  %7366 = vmatmul.mubr.bf16.gmra.mxu0 %v7285
  %v7367 = vpop.f32.mrf.mxu0
  %v7368 = vadd.f32 %v7235, %v7367
  %v7369 = vpop.f32.mrf.mxu0
  %v7370 = vpop.f32.mrf.mxu0
  %v7371 = vadd.f32 %v7238, %v7370
  %v7372 = vpop.f32.mrf.mxu0
  %7373 = vmatprep.mubr.bf16.mxu0 0
  %7374 = vmatmul.mubr.bf16.gmra.mxu0 %v7288
  %v7375 = vpop.f32.mrf.mxu0
  %v7376 = vadd.f32 %v7243, %v7375
  %v7377 = vpop.f32.mrf.mxu0
  %v7378 = vpop.f32.mrf.mxu0
  %v7379 = vadd.f32 %v7246, %v7378
  %v7380 = vpop.f32.mrf.mxu0
  %7381 = vmatprep.mubr.bf16.mxu0 0
  %7382 = vmatmul.mubr.bf16.gmra.mxu0 %v7291
  %v7383 = vpop.f32.mrf.mxu0
  %v7384 = vadd.f32 %v7251, %v7383
  %v7385 = vpop.f32.mrf.mxu0
  %v7386 = vpop.f32.mrf.mxu0
  %v7387 = vadd.f32 %v7254, %v7386
  %v7388 = vpop.f32.mrf.mxu0
  %7389 = vdwg.mxu0
  %v7390 = vld [vmem:[#allocation3 + $0x2] sm:$0xff]
  %v7391 = vld [vmem:[#allocation3 + $0x12] sm:$0xff]
  %v7392 = vld [vmem:[#allocation3 + $0x22] sm:$0xff]
  %v7393 = vld [vmem:[#allocation3 + $0x32] sm:$0xff]
  %v7394 = vld [vmem:[#allocation3 + $0x42] sm:$0xff]
  %v7395 = vld [vmem:[#allocation3 + $0x52] sm:$0xff]
  %v7396 = vld [vmem:[#allocation3 + $0x62] sm:$0xff]
  %v7397 = vld [vmem:[#allocation3 + $0x72] sm:$0xff]
  %v7398 = vld [vmem:[#allocation3 + $0xa2] sm:$0xff]
  %v7399 = vld [vmem:[#allocation3 + $0xb2] sm:$0xff]
  %v7400 = vld [vmem:[#allocation3 + $0xc2] sm:$0xff]
  %v7401 = vld [vmem:[#allocation3 + $0xd2] sm:$0xff]
  %v7402 = vld [vmem:[#allocation3 + $0xe2] sm:$0xff]
  %v7403 = vld [vmem:[#allocation3 + $0xf2] sm:$0xff]
  %v7404 = vld [vmem:[#allocation3 + $0x102] sm:$0xff]
  %v7405 = vld [vmem:[#allocation3 + $0x112] sm:$0xff]
  %v7406 = vpack.c.bf16 %v7391, %v7390
  %v7407 = vpack.c.bf16 %v7393, %v7392
  %v7408 = vpack.c.bf16 %v7395, %v7394
  %v7409 = vpack.c.bf16 %v7397, %v7396
  %v7410 = vpack.c.bf16 %v7399, %v7398
  %v7411 = vpack.c.bf16 %v7401, %v7400
  %v7412 = vpack.c.bf16 %v7403, %v7402
  %v7413 = vpack.c.bf16 %v7405, %v7404
  %s7414 = scalar_lea.vmem %s7, 32
  %v7415 = vld [vmem:[%s7414] sm:$0xf]
  %v7416 = vld [vmem:[%s7414 + $0x4] sm:$0xf]
  %v7417 = vld [vmem:[%s7414 + $0x8] sm:$0xf]
  %v7418 = vld [vmem:[%s7414 + $0xc] sm:$0xf]
  %v7423 = vunpack.c.l.b16 %v7415
  %v7424 = vunpack.c.l.b16 %v7416
  %v7425 = vunpack.c.l.b16 %v7417
  %v7426 = vunpack.c.l.b16 %v7418
  %v7427 = vpack.c.b16 %v7424, %v7423
  %v7428 = vpack.c.b16 %v7426, %v7425
  %v7432 = vsel %vm671, %v7406, 0
  %v7435 = vsel %vm671, %v7407, 0
  %v7438 = vsel %vm671, %v7408, 0
  %v7441 = vsel %vm671, %v7409, 0
  %v7444 = vsel %vm671, %v7410, 0
  %v7447 = vsel %vm671, %v7411, 0
  %v7450 = vsel %vm671, %v7412, 0
  %v7453 = vsel %vm671, %v7413, 0
  %7455 = vmatprep.subr.bf16.mxu0 0
  %7456 = vmatpush1.bf16.msra.mxu0 0
  %7457 = vmatprep.subr.bf16.mxu0 0
  %7458 = vmatpush1.bf16.msra.mxu0 0
  %7459 = vmatprep.subr.bf16.mxu0 0
  %7460 = vmatpush1.bf16.msra.mxu0 0
  %7461 = vmatprep.subr.bf16.mxu0 0
  %7462 = vmatpush1.bf16.msra.mxu0 0
  %7463 = vmatprep.subr.bf16.mxu0 0
  %7464 = vmatpush1.bf16.msra.mxu0 0
  %7465 = vmatprep.subr.bf16.mxu0 0
  %7466 = vmatpush1.bf16.msra.mxu0 0
  %7467 = vmatprep.subr.bf16.mxu0 0
  %7468 = vmatpush1.bf16.msra.mxu0 %v7428
  %7469 = vmatprep.subr.bf16.mxu0 0
  %7470 = vmatpush1.bf16.msra.mxu0 %v7427
  %7471 = vmatprep.subr.bf16.mxu0 0
  %7472 = vmatpush2.bf16.msra.mxu0 0
  %7473 = vmatprep.subr.bf16.mxu0 0
  %7474 = vmatpush2.bf16.msra.mxu0 0
  %7475 = vmatprep.subr.bf16.mxu0 0
  %7476 = vmatpush2.bf16.msra.mxu0 0
  %7477 = vmatprep.subr.bf16.mxu0 0
  %7478 = vmatpush2.bf16.msra.mxu0 0
  %7479 = vmatprep.subr.bf16.mxu0 0
  %7480 = vmatpush2.bf16.msra.mxu0 0
  %7481 = vmatprep.subr.bf16.mxu0 0
  %7482 = vmatpush2.bf16.msra.mxu0 0
  %7483 = vmatprep.subr.bf16.mxu0 0
  %7484 = vmatpush2.bf16.msra.mxu0 0
  %7485 = vmatprep.subr.bf16.mxu0 0
  %7486 = vmatpush2.bf16.msra.mxu0 0
  %7487 = vmatprep.mubr.bf16.mxu0 0
  %7488 = vmatmul.mubr.bf16.gmra.mxu0 %v7432
  %v7489 = vpop.f32.mrf.mxu0
  %v7490 = vadd.f32 0.0, %v7489
  %v7491 = vpop.f32.mrf.mxu0
  %v7492 = vpop.f32.mrf.mxu0
  %v7493 = vadd.f32 0.0, %v7492
  %v7494 = vpop.f32.mrf.mxu0
  %7495 = vmatprep.mubr.bf16.mxu0 0
  %7496 = vmatmul.mubr.bf16.gmra.mxu0 %v7435
  %v7497 = vpop.f32.mrf.mxu0
  %v7498 = vadd.f32 0.0, %v7497
  %v7499 = vpop.f32.mrf.mxu0
  %v7500 = vpop.f32.mrf.mxu0
  %v7501 = vadd.f32 0.0, %v7500
  %v7502 = vpop.f32.mrf.mxu0
  %7503 = vmatprep.mubr.bf16.mxu0 0
  %7504 = vmatmul.mubr.bf16.gmra.mxu0 %v7438
  %v7505 = vpop.f32.mrf.mxu0
  %v7506 = vadd.f32 0.0, %v7505
  %v7507 = vpop.f32.mrf.mxu0
  %v7508 = vpop.f32.mrf.mxu0
  %v7509 = vadd.f32 0.0, %v7508
  %v7510 = vpop.f32.mrf.mxu0
  %7511 = vmatprep.mubr.bf16.mxu0 0
  %7512 = vmatmul.mubr.bf16.gmra.mxu0 %v7441
  %v7513 = vpop.f32.mrf.mxu0
  %v7514 = vadd.f32 0.0, %v7513
  %v7515 = vpop.f32.mrf.mxu0
  %v7516 = vpop.f32.mrf.mxu0
  %v7517 = vadd.f32 0.0, %v7516
  %v7518 = vpop.f32.mrf.mxu0
  %7519 = vmatprep.mubr.bf16.mxu0 0
  %7520 = vmatmul.mubr.bf16.gmra.mxu0 %v7444
  %v7521 = vpop.f32.mrf.mxu0
  %v7522 = vadd.f32 0.0, %v7521
  %v7523 = vpop.f32.mrf.mxu0
  %v7524 = vpop.f32.mrf.mxu0
  %v7525 = vadd.f32 0.0, %v7524
  %v7526 = vpop.f32.mrf.mxu0
  %7527 = vmatprep.mubr.bf16.mxu0 0
  %7528 = vmatmul.mubr.bf16.gmra.mxu0 %v7447
  %v7529 = vpop.f32.mrf.mxu0
  %v7530 = vadd.f32 0.0, %v7529
  %v7531 = vpop.f32.mrf.mxu0
  %v7532 = vpop.f32.mrf.mxu0
  %v7533 = vadd.f32 0.0, %v7532
  %v7534 = vpop.f32.mrf.mxu0
  %7535 = vmatprep.mubr.bf16.mxu0 0
  %7536 = vmatmul.mubr.bf16.gmra.mxu0 %v7450
  %v7537 = vpop.f32.mrf.mxu0
  %v7538 = vadd.f32 0.0, %v7537
  %v7539 = vpop.f32.mrf.mxu0
  %v7540 = vpop.f32.mrf.mxu0
  %v7541 = vadd.f32 0.0, %v7540
  %v7542 = vpop.f32.mrf.mxu0
  %7543 = vmatprep.mubr.bf16.mxu0 0
  %7544 = vmatmul.mubr.bf16.gmra.mxu0 %v7453
  %v7545 = vpop.f32.mrf.mxu0
  %v7546 = vadd.f32 0.0, %v7545
  %v7547 = vpop.f32.mrf.mxu0
  %v7548 = vpop.f32.mrf.mxu0
  %v7549 = vadd.f32 0.0, %v7548
  %v7550 = vpop.f32.mrf.mxu0
  %7551 = vdwg.mxu0
  %v7552 = vadd.f32 %v7328, %v7490
  %v7553 = vadd.f32 %v7331, %v7493
  %v7554 = vadd.f32 %v7336, %v7498
  %v7555 = vadd.f32 %v7339, %v7501
  %v7556 = vadd.f32 %v7344, %v7506
  %v7557 = vadd.f32 %v7347, %v7509
  %v7558 = vadd.f32 %v7352, %v7514
  %v7559 = vadd.f32 %v7355, %v7517
  %v7560 = vadd.f32 %v7360, %v7522
  %v7561 = vadd.f32 %v7363, %v7525
  %v7562 = vadd.f32 %v7368, %v7530
  %v7563 = vadd.f32 %v7371, %v7533
  %v7564 = vadd.f32 %v7376, %v7538
  %v7565 = vadd.f32 %v7379, %v7541
  %v7566 = vadd.f32 %v7384, %v7546
  %v7567 = vadd.f32 %v7387, %v7549
  %v7568 = vld [vmem:[%s7050] sm:$0xff]
  %v7569 = vld [vmem:[%s7050 + $0x10] sm:$0xff]
  %v7570 = vld [vmem:[%s7050 + $0x20] sm:$0xff]
  %v7571 = vld [vmem:[%s7050 + $0x30] sm:$0xff]
  %v7572 = vld [vmem:[%s7050 + $0x40] sm:$0xff]
  %v7573 = vld [vmem:[%s7050 + $0x50] sm:$0xff]
  %v7574 = vld [vmem:[%s7050 + $0x60] sm:$0xff]
  %v7575 = vld [vmem:[%s7050 + $0x70] sm:$0xff]
  %v7576 = vld [vmem:[%s7050 + $0xa0] sm:$0xff]
  %v7577 = vld [vmem:[%s7050 + $0xb0] sm:$0xff]
  %v7578 = vld [vmem:[%s7050 + $0xc0] sm:$0xff]
  %v7579 = vld [vmem:[%s7050 + $0xd0] sm:$0xff]
  %v7580 = vld [vmem:[%s7050 + $0xe0] sm:$0xff]
  %v7581 = vld [vmem:[%s7050 + $0xf0] sm:$0xff]
  %v7582 = vld [vmem:[%s7050 + $0x100] sm:$0xff]
  %v7583 = vld [vmem:[%s7050 + $0x110] sm:$0xff]
  %v7584 = vpack.c.bf16 %v7569, %v7568
  %v7585 = vpack.c.bf16 %v7571, %v7570
  %v7586 = vpack.c.bf16 %v7573, %v7572
  %v7587 = vpack.c.bf16 %v7575, %v7574
  %v7588 = vpack.c.bf16 %v7577, %v7576
  %v7589 = vpack.c.bf16 %v7579, %v7578
  %v7590 = vpack.c.bf16 %v7581, %v7580
  %v7591 = vpack.c.bf16 %v7583, %v7582
  %s7592 = scalar_lea.vmem %s7, 48
  %v7593 = vld [vmem:[%s7592] sm:$0xf]
  %v7594 = vld [vmem:[%s7592 + $0x4] sm:$0xf]
  %v7595 = vld [vmem:[%s7592 + $0x8] sm:$0xf]
  %v7596 = vld [vmem:[%s7592 + $0xc] sm:$0xf]
  %v7601 = vunpack.c.l.b16 %v7593
  %v7602 = vunpack.c.l.b16 %v7594
  %v7603 = vunpack.c.l.b16 %v7595
  %v7604 = vunpack.c.l.b16 %v7596
  %v7605 = vpack.c.b16 %v7602, %v7601
  %v7606 = vpack.c.b16 %v7604, %v7603
  %v7610 = vsel %vm671, %v7584, 0
  %v7613 = vsel %vm671, %v7585, 0
  %v7616 = vsel %vm671, %v7586, 0
  %v7619 = vsel %vm671, %v7587, 0
  %v7622 = vsel %vm671, %v7588, 0
  %v7625 = vsel %vm671, %v7589, 0
  %v7628 = vsel %vm671, %v7590, 0
  %v7631 = vsel %vm671, %v7591, 0
  %7633 = vmatprep.subr.bf16.mxu0 0
  %7634 = vmatpush1.bf16.msra.mxu0 0
  %7635 = vmatprep.subr.bf16.mxu0 0
  %7636 = vmatpush1.bf16.msra.mxu0 0
  %7637 = vmatprep.subr.bf16.mxu0 0
  %7638 = vmatpush1.bf16.msra.mxu0 0
  %7639 = vmatprep.subr.bf16.mxu0 0
  %7640 = vmatpush1.bf16.msra.mxu0 0
  %7641 = vmatprep.subr.bf16.mxu0 0
  %7642 = vmatpush1.bf16.msra.mxu0 0
  %7643 = vmatprep.subr.bf16.mxu0 0
  %7644 = vmatpush1.bf16.msra.mxu0 0
  %7645 = vmatprep.subr.bf16.mxu0 0
  %7646 = vmatpush1.bf16.msra.mxu0 %v7606
  %7647 = vmatprep.subr.bf16.mxu0 0
  %7648 = vmatpush1.bf16.msra.mxu0 %v7605
  %7649 = vmatprep.subr.bf16.mxu0 0
  %7650 = vmatpush2.bf16.msra.mxu0 0
  %7651 = vmatprep.subr.bf16.mxu0 0
  %7652 = vmatpush2.bf16.msra.mxu0 0
  %7653 = vmatprep.subr.bf16.mxu0 0
  %7654 = vmatpush2.bf16.msra.mxu0 0
  %7655 = vmatprep.subr.bf16.mxu0 0
  %7656 = vmatpush2.bf16.msra.mxu0 0
  %7657 = vmatprep.subr.bf16.mxu0 0
  %7658 = vmatpush2.bf16.msra.mxu0 0
  %7659 = vmatprep.subr.bf16.mxu0 0
  %7660 = vmatpush2.bf16.msra.mxu0 0
  %7661 = vmatprep.subr.bf16.mxu0 0
  %7662 = vmatpush2.bf16.msra.mxu0 0
  %7663 = vmatprep.subr.bf16.mxu0 0
  %7664 = vmatpush2.bf16.msra.mxu0 0
  %7665 = vmatprep.mubr.bf16.mxu0 0
  %7666 = vmatmul.mubr.bf16.gmra.mxu0 %v7610
  %v7667 = vpop.f32.mrf.mxu0
  %v7668 = vadd.f32 0.0, %v7667
  %v7669 = vpop.f32.mrf.mxu0
  %v7670 = vpop.f32.mrf.mxu0
  %v7671 = vadd.f32 0.0, %v7670
  %v7672 = vpop.f32.mrf.mxu0
  %7673 = vmatprep.mubr.bf16.mxu0 0
  %7674 = vmatmul.mubr.bf16.gmra.mxu0 %v7613
  %v7675 = vpop.f32.mrf.mxu0
  %v7676 = vadd.f32 0.0, %v7675
  %v7677 = vpop.f32.mrf.mxu0
  %v7678 = vpop.f32.mrf.mxu0
  %v7679 = vadd.f32 0.0, %v7678
  %v7680 = vpop.f32.mrf.mxu0
  %7681 = vmatprep.mubr.bf16.mxu0 0
  %7682 = vmatmul.mubr.bf16.gmra.mxu0 %v7616
  %v7683 = vpop.f32.mrf.mxu0
  %v7684 = vadd.f32 0.0, %v7683
  %v7685 = vpop.f32.mrf.mxu0
  %v7686 = vpop.f32.mrf.mxu0
  %v7687 = vadd.f32 0.0, %v7686
  %v7688 = vpop.f32.mrf.mxu0
  %7689 = vmatprep.mubr.bf16.mxu0 0
  %7690 = vmatmul.mubr.bf16.gmra.mxu0 %v7619
  %v7691 = vpop.f32.mrf.mxu0
  %v7692 = vadd.f32 0.0, %v7691
  %v7693 = vpop.f32.mrf.mxu0
  %v7694 = vpop.f32.mrf.mxu0
  %v7695 = vadd.f32 0.0, %v7694
  %v7696 = vpop.f32.mrf.mxu0
  %7697 = vmatprep.mubr.bf16.mxu0 0
  %7698 = vmatmul.mubr.bf16.gmra.mxu0 %v7622
  %v7699 = vpop.f32.mrf.mxu0
  %v7700 = vadd.f32 0.0, %v7699
  %v7701 = vpop.f32.mrf.mxu0
  %v7702 = vpop.f32.mrf.mxu0
  %v7703 = vadd.f32 0.0, %v7702
  %v7704 = vpop.f32.mrf.mxu0
  %7705 = vmatprep.mubr.bf16.mxu0 0
  %7706 = vmatmul.mubr.bf16.gmra.mxu0 %v7625
  %v7707 = vpop.f32.mrf.mxu0
  %v7708 = vadd.f32 0.0, %v7707
  %v7709 = vpop.f32.mrf.mxu0
  %v7710 = vpop.f32.mrf.mxu0
  %v7711 = vadd.f32 0.0, %v7710
  %v7712 = vpop.f32.mrf.mxu0
  %7713 = vmatprep.mubr.bf16.mxu0 0
  %7714 = vmatmul.mubr.bf16.gmra.mxu0 %v7628
  %v7715 = vpop.f32.mrf.mxu0
  %v7716 = vadd.f32 0.0, %v7715
  %v7717 = vpop.f32.mrf.mxu0
  %v7718 = vpop.f32.mrf.mxu0
  %v7719 = vadd.f32 0.0, %v7718
  %v7720 = vpop.f32.mrf.mxu0
  %7721 = vmatprep.mubr.bf16.mxu0 0
  %7722 = vmatmul.mubr.bf16.gmra.mxu0 %v7631
  %v7723 = vpop.f32.mrf.mxu0
  %v7724 = vadd.f32 0.0, %v7723
  %v7725 = vpop.f32.mrf.mxu0
  %v7726 = vpop.f32.mrf.mxu0
  %v7727 = vadd.f32 0.0, %v7726
  %v7728 = vpop.f32.mrf.mxu0
  %7729 = vdwg.mxu0
  %v7730 = vadd.f32 %v7552, %v7668
  %v7731 = vadd.f32 %v7553, %v7671
  %v7732 = vadd.f32 %v7554, %v7676
  %v7733 = vadd.f32 %v7555, %v7679
  %v7734 = vadd.f32 %v7556, %v7684
  %v7735 = vadd.f32 %v7557, %v7687
  %v7736 = vadd.f32 %v7558, %v7692
  %v7737 = vadd.f32 %v7559, %v7695
  %v7738 = vadd.f32 %v7560, %v7700
  %v7739 = vadd.f32 %v7561, %v7703
  %v7740 = vadd.f32 %v7562, %v7708
  %v7741 = vadd.f32 %v7563, %v7711
  %v7742 = vadd.f32 %v7564, %v7716
  %v7743 = vadd.f32 %v7565, %v7719
  %v7744 = vadd.f32 %v7566, %v7724
  %v7745 = vadd.f32 %v7567, %v7727
  %v7746 = vld [vmem:[%s7050 + $0x1] sm:$0xff]
  %v7747 = vld [vmem:[%s7050 + $0x11] sm:$0xff]
  %v7748 = vld [vmem:[%s7050 + $0x21] sm:$0xff]
  %v7749 = vld [vmem:[%s7050 + $0x31] sm:$0xff]
  %v7750 = vld [vmem:[%s7050 + $0x41] sm:$0xff]
  %v7751 = vld [vmem:[%s7050 + $0x51] sm:$0xff]
  %v7752 = vld [vmem:[%s7050 + $0x61] sm:$0xff]
  %v7753 = vld [vmem:[%s7050 + $0x71] sm:$0xff]
  %v7754 = vld [vmem:[%s7050 + $0xa1] sm:$0xff]
  %v7755 = vld [vmem:[%s7050 + $0xb1] sm:$0xff]
  %v7756 = vld [vmem:[%s7050 + $0xc1] sm:$0xff]
  %v7757 = vld [vmem:[%s7050 + $0xd1] sm:$0xff]
  %v7758 = vld [vmem:[%s7050 + $0xe1] sm:$0xff]
  %v7759 = vld [vmem:[%s7050 + $0xf1] sm:$0xff]
  %v7760 = vld [vmem:[%s7050 + $0x101] sm:$0xff]
  %v7761 = vld [vmem:[%s7050 + $0x111] sm:$0xff]
  %v7762 = vpack.c.bf16 %v7747, %v7746
  %v7763 = vpack.c.bf16 %v7749, %v7748
  %v7764 = vpack.c.bf16 %v7751, %v7750
  %v7765 = vpack.c.bf16 %v7753, %v7752
  %v7766 = vpack.c.bf16 %v7755, %v7754
  %v7767 = vpack.c.bf16 %v7757, %v7756
  %v7768 = vpack.c.bf16 %v7759, %v7758
  %v7769 = vpack.c.bf16 %v7761, %v7760
  %s7770 = scalar_lea.vmem %s7, 64
  %v7771 = vld [vmem:[%s7770] sm:$0xf]
  %v7772 = vld [vmem:[%s7770 + $0x4] sm:$0xf]
  %v7773 = vld [vmem:[%s7770 + $0x8] sm:$0xf]
  %v7774 = vld [vmem:[%s7770 + $0xc] sm:$0xf]
  %v7779 = vunpack.c.l.b16 %v7771
  %v7780 = vunpack.c.l.b16 %v7772
  %v7781 = vunpack.c.l.b16 %v7773
  %v7782 = vunpack.c.l.b16 %v7774
  %v7783 = vpack.c.b16 %v7780, %v7779
  %v7784 = vpack.c.b16 %v7782, %v7781
  %v7788 = vsel %vm671, %v7762, 0
  %v7791 = vsel %vm671, %v7763, 0
  %v7794 = vsel %vm671, %v7764, 0
  %v7797 = vsel %vm671, %v7765, 0
  %v7800 = vsel %vm671, %v7766, 0
  %v7803 = vsel %vm671, %v7767, 0
  %v7806 = vsel %vm671, %v7768, 0
  %v7809 = vsel %vm671, %v7769, 0
  %7811 = vmatprep.subr.bf16.mxu0 0
  %7812 = vmatpush1.bf16.msra.mxu0 0
  %7813 = vmatprep.subr.bf16.mxu0 0
  %7814 = vmatpush1.bf16.msra.mxu0 0
  %7815 = vmatprep.subr.bf16.mxu0 0
  %7816 = vmatpush1.bf16.msra.mxu0 0
  %7817 = vmatprep.subr.bf16.mxu0 0
  %7818 = vmatpush1.bf16.msra.mxu0 0
  %7819 = vmatprep.subr.bf16.mxu0 0
  %7820 = vmatpush1.bf16.msra.mxu0 0
  %7821 = vmatprep.subr.bf16.mxu0 0
  %7822 = vmatpush1.bf16.msra.mxu0 0
  %7823 = vmatprep.subr.bf16.mxu0 0
  %7824 = vmatpush1.bf16.msra.mxu0 %v7784
  %7825 = vmatprep.subr.bf16.mxu0 0
  %7826 = vmatpush1.bf16.msra.mxu0 %v7783
  %7827 = vmatprep.subr.bf16.mxu0 0
  %7828 = vmatpush2.bf16.msra.mxu0 0
  %7829 = vmatprep.subr.bf16.mxu0 0
  %7830 = vmatpush2.bf16.msra.mxu0 0
  %7831 = vmatprep.subr.bf16.mxu0 0
  %7832 = vmatpush2.bf16.msra.mxu0 0
  %7833 = vmatprep.subr.bf16.mxu0 0
  %7834 = vmatpush2.bf16.msra.mxu0 0
  %7835 = vmatprep.subr.bf16.mxu0 0
  %7836 = vmatpush2.bf16.msra.mxu0 0
  %7837 = vmatprep.subr.bf16.mxu0 0
  %7838 = vmatpush2.bf16.msra.mxu0 0
  %7839 = vmatprep.subr.bf16.mxu0 0
  %7840 = vmatpush2.bf16.msra.mxu0 0
  %7841 = vmatprep.subr.bf16.mxu0 0
  %7842 = vmatpush2.bf16.msra.mxu0 0
  %7843 = vmatprep.mubr.bf16.mxu0 0
  %7844 = vmatmul.mubr.bf16.gmra.mxu0 %v7788
  %v7845 = vpop.f32.mrf.mxu0
  %v7846 = vadd.f32 0.0, %v7845
  %v7847 = vpop.f32.mrf.mxu0
  %v7848 = vpop.f32.mrf.mxu0
  %v7849 = vadd.f32 0.0, %v7848
  %v7850 = vpop.f32.mrf.mxu0
  %7851 = vmatprep.mubr.bf16.mxu0 0
  %7852 = vmatmul.mubr.bf16.gmra.mxu0 %v7791
  %v7853 = vpop.f32.mrf.mxu0
  %v7854 = vadd.f32 0.0, %v7853
  %v7855 = vpop.f32.mrf.mxu0
  %v7856 = vpop.f32.mrf.mxu0
  %v7857 = vadd.f32 0.0, %v7856
  %v7858 = vpop.f32.mrf.mxu0
  %7859 = vmatprep.mubr.bf16.mxu0 0
  %7860 = vmatmul.mubr.bf16.gmra.mxu0 %v7794
  %v7861 = vpop.f32.mrf.mxu0
  %v7862 = vadd.f32 0.0, %v7861
  %v7863 = vpop.f32.mrf.mxu0
  %v7864 = vpop.f32.mrf.mxu0
  %v7865 = vadd.f32 0.0, %v7864
  %v7866 = vpop.f32.mrf.mxu0
  %7867 = vmatprep.mubr.bf16.mxu0 0
  %7868 = vmatmul.mubr.bf16.gmra.mxu0 %v7797
  %v7869 = vpop.f32.mrf.mxu0
  %v7870 = vadd.f32 0.0, %v7869
  %v7871 = vpop.f32.mrf.mxu0
  %v7872 = vpop.f32.mrf.mxu0
  %v7873 = vadd.f32 0.0, %v7872
  %v7874 = vpop.f32.mrf.mxu0
  %7875 = vmatprep.mubr.bf16.mxu0 0
  %7876 = vmatmul.mubr.bf16.gmra.mxu0 %v7800
  %v7877 = vpop.f32.mrf.mxu0
  %v7878 = vadd.f32 0.0, %v7877
  %v7879 = vpop.f32.mrf.mxu0
  %v7880 = vpop.f32.mrf.mxu0
  %v7881 = vadd.f32 0.0, %v7880
  %v7882 = vpop.f32.mrf.mxu0
  %7883 = vmatprep.mubr.bf16.mxu0 0
  %7884 = vmatmul.mubr.bf16.gmra.mxu0 %v7803
  %v7885 = vpop.f32.mrf.mxu0
  %v7886 = vadd.f32 0.0, %v7885
  %v7887 = vpop.f32.mrf.mxu0
  %v7888 = vpop.f32.mrf.mxu0
  %v7889 = vadd.f32 0.0, %v7888
  %v7890 = vpop.f32.mrf.mxu0
  %7891 = vmatprep.mubr.bf16.mxu0 0
  %7892 = vmatmul.mubr.bf16.gmra.mxu0 %v7806
  %v7893 = vpop.f32.mrf.mxu0
  %v7894 = vadd.f32 0.0, %v7893
  %v7895 = vpop.f32.mrf.mxu0
  %v7896 = vpop.f32.mrf.mxu0
  %v7897 = vadd.f32 0.0, %v7896
  %v7898 = vpop.f32.mrf.mxu0
  %7899 = vmatprep.mubr.bf16.mxu0 0
  %7900 = vmatmul.mubr.bf16.gmra.mxu0 %v7809
  %v7901 = vpop.f32.mrf.mxu0
  %v7902 = vadd.f32 0.0, %v7901
  %v7903 = vpop.f32.mrf.mxu0
  %v7904 = vpop.f32.mrf.mxu0
  %v7905 = vadd.f32 0.0, %v7904
  %v7906 = vpop.f32.mrf.mxu0
  %7907 = vdwg.mxu0
  %v7908 = vadd.f32 %v7730, %v7846
  %v7909 = vadd.f32 %v7731, %v7849
  %v7910 = vadd.f32 %v7732, %v7854
  %v7911 = vadd.f32 %v7733, %v7857
  %v7912 = vadd.f32 %v7734, %v7862
  %v7913 = vadd.f32 %v7735, %v7865
  %v7914 = vadd.f32 %v7736, %v7870
  %v7915 = vadd.f32 %v7737, %v7873
  %v7916 = vadd.f32 %v7738, %v7878
  %v7917 = vadd.f32 %v7739, %v7881
  %v7918 = vadd.f32 %v7740, %v7886
  %v7919 = vadd.f32 %v7741, %v7889
  %v7920 = vadd.f32 %v7742, %v7894
  %v7921 = vadd.f32 %v7743, %v7897
  %v7922 = vadd.f32 %v7744, %v7902
  %v7923 = vadd.f32 %v7745, %v7905
  %v7924 = vld [vmem:[%s7050 + $0x2] sm:$0xff]
  %v7925 = vld [vmem:[%s7050 + $0x12] sm:$0xff]
  %v7926 = vld [vmem:[%s7050 + $0x22] sm:$0xff]
  %v7927 = vld [vmem:[%s7050 + $0x32] sm:$0xff]
  %v7928 = vld [vmem:[%s7050 + $0x42] sm:$0xff]
  %v7929 = vld [vmem:[%s7050 + $0x52] sm:$0xff]
  %v7930 = vld [vmem:[%s7050 + $0x62] sm:$0xff]
  %v7931 = vld [vmem:[%s7050 + $0x72] sm:$0xff]
  %v7932 = vld [vmem:[%s7050 + $0xa2] sm:$0xff]
  %v7933 = vld [vmem:[%s7050 + $0xb2] sm:$0xff]
  %v7934 = vld [vmem:[%s7050 + $0xc2] sm:$0xff]
  %v7935 = vld [vmem:[%s7050 + $0xd2] sm:$0xff]
  %v7936 = vld [vmem:[%s7050 + $0xe2] sm:$0xff]
  %v7937 = vld [vmem:[%s7050 + $0xf2] sm:$0xff]
  %v7938 = vld [vmem:[%s7050 + $0x102] sm:$0xff]
  %v7939 = vld [vmem:[%s7050 + $0x112] sm:$0xff]
  %v7940 = vpack.c.bf16 %v7925, %v7924
  %v7941 = vpack.c.bf16 %v7927, %v7926
  %v7942 = vpack.c.bf16 %v7929, %v7928
  %v7943 = vpack.c.bf16 %v7931, %v7930
  %v7944 = vpack.c.bf16 %v7933, %v7932
  %v7945 = vpack.c.bf16 %v7935, %v7934
  %v7946 = vpack.c.bf16 %v7937, %v7936
  %v7947 = vpack.c.bf16 %v7939, %v7938
  %s7948 = scalar_lea.vmem %s7, 80
  %v7949 = vld [vmem:[%s7948] sm:$0xf]
  %v7950 = vld [vmem:[%s7948 + $0x4] sm:$0xf]
  %v7951 = vld [vmem:[%s7948 + $0x8] sm:$0xf]
  %v7952 = vld [vmem:[%s7948 + $0xc] sm:$0xf]
  %v7957 = vunpack.c.l.b16 %v7949
  %v7958 = vunpack.c.l.b16 %v7950
  %v7959 = vunpack.c.l.b16 %v7951
  %v7960 = vunpack.c.l.b16 %v7952
  %v7961 = vpack.c.b16 %v7958, %v7957
  %v7962 = vpack.c.b16 %v7960, %v7959
  %v7966 = vsel %vm671, %v7940, 0
  %v7969 = vsel %vm671, %v7941, 0
  %v7972 = vsel %vm671, %v7942, 0
  %v7975 = vsel %vm671, %v7943, 0
  %v7978 = vsel %vm671, %v7944, 0
  %v7981 = vsel %vm671, %v7945, 0
  %v7984 = vsel %vm671, %v7946, 0
  %v7987 = vsel %vm671, %v7947, 0
  %7989 = vmatprep.subr.bf16.mxu0 0
  %7990 = vmatpush1.bf16.msra.mxu0 0
  %7991 = vmatprep.subr.bf16.mxu0 0
  %7992 = vmatpush1.bf16.msra.mxu0 0
  %7993 = vmatprep.subr.bf16.mxu0 0
  %7994 = vmatpush1.bf16.msra.mxu0 0
  %7995 = vmatprep.subr.bf16.mxu0 0
  %7996 = vmatpush1.bf16.msra.mxu0 0
  %7997 = vmatprep.subr.bf16.mxu0 0
  %7998 = vmatpush1.bf16.msra.mxu0 0
  %7999 = vmatprep.subr.bf16.mxu0 0
  %8000 = vmatpush1.bf16.msra.mxu0 0
  %8001 = vmatprep.subr.bf16.mxu0 0
  %8002 = vmatpush1.bf16.msra.mxu0 %v7962
  %8003 = vmatprep.subr.bf16.mxu0 0
  %8004 = vmatpush1.bf16.msra.mxu0 %v7961
  %8005 = vmatprep.subr.bf16.mxu0 0
  %8006 = vmatpush2.bf16.msra.mxu0 0
  %8007 = vmatprep.subr.bf16.mxu0 0
  %8008 = vmatpush2.bf16.msra.mxu0 0
  %8009 = vmatprep.subr.bf16.mxu0 0
  %8010 = vmatpush2.bf16.msra.mxu0 0
  %8011 = vmatprep.subr.bf16.mxu0 0
  %8012 = vmatpush2.bf16.msra.mxu0 0
  %8013 = vmatprep.subr.bf16.mxu0 0
  %8014 = vmatpush2.bf16.msra.mxu0 0
  %8015 = vmatprep.subr.bf16.mxu0 0
  %8016 = vmatpush2.bf16.msra.mxu0 0
  %8017 = vmatprep.subr.bf16.mxu0 0
  %8018 = vmatpush2.bf16.msra.mxu0 0
  %8019 = vmatprep.subr.bf16.mxu0 0
  %8020 = vmatpush2.bf16.msra.mxu0 0
  %8021 = vmatprep.mubr.bf16.mxu0 0
  %8022 = vmatmul.mubr.bf16.gmra.mxu0 %v7966
  %v8023 = vpop.f32.mrf.mxu0
  %v8024 = vadd.f32 0.0, %v8023
  %v8025 = vpop.f32.mrf.mxu0
  %v8026 = vpop.f32.mrf.mxu0
  %v8027 = vadd.f32 0.0, %v8026
  %v8028 = vpop.f32.mrf.mxu0
  %8029 = vmatprep.mubr.bf16.mxu0 0
  %8030 = vmatmul.mubr.bf16.gmra.mxu0 %v7969
  %v8031 = vpop.f32.mrf.mxu0
  %v8032 = vadd.f32 0.0, %v8031
  %v8033 = vpop.f32.mrf.mxu0
  %v8034 = vpop.f32.mrf.mxu0
  %v8035 = vadd.f32 0.0, %v8034
  %v8036 = vpop.f32.mrf.mxu0
  %8037 = vmatprep.mubr.bf16.mxu0 0
  %8038 = vmatmul.mubr.bf16.gmra.mxu0 %v7972
  %v8039 = vpop.f32.mrf.mxu0
  %v8040 = vadd.f32 0.0, %v8039
  %v8041 = vpop.f32.mrf.mxu0
  %v8042 = vpop.f32.mrf.mxu0
  %v8043 = vadd.f32 0.0, %v8042
  %v8044 = vpop.f32.mrf.mxu0
  %8045 = vmatprep.mubr.bf16.mxu0 0
  %8046 = vmatmul.mubr.bf16.gmra.mxu0 %v7975
  %v8047 = vpop.f32.mrf.mxu0
  %v8048 = vadd.f32 0.0, %v8047
  %v8049 = vpop.f32.mrf.mxu0
  %v8050 = vpop.f32.mrf.mxu0
  %v8051 = vadd.f32 0.0, %v8050
  %v8052 = vpop.f32.mrf.mxu0
  %8053 = vmatprep.mubr.bf16.mxu0 0
  %8054 = vmatmul.mubr.bf16.gmra.mxu0 %v7978
  %v8055 = vpop.f32.mrf.mxu0
  %v8056 = vadd.f32 0.0, %v8055
  %v8057 = vpop.f32.mrf.mxu0
  %v8058 = vpop.f32.mrf.mxu0
  %v8059 = vadd.f32 0.0, %v8058
  %v8060 = vpop.f32.mrf.mxu0
  %8061 = vmatprep.mubr.bf16.mxu0 0
  %8062 = vmatmul.mubr.bf16.gmra.mxu0 %v7981
  %v8063 = vpop.f32.mrf.mxu0
  %v8064 = vadd.f32 0.0, %v8063
  %v8065 = vpop.f32.mrf.mxu0
  %v8066 = vpop.f32.mrf.mxu0
  %v8067 = vadd.f32 0.0, %v8066
  %v8068 = vpop.f32.mrf.mxu0
  %8069 = vmatprep.mubr.bf16.mxu0 0
  %8070 = vmatmul.mubr.bf16.gmra.mxu0 %v7984
  %v8071 = vpop.f32.mrf.mxu0
  %v8072 = vadd.f32 0.0, %v8071
  %v8073 = vpop.f32.mrf.mxu0
  %v8074 = vpop.f32.mrf.mxu0
  %v8075 = vadd.f32 0.0, %v8074
  %v8076 = vpop.f32.mrf.mxu0
  %8077 = vmatprep.mubr.bf16.mxu0 0
  %8078 = vmatmul.mubr.bf16.gmra.mxu0 %v7987
  %v8079 = vpop.f32.mrf.mxu0
  %v8080 = vadd.f32 0.0, %v8079
  %v8081 = vpop.f32.mrf.mxu0
  %v8082 = vpop.f32.mrf.mxu0
  %v8083 = vadd.f32 0.0, %v8082
  %v8084 = vpop.f32.mrf.mxu0
  %8085 = vdwg.mxu0
  %v8086 = vadd.f32 %v7908, %v8024
  %v8087 = vadd.f32 %v7909, %v8027
  %v8088 = vadd.f32 %v7910, %v8032
  %v8089 = vadd.f32 %v7911, %v8035
  %v8090 = vadd.f32 %v7912, %v8040
  %v8091 = vadd.f32 %v7913, %v8043
  %v8092 = vadd.f32 %v7914, %v8048
  %v8093 = vadd.f32 %v7915, %v8051
  %v8094 = vadd.f32 %v7916, %v8056
  %v8095 = vadd.f32 %v7917, %v8059
  %v8096 = vadd.f32 %v7918, %v8064
  %v8097 = vadd.f32 %v7919, %v8067
  %v8098 = vadd.f32 %v7920, %v8072
  %v8099 = vadd.f32 %v7921, %v8075
  %v8100 = vadd.f32 %v7922, %v8080
  %v8101 = vadd.f32 %v7923, %v8083
  %s8102 = scalar_lea.vmem [#allocation3], 32
  %v8103 = vld [vmem:[%s8102] sm:$0xff]
  %v8104 = vld [vmem:[%s8102 + $0x10] sm:$0xff]
  %v8105 = vld [vmem:[%s8102 + $0x20] sm:$0xff]
  %v8106 = vld [vmem:[%s8102 + $0x30] sm:$0xff]
  %v8107 = vld [vmem:[%s8102 + $0x40] sm:$0xff]
  %v8108 = vld [vmem:[%s8102 + $0x50] sm:$0xff]
  %v8109 = vld [vmem:[%s8102 + $0x60] sm:$0xff]
  %v8110 = vld [vmem:[%s8102 + $0x70] sm:$0xff]
  %v8111 = vld [vmem:[%s8102 + $0xa0] sm:$0xff]
  %v8112 = vld [vmem:[%s8102 + $0xb0] sm:$0xff]
  %v8113 = vld [vmem:[%s8102 + $0xc0] sm:$0xff]
  %v8114 = vld [vmem:[%s8102 + $0xd0] sm:$0xff]
  %v8115 = vld [vmem:[%s8102 + $0xe0] sm:$0xff]
  %v8116 = vld [vmem:[%s8102 + $0xf0] sm:$0xff]
  %v8117 = vld [vmem:[%s8102 + $0x100] sm:$0xff]
  %v8118 = vld [vmem:[%s8102 + $0x110] sm:$0xff]
  %v8119 = vpack.c.bf16 %v8104, %v8103
  %v8120 = vpack.c.bf16 %v8106, %v8105
  %v8121 = vpack.c.bf16 %v8108, %v8107
  %v8122 = vpack.c.bf16 %v8110, %v8109
  %v8123 = vpack.c.bf16 %v8112, %v8111
  %v8124 = vpack.c.bf16 %v8114, %v8113
  %v8125 = vpack.c.bf16 %v8116, %v8115
  %v8126 = vpack.c.bf16 %v8118, %v8117
  %s8127 = scalar_lea.vmem %s7, 96
  %v8128 = vld [vmem:[%s8127] sm:$0xf]
  %v8129 = vld [vmem:[%s8127 + $0x4] sm:$0xf]
  %v8130 = vld [vmem:[%s8127 + $0x8] sm:$0xf]
  %v8131 = vld [vmem:[%s8127 + $0xc] sm:$0xf]
  %v8136 = vunpack.c.l.b16 %v8128
  %v8137 = vunpack.c.l.b16 %v8129
  %v8138 = vunpack.c.l.b16 %v8130
  %v8139 = vunpack.c.l.b16 %v8131
  %v8140 = vpack.c.b16 %v8137, %v8136
  %v8141 = vpack.c.b16 %v8139, %v8138
  %v8145 = vsel %vm671, %v8119, 0
  %v8148 = vsel %vm671, %v8120, 0
  %v8151 = vsel %vm671, %v8121, 0
  %v8154 = vsel %vm671, %v8122, 0
  %v8157 = vsel %vm671, %v8123, 0
  %v8160 = vsel %vm671, %v8124, 0
  %v8163 = vsel %vm671, %v8125, 0
  %v8166 = vsel %vm671, %v8126, 0
  %8168 = vmatprep.subr.bf16.mxu0 0
  %8169 = vmatpush1.bf16.msra.mxu0 0
  %8170 = vmatprep.subr.bf16.mxu0 0
  %8171 = vmatpush1.bf16.msra.mxu0 0
  %8172 = vmatprep.subr.bf16.mxu0 0
  %8173 = vmatpush1.bf16.msra.mxu0 0
  %8174 = vmatprep.subr.bf16.mxu0 0
  %8175 = vmatpush1.bf16.msra.mxu0 0
  %8176 = vmatprep.subr.bf16.mxu0 0
  %8177 = vmatpush1.bf16.msra.mxu0 0
  %8178 = vmatprep.subr.bf16.mxu0 0
  %8179 = vmatpush1.bf16.msra.mxu0 0
  %8180 = vmatprep.subr.bf16.mxu0 0
  %8181 = vmatpush1.bf16.msra.mxu0 %v8141
  %8182 = vmatprep.subr.bf16.mxu0 0
  %8183 = vmatpush1.bf16.msra.mxu0 %v8140
  %8184 = vmatprep.subr.bf16.mxu0 0
  %8185 = vmatpush2.bf16.msra.mxu0 0
  %8186 = vmatprep.subr.bf16.mxu0 0
  %8187 = vmatpush2.bf16.msra.mxu0 0
  %8188 = vmatprep.subr.bf16.mxu0 0
  %8189 = vmatpush2.bf16.msra.mxu0 0
  %8190 = vmatprep.subr.bf16.mxu0 0
  %8191 = vmatpush2.bf16.msra.mxu0 0
  %8192 = vmatprep.subr.bf16.mxu0 0
  %8193 = vmatpush2.bf16.msra.mxu0 0
  %8194 = vmatprep.subr.bf16.mxu0 0
  %8195 = vmatpush2.bf16.msra.mxu0 0
  %8196 = vmatprep.subr.bf16.mxu0 0
  %8197 = vmatpush2.bf16.msra.mxu0 0
  %8198 = vmatprep.subr.bf16.mxu0 0
  %8199 = vmatpush2.bf16.msra.mxu0 0
  %8200 = vmatprep.mubr.bf16.mxu0 0
  %8201 = vmatmul.mubr.bf16.gmra.mxu0 %v8145
  %v8202 = vpop.f32.mrf.mxu0
  %v8203 = vadd.f32 0.0, %v8202
  %v8204 = vpop.f32.mrf.mxu0
  %v8205 = vpop.f32.mrf.mxu0
  %v8206 = vadd.f32 0.0, %v8205
  %v8207 = vpop.f32.mrf.mxu0
  %8208 = vmatprep.mubr.bf16.mxu0 0
  %8209 = vmatmul.mubr.bf16.gmra.mxu0 %v8148
  %v8210 = vpop.f32.mrf.mxu0
  %v8211 = vadd.f32 0.0, %v8210
  %v8212 = vpop.f32.mrf.mxu0
  %v8213 = vpop.f32.mrf.mxu0
  %v8214 = vadd.f32 0.0, %v8213
  %v8215 = vpop.f32.mrf.mxu0
  %8216 = vmatprep.mubr.bf16.mxu0 0
  %8217 = vmatmul.mubr.bf16.gmra.mxu0 %v8151
  %v8218 = vpop.f32.mrf.mxu0
  %v8219 = vadd.f32 0.0, %v8218
  %v8220 = vpop.f32.mrf.mxu0
  %v8221 = vpop.f32.mrf.mxu0
  %v8222 = vadd.f32 0.0, %v8221
  %v8223 = vpop.f32.mrf.mxu0
  %8224 = vmatprep.mubr.bf16.mxu0 0
  %8225 = vmatmul.mubr.bf16.gmra.mxu0 %v8154
  %v8226 = vpop.f32.mrf.mxu0
  %v8227 = vadd.f32 0.0, %v8226
  %v8228 = vpop.f32.mrf.mxu0
  %v8229 = vpop.f32.mrf.mxu0
  %v8230 = vadd.f32 0.0, %v8229
  %v8231 = vpop.f32.mrf.mxu0
  %8232 = vmatprep.mubr.bf16.mxu0 0
  %8233 = vmatmul.mubr.bf16.gmra.mxu0 %v8157
  %v8234 = vpop.f32.mrf.mxu0
  %v8235 = vadd.f32 0.0, %v8234
  %v8236 = vpop.f32.mrf.mxu0
  %v8237 = vpop.f32.mrf.mxu0
  %v8238 = vadd.f32 0.0, %v8237
  %v8239 = vpop.f32.mrf.mxu0
  %8240 = vmatprep.mubr.bf16.mxu0 0
  %8241 = vmatmul.mubr.bf16.gmra.mxu0 %v8160
  %v8242 = vpop.f32.mrf.mxu0
  %v8243 = vadd.f32 0.0, %v8242
  %v8244 = vpop.f32.mrf.mxu0
  %v8245 = vpop.f32.mrf.mxu0
  %v8246 = vadd.f32 0.0, %v8245
  %v8247 = vpop.f32.mrf.mxu0
  %8248 = vmatprep.mubr.bf16.mxu0 0
  %8249 = vmatmul.mubr.bf16.gmra.mxu0 %v8163
  %v8250 = vpop.f32.mrf.mxu0
  %v8251 = vadd.f32 0.0, %v8250
  %v8252 = vpop.f32.mrf.mxu0
  %v8253 = vpop.f32.mrf.mxu0
  %v8254 = vadd.f32 0.0, %v8253
  %v8255 = vpop.f32.mrf.mxu0
  %8256 = vmatprep.mubr.bf16.mxu0 0
  %8257 = vmatmul.mubr.bf16.gmra.mxu0 %v8166
  %v8258 = vpop.f32.mrf.mxu0
  %v8259 = vadd.f32 0.0, %v8258
  %v8260 = vpop.f32.mrf.mxu0
  %v8261 = vpop.f32.mrf.mxu0
  %v8262 = vadd.f32 0.0, %v8261
  %v8263 = vpop.f32.mrf.mxu0
  %8264 = vdwg.mxu0
  %v8265 = vadd.f32 %v8086, %v8203
  %v8266 = vadd.f32 %v8087, %v8206
  %v8267 = vadd.f32 %v8088, %v8211
  %v8268 = vadd.f32 %v8089, %v8214
  %v8269 = vadd.f32 %v8090, %v8219
  %v8270 = vadd.f32 %v8091, %v8222
  %v8271 = vadd.f32 %v8092, %v8227
  %v8272 = vadd.f32 %v8093, %v8230
  %v8273 = vadd.f32 %v8094, %v8235
  %v8274 = vadd.f32 %v8095, %v8238
  %v8275 = vadd.f32 %v8096, %v8243
  %v8276 = vadd.f32 %v8097, %v8246
  %v8277 = vadd.f32 %v8098, %v8251
  %v8278 = vadd.f32 %v8099, %v8254
  %v8279 = vadd.f32 %v8100, %v8259
  %v8280 = vadd.f32 %v8101, %v8262
  %v8281 = vld [vmem:[%s8102 + $0x1] sm:$0xff]
  %v8282 = vld [vmem:[%s8102 + $0x11] sm:$0xff]
  %v8283 = vld [vmem:[%s8102 + $0x21] sm:$0xff]
  %v8284 = vld [vmem:[%s8102 + $0x31] sm:$0xff]
  %v8285 = vld [vmem:[%s8102 + $0x41] sm:$0xff]
  %v8286 = vld [vmem:[%s8102 + $0x51] sm:$0xff]
  %v8287 = vld [vmem:[%s8102 + $0x61] sm:$0xff]
  %v8288 = vld [vmem:[%s8102 + $0x71] sm:$0xff]
  %v8289 = vld [vmem:[%s8102 + $0xa1] sm:$0xff]
  %v8290 = vld [vmem:[%s8102 + $0xb1] sm:$0xff]
  %v8291 = vld [vmem:[%s8102 + $0xc1] sm:$0xff]
  %v8292 = vld [vmem:[%s8102 + $0xd1] sm:$0xff]
  %v8293 = vld [vmem:[%s8102 + $0xe1] sm:$0xff]
  %v8294 = vld [vmem:[%s8102 + $0xf1] sm:$0xff]
  %v8295 = vld [vmem:[%s8102 + $0x101] sm:$0xff]
  %v8296 = vld [vmem:[%s8102 + $0x111] sm:$0xff]
  %v8297 = vpack.c.bf16 %v8282, %v8281
  %v8298 = vpack.c.bf16 %v8284, %v8283
  %v8299 = vpack.c.bf16 %v8286, %v8285
  %v8300 = vpack.c.bf16 %v8288, %v8287
  %v8301 = vpack.c.bf16 %v8290, %v8289
  %v8302 = vpack.c.bf16 %v8292, %v8291
  %v8303 = vpack.c.bf16 %v8294, %v8293
  %v8304 = vpack.c.bf16 %v8296, %v8295
  %s8305 = scalar_lea.vmem %s7, 112
  %v8306 = vld [vmem:[%s8305] sm:$0xf]
  %v8307 = vld [vmem:[%s8305 + $0x4] sm:$0xf]
  %v8308 = vld [vmem:[%s8305 + $0x8] sm:$0xf]
  %v8309 = vld [vmem:[%s8305 + $0xc] sm:$0xf]
  %v8314 = vunpack.c.l.b16 %v8306
  %v8315 = vunpack.c.l.b16 %v8307
  %v8316 = vunpack.c.l.b16 %v8308
  %v8317 = vunpack.c.l.b16 %v8309
  %v8318 = vpack.c.b16 %v8315, %v8314
  %v8319 = vpack.c.b16 %v8317, %v8316
  %v8323 = vsel %vm671, %v8297, 0
  %v8326 = vsel %vm671, %v8298, 0
  %v8329 = vsel %vm671, %v8299, 0
  %v8332 = vsel %vm671, %v8300, 0
  %v8335 = vsel %vm671, %v8301, 0
  %v8338 = vsel %vm671, %v8302, 0
  %v8341 = vsel %vm671, %v8303, 0
  %v8344 = vsel %vm671, %v8304, 0
  %8346 = vmatprep.subr.bf16.mxu0 0
  %8347 = vmatpush1.bf16.msra.mxu0 0
  %8348 = vmatprep.subr.bf16.mxu0 0
  %8349 = vmatpush1.bf16.msra.mxu0 0
  %8350 = vmatprep.subr.bf16.mxu0 0
  %8351 = vmatpush1.bf16.msra.mxu0 0
  %8352 = vmatprep.subr.bf16.mxu0 0
  %8353 = vmatpush1.bf16.msra.mxu0 0
  %8354 = vmatprep.subr.bf16.mxu0 0
  %8355 = vmatpush1.bf16.msra.mxu0 0
  %8356 = vmatprep.subr.bf16.mxu0 0
  %8357 = vmatpush1.bf16.msra.mxu0 0
  %8358 = vmatprep.subr.bf16.mxu0 0
  %8359 = vmatpush1.bf16.msra.mxu0 %v8319
  %8360 = vmatprep.subr.bf16.mxu0 0
  %8361 = vmatpush1.bf16.msra.mxu0 %v8318
  %8362 = vmatprep.subr.bf16.mxu0 0
  %8363 = vmatpush2.bf16.msra.mxu0 0
  %8364 = vmatprep.subr.bf16.mxu0 0
  %8365 = vmatpush2.bf16.msra.mxu0 0
  %8366 = vmatprep.subr.bf16.mxu0 0
  %8367 = vmatpush2.bf16.msra.mxu0 0
  %8368 = vmatprep.subr.bf16.mxu0 0
  %8369 = vmatpush2.bf16.msra.mxu0 0
  %8370 = vmatprep.subr.bf16.mxu0 0
  %8371 = vmatpush2.bf16.msra.mxu0 0
  %8372 = vmatprep.subr.bf16.mxu0 0
  %8373 = vmatpush2.bf16.msra.mxu0 0
  %8374 = vmatprep.subr.bf16.mxu0 0
  %8375 = vmatpush2.bf16.msra.mxu0 0
  %8376 = vmatprep.subr.bf16.mxu0 0
  %8377 = vmatpush2.bf16.msra.mxu0 0
  %8378 = vmatprep.mubr.bf16.mxu0 0
  %8379 = vmatmul.mubr.bf16.gmra.mxu0 %v8323
  %v8380 = vpop.f32.mrf.mxu0
  %v8381 = vadd.f32 0.0, %v8380
  %v8382 = vpop.f32.mrf.mxu0
  %v8383 = vpop.f32.mrf.mxu0
  %v8384 = vadd.f32 0.0, %v8383
  %v8385 = vpop.f32.mrf.mxu0
  %8386 = vmatprep.mubr.bf16.mxu0 0
  %8387 = vmatmul.mubr.bf16.gmra.mxu0 %v8326
  %v8388 = vpop.f32.mrf.mxu0
  %v8389 = vadd.f32 0.0, %v8388
  %v8390 = vpop.f32.mrf.mxu0
  %v8391 = vpop.f32.mrf.mxu0
  %v8392 = vadd.f32 0.0, %v8391
  %v8393 = vpop.f32.mrf.mxu0
  %8394 = vmatprep.mubr.bf16.mxu0 0
  %8395 = vmatmul.mubr.bf16.gmra.mxu0 %v8329
  %v8396 = vpop.f32.mrf.mxu0
  %v8397 = vadd.f32 0.0, %v8396
  %v8398 = vpop.f32.mrf.mxu0
  %v8399 = vpop.f32.mrf.mxu0
  %v8400 = vadd.f32 0.0, %v8399
  %v8401 = vpop.f32.mrf.mxu0
  %8402 = vmatprep.mubr.bf16.mxu0 0
  %8403 = vmatmul.mubr.bf16.gmra.mxu0 %v8332
  %v8404 = vpop.f32.mrf.mxu0
  %v8405 = vadd.f32 0.0, %v8404
  %v8406 = vpop.f32.mrf.mxu0
  %v8407 = vpop.f32.mrf.mxu0
  %v8408 = vadd.f32 0.0, %v8407
  %v8409 = vpop.f32.mrf.mxu0
  %8410 = vmatprep.mubr.bf16.mxu0 0
  %8411 = vmatmul.mubr.bf16.gmra.mxu0 %v8335
  %v8412 = vpop.f32.mrf.mxu0
  %v8413 = vadd.f32 0.0, %v8412
  %v8414 = vpop.f32.mrf.mxu0
  %v8415 = vpop.f32.mrf.mxu0
  %v8416 = vadd.f32 0.0, %v8415
  %v8417 = vpop.f32.mrf.mxu0
  %8418 = vmatprep.mubr.bf16.mxu0 0
  %8419 = vmatmul.mubr.bf16.gmra.mxu0 %v8338
  %v8420 = vpop.f32.mrf.mxu0
  %v8421 = vadd.f32 0.0, %v8420
  %v8422 = vpop.f32.mrf.mxu0
  %v8423 = vpop.f32.mrf.mxu0
  %v8424 = vadd.f32 0.0, %v8423
  %v8425 = vpop.f32.mrf.mxu0
  %8426 = vmatprep.mubr.bf16.mxu0 0
  %8427 = vmatmul.mubr.bf16.gmra.mxu0 %v8341
  %v8428 = vpop.f32.mrf.mxu0
  %v8429 = vadd.f32 0.0, %v8428
  %v8430 = vpop.f32.mrf.mxu0
  %v8431 = vpop.f32.mrf.mxu0
  %v8432 = vadd.f32 0.0, %v8431
  %v8433 = vpop.f32.mrf.mxu0
  %8434 = vmatprep.mubr.bf16.mxu0 0
  %8435 = vmatmul.mubr.bf16.gmra.mxu0 %v8344
  %v8436 = vpop.f32.mrf.mxu0
  %v8437 = vadd.f32 0.0, %v8436
  %v8438 = vpop.f32.mrf.mxu0
  %v8439 = vpop.f32.mrf.mxu0
  %v8440 = vadd.f32 0.0, %v8439
  %v8441 = vpop.f32.mrf.mxu0
  %8442 = vdwg.mxu0
  %v8443 = vadd.f32 %v8265, %v8381
  %v8444 = vadd.f32 %v8266, %v8384
  %v8445 = vadd.f32 %v8267, %v8389
  %v8446 = vadd.f32 %v8268, %v8392
  %v8447 = vadd.f32 %v8269, %v8397
  %v8448 = vadd.f32 %v8270, %v8400
  %v8449 = vadd.f32 %v8271, %v8405
  %v8450 = vadd.f32 %v8272, %v8408
  %v8451 = vadd.f32 %v8273, %v8413
  %v8452 = vadd.f32 %v8274, %v8416
  %v8453 = vadd.f32 %v8275, %v8421
  %v8454 = vadd.f32 %v8276, %v8424
  %v8455 = vadd.f32 %v8277, %v8429
  %v8456 = vadd.f32 %v8278, %v8432
  %v8457 = vadd.f32 %v8279, %v8437
  %v8458 = vadd.f32 %v8280, %v8440
  %v8459 = vld [vmem:[%s8102 + $0x2] sm:$0xff]
  %v8460 = vld [vmem:[%s8102 + $0x12] sm:$0xff]
  %v8461 = vld [vmem:[%s8102 + $0x22] sm:$0xff]
  %v8462 = vld [vmem:[%s8102 + $0x32] sm:$0xff]
  %v8463 = vld [vmem:[%s8102 + $0x42] sm:$0xff]
  %v8464 = vld [vmem:[%s8102 + $0x52] sm:$0xff]
  %v8465 = vld [vmem:[%s8102 + $0x62] sm:$0xff]
  %v8466 = vld [vmem:[%s8102 + $0x72] sm:$0xff]
  %v8467 = vld [vmem:[%s8102 + $0xa2] sm:$0xff]
  %v8468 = vld [vmem:[%s8102 + $0xb2] sm:$0xff]
  %v8469 = vld [vmem:[%s8102 + $0xc2] sm:$0xff]
  %v8470 = vld [vmem:[%s8102 + $0xd2] sm:$0xff]
  %v8471 = vld [vmem:[%s8102 + $0xe2] sm:$0xff]
  %v8472 = vld [vmem:[%s8102 + $0xf2] sm:$0xff]
  %v8473 = vld [vmem:[%s8102 + $0x102] sm:$0xff]
  %v8474 = vld [vmem:[%s8102 + $0x112] sm:$0xff]
  %v8475 = vpack.c.bf16 %v8460, %v8459
  %v8476 = vpack.c.bf16 %v8462, %v8461
  %v8477 = vpack.c.bf16 %v8464, %v8463
  %v8478 = vpack.c.bf16 %v8466, %v8465
  %v8479 = vpack.c.bf16 %v8468, %v8467
  %v8480 = vpack.c.bf16 %v8470, %v8469
  %v8481 = vpack.c.bf16 %v8472, %v8471
  %v8482 = vpack.c.bf16 %v8474, %v8473
  %s8483 = scalar_lea.vmem %s7, 128
  %v8484 = vld [vmem:[%s8483] sm:$0xf]
  %v8485 = vld [vmem:[%s8483 + $0x4] sm:$0xf]
  %v8486 = vld [vmem:[%s8483 + $0x8] sm:$0xf]
  %v8487 = vld [vmem:[%s8483 + $0xc] sm:$0xf]
  %v8492 = vunpack.c.l.b16 %v8484
  %v8493 = vunpack.c.l.b16 %v8485
  %v8494 = vunpack.c.l.b16 %v8486
  %v8495 = vunpack.c.l.b16 %v8487
  %v8496 = vpack.c.b16 %v8493, %v8492
  %v8497 = vpack.c.b16 %v8495, %v8494
  %v8501 = vsel %vm671, %v8475, 0
  %v8504 = vsel %vm671, %v8476, 0
  %v8507 = vsel %vm671, %v8477, 0
  %v8510 = vsel %vm671, %v8478, 0
  %v8513 = vsel %vm671, %v8479, 0
  %v8516 = vsel %vm671, %v8480, 0
  %v8519 = vsel %vm671, %v8481, 0
  %v8522 = vsel %vm671, %v8482, 0
  %8524 = vmatprep.subr.bf16.mxu0 0
  %8525 = vmatpush1.bf16.msra.mxu0 0
  %8526 = vmatprep.subr.bf16.mxu0 0
  %8527 = vmatpush1.bf16.msra.mxu0 0
  %8528 = vmatprep.subr.bf16.mxu0 0
  %8529 = vmatpush1.bf16.msra.mxu0 0
  %8530 = vmatprep.subr.bf16.mxu0 0
  %8531 = vmatpush1.bf16.msra.mxu0 0
  %8532 = vmatprep.subr.bf16.mxu0 0
  %8533 = vmatpush1.bf16.msra.mxu0 0
  %8534 = vmatprep.subr.bf16.mxu0 0
  %8535 = vmatpush1.bf16.msra.mxu0 0
  %8536 = vmatprep.subr.bf16.mxu0 0
  %8537 = vmatpush1.bf16.msra.mxu0 %v8497
  %8538 = vmatprep.subr.bf16.mxu0 0
  %8539 = vmatpush1.bf16.msra.mxu0 %v8496
  %8540 = vmatprep.subr.bf16.mxu0 0
  %8541 = vmatpush2.bf16.msra.mxu0 0
  %8542 = vmatprep.subr.bf16.mxu0 0
  %8543 = vmatpush2.bf16.msra.mxu0 0
  %8544 = vmatprep.subr.bf16.mxu0 0
  %8545 = vmatpush2.bf16.msra.mxu0 0
  %8546 = vmatprep.subr.bf16.mxu0 0
  %8547 = vmatpush2.bf16.msra.mxu0 0
  %8548 = vmatprep.subr.bf16.mxu0 0
  %8549 = vmatpush2.bf16.msra.mxu0 0
  %8550 = vmatprep.subr.bf16.mxu0 0
  %8551 = vmatpush2.bf16.msra.mxu0 0
  %8552 = vmatprep.subr.bf16.mxu0 0
  %8553 = vmatpush2.bf16.msra.mxu0 0
  %8554 = vmatprep.subr.bf16.mxu0 0
  %8555 = vmatpush2.bf16.msra.mxu0 0
  %8556 = vmatprep.mubr.bf16.mxu0 0
  %8557 = vmatmul.mubr.bf16.gmra.mxu0 %v8501
  %v8558 = vpop.f32.mrf.mxu0
  %v8559 = vadd.f32 0.0, %v8558
  %v8560 = vpop.f32.mrf.mxu0
  %v8561 = vpop.f32.mrf.mxu0
  %v8562 = vadd.f32 0.0, %v8561
  %v8563 = vpop.f32.mrf.mxu0
  %8564 = vmatprep.mubr.bf16.mxu0 0
  %8565 = vmatmul.mubr.bf16.gmra.mxu0 %v8504
  %v8566 = vpop.f32.mrf.mxu0
  %v8567 = vadd.f32 0.0, %v8566
  %v8568 = vpop.f32.mrf.mxu0
  %v8569 = vpop.f32.mrf.mxu0
  %v8570 = vadd.f32 0.0, %v8569
  %v8571 = vpop.f32.mrf.mxu0
  %8572 = vmatprep.mubr.bf16.mxu0 0
  %8573 = vmatmul.mubr.bf16.gmra.mxu0 %v8507
  %v8574 = vpop.f32.mrf.mxu0
  %v8575 = vadd.f32 0.0, %v8574
  %v8576 = vpop.f32.mrf.mxu0
  %v8577 = vpop.f32.mrf.mxu0
  %v8578 = vadd.f32 0.0, %v8577
  %v8579 = vpop.f32.mrf.mxu0
  %8580 = vmatprep.mubr.bf16.mxu0 0
  %8581 = vmatmul.mubr.bf16.gmra.mxu0 %v8510
  %v8582 = vpop.f32.mrf.mxu0
  %v8583 = vadd.f32 0.0, %v8582
  %v8584 = vpop.f32.mrf.mxu0
  %v8585 = vpop.f32.mrf.mxu0
  %v8586 = vadd.f32 0.0, %v8585
  %v8587 = vpop.f32.mrf.mxu0
  %8588 = vmatprep.mubr.bf16.mxu0 0
  %8589 = vmatmul.mubr.bf16.gmra.mxu0 %v8513
  %v8590 = vpop.f32.mrf.mxu0
  %v8591 = vadd.f32 0.0, %v8590
  %v8592 = vpop.f32.mrf.mxu0
  %v8593 = vpop.f32.mrf.mxu0
  %v8594 = vadd.f32 0.0, %v8593
  %v8595 = vpop.f32.mrf.mxu0
  %8596 = vmatprep.mubr.bf16.mxu0 0
  %8597 = vmatmul.mubr.bf16.gmra.mxu0 %v8516
  %v8598 = vpop.f32.mrf.mxu0
  %v8599 = vadd.f32 0.0, %v8598
  %v8600 = vpop.f32.mrf.mxu0
  %v8601 = vpop.f32.mrf.mxu0
  %v8602 = vadd.f32 0.0, %v8601
  %v8603 = vpop.f32.mrf.mxu0
  %8604 = vmatprep.mubr.bf16.mxu0 0
  %8605 = vmatmul.mubr.bf16.gmra.mxu0 %v8519
  %v8606 = vpop.f32.mrf.mxu0
  %v8607 = vadd.f32 0.0, %v8606
  %v8608 = vpop.f32.mrf.mxu0
  %v8609 = vpop.f32.mrf.mxu0
  %v8610 = vadd.f32 0.0, %v8609
  %v8611 = vpop.f32.mrf.mxu0
  %8612 = vmatprep.mubr.bf16.mxu0 0
  %8613 = vmatmul.mubr.bf16.gmra.mxu0 %v8522
  %v8614 = vpop.f32.mrf.mxu0
  %v8615 = vadd.f32 0.0, %v8614
  %v8616 = vpop.f32.mrf.mxu0
  %v8617 = vpop.f32.mrf.mxu0
  %v8618 = vadd.f32 0.0, %v8617
  %v8619 = vpop.f32.mrf.mxu0
  %8620 = vdwg.mxu0
  %v8621 = vadd.f32 %v8443, %v8559
  %v8622 = vadd.f32 %v8444, %v8562
  %v8623 = vadd.f32 %v8445, %v8567
  %v8624 = vadd.f32 %v8446, %v8570
  %v8625 = vadd.f32 %v8447, %v8575
  %v8626 = vadd.f32 %v8448, %v8578
  %v8627 = vadd.f32 %v8449, %v8583
  %v8628 = vadd.f32 %v8450, %v8586
  %v8629 = vadd.f32 %v8451, %v8591
  %v8630 = vadd.f32 %v8452, %v8594
  %v8631 = vadd.f32 %v8453, %v8599
  %v8632 = vadd.f32 %v8454, %v8602
  %v8633 = vadd.f32 %v8455, %v8607
  %v8634 = vadd.f32 %v8456, %v8610
  %v8635 = vadd.f32 %v8457, %v8615
  %v8636 = vadd.f32 %v8458, %v8618
  %v8637 = vld [vmem:[%s8] sm:$0x1]
  %v8638 = vld [vmem:[%s9] sm:$0x1]
  %vm8639 = vcmask 523264
  %v8640 = vsel %vm8639, %v8621, 0.0
  %v8641 = vsel %vm8639, %v8622, 0.0
  %v8642 = vadd.f32 %v8640, %v8641
  %v8643 = vsel %vm8639, %v8623, 0.0
  %v8644 = vadd.f32 %v8642, %v8643
  %v8645 = vsel %vm8639, %v8624, 0.0
  %v8646 = vadd.f32 %v8644, %v8645
  %v8647 = vsel %vm8639, %v8625, 0.0
  %v8648 = vadd.f32 %v8646, %v8647
  %v8649 = vsel %vm8639, %v8626, 0.0
  %v8650 = vadd.f32 %v8648, %v8649
  %v8651 = vsel %vm8639, %v8627, 0.0
  %v8652 = vadd.f32 %v8650, %v8651
  %v8653 = vsel %vm8639, %v8628, 0.0
  %v8654 = vadd.f32 %v8652, %v8653
  %v8655 = vsel %vm8639, %v8629, 0.0
  %v8656 = vadd.f32 %v8654, %v8655
  %v8657 = vsel %vm8639, %v8630, 0.0
  %v8658 = vadd.f32 %v8656, %v8657
  %v8659 = vsel %vm8639, %v8631, 0.0
  %v8660 = vadd.f32 %v8658, %v8659
  %v8661 = vsel %vm8639, %v8632, 0.0
  %v8662 = vadd.f32 %v8660, %v8661
  %v8663 = vsel %vm8639, %v8633, 0.0
  %v8664 = vadd.f32 %v8662, %v8663
  %v8665 = vsel %vm8639, %v8634, 0.0
  %v8666 = vadd.f32 %v8664, %v8665
  %v8667 = vsel %vm8639, %v8635, 0.0
  %v8668 = vadd.f32 %v8666, %v8667
  %v8669 = vsel %vm8639, %v8636, 0.0
  %v8670 = vadd.f32 %v8668, %v8669
  %v8671 = vrot.slane %v8670, 4
  %v8672 = vadd.f32 %v8670, %v8671
  %v8673 = vrot.slane %v8672, 2
  %v8674 = vadd.f32 %v8672, %v8673
  %v8675 = vrot.slane %v8674, 1
  %v8676 = vadd.f32 %v8674, %v8675
  %v8677 = vrcp.pop 128.0
  %v8678 = vmul.f32 %v8676, %v8677
  %v8679 = vmul.f32 %v8621, %v8621
  %v8680 = vmul.f32 %v8622, %v8622
  %v8681 = vmul.f32 %v8623, %v8623
  %v8682 = vmul.f32 %v8624, %v8624
  %v8683 = vmul.f32 %v8625, %v8625
  %v8684 = vmul.f32 %v8626, %v8626
  %v8685 = vmul.f32 %v8627, %v8627
  %v8686 = vmul.f32 %v8628, %v8628
  %v8687 = vmul.f32 %v8629, %v8629
  %v8688 = vmul.f32 %v8630, %v8630
  %v8689 = vmul.f32 %v8631, %v8631
  %v8690 = vmul.f32 %v8632, %v8632
  %v8691 = vmul.f32 %v8633, %v8633
  %v8692 = vmul.f32 %v8634, %v8634
  %v8693 = vmul.f32 %v8635, %v8635
  %v8694 = vmul.f32 %v8636, %v8636
  %v8695 = vsel %vm8639, %v8679, 0.0
  %v8696 = vsel %vm8639, %v8680, 0.0
  %v8697 = vadd.f32 %v8695, %v8696
  %v8698 = vsel %vm8639, %v8681, 0.0
  %v8699 = vadd.f32 %v8697, %v8698
  %v8700 = vsel %vm8639, %v8682, 0.0
  %v8701 = vadd.f32 %v8699, %v8700
  %v8702 = vsel %vm8639, %v8683, 0.0
  %v8703 = vadd.f32 %v8701, %v8702
  %v8704 = vsel %vm8639, %v8684, 0.0
  %v8705 = vadd.f32 %v8703, %v8704
  %v8706 = vsel %vm8639, %v8685, 0.0
  %v8707 = vadd.f32 %v8705, %v8706
  %v8708 = vsel %vm8639, %v8686, 0.0
  %v8709 = vadd.f32 %v8707, %v8708
  %v8710 = vsel %vm8639, %v8687, 0.0
  %v8711 = vadd.f32 %v8709, %v8710
  %v8712 = vsel %vm8639, %v8688, 0.0
  %v8713 = vadd.f32 %v8711, %v8712
  %v8714 = vsel %vm8639, %v8689, 0.0
  %v8715 = vadd.f32 %v8713, %v8714
  %v8716 = vsel %vm8639, %v8690, 0.0
  %v8717 = vadd.f32 %v8715, %v8716
  %v8718 = vsel %vm8639, %v8691, 0.0
  %v8719 = vadd.f32 %v8717, %v8718
  %v8720 = vsel %vm8639, %v8692, 0.0
  %v8721 = vadd.f32 %v8719, %v8720
  %v8722 = vsel %vm8639, %v8693, 0.0
  %v8723 = vadd.f32 %v8721, %v8722
  %v8724 = vsel %vm8639, %v8694, 0.0
  %v8725 = vadd.f32 %v8723, %v8724
  %v8726 = vrot.slane %v8725, 4
  %v8727 = vadd.f32 %v8725, %v8726
  %v8728 = vrot.slane %v8727, 2
  %v8729 = vadd.f32 %v8727, %v8728
  %v8730 = vrot.slane %v8729, 1
  %v8731 = vadd.f32 %v8729, %v8730
  %v8732 = vmul.f32 %v8731, %v8677
  %v8733 = vmul.f32 %v8678, %v8678
  %v8734 = vsub.f32 %v8732, %v8733
  %v8735 = vmax.f32 %v8734, 0.0
  %v8736 = vadd.f32 %v8735, 1e-05
  %v8737 = vrsqrt.pop %v8736
  %v8738 = vmul.f32 %v8637, %v8737
  %v8739 = vmul.f32 %v8678, %v8738
  %v8740 = vsub.f32 %v8638, %v8739
  %v8742 = vlaneseq
  %v8743 = vshrl.u32 %v8742, 7
  %v8744 = vsub.s32 0, %v8743
  %v8745 = vrot.slane %v8738, %v8744
  %v8747 = vmul.f32 %v8621, %v8745
  %v8748 = vmul.f32 %v8622, %v8745
  %v8749 = vmul.f32 %v8623, %v8745
  %v8750 = vmul.f32 %v8624, %v8745
  %v8751 = vmul.f32 %v8625, %v8745
  %v8752 = vmul.f32 %v8626, %v8745
  %v8753 = vmul.f32 %v8627, %v8745
  %v8754 = vmul.f32 %v8628, %v8745
  %v8755 = vmul.f32 %v8629, %v8745
  %v8756 = vmul.f32 %v8630, %v8745
  %v8757 = vmul.f32 %v8631, %v8745
  %v8758 = vmul.f32 %v8632, %v8745
  %v8759 = vmul.f32 %v8633, %v8745
  %v8760 = vmul.f32 %v8634, %v8745
  %v8761 = vmul.f32 %v8635, %v8745
  %v8762 = vmul.f32 %v8636, %v8745
  %v8764 = vlaneseq
  %v8765 = vshrl.u32 %v8764, 7
  %v8766 = vsub.s32 0, %v8765
  %v8767 = vrot.slane %v8740, %v8766
  %v8769 = vadd.f32 %v8747, %v8767
  %v8770 = vadd.f32 %v8748, %v8767
  %v8771 = vadd.f32 %v8749, %v8767
  %v8772 = vadd.f32 %v8750, %v8767
  %v8773 = vadd.f32 %v8751, %v8767
  %v8774 = vadd.f32 %v8752, %v8767
  %v8775 = vadd.f32 %v8753, %v8767
  %v8776 = vadd.f32 %v8754, %v8767
  %v8777 = vadd.f32 %v8755, %v8767
  %v8778 = vadd.f32 %v8756, %v8767
  %v8779 = vadd.f32 %v8757, %v8767
  %v8780 = vadd.f32 %v8758, %v8767
  %v8781 = vadd.f32 %v8759, %v8767
  %v8782 = vadd.f32 %v8760, %v8767
  %v8783 = vadd.f32 %v8761, %v8767
  %v8784 = vadd.f32 %v8762, %v8767
  %v8785 = vmax.f32 %v8769, 0.0
  %v8786 = vmax.f32 %v8770, 0.0
  %v8787 = vmax.f32 %v8771, 0.0
  %v8788 = vmax.f32 %v8772, 0.0
  %v8789 = vmax.f32 %v8773, 0.0
  %v8790 = vmax.f32 %v8774, 0.0
  %v8791 = vmax.f32 %v8775, 0.0
  %v8792 = vmax.f32 %v8776, 0.0
  %v8793 = vmax.f32 %v8777, 0.0
  %v8794 = vmax.f32 %v8778, 0.0
  %v8795 = vmax.f32 %v8779, 0.0
  %v8796 = vmax.f32 %v8780, 0.0
  %v8797 = vmax.f32 %v8781, 0.0
  %v8798 = vmax.f32 %v8782, 0.0
  %v8799 = vmax.f32 %v8783, 0.0
  %v8800 = vmax.f32 %v8784, 0.0
  %v8801 = vmax.f32 %v8785, %v8786
  %v8802 = vmax.f32 %v8787, %v8788
  %v8803 = vmax.f32 %v8789, %v8790
  %v8804 = vmax.f32 %v8791, %v8792
  %v8805 = vmax.f32 %v8793, %v8794
  %v8806 = vmax.f32 %v8795, %v8796
  %v8807 = vmax.f32 %v8797, %v8798
  %v8808 = vmax.f32 %v8799, %v8800
  %8809 = vst.msk [vmem:[#allocation6] sm:$0xff] %vm8639, %v8801
  %8810 = vst.msk [vmem:[#allocation6 + $0x8] sm:$0xff] %vm8639, %v8802
  %8811 = vst.msk [vmem:[#allocation6 + $0x10] sm:$0xff] %vm8639, %v8803
  %8812 = vst.msk [vmem:[#allocation6 + $0x18] sm:$0xff] %vm8639, %v8804
  %8813 = vst.msk [vmem:[#allocation6 + $0x20] sm:$0xff] %vm8639, %v8805
  %8814 = vst.msk [vmem:[#allocation6 + $0x28] sm:$0xff] %vm8639, %v8806
  %8815 = vst.msk [vmem:[#allocation6 + $0x30] sm:$0xff] %vm8639, %v8807
  %8816 = vst.msk [vmem:[#allocation6 + $0x38] sm:$0xff] %vm8639, %v8808
  %v8817 = vld [vmem:[#allocation6] ss:$2 sm:$0xff]
  %s8818 = scalar_lea.vmem [#allocation6], 16
  %v8819 = vld [vmem:[%s8818] ss:$2 sm:$0xff]
  %s8820 = scalar_lea.vmem [#allocation6], 32
  %v8821 = vld [vmem:[%s8820] ss:$2 sm:$0xff]
  %s8822 = scalar_lea.vmem [#allocation6], 48
  %v8823 = vld [vmem:[%s8822] ss:$2 sm:$0xff]
  %s8824 = scalar_lea.vmem [#allocation6], 1
  %v8825 = vld [vmem:[%s8824] ss:$2 sm:$0xff]
  %s8826 = scalar_lea.vmem [#allocation6], 17
  %v8827 = vld [vmem:[%s8826] ss:$2 sm:$0xff]
  %s8828 = scalar_lea.vmem [#allocation6], 33
  %v8829 = vld [vmem:[%s8828] ss:$2 sm:$0xff]
  %s8830 = scalar_lea.vmem [#allocation6], 49
  %v8831 = vld [vmem:[%s8830] ss:$2 sm:$0xff]
  %v8832 = vmax.f32 %v8817, %v8825
  %v8833 = vmax.f32 %v8819, %v8827
  %v8834 = vmax.f32 %v8821, %v8829
  %v8835 = vmax.f32 %v8823, %v8831
  %vm8836 = vcmask 521216
  %8837 = vst.msk [vmem:[#allocation4] sm:$0x3f] %vm8836, 0.0
  %8838 = vst.msk [vmem:[#allocation4 + $0x8] sm:$0x3f] %vm8836, 0.0
  %8839 = vst.msk [vmem:[#allocation4 + $0x10] sm:$0x3f] %vm8836, 0.0
  %8840 = vst.msk [vmem:[#allocation4 + $0x18] sm:$0x3f] %vm8836, 0.0
  %8841 = vst.msk [vmem:[#allocation4 + $0x20] sm:$0x3f] %vm8836, 0.0
  %8842 = vst.msk [vmem:[#allocation4 + $0x28] sm:$0x3f] %vm8836, 0.0
  %8843 = vst.msk [vmem:[#allocation4 + $0x30] sm:$0x3f] %vm8836, 0.0
  %8844 = vst.msk [vmem:[#allocation4 + $0x38] sm:$0x3f] %vm8836, 0.0
  %8845 = vst.msk [vmem:[#allocation4 + $0x40] sm:$0x3f] %vm8836, 0.0
  %8846 = vst.msk [vmem:[#allocation4 + $0x48] sm:$0x3f] %vm8836, 0.0
  %8847 = vst.msk [vmem:[#allocation4 + $0x50] sm:$0x3f] %vm8836, 0.0
  %8848 = vst.msk [vmem:[#allocation4 + $0x58] sm:$0x3f] %vm8836, 0.0
  %v8853 = vcombine.high %v8832, %v8832
  %v8854 = vcombine.high %v8833, %v8833
  %v8855 = vcombine.high %v8834, %v8834
  %v8856 = vcombine.high %v8835, %v8835
  %s8861 = scalar_lea.vmem [#allocation4], 8
  %vm8862 = vcmask 519168
  %8863 = vst.msk [vmem:[%s8861 + $0x1] sm:$0xf] %vm8862, %v8832
  %8864 = vst.msk [vmem:[%s8861 + $0x9] sm:$0xf] %vm8862, %v8853
  %8865 = vst.msk [vmem:[%s8861 + $0x11] sm:$0xf] %vm8862, %v8833
  %8866 = vst.msk [vmem:[%s8861 + $0x19] sm:$0xf] %vm8862, %v8854
  %8867 = vst.msk [vmem:[%s8861 + $0x31] sm:$0xf] %vm8862, %v8834
  %8868 = vst.msk [vmem:[%s8861 + $0x39] sm:$0xf] %vm8862, %v8855
  %8869 = vst.msk [vmem:[%s8861 + $0x41] sm:$0xf] %vm8862, %v8835
  %8870 = vst.msk [vmem:[%s8861 + $0x49] sm:$0xf] %vm8862, %v8856
  %v8871 = vld [vmem:[#allocation4] sm:$0xf]
  %v8872 = vld [vmem:[#allocation4 + $0x8] sm:$0xf]
  %v8873 = vld [vmem:[#allocation4 + $0x10] sm:$0xf]
  %v8874 = vld [vmem:[#allocation4 + $0x18] sm:$0xf]
  %v8875 = vld [vmem:[#allocation4 + $0x30] sm:$0xf]
  %v8876 = vld [vmem:[#allocation4 + $0x38] sm:$0xf]
  %v8877 = vld [vmem:[#allocation4 + $0x40] sm:$0xf]
  %v8878 = vld [vmem:[#allocation4 + $0x48] sm:$0xf]
  %v8887 = vcombine.low %v8871, %v8872
  %v8888 = vcombine.low %v8873, %v8874
  %v8889 = vcombine.low %v8875, %v8876
  %v8890 = vcombine.low %v8877, %v8878
  %v8895 = vpack.c.bf16 %v8888, %v8887
  %v8896 = vpack.c.bf16 %v8890, %v8889
  %v8897 = vld [vmem:[%s10] sm:$0xf]
  %v8898 = vld [vmem:[%s10 + $0x4] sm:$0xf]
  %v8899 = vld [vmem:[%s10 + $0x8] sm:$0xf]
  %v8900 = vld [vmem:[%s10 + $0xc] sm:$0xf]
  %v8901 = vld [vmem:[%s10 + $0x10] sm:$0xf]
  %v8902 = vld [vmem:[%s10 + $0x14] sm:$0xf]
  %v8903 = vld [vmem:[%s10 + $0x18] sm:$0xf]
  %v8904 = vld [vmem:[%s10 + $0x1c] sm:$0xf]
  %v8905 = vld [vmem:[#allocation4 + $0x1] sm:$0xf]
  %v8906 = vld [vmem:[#allocation4 + $0x9] sm:$0xf]
  %v8907 = vld [vmem:[#allocation4 + $0x11] sm:$0xf]
  %v8908 = vld [vmem:[#allocation4 + $0x19] sm:$0xf]
  %v8909 = vld [vmem:[#allocation4 + $0x31] sm:$0xf]
  %v8910 = vld [vmem:[#allocation4 + $0x39] sm:$0xf]
  %v8911 = vld [vmem:[#allocation4 + $0x41] sm:$0xf]
  %v8912 = vld [vmem:[#allocation4 + $0x49] sm:$0xf]
  %v8921 = vcombine.low %v8905, %v8906
  %v8922 = vcombine.low %v8907, %v8908
  %v8923 = vcombine.low %v8909, %v8910
  %v8924 = vcombine.low %v8911, %v8912
  %v8929 = vpack.c.bf16 %v8922, %v8921
  %v8930 = vpack.c.bf16 %v8924, %v8923
  %s8931 = scalar_lea.vmem %s10, 32
  %v8932 = vld [vmem:[%s8931] sm:$0xf]
  %v8933 = vld [vmem:[%s8931 + $0x4] sm:$0xf]
  %v8934 = vld [vmem:[%s8931 + $0x8] sm:$0xf]
  %v8935 = vld [vmem:[%s8931 + $0xc] sm:$0xf]
  %v8936 = vld [vmem:[%s8931 + $0x10] sm:$0xf]
  %v8937 = vld [vmem:[%s8931 + $0x14] sm:$0xf]
  %v8938 = vld [vmem:[%s8931 + $0x18] sm:$0xf]
  %v8939 = vld [vmem:[%s8931 + $0x1c] sm:$0xf]
  %v8948 = vunpack.c.l.b16 %v8932
  %v8949 = vunpack.c.l.b16 %v8933
  %v8950 = vunpack.c.l.b16 %v8934
  %v8951 = vunpack.c.l.b16 %v8935
  %v8952 = vunpack.c.l.b16 %v8936
  %v8953 = vunpack.c.l.b16 %v8937
  %v8954 = vunpack.c.l.b16 %v8938
  %v8955 = vunpack.c.l.b16 %v8939
  %v8956 = vpack.c.b16 %v8949, %v8948
  %v8957 = vpack.c.b16 %v8951, %v8950
  %v8958 = vpack.c.b16 %v8953, %v8952
  %v8959 = vpack.c.b16 %v8955, %v8954
  %v8965 = vsel %vm8639, %v8929, 0
  %v8968 = vsel %vm8639, %v8930, 0
  %8970 = vmatprep.subr.bf16.mxu0 0
  %8971 = vmatpush1.bf16.msra.mxu0 0
  %8972 = vmatprep.subr.bf16.mxu0 0
  %8973 = vmatpush1.bf16.msra.mxu0 0
  %8974 = vmatprep.subr.bf16.mxu0 0
  %8975 = vmatpush1.bf16.msra.mxu0 0
  %8976 = vmatprep.subr.bf16.mxu0 0
  %8977 = vmatpush1.bf16.msra.mxu0 0
  %8978 = vmatprep.subr.bf16.mxu0 0
  %8979 = vmatpush1.bf16.msra.mxu0 %v8959
  %8980 = vmatprep.subr.bf16.mxu0 0
  %8981 = vmatpush1.bf16.msra.mxu0 %v8958
  %8982 = vmatprep.subr.bf16.mxu0 0
  %8983 = vmatpush1.bf16.msra.mxu0 %v8957
  %8984 = vmatprep.subr.bf16.mxu0 0
  %8985 = vmatpush1.bf16.msra.mxu0 %v8956
  %8986 = vmatprep.subr.bf16.mxu0 0
  %8987 = vmatpush2.bf16.msra.mxu0 0
  %8988 = vmatprep.subr.bf16.mxu0 0
  %8989 = vmatpush2.bf16.msra.mxu0 0
  %8990 = vmatprep.subr.bf16.mxu0 0
  %8991 = vmatpush2.bf16.msra.mxu0 0
  %8992 = vmatprep.subr.bf16.mxu0 0
  %8993 = vmatpush2.bf16.msra.mxu0 0
  %8994 = vmatprep.subr.bf16.mxu0 0
  %8995 = vmatpush2.bf16.msra.mxu0 0
  %8996 = vmatprep.subr.bf16.mxu0 0
  %8997 = vmatpush2.bf16.msra.mxu0 0
  %8998 = vmatprep.subr.bf16.mxu0 0
  %8999 = vmatpush2.bf16.msra.mxu0 0
  %9000 = vmatprep.subr.bf16.mxu0 0
  %9001 = vmatpush2.bf16.msra.mxu0 0
  %9002 = vmatprep.mubr.bf16.mxu0 0
  %9003 = vmatmul.mubr.bf16.gmra.mxu0 %v8965
  %v9004 = vpop.f32.mrf.mxu0
  %v9005 = vadd.f32 0.0, %v9004
  %v9006 = vpop.f32.mrf.mxu0
  %v9007 = vpop.f32.mrf.mxu0
  %v9008 = vadd.f32 0.0, %v9007
  %v9009 = vpop.f32.mrf.mxu0
  %9010 = vmatprep.mubr.bf16.mxu0 0
  %9011 = vmatmul.mubr.bf16.gmra.mxu0 %v8968
  %v9012 = vpop.f32.mrf.mxu0
  %v9013 = vadd.f32 0.0, %v9012
  %v9014 = vpop.f32.mrf.mxu0
  %v9015 = vpop.f32.mrf.mxu0
  %v9016 = vadd.f32 0.0, %v9015
  %v9017 = vpop.f32.mrf.mxu0
  %9018 = vdwg.mxu0
  %v9027 = vunpack.c.l.b16 %v8897
  %v9028 = vunpack.c.l.b16 %v8898
  %v9029 = vunpack.c.l.b16 %v8899
  %v9030 = vunpack.c.l.b16 %v8900
  %v9031 = vunpack.c.l.b16 %v8901
  %v9032 = vunpack.c.l.b16 %v8902
  %v9033 = vunpack.c.l.b16 %v8903
  %v9034 = vunpack.c.l.b16 %v8904
  %v9035 = vpack.c.b16 %v9028, %v9027
  %v9036 = vpack.c.b16 %v9030, %v9029
  %v9037 = vpack.c.b16 %v9032, %v9031
  %v9038 = vpack.c.b16 %v9034, %v9033
  %v9044 = vsel %vm8639, %v8895, 0
  %v9047 = vsel %vm8639, %v8896, 0
  %9049 = vmatprep.subr.bf16.mxu0 0
  %9050 = vmatpush1.bf16.msra.mxu0 0
  %9051 = vmatprep.subr.bf16.mxu0 0
  %9052 = vmatpush1.bf16.msra.mxu0 0
  %9053 = vmatprep.subr.bf16.mxu0 0
  %9054 = vmatpush1.bf16.msra.mxu0 0
  %9055 = vmatprep.subr.bf16.mxu0 0
  %9056 = vmatpush1.bf16.msra.mxu0 0
  %9057 = vmatprep.subr.bf16.mxu0 0
  %9058 = vmatpush1.bf16.msra.mxu0 %v9038
  %9059 = vmatprep.subr.bf16.mxu0 0
  %9060 = vmatpush1.bf16.msra.mxu0 %v9037
  %9061 = vmatprep.subr.bf16.mxu0 0
  %9062 = vmatpush1.bf16.msra.mxu0 %v9036
  %9063 = vmatprep.subr.bf16.mxu0 0
  %9064 = vmatpush1.bf16.msra.mxu0 %v9035
  %9065 = vmatprep.subr.bf16.mxu0 0
  %9066 = vmatpush2.bf16.msra.mxu0 0
  %9067 = vmatprep.subr.bf16.mxu0 0
  %9068 = vmatpush2.bf16.msra.mxu0 0
  %9069 = vmatprep.subr.bf16.mxu0 0
  %9070 = vmatpush2.bf16.msra.mxu0 0
  %9071 = vmatprep.subr.bf16.mxu0 0
  %9072 = vmatpush2.bf16.msra.mxu0 0
  %9073 = vmatprep.subr.bf16.mxu0 0
  %9074 = vmatpush2.bf16.msra.mxu0 0
  %9075 = vmatprep.subr.bf16.mxu0 0
  %9076 = vmatpush2.bf16.msra.mxu0 0
  %9077 = vmatprep.subr.bf16.mxu0 0
  %9078 = vmatpush2.bf16.msra.mxu0 0
  %9079 = vmatprep.subr.bf16.mxu0 0
  %9080 = vmatpush2.bf16.msra.mxu0 0
  %9081 = vmatprep.mubr.bf16.mxu0 0
  %9082 = vmatmul.mubr.bf16.gmra.mxu0 %v9044
  %v9083 = vpop.f32.mrf.mxu0
  %v9084 = vadd.f32 %v9005, %v9083
  %v9085 = vpop.f32.mrf.mxu0
  %v9086 = vpop.f32.mrf.mxu0
  %v9087 = vadd.f32 %v9008, %v9086
  %v9088 = vpop.f32.mrf.mxu0
  %9089 = vmatprep.mubr.bf16.mxu0 0
  %9090 = vmatmul.mubr.bf16.gmra.mxu0 %v9047
  %v9091 = vpop.f32.mrf.mxu0
  %v9092 = vadd.f32 %v9013, %v9091
  %v9093 = vpop.f32.mrf.mxu0
  %v9094 = vpop.f32.mrf.mxu0
  %v9095 = vadd.f32 %v9016, %v9094
  %v9096 = vpop.f32.mrf.mxu0
  %9097 = vdwg.mxu0
  %v9098 = vld [vmem:[#allocation4 + $0x2] sm:$0xf]
  %v9099 = vld [vmem:[#allocation4 + $0xa] sm:$0xf]
  %v9100 = vld [vmem:[#allocation4 + $0x12] sm:$0xf]
  %v9101 = vld [vmem:[#allocation4 + $0x1a] sm:$0xf]
  %v9102 = vld [vmem:[#allocation4 + $0x32] sm:$0xf]
  %v9103 = vld [vmem:[#allocation4 + $0x3a] sm:$0xf]
  %v9104 = vld [vmem:[#allocation4 + $0x42] sm:$0xf]
  %v9105 = vld [vmem:[#allocation4 + $0x4a] sm:$0xf]
  %v9114 = vcombine.low %v9098, %v9099
  %v9115 = vcombine.low %v9100, %v9101
  %v9116 = vcombine.low %v9102, %v9103
  %v9117 = vcombine.low %v9104, %v9105
  %v9122 = vpack.c.bf16 %v9115, %v9114
  %v9123 = vpack.c.bf16 %v9117, %v9116
  %s9124 = scalar_lea.vmem %s10, 64
  %v9125 = vld [vmem:[%s9124] sm:$0xf]
  %v9126 = vld [vmem:[%s9124 + $0x4] sm:$0xf]
  %v9127 = vld [vmem:[%s9124 + $0x8] sm:$0xf]
  %v9128 = vld [vmem:[%s9124 + $0xc] sm:$0xf]
  %v9129 = vld [vmem:[%s9124 + $0x10] sm:$0xf]
  %v9130 = vld [vmem:[%s9124 + $0x14] sm:$0xf]
  %v9131 = vld [vmem:[%s9124 + $0x18] sm:$0xf]
  %v9132 = vld [vmem:[%s9124 + $0x1c] sm:$0xf]
  %v9141 = vunpack.c.l.b16 %v9125
  %v9142 = vunpack.c.l.b16 %v9126
  %v9143 = vunpack.c.l.b16 %v9127
  %v9144 = vunpack.c.l.b16 %v9128
  %v9145 = vunpack.c.l.b16 %v9129
  %v9146 = vunpack.c.l.b16 %v9130
  %v9147 = vunpack.c.l.b16 %v9131
  %v9148 = vunpack.c.l.b16 %v9132
  %v9149 = vpack.c.b16 %v9142, %v9141
  %v9150 = vpack.c.b16 %v9144, %v9143
  %v9151 = vpack.c.b16 %v9146, %v9145
  %v9152 = vpack.c.b16 %v9148, %v9147
  %v9158 = vsel %vm8639, %v9122, 0
  %v9161 = vsel %vm8639, %v9123, 0
  %9163 = vmatprep.subr.bf16.mxu0 0
  %9164 = vmatpush1.bf16.msra.mxu0 0
  %9165 = vmatprep.subr.bf16.mxu0 0
  %9166 = vmatpush1.bf16.msra.mxu0 0
  %9167 = vmatprep.subr.bf16.mxu0 0
  %9168 = vmatpush1.bf16.msra.mxu0 0
  %9169 = vmatprep.subr.bf16.mxu0 0
  %9170 = vmatpush1.bf16.msra.mxu0 0
  %9171 = vmatprep.subr.bf16.mxu0 0
  %9172 = vmatpush1.bf16.msra.mxu0 %v9152
  %9173 = vmatprep.subr.bf16.mxu0 0
  %9174 = vmatpush1.bf16.msra.mxu0 %v9151
  %9175 = vmatprep.subr.bf16.mxu0 0
  %9176 = vmatpush1.bf16.msra.mxu0 %v9150
  %9177 = vmatprep.subr.bf16.mxu0 0
  %9178 = vmatpush1.bf16.msra.mxu0 %v9149
  %9179 = vmatprep.subr.bf16.mxu0 0
  %9180 = vmatpush2.bf16.msra.mxu0 0
  %9181 = vmatprep.subr.bf16.mxu0 0
  %9182 = vmatpush2.bf16.msra.mxu0 0
  %9183 = vmatprep.subr.bf16.mxu0 0
  %9184 = vmatpush2.bf16.msra.mxu0 0
  %9185 = vmatprep.subr.bf16.mxu0 0
  %9186 = vmatpush2.bf16.msra.mxu0 0
  %9187 = vmatprep.subr.bf16.mxu0 0
  %9188 = vmatpush2.bf16.msra.mxu0 0
  %9189 = vmatprep.subr.bf16.mxu0 0
  %9190 = vmatpush2.bf16.msra.mxu0 0
  %9191 = vmatprep.subr.bf16.mxu0 0
  %9192 = vmatpush2.bf16.msra.mxu0 0
  %9193 = vmatprep.subr.bf16.mxu0 0
  %9194 = vmatpush2.bf16.msra.mxu0 0
  %9195 = vmatprep.mubr.bf16.mxu0 0
  %9196 = vmatmul.mubr.bf16.gmra.mxu0 %v9158
  %v9197 = vpop.f32.mrf.mxu0
  %v9198 = vadd.f32 0.0, %v9197
  %v9199 = vpop.f32.mrf.mxu0
  %v9200 = vpop.f32.mrf.mxu0
  %v9201 = vadd.f32 0.0, %v9200
  %v9202 = vpop.f32.mrf.mxu0
  %9203 = vmatprep.mubr.bf16.mxu0 0
  %9204 = vmatmul.mubr.bf16.gmra.mxu0 %v9161
  %v9205 = vpop.f32.mrf.mxu0
  %v9206 = vadd.f32 0.0, %v9205
  %v9207 = vpop.f32.mrf.mxu0
  %v9208 = vpop.f32.mrf.mxu0
  %v9209 = vadd.f32 0.0, %v9208
  %v9210 = vpop.f32.mrf.mxu0
  %9211 = vdwg.mxu0
  %v9212 = vadd.f32 %v9084, %v9198
  %v9213 = vadd.f32 %v9087, %v9201
  %v9214 = vadd.f32 %v9092, %v9206
  %v9215 = vadd.f32 %v9095, %v9209
  %v9216 = vld [vmem:[%s8861] sm:$0xf]
  %v9217 = vld [vmem:[%s8861 + $0x8] sm:$0xf]
  %v9218 = vld [vmem:[%s8861 + $0x10] sm:$0xf]
  %v9219 = vld [vmem:[%s8861 + $0x18] sm:$0xf]
  %v9220 = vld [vmem:[%s8861 + $0x30] sm:$0xf]
  %v9221 = vld [vmem:[%s8861 + $0x38] sm:$0xf]
  %v9222 = vld [vmem:[%s8861 + $0x40] sm:$0xf]
  %v9223 = vld [vmem:[%s8861 + $0x48] sm:$0xf]
  %v9232 = vcombine.low %v9216, %v9217
  %v9233 = vcombine.low %v9218, %v9219
  %v9234 = vcombine.low %v9220, %v9221
  %v9235 = vcombine.low %v9222, %v9223
  %v9240 = vpack.c.bf16 %v9233, %v9232
  %v9241 = vpack.c.bf16 %v9235, %v9234
  %s9242 = scalar_lea.vmem %s10, 96
  %v9243 = vld [vmem:[%s9242] sm:$0xf]
  %v9244 = vld [vmem:[%s9242 + $0x4] sm:$0xf]
  %v9245 = vld [vmem:[%s9242 + $0x8] sm:$0xf]
  %v9246 = vld [vmem:[%s9242 + $0xc] sm:$0xf]
  %v9247 = vld [vmem:[%s9242 + $0x10] sm:$0xf]
  %v9248 = vld [vmem:[%s9242 + $0x14] sm:$0xf]
  %v9249 = vld [vmem:[%s9242 + $0x18] sm:$0xf]
  %v9250 = vld [vmem:[%s9242 + $0x1c] sm:$0xf]
  %v9259 = vunpack.c.l.b16 %v9243
  %v9260 = vunpack.c.l.b16 %v9244
  %v9261 = vunpack.c.l.b16 %v9245
  %v9262 = vunpack.c.l.b16 %v9246
  %v9263 = vunpack.c.l.b16 %v9247
  %v9264 = vunpack.c.l.b16 %v9248
  %v9265 = vunpack.c.l.b16 %v9249
  %v9266 = vunpack.c.l.b16 %v9250
  %v9267 = vpack.c.b16 %v9260, %v9259
  %v9268 = vpack.c.b16 %v9262, %v9261
  %v9269 = vpack.c.b16 %v9264, %v9263
  %v9270 = vpack.c.b16 %v9266, %v9265
  %v9276 = vsel %vm8639, %v9240, 0
  %v9279 = vsel %vm8639, %v9241, 0
  %9281 = vmatprep.subr.bf16.mxu0 0
  %9282 = vmatpush1.bf16.msra.mxu0 0
  %9283 = vmatprep.subr.bf16.mxu0 0
  %9284 = vmatpush1.bf16.msra.mxu0 0
  %9285 = vmatprep.subr.bf16.mxu0 0
  %9286 = vmatpush1.bf16.msra.mxu0 0
  %9287 = vmatprep.subr.bf16.mxu0 0
  %9288 = vmatpush1.bf16.msra.mxu0 0
  %9289 = vmatprep.subr.bf16.mxu0 0
  %9290 = vmatpush1.bf16.msra.mxu0 %v9270
  %9291 = vmatprep.subr.bf16.mxu0 0
  %9292 = vmatpush1.bf16.msra.mxu0 %v9269
  %9293 = vmatprep.subr.bf16.mxu0 0
  %9294 = vmatpush1.bf16.msra.mxu0 %v9268
  %9295 = vmatprep.subr.bf16.mxu0 0
  %9296 = vmatpush1.bf16.msra.mxu0 %v9267
  %9297 = vmatprep.subr.bf16.mxu0 0
  %9298 = vmatpush2.bf16.msra.mxu0 0
  %9299 = vmatprep.subr.bf16.mxu0 0
  %9300 = vmatpush2.bf16.msra.mxu0 0
  %9301 = vmatprep.subr.bf16.mxu0 0
  %9302 = vmatpush2.bf16.msra.mxu0 0
  %9303 = vmatprep.subr.bf16.mxu0 0
  %9304 = vmatpush2.bf16.msra.mxu0 0
  %9305 = vmatprep.subr.bf16.mxu0 0
  %9306 = vmatpush2.bf16.msra.mxu0 0
  %9307 = vmatprep.subr.bf16.mxu0 0
  %9308 = vmatpush2.bf16.msra.mxu0 0
  %9309 = vmatprep.subr.bf16.mxu0 0
  %9310 = vmatpush2.bf16.msra.mxu0 0
  %9311 = vmatprep.subr.bf16.mxu0 0
  %9312 = vmatpush2.bf16.msra.mxu0 0
  %9313 = vmatprep.mubr.bf16.mxu0 0
  %9314 = vmatmul.mubr.bf16.gmra.mxu0 %v9276
  %v9315 = vpop.f32.mrf.mxu0
  %v9316 = vadd.f32 0.0, %v9315
  %v9317 = vpop.f32.mrf.mxu0
  %v9318 = vpop.f32.mrf.mxu0
  %v9319 = vadd.f32 0.0, %v9318
  %v9320 = vpop.f32.mrf.mxu0
  %9321 = vmatprep.mubr.bf16.mxu0 0
  %9322 = vmatmul.mubr.bf16.gmra.mxu0 %v9279
  %v9323 = vpop.f32.mrf.mxu0
  %v9324 = vadd.f32 0.0, %v9323
  %v9325 = vpop.f32.mrf.mxu0
  %v9326 = vpop.f32.mrf.mxu0
  %v9327 = vadd.f32 0.0, %v9326
  %v9328 = vpop.f32.mrf.mxu0
  %9329 = vdwg.mxu0
  %v9330 = vadd.f32 %v9212, %v9316
  %v9331 = vadd.f32 %v9213, %v9319
  %v9332 = vadd.f32 %v9214, %v9324
  %v9333 = vadd.f32 %v9215, %v9327
  %v9334 = vld [vmem:[%s8861 + $0x1] sm:$0xf]
  %v9335 = vld [vmem:[%s8861 + $0x9] sm:$0xf]
  %v9336 = vld [vmem:[%s8861 + $0x11] sm:$0xf]
  %v9337 = vld [vmem:[%s8861 + $0x19] sm:$0xf]
  %v9338 = vld [vmem:[%s8861 + $0x31] sm:$0xf]
  %v9339 = vld [vmem:[%s8861 + $0x39] sm:$0xf]
  %v9340 = vld [vmem:[%s8861 + $0x41] sm:$0xf]
  %v9341 = vld [vmem:[%s8861 + $0x49] sm:$0xf]
  %v9350 = vcombine.low %v9334, %v9335
  %v9351 = vcombine.low %v9336, %v9337
  %v9352 = vcombine.low %v9338, %v9339
  %v9353 = vcombine.low %v9340, %v9341
  %v9358 = vpack.c.bf16 %v9351, %v9350
  %v9359 = vpack.c.bf16 %v9353, %v9352
  %s9360 = scalar_lea.vmem %s10, 128
  %v9361 = vld [vmem:[%s9360] sm:$0xf]
  %v9362 = vld [vmem:[%s9360 + $0x4] sm:$0xf]
  %v9363 = vld [vmem:[%s9360 + $0x8] sm:$0xf]
  %v9364 = vld [vmem:[%s9360 + $0xc] sm:$0xf]
  %v9365 = vld [vmem:[%s9360 + $0x10] sm:$0xf]
  %v9366 = vld [vmem:[%s9360 + $0x14] sm:$0xf]
  %v9367 = vld [vmem:[%s9360 + $0x18] sm:$0xf]
  %v9368 = vld [vmem:[%s9360 + $0x1c] sm:$0xf]
  %v9377 = vunpack.c.l.b16 %v9361
  %v9378 = vunpack.c.l.b16 %v9362
  %v9379 = vunpack.c.l.b16 %v9363
  %v9380 = vunpack.c.l.b16 %v9364
  %v9381 = vunpack.c.l.b16 %v9365
  %v9382 = vunpack.c.l.b16 %v9366
  %v9383 = vunpack.c.l.b16 %v9367
  %v9384 = vunpack.c.l.b16 %v9368
  %v9385 = vpack.c.b16 %v9378, %v9377
  %v9386 = vpack.c.b16 %v9380, %v9379
  %v9387 = vpack.c.b16 %v9382, %v9381
  %v9388 = vpack.c.b16 %v9384, %v9383
  %v9394 = vsel %vm8639, %v9358, 0
  %v9397 = vsel %vm8639, %v9359, 0
  %9399 = vmatprep.subr.bf16.mxu0 0
  %9400 = vmatpush1.bf16.msra.mxu0 0
  %9401 = vmatprep.subr.bf16.mxu0 0
  %9402 = vmatpush1.bf16.msra.mxu0 0
  %9403 = vmatprep.subr.bf16.mxu0 0
  %9404 = vmatpush1.bf16.msra.mxu0 0
  %9405 = vmatprep.subr.bf16.mxu0 0
  %9406 = vmatpush1.bf16.msra.mxu0 0
  %9407 = vmatprep.subr.bf16.mxu0 0
  %9408 = vmatpush1.bf16.msra.mxu0 %v9388
  %9409 = vmatprep.subr.bf16.mxu0 0
  %9410 = vmatpush1.bf16.msra.mxu0 %v9387
  %9411 = vmatprep.subr.bf16.mxu0 0
  %9412 = vmatpush1.bf16.msra.mxu0 %v9386
  %9413 = vmatprep.subr.bf16.mxu0 0
  %9414 = vmatpush1.bf16.msra.mxu0 %v9385
  %9415 = vmatprep.subr.bf16.mxu0 0
  %9416 = vmatpush2.bf16.msra.mxu0 0
  %9417 = vmatprep.subr.bf16.mxu0 0
  %9418 = vmatpush2.bf16.msra.mxu0 0
  %9419 = vmatprep.subr.bf16.mxu0 0
  %9420 = vmatpush2.bf16.msra.mxu0 0
  %9421 = vmatprep.subr.bf16.mxu0 0
  %9422 = vmatpush2.bf16.msra.mxu0 0
  %9423 = vmatprep.subr.bf16.mxu0 0
  %9424 = vmatpush2.bf16.msra.mxu0 0
  %9425 = vmatprep.subr.bf16.mxu0 0
  %9426 = vmatpush2.bf16.msra.mxu0 0
  %9427 = vmatprep.subr.bf16.mxu0 0
  %9428 = vmatpush2.bf16.msra.mxu0 0
  %9429 = vmatprep.subr.bf16.mxu0 0
  %9430 = vmatpush2.bf16.msra.mxu0 0
  %9431 = vmatprep.mubr.bf16.mxu0 0
  %9432 = vmatmul.mubr.bf16.gmra.mxu0 %v9394
  %v9433 = vpop.f32.mrf.mxu0
  %v9434 = vadd.f32 0.0, %v9433
  %v9435 = vpop.f32.mrf.mxu0
  %v9436 = vpop.f32.mrf.mxu0
  %v9437 = vadd.f32 0.0, %v9436
  %v9438 = vpop.f32.mrf.mxu0
  %9439 = vmatprep.mubr.bf16.mxu0 0
  %9440 = vmatmul.mubr.bf16.gmra.mxu0 %v9397
  %v9441 = vpop.f32.mrf.mxu0
  %v9442 = vadd.f32 0.0, %v9441
  %v9443 = vpop.f32.mrf.mxu0
  %v9444 = vpop.f32.mrf.mxu0
  %v9445 = vadd.f32 0.0, %v9444
  %v9446 = vpop.f32.mrf.mxu0
  %9447 = vdwg.mxu0
  %v9448 = vadd.f32 %v9330, %v9434
  %v9449 = vadd.f32 %v9331, %v9437
  %v9450 = vadd.f32 %v9332, %v9442
  %v9451 = vadd.f32 %v9333, %v9445
  %v9452 = vld [vmem:[%s8861 + $0x2] sm:$0xf]
  %v9453 = vld [vmem:[%s8861 + $0xa] sm:$0xf]
  %v9454 = vld [vmem:[%s8861 + $0x12] sm:$0xf]
  %v9455 = vld [vmem:[%s8861 + $0x1a] sm:$0xf]
  %v9456 = vld [vmem:[%s8861 + $0x32] sm:$0xf]
  %v9457 = vld [vmem:[%s8861 + $0x3a] sm:$0xf]
  %v9458 = vld [vmem:[%s8861 + $0x42] sm:$0xf]
  %v9459 = vld [vmem:[%s8861 + $0x4a] sm:$0xf]
  %v9468 = vcombine.low %v9452, %v9453
  %v9469 = vcombine.low %v9454, %v9455
  %v9470 = vcombine.low %v9456, %v9457
  %v9471 = vcombine.low %v9458, %v9459
  %v9476 = vpack.c.bf16 %v9469, %v9468
  %v9477 = vpack.c.bf16 %v9471, %v9470
  %s9478 = scalar_lea.vmem %s10, 160
  %v9479 = vld [vmem:[%s9478] sm:$0xf]
  %v9480 = vld [vmem:[%s9478 + $0x4] sm:$0xf]
  %v9481 = vld [vmem:[%s9478 + $0x8] sm:$0xf]
  %v9482 = vld [vmem:[%s9478 + $0xc] sm:$0xf]
  %v9483 = vld [vmem:[%s9478 + $0x10] sm:$0xf]
  %v9484 = vld [vmem:[%s9478 + $0x14] sm:$0xf]
  %v9485 = vld [vmem:[%s9478 + $0x18] sm:$0xf]
  %v9486 = vld [vmem:[%s9478 + $0x1c] sm:$0xf]
  %v9495 = vunpack.c.l.b16 %v9479
  %v9496 = vunpack.c.l.b16 %v9480
  %v9497 = vunpack.c.l.b16 %v9481
  %v9498 = vunpack.c.l.b16 %v9482
  %v9499 = vunpack.c.l.b16 %v9483
  %v9500 = vunpack.c.l.b16 %v9484
  %v9501 = vunpack.c.l.b16 %v9485
  %v9502 = vunpack.c.l.b16 %v9486
  %v9503 = vpack.c.b16 %v9496, %v9495
  %v9504 = vpack.c.b16 %v9498, %v9497
  %v9505 = vpack.c.b16 %v9500, %v9499
  %v9506 = vpack.c.b16 %v9502, %v9501
  %v9512 = vsel %vm8639, %v9476, 0
  %v9515 = vsel %vm8639, %v9477, 0
  %9517 = vmatprep.subr.bf16.mxu0 0
  %9518 = vmatpush1.bf16.msra.mxu0 0
  %9519 = vmatprep.subr.bf16.mxu0 0
  %9520 = vmatpush1.bf16.msra.mxu0 0
  %9521 = vmatprep.subr.bf16.mxu0 0
  %9522 = vmatpush1.bf16.msra.mxu0 0
  %9523 = vmatprep.subr.bf16.mxu0 0
  %9524 = vmatpush1.bf16.msra.mxu0 0
  %9525 = vmatprep.subr.bf16.mxu0 0
  %9526 = vmatpush1.bf16.msra.mxu0 %v9506
  %9527 = vmatprep.subr.bf16.mxu0 0
  %9528 = vmatpush1.bf16.msra.mxu0 %v9505
  %9529 = vmatprep.subr.bf16.mxu0 0
  %9530 = vmatpush1.bf16.msra.mxu0 %v9504
  %9531 = vmatprep.subr.bf16.mxu0 0
  %9532 = vmatpush1.bf16.msra.mxu0 %v9503
  %9533 = vmatprep.subr.bf16.mxu0 0
  %9534 = vmatpush2.bf16.msra.mxu0 0
  %9535 = vmatprep.subr.bf16.mxu0 0
  %9536 = vmatpush2.bf16.msra.mxu0 0
  %9537 = vmatprep.subr.bf16.mxu0 0
  %9538 = vmatpush2.bf16.msra.mxu0 0
  %9539 = vmatprep.subr.bf16.mxu0 0
  %9540 = vmatpush2.bf16.msra.mxu0 0
  %9541 = vmatprep.subr.bf16.mxu0 0
  %9542 = vmatpush2.bf16.msra.mxu0 0
  %9543 = vmatprep.subr.bf16.mxu0 0
  %9544 = vmatpush2.bf16.msra.mxu0 0
  %9545 = vmatprep.subr.bf16.mxu0 0
  %9546 = vmatpush2.bf16.msra.mxu0 0
  %9547 = vmatprep.subr.bf16.mxu0 0
  %9548 = vmatpush2.bf16.msra.mxu0 0
  %9549 = vmatprep.mubr.bf16.mxu0 0
  %9550 = vmatmul.mubr.bf16.gmra.mxu0 %v9512
  %v9551 = vpop.f32.mrf.mxu0
  %v9552 = vadd.f32 0.0, %v9551
  %v9553 = vpop.f32.mrf.mxu0
  %v9554 = vpop.f32.mrf.mxu0
  %v9555 = vadd.f32 0.0, %v9554
  %v9556 = vpop.f32.mrf.mxu0
  %9557 = vmatprep.mubr.bf16.mxu0 0
  %9558 = vmatmul.mubr.bf16.gmra.mxu0 %v9515
  %v9559 = vpop.f32.mrf.mxu0
  %v9560 = vadd.f32 0.0, %v9559
  %v9561 = vpop.f32.mrf.mxu0
  %v9562 = vpop.f32.mrf.mxu0
  %v9563 = vadd.f32 0.0, %v9562
  %v9564 = vpop.f32.mrf.mxu0
  %9565 = vdwg.mxu0
  %v9566 = vadd.f32 %v9448, %v9552
  %v9567 = vadd.f32 %v9449, %v9555
  %v9568 = vadd.f32 %v9450, %v9560
  %v9569 = vadd.f32 %v9451, %v9563
  %s9570 = scalar_lea.vmem [#allocation4], 16
  %v9571 = vld [vmem:[%s9570] sm:$0xf]
  %v9572 = vld [vmem:[%s9570 + $0x8] sm:$0xf]
  %v9573 = vld [vmem:[%s9570 + $0x10] sm:$0xf]
  %v9574 = vld [vmem:[%s9570 + $0x18] sm:$0xf]
  %v9575 = vld [vmem:[%s9570 + $0x30] sm:$0xf]
  %v9576 = vld [vmem:[%s9570 + $0x38] sm:$0xf]
  %v9577 = vld [vmem:[%s9570 + $0x40] sm:$0xf]
  %v9578 = vld [vmem:[%s9570 + $0x48] sm:$0xf]
  %v9587 = vcombine.low %v9571, %v9572
  %v9588 = vcombine.low %v9573, %v9574
  %v9589 = vcombine.low %v9575, %v9576
  %v9590 = vcombine.low %v9577, %v9578
  %v9595 = vpack.c.bf16 %v9588, %v9587
  %v9596 = vpack.c.bf16 %v9590, %v9589
  %s9597 = scalar_lea.vmem %s10, 192
  %v9598 = vld [vmem:[%s9597] sm:$0xf]
  %v9599 = vld [vmem:[%s9597 + $0x4] sm:$0xf]
  %v9600 = vld [vmem:[%s9597 + $0x8] sm:$0xf]
  %v9601 = vld [vmem:[%s9597 + $0xc] sm:$0xf]
  %v9602 = vld [vmem:[%s9597 + $0x10] sm:$0xf]
  %v9603 = vld [vmem:[%s9597 + $0x14] sm:$0xf]
  %v9604 = vld [vmem:[%s9597 + $0x18] sm:$0xf]
  %v9605 = vld [vmem:[%s9597 + $0x1c] sm:$0xf]
  %v9614 = vunpack.c.l.b16 %v9598
  %v9615 = vunpack.c.l.b16 %v9599
  %v9616 = vunpack.c.l.b16 %v9600
  %v9617 = vunpack.c.l.b16 %v9601
  %v9618 = vunpack.c.l.b16 %v9602
  %v9619 = vunpack.c.l.b16 %v9603
  %v9620 = vunpack.c.l.b16 %v9604
  %v9621 = vunpack.c.l.b16 %v9605
  %v9622 = vpack.c.b16 %v9615, %v9614
  %v9623 = vpack.c.b16 %v9617, %v9616
  %v9624 = vpack.c.b16 %v9619, %v9618
  %v9625 = vpack.c.b16 %v9621, %v9620
  %v9631 = vsel %vm8639, %v9595, 0
  %v9634 = vsel %vm8639, %v9596, 0
  %9636 = vmatprep.subr.bf16.mxu0 0
  %9637 = vmatpush1.bf16.msra.mxu0 0
  %9638 = vmatprep.subr.bf16.mxu0 0
  %9639 = vmatpush1.bf16.msra.mxu0 0
  %9640 = vmatprep.subr.bf16.mxu0 0
  %9641 = vmatpush1.bf16.msra.mxu0 0
  %9642 = vmatprep.subr.bf16.mxu0 0
  %9643 = vmatpush1.bf16.msra.mxu0 0
  %9644 = vmatprep.subr.bf16.mxu0 0
  %9645 = vmatpush1.bf16.msra.mxu0 %v9625
  %9646 = vmatprep.subr.bf16.mxu0 0
  %9647 = vmatpush1.bf16.msra.mxu0 %v9624
  %9648 = vmatprep.subr.bf16.mxu0 0
  %9649 = vmatpush1.bf16.msra.mxu0 %v9623
  %9650 = vmatprep.subr.bf16.mxu0 0
  %9651 = vmatpush1.bf16.msra.mxu0 %v9622
  %9652 = vmatprep.subr.bf16.mxu0 0
  %9653 = vmatpush2.bf16.msra.mxu0 0
  %9654 = vmatprep.subr.bf16.mxu0 0
  %9655 = vmatpush2.bf16.msra.mxu0 0
  %9656 = vmatprep.subr.bf16.mxu0 0
  %9657 = vmatpush2.bf16.msra.mxu0 0
  %9658 = vmatprep.subr.bf16.mxu0 0
  %9659 = vmatpush2.bf16.msra.mxu0 0
  %9660 = vmatprep.subr.bf16.mxu0 0
  %9661 = vmatpush2.bf16.msra.mxu0 0
  %9662 = vmatprep.subr.bf16.mxu0 0
  %9663 = vmatpush2.bf16.msra.mxu0 0
  %9664 = vmatprep.subr.bf16.mxu0 0
  %9665 = vmatpush2.bf16.msra.mxu0 0
  %9666 = vmatprep.subr.bf16.mxu0 0
  %9667 = vmatpush2.bf16.msra.mxu0 0
  %9668 = vmatprep.mubr.bf16.mxu0 0
  %9669 = vmatmul.mubr.bf16.gmra.mxu0 %v9631
  %v9670 = vpop.f32.mrf.mxu0
  %v9671 = vadd.f32 0.0, %v9670
  %v9672 = vpop.f32.mrf.mxu0
  %v9673 = vpop.f32.mrf.mxu0
  %v9674 = vadd.f32 0.0, %v9673
  %v9675 = vpop.f32.mrf.mxu0
  %9676 = vmatprep.mubr.bf16.mxu0 0
  %9677 = vmatmul.mubr.bf16.gmra.mxu0 %v9634
  %v9678 = vpop.f32.mrf.mxu0
  %v9679 = vadd.f32 0.0, %v9678
  %v9680 = vpop.f32.mrf.mxu0
  %v9681 = vpop.f32.mrf.mxu0
  %v9682 = vadd.f32 0.0, %v9681
  %v9683 = vpop.f32.mrf.mxu0
  %9684 = vdwg.mxu0
  %v9685 = vadd.f32 %v9566, %v9671
  %v9686 = vadd.f32 %v9567, %v9674
  %v9687 = vadd.f32 %v9568, %v9679
  %v9688 = vadd.f32 %v9569, %v9682
  %v9689 = vld [vmem:[%s9570 + $0x1] sm:$0xf]
  %v9690 = vld [vmem:[%s9570 + $0x9] sm:$0xf]
  %v9691 = vld [vmem:[%s9570 + $0x11] sm:$0xf]
  %v9692 = vld [vmem:[%s9570 + $0x19] sm:$0xf]
  %v9693 = vld [vmem:[%s9570 + $0x31] sm:$0xf]
  %v9694 = vld [vmem:[%s9570 + $0x39] sm:$0xf]
  %v9695 = vld [vmem:[%s9570 + $0x41] sm:$0xf]
  %v9696 = vld [vmem:[%s9570 + $0x49] sm:$0xf]
  %v9705 = vcombine.low %v9689, %v9690
  %v9706 = vcombine.low %v9691, %v9692
  %v9707 = vcombine.low %v9693, %v9694
  %v9708 = vcombine.low %v9695, %v9696
  %v9713 = vpack.c.bf16 %v9706, %v9705
  %v9714 = vpack.c.bf16 %v9708, %v9707
  %s9715 = scalar_lea.vmem %s10, 224
  %v9716 = vld [vmem:[%s9715] sm:$0xf]
  %v9717 = vld [vmem:[%s9715 + $0x4] sm:$0xf]
  %v9718 = vld [vmem:[%s9715 + $0x8] sm:$0xf]
  %v9719 = vld [vmem:[%s9715 + $0xc] sm:$0xf]
  %v9720 = vld [vmem:[%s9715 + $0x10] sm:$0xf]
  %v9721 = vld [vmem:[%s9715 + $0x14] sm:$0xf]
  %v9722 = vld [vmem:[%s9715 + $0x18] sm:$0xf]
  %v9723 = vld [vmem:[%s9715 + $0x1c] sm:$0xf]
  %v9732 = vunpack.c.l.b16 %v9716
  %v9733 = vunpack.c.l.b16 %v9717
  %v9734 = vunpack.c.l.b16 %v9718
  %v9735 = vunpack.c.l.b16 %v9719
  %v9736 = vunpack.c.l.b16 %v9720
  %v9737 = vunpack.c.l.b16 %v9721
  %v9738 = vunpack.c.l.b16 %v9722
  %v9739 = vunpack.c.l.b16 %v9723
  %v9740 = vpack.c.b16 %v9733, %v9732
  %v9741 = vpack.c.b16 %v9735, %v9734
  %v9742 = vpack.c.b16 %v9737, %v9736
  %v9743 = vpack.c.b16 %v9739, %v9738
  %v9749 = vsel %vm8639, %v9713, 0
  %v9752 = vsel %vm8639, %v9714, 0
  %9754 = vmatprep.subr.bf16.mxu0 0
  %9755 = vmatpush1.bf16.msra.mxu0 0
  %9756 = vmatprep.subr.bf16.mxu0 0
  %9757 = vmatpush1.bf16.msra.mxu0 0
  %9758 = vmatprep.subr.bf16.mxu0 0
  %9759 = vmatpush1.bf16.msra.mxu0 0
  %9760 = vmatprep.subr.bf16.mxu0 0
  %9761 = vmatpush1.bf16.msra.mxu0 0
  %9762 = vmatprep.subr.bf16.mxu0 0
  %9763 = vmatpush1.bf16.msra.mxu0 %v9743
  %9764 = vmatprep.subr.bf16.mxu0 0
  %9765 = vmatpush1.bf16.msra.mxu0 %v9742
  %9766 = vmatprep.subr.bf16.mxu0 0
  %9767 = vmatpush1.bf16.msra.mxu0 %v9741
  %9768 = vmatprep.subr.bf16.mxu0 0
  %9769 = vmatpush1.bf16.msra.mxu0 %v9740
  %9770 = vmatprep.subr.bf16.mxu0 0
  %9771 = vmatpush2.bf16.msra.mxu0 0
  %9772 = vmatprep.subr.bf16.mxu0 0
  %9773 = vmatpush2.bf16.msra.mxu0 0
  %9774 = vmatprep.subr.bf16.mxu0 0
  %9775 = vmatpush2.bf16.msra.mxu0 0
  %9776 = vmatprep.subr.bf16.mxu0 0
  %9777 = vmatpush2.bf16.msra.mxu0 0
  %9778 = vmatprep.subr.bf16.mxu0 0
  %9779 = vmatpush2.bf16.msra.mxu0 0
  %9780 = vmatprep.subr.bf16.mxu0 0
  %9781 = vmatpush2.bf16.msra.mxu0 0
  %9782 = vmatprep.subr.bf16.mxu0 0
  %9783 = vmatpush2.bf16.msra.mxu0 0
  %9784 = vmatprep.subr.bf16.mxu0 0
  %9785 = vmatpush2.bf16.msra.mxu0 0
  %9786 = vmatprep.mubr.bf16.mxu0 0
  %9787 = vmatmul.mubr.bf16.gmra.mxu0 %v9749
  %v9788 = vpop.f32.mrf.mxu0
  %v9789 = vadd.f32 0.0, %v9788
  %v9790 = vpop.f32.mrf.mxu0
  %v9791 = vpop.f32.mrf.mxu0
  %v9792 = vadd.f32 0.0, %v9791
  %v9793 = vpop.f32.mrf.mxu0
  %9794 = vmatprep.mubr.bf16.mxu0 0
  %9795 = vmatmul.mubr.bf16.gmra.mxu0 %v9752
  %v9796 = vpop.f32.mrf.mxu0
  %v9797 = vadd.f32 0.0, %v9796
  %v9798 = vpop.f32.mrf.mxu0
  %v9799 = vpop.f32.mrf.mxu0
  %v9800 = vadd.f32 0.0, %v9799
  %v9801 = vpop.f32.mrf.mxu0
  %9802 = vdwg.mxu0
  %v9803 = vadd.f32 %v9685, %v9789
  %v9804 = vadd.f32 %v9686, %v9792
  %v9805 = vadd.f32 %v9687, %v9797
  %v9806 = vadd.f32 %v9688, %v9800
  %v9807 = vld [vmem:[%s9570 + $0x2] sm:$0xf]
  %v9808 = vld [vmem:[%s9570 + $0xa] sm:$0xf]
  %v9809 = vld [vmem:[%s9570 + $0x12] sm:$0xf]
  %v9810 = vld [vmem:[%s9570 + $0x1a] sm:$0xf]
  %v9811 = vld [vmem:[%s9570 + $0x32] sm:$0xf]
  %v9812 = vld [vmem:[%s9570 + $0x3a] sm:$0xf]
  %v9813 = vld [vmem:[%s9570 + $0x42] sm:$0xf]
  %v9814 = vld [vmem:[%s9570 + $0x4a] sm:$0xf]
  %v9823 = vcombine.low %v9807, %v9808
  %v9824 = vcombine.low %v9809, %v9810
  %v9825 = vcombine.low %v9811, %v9812
  %v9826 = vcombine.low %v9813, %v9814
  %v9831 = vpack.c.bf16 %v9824, %v9823
  %v9832 = vpack.c.bf16 %v9826, %v9825
  %s9833 = scalar_lea.vmem %s10, 256
  %v9834 = vld [vmem:[%s9833] sm:$0xf]
  %v9835 = vld [vmem:[%s9833 + $0x4] sm:$0xf]
  %v9836 = vld [vmem:[%s9833 + $0x8] sm:$0xf]
  %v9837 = vld [vmem:[%s9833 + $0xc] sm:$0xf]
  %v9838 = vld [vmem:[%s9833 + $0x10] sm:$0xf]
  %v9839 = vld [vmem:[%s9833 + $0x14] sm:$0xf]
  %v9840 = vld [vmem:[%s9833 + $0x18] sm:$0xf]
  %v9841 = vld [vmem:[%s9833 + $0x1c] sm:$0xf]
  %v9850 = vunpack.c.l.b16 %v9834
  %v9851 = vunpack.c.l.b16 %v9835
  %v9852 = vunpack.c.l.b16 %v9836
  %v9853 = vunpack.c.l.b16 %v9837
  %v9854 = vunpack.c.l.b16 %v9838
  %v9855 = vunpack.c.l.b16 %v9839
  %v9856 = vunpack.c.l.b16 %v9840
  %v9857 = vunpack.c.l.b16 %v9841
  %v9858 = vpack.c.b16 %v9851, %v9850
  %v9859 = vpack.c.b16 %v9853, %v9852
  %v9860 = vpack.c.b16 %v9855, %v9854
  %v9861 = vpack.c.b16 %v9857, %v9856
  %v9867 = vsel %vm8639, %v9831, 0
  %v9870 = vsel %vm8639, %v9832, 0
  %9872 = vmatprep.subr.bf16.mxu0 0
  %9873 = vmatpush1.bf16.msra.mxu0 0
  %9874 = vmatprep.subr.bf16.mxu0 0
  %9875 = vmatpush1.bf16.msra.mxu0 0
  %9876 = vmatprep.subr.bf16.mxu0 0
  %9877 = vmatpush1.bf16.msra.mxu0 0
  %9878 = vmatprep.subr.bf16.mxu0 0
  %9879 = vmatpush1.bf16.msra.mxu0 0
  %9880 = vmatprep.subr.bf16.mxu0 0
  %9881 = vmatpush1.bf16.msra.mxu0 %v9861
  %9882 = vmatprep.subr.bf16.mxu0 0
  %9883 = vmatpush1.bf16.msra.mxu0 %v9860
  %9884 = vmatprep.subr.bf16.mxu0 0
  %9885 = vmatpush1.bf16.msra.mxu0 %v9859
  %9886 = vmatprep.subr.bf16.mxu0 0
  %9887 = vmatpush1.bf16.msra.mxu0 %v9858
  %9888 = vmatprep.subr.bf16.mxu0 0
  %9889 = vmatpush2.bf16.msra.mxu0 0
  %9890 = vmatprep.subr.bf16.mxu0 0
  %9891 = vmatpush2.bf16.msra.mxu0 0
  %9892 = vmatprep.subr.bf16.mxu0 0
  %9893 = vmatpush2.bf16.msra.mxu0 0
  %9894 = vmatprep.subr.bf16.mxu0 0
  %9895 = vmatpush2.bf16.msra.mxu0 0
  %9896 = vmatprep.subr.bf16.mxu0 0
  %9897 = vmatpush2.bf16.msra.mxu0 0
  %9898 = vmatprep.subr.bf16.mxu0 0
  %9899 = vmatpush2.bf16.msra.mxu0 0
  %9900 = vmatprep.subr.bf16.mxu0 0
  %9901 = vmatpush2.bf16.msra.mxu0 0
  %9902 = vmatprep.subr.bf16.mxu0 0
  %9903 = vmatpush2.bf16.msra.mxu0 0
  %9904 = vmatprep.mubr.bf16.mxu0 0
  %9905 = vmatmul.mubr.bf16.gmra.mxu0 %v9867
  %v9906 = vpop.f32.mrf.mxu0
  %v9907 = vadd.f32 0.0, %v9906
  %v9908 = vpop.f32.mrf.mxu0
  %v9909 = vpop.f32.mrf.mxu0
  %v9910 = vadd.f32 0.0, %v9909
  %v9911 = vpop.f32.mrf.mxu0
  %9912 = vmatprep.mubr.bf16.mxu0 0
  %9913 = vmatmul.mubr.bf16.gmra.mxu0 %v9870
  %v9914 = vpop.f32.mrf.mxu0
  %v9915 = vadd.f32 0.0, %v9914
  %v9916 = vpop.f32.mrf.mxu0
  %v9917 = vpop.f32.mrf.mxu0
  %v9918 = vadd.f32 0.0, %v9917
  %v9919 = vpop.f32.mrf.mxu0
  %9920 = vdwg.mxu0
  %v9921 = vadd.f32 %v9803, %v9907
  %v9922 = vadd.f32 %v9804, %v9910
  %v9923 = vadd.f32 %v9805, %v9915
  %v9924 = vadd.f32 %v9806, %v9918
  %v9925 = vld [vmem:[%s11] sm:$0x1]
  %v9926 = vld [vmem:[%s12] sm:$0x1]
  %v9927 = vsel %vm8639, %v9921, 0.0
  %v9928 = vsel %vm8639, %v9922, 0.0
  %v9929 = vadd.f32 %v9927, %v9928
  %v9930 = vsel %vm8639, %v9923, 0.0
  %v9931 = vadd.f32 %v9929, %v9930
  %v9932 = vsel %vm8639, %v9924, 0.0
  %v9933 = vadd.f32 %v9931, %v9932
  %v9934 = vrot.slane %v9933, 4
  %v9935 = vadd.f32 %v9933, %v9934
  %v9936 = vrot.slane %v9935, 2
  %v9937 = vadd.f32 %v9935, %v9936
  %v9938 = vrot.slane %v9937, 1
  %v9939 = vadd.f32 %v9937, %v9938
  %v9940 = vrcp.pop 32.0
  %v9941 = vmul.f32 %v9939, %v9940
  %v9942 = vmul.f32 %v9921, %v9921
  %v9943 = vmul.f32 %v9922, %v9922
  %v9944 = vmul.f32 %v9923, %v9923
  %v9945 = vmul.f32 %v9924, %v9924
  %v9946 = vsel %vm8639, %v9942, 0.0
  %v9947 = vsel %vm8639, %v9943, 0.0
  %v9948 = vadd.f32 %v9946, %v9947
  %v9949 = vsel %vm8639, %v9944, 0.0
  %v9950 = vadd.f32 %v9948, %v9949
  %v9951 = vsel %vm8639, %v9945, 0.0
  %v9952 = vadd.f32 %v9950, %v9951
  %v9953 = vrot.slane %v9952, 4
  %v9954 = vadd.f32 %v9952, %v9953
  %v9955 = vrot.slane %v9954, 2
  %v9956 = vadd.f32 %v9954, %v9955
  %v9957 = vrot.slane %v9956, 1
  %v9958 = vadd.f32 %v9956, %v9957
  %v9959 = vmul.f32 %v9958, %v9940
  %v9960 = vmul.f32 %v9941, %v9941
  %v9961 = vsub.f32 %v9959, %v9960
  %v9962 = vmax.f32 %v9961, 0.0
  %v9963 = vadd.f32 %v9962, 1e-05
  %v9964 = vrsqrt.pop %v9963
  %v9965 = vmul.f32 %v9925, %v9964
  %v9966 = vmul.f32 %v9941, %v9965
  %v9967 = vsub.f32 %v9926, %v9966
  %v9969 = vlaneseq
  %v9970 = vshrl.u32 %v9969, 7
  %v9971 = vsub.s32 0, %v9970
  %v9972 = vrot.slane %v9965, %v9971
  %v9974 = vmul.f32 %v9921, %v9972
  %v9975 = vmul.f32 %v9922, %v9972
  %v9976 = vmul.f32 %v9923, %v9972
  %v9977 = vmul.f32 %v9924, %v9972
  %v9979 = vlaneseq
  %v9980 = vshrl.u32 %v9979, 7
  %v9981 = vsub.s32 0, %v9980
  %v9982 = vrot.slane %v9967, %v9981
  %v9984 = vadd.f32 %v9974, %v9982
  %v9985 = vadd.f32 %v9975, %v9982
  %v9986 = vadd.f32 %v9976, %v9982
  %v9987 = vadd.f32 %v9977, %v9982
  %v9988 = vmax.f32 %v9984, 0.0
  %v9989 = vmax.f32 %v9985, 0.0
  %v9990 = vmax.f32 %v9986, 0.0
  %v9991 = vmax.f32 %v9987, 0.0
  %9992 = vst.msk [vmem:[%s13] sm:$0xff] %vm8639, %v9988
  %9993 = vst.msk [vmem:[%s13 + $0x8] sm:$0xff] %vm8639, %v9989
  %9994 = vst.msk [vmem:[%s13 + $0x10] sm:$0xff] %vm8639, %v9990
  %9995 = vst.msk [vmem:[%s13 + $0x18] sm:$0xff] %vm8639, %v9991
  // Predicated region
  $region54: #{feature_extractor.1} parent=0 // pred_check
    _
  $region55: #{feature_extractor.1} parent=0 // pred_check_branch
    %9997 = sbr.rel (0) target = $region57
  $region56: #{feature_extractor.1} parent=0 // pred_region
    _
  $region57: #{feature_extractor.1} parent=0 // pred_fallthru
    _
  // Predicated region
  $region58: #{feature_extractor.1} parent=0 // pred_check
    _
  $region59: #{feature_extractor.1} parent=0 // pred_check_branch
    %9999 = sbr.rel (0) target = $region61
  $region60: #{feature_extractor.1} parent=0 // pred_region
    _
  $region61: #{feature_extractor.1} parent=0 // pred_fallthru
    _

</llo_original>
